<compile_context>
chip_gen: v5e
topology: v5e:2x2
jax: 0.10.0
libtpu: 0.0.40
codegen_flags: <defaults>
</compile_context>

<pallas_src>
import functools

import jax
import jax.numpy as jnp
from jax import lax
from jax.experimental import pallas as pl
from jax.experimental.pallas import tpu as pltpu


# ----------------------------- encoder kernel -----------------------------

def _encoder_kernel(xw_ref, whh_ref, h_ref, c_ref, *, n_steps, steps_per_block):
    """Runs `steps_per_block` encoder LSTM timesteps per grid iteration.

    xw_ref = precomputed (x @ W_ih + b) stream, shape [U, B, 4H] f32.
    h/c have constant output block indices -> VMEM-resident recurrent state
    (written back to HBM once at the end).
    """
    g = pl.program_id(0)
    H = c_ref.shape[1]

    @pl.when(g == 0)
    def _init():
        h_ref[...] = jnp.zeros_like(h_ref)
        c_ref[...] = jnp.zeros_like(c_ref)

    ragged = (n_steps % steps_per_block) != 0
    for u in range(steps_per_block):
        def step(u=u):
            h = h_ref[...]                                    # [B, H] f32
            c = c_ref[...]
            gates = (jnp.dot(h.astype(jnp.bfloat16), whh_ref[...],
                             preferred_element_type=jnp.float32)
                     + xw_ref[u])                             # [B, 4H] f32
            i = jax.nn.sigmoid(gates[:, 0 * H:1 * H])
            f = jax.nn.sigmoid(gates[:, 1 * H:2 * H])
            gg = jnp.tanh(gates[:, 2 * H:3 * H])
            o = jax.nn.sigmoid(gates[:, 3 * H:4 * H])
            c_new = f * c + i * gg
            c_ref[...] = c_new
            h_ref[...] = o * jnp.tanh(c_new)

        if ragged:
            pl.when(g * steps_per_block + u < n_steps)(step)
        else:
            step()


def encoder_forward(xw, w_hh, *, steps_per_block=4,
                    vmem_limit_bytes=32 * 1024 * 1024):
    """xw: [T, B, 4H] f32 (hoisted x @ W_ih + b). Returns final (h, c), each [B, H] f32."""
    T, B, G4 = xw.shape
    H = w_hh.shape[0]
    assert G4 == 4 * H
    n_blocks = pl.cdiv(T, steps_per_block)
    T_pad = n_blocks * steps_per_block
    if T_pad != T:
        xw = jnp.pad(xw, ((0, T_pad - T), (0, 0), (0, 0)))

    kernel = functools.partial(_encoder_kernel, n_steps=T,
                               steps_per_block=steps_per_block)
    cost = pl.CostEstimate(
        flops=2 * T * B * H * 4 * H,
        transcendentals=5 * T * B * H,
        bytes_accessed=xw.size * 4 + w_hh.size * 2 + 2 * B * H * 4)

    return pl.pallas_call(
        kernel,
        out_shape=(jax.ShapeDtypeStruct((B, H), jnp.float32),
                   jax.ShapeDtypeStruct((B, H), jnp.float32)),
        grid_spec=pltpu.PrefetchScalarGridSpec(
            num_scalar_prefetch=0,
            grid=(n_blocks,),
            in_specs=[
                pl.BlockSpec((steps_per_block, B, G4), lambda g: (g, 0, 0)),  # xw stream
                pl.BlockSpec((H, G4), lambda g: (0, 0)),                      # W_hh resident
            ],
            out_specs=(pl.BlockSpec((B, H), lambda g: (0, 0)),
                       pl.BlockSpec((B, H), lambda g: (0, 0))),
        ),
        compiler_params=pltpu.CompilerParams(
            dimension_semantics=("arbitrary",),
            vmem_limit_bytes=vmem_limit_bytes),
        cost_estimate=cost,
    )(xw, w_hh)


# ----------------------------- fused decoder kernel -----------------------------

def _decoder_kernel(use_tf_ref,            # SMEM [n_pad+1] int32 (scalar prefetch)
                    tfxw_ref,              # [U, B, 4H] f32  teacher-forced x@W_ih stream
                    h0_ref, c0_ref,        # [B, H]     f32  encoder final state
                    eproj_ref,             # [V, 4H]    bf16 dec_embed @ W_ih (greedy path)
                    whh_ref,               # [H, 4H]    bf16
                    b_ref,                 # [1, 4H]    f32
                    wout_ref,              # [H, V]     bf16
                    bout_ref,              # [1, V]     f32
                    logits_ref,            # out [U, B, V] f32
                    xw_scr, h_scr, c_scr,  # VMEM scratch (persist across grid)
                    *, n_steps, steps_per_block):
    g = pl.program_id(0)
    B, H = c_scr.shape
    V = wout_ref.shape[1]

    @pl.when(g == 0)
    def _init():
        h_scr[...] = h0_ref[...].astype(jnp.bfloat16)
        c_scr[...] = c0_ref[...]

    ragged = (n_steps % steps_per_block) != 0
    for u in range(steps_per_block):
        def step(u=u):
            s = g * steps_per_block + u

            # Teacher forcing (and step 0): use the streamed tgt input projection.
            @pl.when(use_tf_ref[s] != 0)
            def _teacher():
                xw_scr[...] = tfxw_ref[u]

            # One MXU matmul on the recurrence critical path (x@W_ih was hoisted).
            gates = (jnp.dot(h_scr[...], whh_ref[...],
                             preferred_element_type=jnp.float32)
                     + xw_scr[...] + b_ref[...])               # [B, 4H] f32
            i = jax.nn.sigmoid(gates[:, 0 * H:1 * H])
            f = jax.nn.sigmoid(gates[:, 1 * H:2 * H])
            gg = jnp.tanh(gates[:, 2 * H:3 * H])
            o = jax.nn.sigmoid(gates[:, 3 * H:4 * H])
            c_new = f * c_scr[...] + i * gg
            h_new = o * jnp.tanh(c_new)
            h_bf = h_new.astype(jnp.bfloat16)                  # cast once, reuse twice
            c_scr[...] = c_new
            h_scr[...] = h_bf

            # fc_out projection (W_out resident in VMEM for all steps).
            # TODO(synk): for production-size vocab, tile W_out over a vocab grid axis and
            # keep running (max, argmax) scratch instead of one resident [H, V] block.
            logits = (jnp.dot(h_bf, wout_ref[...],
                              preferred_element_type=jnp.float32)
                      + bout_ref[...])                         # [B, V] f32
            logits_ref[u] = logits

            # Greedy next input only when the NEXT step exists and is not teacher-forced:
            # embed(argmax(logits)) @ W_ih fused into one one-hot matmul vs embed_proj.
            @pl.when(jnp.logical_and(s + 1 < n_steps, use_tf_ref[s + 1] == 0))
            def _greedy():
                iota_v = lax.broadcasted_iota(jnp.int32, (B, V), 1)
                m = jnp.max(logits, axis=1, keepdims=True)
                cand = jnp.where(logits == m, iota_v, V)
                top1 = jnp.min(cand, axis=1, keepdims=True)    # first-occurrence argmax
                onehot = (iota_v == top1).astype(jnp.bfloat16)
                # TODO(synk): for very large vocab, replace with a DMA row gather
                # (dec_embed in pl.ANY + make_async_copy) instead of one-hot @ table.
                xw_scr[...] = jnp.dot(onehot, eproj_ref[...],
                                      preferred_element_type=jnp.float32)

        if ragged:
            pl.when(g * steps_per_block + u < n_steps)(step)
        else:
            step()


def decoder_forward(use_tf, tf_xw, h0, c0, embed_proj_bf, w_hh, b, w_out, b_out,
                    *, steps_per_block=4, vmem_limit_bytes=32 * 1024 * 1024):
    """Whole decode loop in one kernel. Returns logits [n_steps, B, V] f32."""
    n_steps, B, G4 = tf_xw.shape
    H = h0.shape[1]
    V = w_out.shape[1]
    n_blocks = pl.cdiv(n_steps, steps_per_block)
    n_pad = n_blocks * steps_per_block
    if n_pad != n_steps:
        tf_xw = jnp.pad(tf_xw, ((0, n_pad - n_steps), (0, 0), (0, 0)))
    use_tf_p = jnp.zeros((n_pad + 1,), jnp.int32).at[:n_steps].set(use_tf)

    kernel = functools.partial(_decoder_kernel, n_steps=n_steps,
                               steps_per_block=steps_per_block)
    cost = pl.CostEstimate(
        flops=n_steps * (2 * B * H * 4 * H + 2 * B * H * V + 2 * B * V * 4 * H),
        transcendentals=5 * n_steps * B * H,
        bytes_accessed=(tf_xw.size * 4 + w_hh.size * 2 + w_out.size * 2
                        + embed_proj_bf.size * 2 + n_pad * B * V * 4))

    # TODO(synk): on v7x add a leading "parallel" batch-block grid axis (one h/c/xw scratch
    # per block) to use both TensorCores once B >= 32.
    logits = pl.pallas_call(
        kernel,
        out_shape=jax.ShapeDtypeStruct((n_pad, B, V), jnp.float32),
        grid_spec=pltpu.PrefetchScalarGridSpec(
            num_scalar_prefetch=1,                                        # use_tf -> SMEM
            grid=(n_blocks,),
            in_specs=[
                pl.BlockSpec((steps_per_block, B, G4), lambda g, tf: (g, 0, 0)),  # tf_xw
                pl.BlockSpec((B, H), lambda g, tf: (0, 0)),                       # h0
                pl.BlockSpec((B, H), lambda g, tf: (0, 0)),                       # c0
                pl.BlockSpec((V, G4), lambda g, tf: (0, 0)),                      # embed_proj
                pl.BlockSpec((H, G4), lambda g, tf: (0, 0)),                      # W_hh
                pl.BlockSpec((1, G4), lambda g, tf: (0, 0)),                      # b
                pl.BlockSpec((H, V), lambda g, tf: (0, 0)),                       # W_out
                pl.BlockSpec((1, V), lambda g, tf: (0, 0)),                       # b_out
            ],
            out_specs=pl.BlockSpec((steps_per_block, B, V), lambda g, tf: (g, 0, 0)),
            scratch_shapes=[
                pltpu.VMEM((B, G4), jnp.float32),    # current input projection x@W_ih
                pltpu.VMEM((B, H), jnp.bfloat16),    # h (bf16: reused by W_hh and W_out)
                pltpu.VMEM((B, H), jnp.float32),     # c
            ],
        ),
        compiler_params=pltpu.CompilerParams(
            dimension_semantics=("arbitrary",),
            vmem_limit_bytes=vmem_limit_bytes),
        cost_estimate=cost,
    )(use_tf_p, tf_xw, h0, c0, embed_proj_bf, w_hh, b, w_out, b_out)
    return logits[:n_steps]


# ----------------------------- Seq2Seq forward (jit-able) -----------------------------

@jax.jit
def seq2seq_forward(params, src, tgt, tf_key, teacher_forcing_ratio=0.5):
    """Mirrors Seq2Seq.forward.

    src: [B, src_len] int32, tgt: [B, tgt_len] int32.
    Returns outputs: [B, tgt_len, tgt_vocab] f32 (row t=0 stays zero, as in PyTorch).
    """
    B, tgt_len = tgt.shape
    V = params["dec_w_out"].shape[1]
    H = params["enc_w_hh"].shape[0]

    # Pad batch so the MXU sees >=16 LHS rows and bf16 vregs are fully sublane-packed.
    B_pad = max(16, ((B + 15) // 16) * 16)
    if B_pad != B:
        src = jnp.pad(src, ((0, B_pad - B), (0, 0)))
        tgt = jnp.pad(tgt, ((0, B_pad - B), (0, 0)))

    # ---------------- encoder ----------------
    # Input projection hoisted out of the recurrence: one large MXU matmul here.
    x_emb = params["enc_embed"][src]                           # [B, T_src, E] bf16
    T_src = x_emb.shape[1]
    xw = (jnp.dot(x_emb.reshape(B_pad * T_src, -1), params["enc_w_ih"],
                  preferred_element_type=jnp.float32)
          + params["enc_b"])                                   # [B*T, 4H] f32
    xw = xw.reshape(B_pad, T_src, 4 * H).transpose(1, 0, 2)    # [T, B, 4H]
    hidden, cell = encoder_forward(xw, params["enc_w_hh"])

    # ---------------- decoder ----------------
    n_steps = tgt_len - 1
    # One coin per PyTorch loop iteration t=1..tgt_len-1 (torch.rand(1).item() < ratio);
    # the coin drawn at iteration t selects the input of iteration t+1.
    coins = jax.random.uniform(tf_key, (tgt_len,)) < teacher_forcing_ratio
    use_tf = jnp.concatenate(
        [jnp.ones((1,), jnp.int32), coins[1:tgt_len - 1].astype(jnp.int32)])  # [n_steps]

    # Fused decoder embedding + input projection table: one big matmul.
    embed_proj = jnp.dot(params["dec_embed"], params["dec_w_ih"],
                         preferred_element_type=jnp.float32)   # [V, 4H] f32
    # Teacher-forced input projections for steps 0..n_steps-1 (inputs tgt[:, 0..T-2]).
    tf_xw = embed_proj[tgt[:, :n_steps]].transpose(1, 0, 2)    # [n_steps, B, 4H] f32

    logits = decoder_forward(
        use_tf, tf_xw, hidden, cell,
        embed_proj.astype(jnp.bfloat16),
        params["dec_w_hh"], params["dec_b"],
        params["dec_w_out"], params["dec_b_out"])              # [n_steps, B_pad, V] f32

    logits = logits[:, :B]                                     # drop batch padding
    outputs = jnp.concatenate(
        [jnp.zeros((1, B, V), jnp.float32), logits], axis=0)   # t=0 row stays zero
    return jnp.transpose(outputs, (1, 0, 2))                   # [B, tgt_len, V]


# ----------------------------- param init -----------------------------

def init_params(key, src_vocab, tgt_vocab, emb_dim, hid_dim):
    ks = jax.random.split(key, 10)
    s = 0.1

    def w(k, shape):     # bf16 weights / embeddings (f32 accumulation everywhere)
        return (s * jax.random.normal(k, shape, jnp.float32)).astype(jnp.bfloat16)

    def bias(k, shape):  # biases stay f32
        return s * jax.random.normal(k, shape, jnp.float32)

    return {
        "enc_embed": w(ks[0], (src_vocab, emb_dim)),
        "enc_w_ih":  w(ks[1], (emb_dim, 4 * hid_dim)),
        "enc_w_hh":  w(ks[2], (hid_dim, 4 * hid_dim)),
        "enc_b":     bias(ks[3], (1, 4 * hid_dim)),
        "dec_embed": w(ks[4], (tgt_vocab, emb_dim)),
        "dec_w_ih":  w(ks[5], (emb_dim, 4 * hid_dim)),
        "dec_w_hh":  w(ks[6], (hid_dim, 4 * hid_dim)),
        "dec_b":     bias(ks[7], (1, 4 * hid_dim)),
        "dec_w_out": w(ks[8], (hid_dim, tgt_vocab)),
        "dec_b_out": bias(ks[9], (1, tgt_vocab)),
    }


# ----------------------------- main -----------------------------

if __name__ == "__main__":
    # Small, deterministic, lane-aligned example shapes (B >= 16, dims multiples of 128,
    # sequence lengths multiples of the 4-step grid block).
    BATCH = 16
    SRC_LEN = 12
    TGT_LEN = 9
    SRC_VOCAB = 64
    TGT_VOCAB = 256        # multiple of 128 -> lane-dense logits
    EMB_DIM = 128
    HID_DIM = 128

    root = jax.random.PRNGKey(0)
    k_params, k_src, k_tgt, k_tf = jax.random.split(root, 4)

    params = init_params(k_params, SRC_VOCAB, TGT_VOCAB, EMB_DIM, HID_DIM)
    src = jax.random.randint(k_src, (BATCH, SRC_LEN), 0, SRC_VOCAB, dtype=jnp.int32)
    tgt = jax.random.randint(k_tgt, (BATCH, TGT_LEN), 0, TGT_VOCAB, dtype=jnp.int32)

    outputs = seq2seq_forward(params, src, tgt, k_tf, 0.5)
    outputs = jax.block_until_ready(outputs)

    assert outputs.shape == (BATCH, TGT_LEN, TGT_VOCAB), outputs.shape
    assert bool(jnp.all(outputs[:, 0] == 0.0))          # t=0 row stays zero, as in PyTorch
    assert bool(jnp.all(jnp.isfinite(outputs)))
    print("KERNEL_OK")
</pallas_src>

<mosaic_0001>
module attributes {stable_mosaic.version = 11 : i64} {
  func.func @_encoder_kernel(%arg0: i32, %arg1: memref<4x16x512xf32, #tpu.memory_space<vmem>>, %arg2: memref<128x512xbf16, #tpu.memory_space<vmem>>, %arg3: memref<16x128xf32, #tpu.memory_space<vmem>>, %arg4: memref<16x128xf32, #tpu.memory_space<vmem>>) attributes {dimension_semantics = [#tpu.dimension_semantics<arbitrary>], iteration_bounds = array<i64: 3>, scalar_prefetch = 0 : i64, scratch_operands = 0 : i64, tpu.core_type = #tpu.core_type<tc>, window_params = [{transform_indices = @transform_0, window_bounds = array<i64: 4, 16, 512>}, {pipeline_mode = #tpu.pipeline_mode<synchronous>, transform_indices = @transform_1, window_bounds = array<i64: 128, 512>}, {pipeline_mode = #tpu.pipeline_mode<synchronous>, transform_indices = @transform_2, window_bounds = array<i64: 16, 128>}, {pipeline_mode = #tpu.pipeline_mode<synchronous>, transform_indices = @transform_3, window_bounds = array<i64: 16, 128>}]} {
    %c0_i32 = arith.constant 0 : i32
    %0 = arith.cmpi eq, %arg0, %c0_i32 : i32
    %1 = arith.extui %0 : i1 to i32
    %c0_i32_0 = arith.constant 0 : i32
    %2 = arith.cmpi ne, %1, %c0_i32_0 : i32
    scf.if %2 {
      %cst_64 = arith.constant 0.000000e+00 : f32
      %143 = vector.broadcast %cst_64 : f32 to vector<16x128xf32>
      %c0_65 = arith.constant 0 : index
      %c0_66 = arith.constant 0 : index
      %144 = vector.load %arg3[%c0_65, %c0_66] : memref<16x128xf32, #tpu.memory_space<vmem>>, vector<16x128xf32>
      tpu.vector_store %arg3[%c0_65, %c0_66], %143 {strides = array<i32>} : memref<16x128xf32, #tpu.memory_space<vmem>>, vector<16x128xf32>,
      %cst_67 = arith.constant 0.000000e+00 : f32
      %145 = vector.broadcast %cst_67 : f32 to vector<16x128xf32>
      %c0_68 = arith.constant 0 : index
      %c0_69 = arith.constant 0 : index
      %146 = vector.load %arg4[%c0_68, %c0_69] : memref<16x128xf32, #tpu.memory_space<vmem>>, vector<16x128xf32>
      tpu.vector_store %arg4[%c0_68, %c0_69], %145 {strides = array<i32>} : memref<16x128xf32, #tpu.memory_space<vmem>>, vector<16x128xf32>,
    } else {
    }
    %c0 = arith.constant 0 : index
    %c0_1 = arith.constant 0 : index
    %3 = vector.load %arg3[%c0, %c0_1] : memref<16x128xf32, #tpu.memory_space<vmem>>, vector<16x128xf32>
    %c0_2 = arith.constant 0 : index
    %c0_3 = arith.constant 0 : index
    %4 = vector.load %arg4[%c0_2, %c0_3] : memref<16x128xf32, #tpu.memory_space<vmem>>, vector<16x128xf32>
    %5 = arith.truncf %3 : vector<16x128xf32> to vector<16x128xbf16>
    %c0_4 = arith.constant 0 : index
    %c0_5 = arith.constant 0 : index
    %6 = vector.load %arg2[%c0_4, %c0_5] : memref<128x512xbf16, #tpu.memory_space<vmem>>, vector<128x512xbf16>
    %cst = arith.constant dense<0.000000e+00> : vector<16x512xf32>
    %7 = tpu.matmul %5, %6, %cst {dimension_numbers = #tpu.dot_dimension_numbers<[1], [0], [0], [1], [0, 0, 1, 1], [], []>} : vector<16x128xbf16>, vector<128x512xbf16>, vector<16x512xf32> -> vector<16x512xf32>
    %c0_6 = arith.constant 0 : index
    %c0_7 = arith.constant 0 : index
    %c0_8 = arith.constant 0 : index
    %8 = vector.load %arg1[%c0_6, %c0_7, %c0_8] : memref<4x16x512xf32, #tpu.memory_space<vmem>>, vector<1x16x512xf32>
    %9 = vector.shape_cast %8 : vector<1x16x512xf32> to vector<16x512xf32>
    %10 = arith.addf %7, %9 : vector<16x512xf32>
    %11 = vector.extract_strided_slice %10 {offsets = [0, 0], sizes = [16, 128], strides = [1, 1]} : vector<16x512xf32> to vector<16x128xf32>
    %12 = arith.negf %11 : vector<16x128xf32>
    %13 = math.exp %12 : vector<16x128xf32>
    %cst_9 = arith.constant 1.000000e+00 : f32
    %14 = vector.broadcast %cst_9 : f32 to vector<16x128xf32>
    %15 = arith.addf %14, %13 : vector<16x128xf32>
    %16 = arith.divf %14, %15 : vector<16x128xf32>
    %17 = vector.extract_strided_slice %10 {offsets = [0, 128], sizes = [16, 128], strides = [1, 1]} : vector<16x512xf32> to vector<16x128xf32>
    %18 = arith.negf %17 : vector<16x128xf32>
    %19 = math.exp %18 : vector<16x128xf32>
    %cst_10 = arith.constant 1.000000e+00 : f32
    %20 = vector.broadcast %cst_10 : f32 to vector<16x128xf32>
    %21 = arith.addf %20, %19 : vector<16x128xf32>
    %22 = arith.divf %20, %21 : vector<16x128xf32>
    %23 = vector.extract_strided_slice %10 {offsets = [0, 256], sizes = [16, 128], strides = [1, 1]} : vector<16x512xf32> to vector<16x128xf32>
    %24 = math.tanh %23 : vector<16x128xf32>
    %25 = vector.extract_strided_slice %10 {offsets = [0, 384], sizes = [16, 128], strides = [1, 1]} : vector<16x512xf32> to vector<16x128xf32>
    %26 = arith.negf %25 : vector<16x128xf32>
    %27 = math.exp %26 : vector<16x128xf32>
    %cst_11 = arith.constant 1.000000e+00 : f32
    %28 = vector.broadcast %cst_11 : f32 to vector<16x128xf32>
    %29 = arith.addf %28, %27 : vector<16x128xf32>
    %30 = arith.divf %28, %29 : vector<16x128xf32>
    %31 = arith.mulf %22, %4 : vector<16x128xf32>
    %32 = arith.mulf %16, %24 : vector<16x128xf32>
    %33 = arith.addf %31, %32 : vector<16x128xf32>
    %c0_12 = arith.constant 0 : index
    %c0_13 = arith.constant 0 : index
    %34 = vector.load %arg4[%c0_12, %c0_13] : memref<16x128xf32, #tpu.memory_space<vmem>>, vector<16x128xf32>
    tpu.vector_store %arg4[%c0_12, %c0_13], %33 {strides = array<i32>} : memref<16x128xf32, #tpu.memory_space<vmem>>, vector<16x128xf32>,
    %35 = math.tanh %33 : vector<16x128xf32>
    %36 = arith.mulf %30, %35 : vector<16x128xf32>
    %c0_14 = arith.constant 0 : index
    %c0_15 = arith.constant 0 : index
    %37 = vector.load %arg3[%c0_14, %c0_15] : memref<16x128xf32, #tpu.memory_space<vmem>>, vector<16x128xf32>
    tpu.vector_store %arg3[%c0_14, %c0_15], %36 {strides = array<i32>} : memref<16x128xf32, #tpu.memory_space<vmem>>, vector<16x128xf32>,
    %c0_16 = arith.constant 0 : index
    %c0_17 = arith.constant 0 : index
    %38 = vector.load %arg3[%c0_16, %c0_17] : memref<16x128xf32, #tpu.memory_space<vmem>>, vector<16x128xf32>
    %c0_18 = arith.constant 0 : index
    %c0_19 = arith.constant 0 : index
    %39 = vector.load %arg4[%c0_18, %c0_19] : memref<16x128xf32, #tpu.memory_space<vmem>>, vector<16x128xf32>
    %40 = arith.truncf %38 : vector<16x128xf32> to vector<16x128xbf16>
    %c0_20 = arith.constant 0 : index
    %c0_21 = arith.constant 0 : index
    %41 = vector.load %arg2[%c0_20, %c0_21] : memref<128x512xbf16, #tpu.memory_space<vmem>>, vector<128x512xbf16>
    %cst_22 = arith.constant dense<0.000000e+00> : vector<16x512xf32>
    %42 = tpu.matmul %40, %41, %cst_22 {dimension_numbers = #tpu.dot_dimension_numbers<[1], [0], [0], [1], [0, 0, 1, 1], [], []>} : vector<16x128xbf16>, vector<128x512xbf16>, vector<16x512xf32> -> vector<16x512xf32>
    %c1 = arith.constant 1 : index
    %c0_23 = arith.constant 0 : index
    %c0_24 = arith.constant 0 : index
    %43 = vector.load %arg1[%c1, %c0_23, %c0_24] : memref<4x16x512xf32, #tpu.memory_space<vmem>>, vector<1x16x512xf32>
    %44 = vector.shape_cast %43 : vector<1x16x512xf32> to vector<16x512xf32>
    %45 = arith.addf %42, %44 : vector<16x512xf32>
    %46 = vector.extract_strided_slice %45 {offsets = [0, 0], sizes = [16, 128], strides = [1, 1]} : vector<16x512xf32> to vector<16x128xf32>
    %47 = arith.negf %46 : vector<16x128xf32>
    %48 = math.exp %47 : vector<16x128xf32>
    %cst_25 = arith.constant 1.000000e+00 : f32
    %49 = vector.broadcast %cst_25 : f32 to vector<16x128xf32>
    %50 = arith.addf %49, %48 : vector<16x128xf32>
    %51 = arith.divf %49, %50 : vector<16x128xf32>
    %52 = vector.extract_strided_slice %45 {offsets = [0, 128], sizes = [16, 128], strides = [1, 1]} : vector<16x512xf32> to vector<16x128xf32>
    %53 = arith.negf %52 : vector<16x128xf32>
    %54 = math.exp %53 : vector<16x128xf32>
    %cst_26 = arith.constant 1.000000e+00 : f32
    %55 = vector.broadcast %cst_26 : f32 to vector<16x128xf32>
    %56 = arith.addf %55, %54 : vector<16x128xf32>
    %57 = arith.divf %55, %56 : vector<16x128xf32>
    %58 = vector.extract_strided_slice %45 {offsets = [0, 256], sizes = [16, 128], strides = [1, 1]} : vector<16x512xf32> to vector<16x128xf32>
    %59 = math.tanh %58 : vector<16x128xf32>
    %60 = vector.extract_strided_slice %45 {offsets = [0, 384], sizes = [16, 128], strides = [1, 1]} : vector<16x512xf32> to vector<16x128xf32>
    %61 = arith.negf %60 : vector<16x128xf32>
    %62 = math.exp %61 : vector<16x128xf32>
    %cst_27 = arith.constant 1.000000e+00 : f32
    %63 = vector.broadcast %cst_27 : f32 to vector<16x128xf32>
    %64 = arith.addf %63, %62 : vector<16x128xf32>
    %65 = arith.divf %63, %64 : vector<16x128xf32>
    %66 = arith.mulf %57, %39 : vector<16x128xf32>
    %67 = arith.mulf %51, %59 : vector<16x128xf32>
    %68 = arith.addf %66, %67 : vector<16x128xf32>
    %c0_28 = arith.constant 0 : index
    %c0_29 = arith.constant 0 : index
    %69 = vector.load %arg4[%c0_28, %c0_29] : memref<16x128xf32, #tpu.memory_space<vmem>>, vector<16x128xf32>
    tpu.vector_store %arg4[%c0_28, %c0_29], %68 {strides = array<i32>} : memref<16x128xf32, #tpu.memory_space<vmem>>, vector<16x128xf32>,
    %70 = math.tanh %68 : vector<16x128xf32>
    %71 = arith.mulf %65, %70 : vector<16x128xf32>
    %c0_30 = arith.constant 0 : index
    %c0_31 = arith.constant 0 : index
    %72 = vector.load %arg3[%c0_30, %c0_31] : memref<16x128xf32, #tpu.memory_space<vmem>>, vector<16x128xf32>
    tpu.vector_store %arg3[%c0_30, %c0_31], %71 {strides = array<i32>} : memref<16x128xf32, #tpu.memory_space<vmem>>, vector<16x128xf32>,
    %c0_32 = arith.constant 0 : index
    %c0_33 = arith.constant 0 : index
    %73 = vector.load %arg3[%c0_32, %c0_33] : memref<16x128xf32, #tpu.memory_space<vmem>>, vector<16x128xf32>
    %c0_34 = arith.constant 0 : index
    %c0_35 = arith.constant 0 : index
    %74 = vector.load %arg4[%c0_34, %c0_35] : memref<16x128xf32, #tpu.memory_space<vmem>>, vector<16x128xf32>
    %75 = arith.truncf %73 : vector<16x128xf32> to vector<16x128xbf16>
    %c0_36 = arith.constant 0 : index
    %c0_37 = arith.constant 0 : index
    %76 = vector.load %arg2[%c0_36, %c0_37] : memref<128x512xbf16, #tpu.memory_space<vmem>>, vector<128x512xbf16>
    %cst_38 = arith.constant dense<0.000000e+00> : vector<16x512xf32>
    %77 = tpu.matmul %75, %76, %cst_38 {dimension_numbers = #tpu.dot_dimension_numbers<[1], [0], [0], [1], [0, 0, 1, 1], [], []>} : vector<16x128xbf16>, vector<128x512xbf16>, vector<16x512xf32> -> vector<16x512xf32>
    %c2 = arith.constant 2 : index
    %c0_39 = arith.constant 0 : index
    %c0_40 = arith.constant 0 : index
    %78 = vector.load %arg1[%c2, %c0_39, %c0_40] : memref<4x16x512xf32, #tpu.memory_space<vmem>>, vector<1x16x512xf32>
    %79 = vector.shape_cast %78 : vector<1x16x512xf32> to vector<16x512xf32>
    %80 = arith.addf %77, %79 : vector<16x512xf32>
    %81 = vector.extract_strided_slice %80 {offsets = [0, 0], sizes = [16, 128], strides = [1, 1]} : vector<16x512xf32> to vector<16x128xf32>
    %82 = arith.negf %81 : vector<16x128xf32>
    %83 = math.exp %82 : vector<16x128xf32>
    %cst_41 = arith.constant 1.000000e+00 : f32
    %84 = vector.broadcast %cst_41 : f32 to vector<16x128xf32>
    %85 = arith.addf %84, %83 : vector<16x128xf32>
    %86 = arith.divf %84, %85 : vector<16x128xf32>
    %87 = vector.extract_strided_slice %80 {offsets = [0, 128], sizes = [16, 128], strides = [1, 1]} : vector<16x512xf32> to vector<16x128xf32>
    %88 = arith.negf %87 : vector<16x128xf32>
    %89 = math.exp %88 : vector<16x128xf32>
    %cst_42 = arith.constant 1.000000e+00 : f32
    %90 = vector.broadcast %cst_42 : f32 to vector<16x128xf32>
    %91 = arith.addf %90, %89 : vector<16x128xf32>
    %92 = arith.divf %90, %91 : vector<16x128xf32>
    %93 = vector.extract_strided_slice %80 {offsets = [0, 256], sizes = [16, 128], strides = [1, 1]} : vector<16x512xf32> to vector<16x128xf32>
    %94 = math.tanh %93 : vector<16x128xf32>
    %95 = vector.extract_strided_slice %80 {offsets = [0, 384], sizes = [16, 128], strides = [1, 1]} : vector<16x512xf32> to vector<16x128xf32>
    %96 = arith.negf %95 : vector<16x128xf32>
    %97 = math.exp %96 : vector<16x128xf32>
    %cst_43 = arith.constant 1.000000e+00 : f32
    %98 = vector.broadcast %cst_43 : f32 to vector<16x128xf32>
    %99 = arith.addf %98, %97 : vector<16x128xf32>
    %100 = arith.divf %98, %99 : vector<16x128xf32>
    %101 = arith.mulf %92, %74 : vector<16x128xf32>
    %102 = arith.mulf %86, %94 : vector<16x128xf32>
    %103 = arith.addf %101, %102 : vector<16x128xf32>
    %c0_44 = arith.constant 0 : index
    %c0_45 = arith.constant 0 : index
    %104 = vector.load %arg4[%c0_44, %c0_45] : memref<16x128xf32, #tpu.memory_space<vmem>>, vector<16x128xf32>
    tpu.vector_store %arg4[%c0_44, %c0_45], %103 {strides = array<i32>} : memref<16x128xf32, #tpu.memory_space<vmem>>, vector<16x128xf32>,
    %105 = math.tanh %103 : vector<16x128xf32>
    %106 = arith.mulf %100, %105 : vector<16x128xf32>
    %c0_46 = arith.constant 0 : index
    %c0_47 = arith.constant 0 : index
    %107 = vector.load %arg3[%c0_46, %c0_47] : memref<16x128xf32, #tpu.memory_space<vmem>>, vector<16x128xf32>
    tpu.vector_store %arg3[%c0_46, %c0_47], %106 {strides = array<i32>} : memref<16x128xf32, #tpu.memory_space<vmem>>, vector<16x128xf32>,
    %c0_48 = arith.constant 0 : index
    %c0_49 = arith.constant 0 : index
    %108 = vector.load %arg3[%c0_48, %c0_49] : memref<16x128xf32, #tpu.memory_space<vmem>>, vector<16x128xf32>
    %c0_50 = arith.constant 0 : index
    %c0_51 = arith.constant 0 : index
    %109 = vector.load %arg4[%c0_50, %c0_51] : memref<16x128xf32, #tpu.memory_space<vmem>>, vector<16x128xf32>
    %110 = arith.truncf %108 : vector<16x128xf32> to vector<16x128xbf16>
    %c0_52 = arith.constant 0 : index
    %c0_53 = arith.constant 0 : index
    %111 = vector.load %arg2[%c0_52, %c0_53] : memref<128x512xbf16, #tpu.memory_space<vmem>>, vector<128x512xbf16>
    %cst_54 = arith.constant dense<0.000000e+00> : vector<16x512xf32>
    %112 = tpu.matmul %110, %111, %cst_54 {dimension_numbers = #tpu.dot_dimension_numbers<[1], [0], [0], [1], [0, 0, 1, 1], [], []>} : vector<16x128xbf16>, vector<128x512xbf16>, vector<16x512xf32> -> vector<16x512xf32>
    %c3 = arith.constant 3 : index
    %c0_55 = arith.constant 0 : index
    %c0_56 = arith.constant 0 : index
    %113 = vector.load %arg1[%c3, %c0_55, %c0_56] : memref<4x16x512xf32, #tpu.memory_space<vmem>>, vector<1x16x512xf32>
    %114 = vector.shape_cast %113 : vector<1x16x512xf32> to vector<16x512xf32>
    %115 = arith.addf %112, %114 : vector<16x512xf32>
    %116 = vector.extract_strided_slice %115 {offsets = [0, 0], sizes = [16, 128], strides = [1, 1]} : vector<16x512xf32> to vector<16x128xf32>
    %117 = arith.negf %116 : vector<16x128xf32>
    %118 = math.exp %117 : vector<16x128xf32>
    %cst_57 = arith.constant 1.000000e+00 : f32
    %119 = vector.broadcast %cst_57 : f32 to vector<16x128xf32>
    %120 = arith.addf %119, %118 : vector<16x128xf32>
    %121 = arith.divf %119, %120 : vector<16x128xf32>
    %122 = vector.extract_strided_slice %115 {offsets = [0, 128], sizes = [16, 128], strides = [1, 1]} : vector<16x512xf32> to vector<16x128xf32>
    %123 = arith.negf %122 : vector<16x128xf32>
    %124 = math.exp %123 : vector<16x128xf32>
    %cst_58 = arith.constant 1.000000e+00 : f32
    %125 = vector.broadcast %cst_58 : f32 to vector<16x128xf32>
    %126 = arith.addf %125, %124 : vector<16x128xf32>
    %127 = arith.divf %125, %126 : vector<16x128xf32>
    %128 = vector.extract_strided_slice %115 {offsets = [0, 256], sizes = [16, 128], strides = [1, 1]} : vector<16x512xf32> to vector<16x128xf32>
    %129 = math.tanh %128 : vector<16x128xf32>
    %130 = vector.extract_strided_slice %115 {offsets = [0, 384], sizes = [16, 128], strides = [1, 1]} : vector<16x512xf32> to vector<16x128xf32>
    %131 = arith.negf %130 : vector<16x128xf32>
    %132 = math.exp %131 : vector<16x128xf32>
    %cst_59 = arith.constant 1.000000e+00 : f32
    %133 = vector.broadcast %cst_59 : f32 to vector<16x128xf32>
    %134 = arith.addf %133, %132 : vector<16x128xf32>
    %135 = arith.divf %133, %134 : vector<16x128xf32>
    %136 = arith.mulf %127, %109 : vector<16x128xf32>
    %137 = arith.mulf %121, %129 : vector<16x128xf32>
    %138 = arith.addf %136, %137 : vector<16x128xf32>
    %c0_60 = arith.constant 0 : index
    %c0_61 = arith.constant 0 : index
    %139 = vector.load %arg4[%c0_60, %c0_61] : memref<16x128xf32, #tpu.memory_space<vmem>>, vector<16x128xf32>
    tpu.vector_store %arg4[%c0_60, %c0_61], %138 {strides = array<i32>} : memref<16x128xf32, #tpu.memory_space<vmem>>, vector<16x128xf32>,
    %140 = math.tanh %138 : vector<16x128xf32>
    %141 = arith.mulf %135, %140 : vector<16x128xf32>
    %c0_62 = arith.constant 0 : index
    %c0_63 = arith.constant 0 : index
    %142 = vector.load %arg3[%c0_62, %c0_63] : memref<16x128xf32, #tpu.memory_space<vmem>>, vector<16x128xf32>
    tpu.vector_store %arg3[%c0_62, %c0_63], %141 {strides = array<i32>} : memref<16x128xf32, #tpu.memory_space<vmem>>, vector<16x128xf32>,
    return
  }
  func.func @transform_0(%arg0: i32) -> (i32, i32, i32) {
    %c0_i32 = arith.constant 0 : i32
    %c0_i32_0 = arith.constant 0 : i32
    %c0_i32_1 = arith.constant 0 : i32
    return %arg0, %c0_i32, %c0_i32_0 : i32, i32, i32
  }
  func.func @transform_1(%arg0: i32) -> (i32, i32) {
    %c0_i32 = arith.constant 0 : i32
    %c0_i32_0 = arith.constant 0 : i32
    %c0_i32_1 = arith.constant 0 : i32
    return %c0_i32, %c0_i32_0 : i32, i32
  }
  func.func @transform_2(%arg0: i32) -> (i32, i32) {
    %c0_i32 = arith.constant 0 : i32
    %c0_i32_0 = arith.constant 0 : i32
    %c0_i32_1 = arith.constant 0 : i32
    return %c0_i32, %c0_i32_0 : i32, i32
  }
  func.func @transform_3(%arg0: i32) -> (i32, i32) {
    %c0_i32 = arith.constant 0 : i32
    %c0_i32_0 = arith.constant 0 : i32
    %c0_i32_1 = arith.constant 0 : i32
    return %c0_i32, %c0_i32_0 : i32, i32
  }
}

module attributes {stable_mosaic.version = 11 : i64} {
  func.func @_decoder_kernel(%arg0: i32, %arg1: memref<9xi32, #tpu.memory_space<smem>>, %arg2: memref<4x16x512xf32, #tpu.memory_space<vmem>>, %arg3: memref<16x128xf32, #tpu.memory_space<vmem>>, %arg4: memref<16x128xf32, #tpu.memory_space<vmem>>, %arg5: memref<256x512xbf16, #tpu.memory_space<vmem>>, %arg6: memref<128x512xbf16, #tpu.memory_space<vmem>>, %arg7: memref<1x512xf32, #tpu.memory_space<vmem>>, %arg8: memref<128x256xbf16, #tpu.memory_space<vmem>>, %arg9: memref<1x256xf32, #tpu.memory_space<vmem>>, %arg10: memref<4x16x256xf32, #tpu.memory_space<vmem>>, %arg11: memref<16x512xf32, #tpu.memory_space<vmem>>, %arg12: memref<16x128xbf16, #tpu.memory_space<vmem>>, %arg13: memref<16x128xf32, #tpu.memory_space<vmem>>) attributes {dimension_semantics = [#tpu.dimension_semantics<arbitrary>], iteration_bounds = array<i64: 2>, scalar_prefetch = 1 : i64, scratch_operands = 3 : i64, tpu.core_type = #tpu.core_type<tc>, window_params = [{transform_indices = @transform_0, window_bounds = array<i64: 4, 16, 512>}, {pipeline_mode = #tpu.pipeline_mode<synchronous>, transform_indices = @transform_1, window_bounds = array<i64: 16, 128>}, {pipeline_mode = #tpu.pipeline_mode<synchronous>, transform_indices = @transform_2, window_bounds = array<i64: 16, 128>}, {pipeline_mode = #tpu.pipeline_mode<synchronous>, transform_indices = @transform_3, window_bounds = array<i64: 256, 512>}, {pipeline_mode = #tpu.pipeline_mode<synchronous>, transform_indices = @transform_4, window_bounds = array<i64: 128, 512>}, {pipeline_mode = #tpu.pipeline_mode<synchronous>, transform_indices = @transform_5, window_bounds = array<i64: 1, 512>}, {pipeline_mode = #tpu.pipeline_mode<synchronous>, transform_indices = @transform_6, window_bounds = array<i64: 128, 256>}, {pipeline_mode = #tpu.pipeline_mode<synchronous>, transform_indices = @transform_7, window_bounds = array<i64: 1, 256>}, {transform_indices = @transform_8, window_bounds = array<i64: 4, 16, 256>}]} {
    %c0_i32 = arith.constant 0 : i32
    %0 = arith.cmpi eq, %arg0, %c0_i32 : i32
    %1 = arith.extui %0 : i1 to i32
    %c0_i32_0 = arith.constant 0 : i32
    %2 = arith.cmpi ne, %1, %c0_i32_0 : i32
    scf.if %2 {
      %c0_131 = arith.constant 0 : index
      %c0_132 = arith.constant 0 : index
      %247 = vector.load %arg3[%c0_131, %c0_132] : memref<16x128xf32, #tpu.memory_space<vmem>>, vector<16x128xf32>
      %248 = arith.truncf %247 : vector<16x128xf32> to vector<16x128xbf16>
      %c0_133 = arith.constant 0 : index
      %c0_134 = arith.constant 0 : index
      %249 = vector.load %arg12[%c0_133, %c0_134] : memref<16x128xbf16, #tpu.memory_space<vmem>>, vector<16x128xbf16>
      tpu.vector_store %arg12[%c0_133, %c0_134], %248 {strides = array<i32>} : memref<16x128xbf16, #tpu.memory_space<vmem>>, vector<16x128xbf16>,
      %c0_135 = arith.constant 0 : index
      %c0_136 = arith.constant 0 : index
      %250 = vector.load %arg4[%c0_135, %c0_136] : memref<16x128xf32, #tpu.memory_space<vmem>>, vector<16x128xf32>
      %c0_137 = arith.constant 0 : index
      %c0_138 = arith.constant 0 : index
      %251 = vector.load %arg13[%c0_137, %c0_138] : memref<16x128xf32, #tpu.memory_space<vmem>>, vector<16x128xf32>
      tpu.vector_store %arg13[%c0_137, %c0_138], %250 {strides = array<i32>} : memref<16x128xf32, #tpu.memory_space<vmem>>, vector<16x128xf32>,
    } else {
    }
    %c4_i32 = arith.constant 4 : i32
    %3 = arith.muli %arg0, %c4_i32 : i32
    %c0_i32_1 = arith.constant 0 : i32
    %4 = arith.addi %3, %c0_i32_1 : i32
    %5 = arith.index_cast %4 : i32 to index
    %6 = memref.load %arg1[%5] : memref<9xi32, #tpu.memory_space<smem>>
    %c0_i32_2 = arith.constant 0 : i32
    %7 = arith.cmpi ne, %6, %c0_i32_2 : i32
    %8 = arith.extui %7 : i1 to i32
    %c0_i32_3 = arith.constant 0 : i32
    %9 = arith.cmpi ne, %8, %c0_i32_3 : i32
    scf.if %9 {
      %c0_131 = arith.constant 0 : index
      %c0_132 = arith.constant 0 : index
      %c0_133 = arith.constant 0 : index
      %247 = vector.load %arg2[%c0_131, %c0_132, %c0_133] : memref<4x16x512xf32, #tpu.memory_space<vmem>>, vector<1x16x512xf32>
      %248 = vector.shape_cast %247 : vector<1x16x512xf32> to vector<16x512xf32>
      %c0_134 = arith.constant 0 : index
      %c0_135 = arith.constant 0 : index
      %249 = vector.load %arg11[%c0_134, %c0_135] : memref<16x512xf32, #tpu.memory_space<vmem>>, vector<16x512xf32>
      tpu.vector_store %arg11[%c0_134, %c0_135], %248 {strides = array<i32>} : memref<16x512xf32, #tpu.memory_space<vmem>>, vector<16x512xf32>,
    } else {
    }
    %c0 = arith.constant 0 : index
    %c0_4 = arith.constant 0 : index
    %10 = vector.load %arg12[%c0, %c0_4] : memref<16x128xbf16, #tpu.memory_space<vmem>>, vector<16x128xbf16>
    %c0_5 = arith.constant 0 : index
    %c0_6 = arith.constant 0 : index
    %11 = vector.load %arg6[%c0_5, %c0_6] : memref<128x512xbf16, #tpu.memory_space<vmem>>, vector<128x512xbf16>
    %cst = arith.constant dense<0.000000e+00> : vector<16x512xf32>
    %12 = tpu.matmul %10, %11, %cst {dimension_numbers = #tpu.dot_dimension_numbers<[1], [0], [0], [1], [0, 0, 1, 1], [], []>} : vector<16x128xbf16>, vector<128x512xbf16>, vector<16x512xf32> -> vector<16x512xf32>
    %c0_7 = arith.constant 0 : index
    %c0_8 = arith.constant 0 : index
    %13 = vector.load %arg11[%c0_7, %c0_8] : memref<16x512xf32, #tpu.memory_space<vmem>>, vector<16x512xf32>
    %14 = arith.addf %12, %13 : vector<16x512xf32>
    %c0_9 = arith.constant 0 : index
    %c0_10 = arith.constant 0 : index
    %15 = vector.load %arg7[%c0_9, %c0_10] : memref<1x512xf32, #tpu.memory_space<vmem>>, vector<1x512xf32>
    %16 = vector.broadcast %15 : vector<1x512xf32> to vector<16x512xf32>
    %17 = arith.addf %14, %16 : vector<16x512xf32>
    %18 = vector.extract_strided_slice %17 {offsets = [0, 0], sizes = [16, 128], strides = [1, 1]} : vector<16x512xf32> to vector<16x128xf32>
    %19 = arith.negf %18 : vector<16x128xf32>
    %20 = math.exp %19 : vector<16x128xf32>
    %cst_11 = arith.constant 1.000000e+00 : f32
    %21 = vector.broadcast %cst_11 : f32 to vector<16x128xf32>
    %22 = arith.addf %21, %20 : vector<16x128xf32>
    %23 = arith.divf %21, %22 : vector<16x128xf32>
    %24 = vector.extract_strided_slice %17 {offsets = [0, 128], sizes = [16, 128], strides = [1, 1]} : vector<16x512xf32> to vector<16x128xf32>
    %25 = arith.negf %24 : vector<16x128xf32>
    %26 = math.exp %25 : vector<16x128xf32>
    %cst_12 = arith.constant 1.000000e+00 : f32
    %27 = vector.broadcast %cst_12 : f32 to vector<16x128xf32>
    %28 = arith.addf %27, %26 : vector<16x128xf32>
    %29 = arith.divf %27, %28 : vector<16x128xf32>
    %30 = vector.extract_strided_slice %17 {offsets = [0, 256], sizes = [16, 128], strides = [1, 1]} : vector<16x512xf32> to vector<16x128xf32>
    %31 = math.tanh %30 : vector<16x128xf32>
    %32 = vector.extract_strided_slice %17 {offsets = [0, 384], sizes = [16, 128], strides = [1, 1]} : vector<16x512xf32> to vector<16x128xf32>
    %33 = arith.negf %32 : vector<16x128xf32>
    %34 = math.exp %33 : vector<16x128xf32>
    %cst_13 = arith.constant 1.000000e+00 : f32
    %35 = vector.broadcast %cst_13 : f32 to vector<16x128xf32>
    %36 = arith.addf %35, %34 : vector<16x128xf32>
    %37 = arith.divf %35, %36 : vector<16x128xf32>
    %c0_14 = arith.constant 0 : index
    %c0_15 = arith.constant 0 : index
    %38 = vector.load %arg13[%c0_14, %c0_15] : memref<16x128xf32, #tpu.memory_space<vmem>>, vector<16x128xf32>
    %39 = arith.mulf %29, %38 : vector<16x128xf32>
    %40 = arith.mulf %23, %31 : vector<16x128xf32>
    %41 = arith.addf %39, %40 : vector<16x128xf32>
    %42 = math.tanh %41 : vector<16x128xf32>
    %43 = arith.mulf %37, %42 : vector<16x128xf32>
    %44 = arith.truncf %43 : vector<16x128xf32> to vector<16x128xbf16>
    %c0_16 = arith.constant 0 : index
    %c0_17 = arith.constant 0 : index
    %45 = vector.load %arg13[%c0_16, %c0_17] : memref<16x128xf32, #tpu.memory_space<vmem>>, vector<16x128xf32>
    tpu.vector_store %arg13[%c0_16, %c0_17], %41 {strides = array<i32>} : memref<16x128xf32, #tpu.memory_space<vmem>>, vector<16x128xf32>,
    %c0_18 = arith.constant 0 : index
    %c0_19 = arith.constant 0 : index
    %46 = vector.load %arg12[%c0_18, %c0_19] : memref<16x128xbf16, #tpu.memory_space<vmem>>, vector<16x128xbf16>
    tpu.vector_store %arg12[%c0_18, %c0_19], %44 {strides = array<i32>} : memref<16x128xbf16, #tpu.memory_space<vmem>>, vector<16x128xbf16>,
    %c0_20 = arith.constant 0 : index
    %c0_21 = arith.constant 0 : index
    %47 = vector.load %arg8[%c0_20, %c0_21] : memref<128x256xbf16, #tpu.memory_space<vmem>>, vector<128x256xbf16>
    %cst_22 = arith.constant dense<0.000000e+00> : vector<16x256xf32>
    %48 = tpu.matmul %44, %47, %cst_22 {dimension_numbers = #tpu.dot_dimension_numbers<[1], [0], [0], [1], [0, 0, 1, 1], [], []>} : vector<16x128xbf16>, vector<128x256xbf16>, vector<16x256xf32> -> vector<16x256xf32>
    %c0_23 = arith.constant 0 : index
    %c0_24 = arith.constant 0 : index
    %49 = vector.load %arg9[%c0_23, %c0_24] : memref<1x256xf32, #tpu.memory_space<vmem>>, vector<1x256xf32>
    %50 = vector.broadcast %49 : vector<1x256xf32> to vector<16x256xf32>
    %51 = arith.addf %48, %50 : vector<16x256xf32>
    %c0_25 = arith.constant 0 : index
    %c0_26 = arith.constant 0 : index
    %c0_27 = arith.constant 0 : index
    %52 = vector.load %arg10[%c0_25, %c0_26, %c0_27] : memref<4x16x256xf32, #tpu.memory_space<vmem>>, vector<1x16x256xf32>
    %53 = vector.shape_cast %52 : vector<1x16x256xf32> to vector<16x256xf32>
    %54 = vector.shape_cast %51 : vector<16x256xf32> to vector<1x16x256xf32>
    tpu.vector_store %arg10[%c0_25, %c0_26, %c0_27], %54 {strides = array<i32>} : memref<4x16x256xf32, #tpu.memory_space<vmem>>, vector<1x16x256xf32>,
    %c1_i32 = arith.constant 1 : i32
    %55 = arith.addi %4, %c1_i32 : i32
    %c8_i32 = arith.constant 8 : i32
    %56 = arith.cmpi slt, %55, %c8_i32 : i32
    %c1_i32_28 = arith.constant 1 : i32
    %57 = arith.addi %4, %c1_i32_28 : i32
    %58 = arith.index_cast %57 : i32 to index
    %59 = memref.load %arg1[%58] : memref<9xi32, #tpu.memory_space<smem>>
    %c0_i32_29 = arith.constant 0 : i32
    %60 = arith.cmpi eq, %59, %c0_i32_29 : i32
    %61 = arith.andi %56, %60 : i1
    %62 = arith.extui %61 : i1 to i32
    %c0_i32_30 = arith.constant 0 : i32
    %63 = arith.cmpi ne, %62, %c0_i32_30 : i32
    scf.if %63 {
      %247 = tpu.iota {dimensions = array<i32: 1>} : vector<16x256xi32>
      %cst_131 = arith.constant dense<0xFF800000> : vector<16xf32>
      %248 = vector.multi_reduction <maximumf>, %51, %cst_131 [1] : vector<16x256xf32> to vector<16xf32>
      %249 = vector.shape_cast %248 : vector<16xf32> to vector<16x1xf32>
      %250 = vector.broadcast %249 : vector<16x1xf32> to vector<16x256xf32>
      %251 = arith.cmpf oeq, %51, %250 : vector<16x256xf32>
      %c256_i32 = arith.constant 256 : i32
      %252 = vector.broadcast %c256_i32 : i32 to vector<16x256xi32>
      %253 = arith.select %251, %247, %252 : vector<16x256xi1>, vector<16x256xi32>
      %cst_132 = arith.constant dense<2147483647> : vector<16xi32>
      %254 = vector.multi_reduction <minsi>, %253, %cst_132 [1] : vector<16x256xi32> to vector<16xi32>
      %255 = vector.shape_cast %254 : vector<16xi32> to vector<16x1xi32>
      %256 = vector.broadcast %255 : vector<16x1xi32> to vector<16x256xi32>
      %257 = arith.cmpi eq, %247, %256 : vector<16x256xi32>
      %258 = arith.extui %257 : vector<16x256xi1> to vector<16x256xi32>
      %259 = arith.sitofp %258 : vector<16x256xi32> to vector<16x256xf32>
      %260 = arith.truncf %259 : vector<16x256xf32> to vector<16x256xbf16>
      %c0_133 = arith.constant 0 : index
      %c0_134 = arith.constant 0 : index
      %261 = vector.load %arg5[%c0_133, %c0_134] : memref<256x512xbf16, #tpu.memory_space<vmem>>, vector<256x512xbf16>
      %cst_135 = arith.constant dense<0.000000e+00> : vector<16x512xf32>
      %262 = tpu.matmul %260, %261, %cst_135 {dimension_numbers = #tpu.dot_dimension_numbers<[1], [0], [0], [1], [0, 0, 1, 1], [], []>} : vector<16x256xbf16>, vector<256x512xbf16>, vector<16x512xf32> -> vector<16x512xf32>
      %c0_136 = arith.constant 0 : index
      %c0_137 = arith.constant 0 : index
      %263 = vector.load %arg11[%c0_136, %c0_137] : memref<16x512xf32, #tpu.memory_space<vmem>>, vector<16x512xf32>
      tpu.vector_store %arg11[%c0_136, %c0_137], %262 {strides = array<i32>} : memref<16x512xf32, #tpu.memory_space<vmem>>, vector<16x512xf32>,
    } else {
    }
    %c4_i32_31 = arith.constant 4 : i32
    %64 = arith.muli %arg0, %c4_i32_31 : i32
    %c1_i32_32 = arith.constant 1 : i32
    %65 = arith.addi %64, %c1_i32_32 : i32
    %66 = arith.index_cast %65 : i32 to index
    %67 = memref.load %arg1[%66] : memref<9xi32, #tpu.memory_space<smem>>
    %c0_i32_33 = arith.constant 0 : i32
    %68 = arith.cmpi ne, %67, %c0_i32_33 : i32
    %69 = arith.extui %68 : i1 to i32
    %c0_i32_34 = arith.constant 0 : i32
    %70 = arith.cmpi ne, %69, %c0_i32_34 : i32
    scf.if %70 {
      %c1_131 = arith.constant 1 : index
      %c0_132 = arith.constant 0 : index
      %c0_133 = arith.constant 0 : index
      %247 = vector.load %arg2[%c1_131, %c0_132, %c0_133] : memref<4x16x512xf32, #tpu.memory_space<vmem>>, vector<1x16x512xf32>
      %248 = vector.shape_cast %247 : vector<1x16x512xf32> to vector<16x512xf32>
      %c0_134 = arith.constant 0 : index
      %c0_135 = arith.constant 0 : index
      %249 = vector.load %arg11[%c0_134, %c0_135] : memref<16x512xf32, #tpu.memory_space<vmem>>, vector<16x512xf32>
      tpu.vector_store %arg11[%c0_134, %c0_135], %248 {strides = array<i32>} : memref<16x512xf32, #tpu.memory_space<vmem>>, vector<16x512xf32>,
    } else {
    }
    %c0_35 = arith.constant 0 : index
    %c0_36 = arith.constant 0 : index
    %71 = vector.load %arg12[%c0_35, %c0_36] : memref<16x128xbf16, #tpu.memory_space<vmem>>, vector<16x128xbf16>
    %c0_37 = arith.constant 0 : index
    %c0_38 = arith.constant 0 : index
    %72 = vector.load %arg6[%c0_37, %c0_38] : memref<128x512xbf16, #tpu.memory_space<vmem>>, vector<128x512xbf16>
    %cst_39 = arith.constant dense<0.000000e+00> : vector<16x512xf32>
    %73 = tpu.matmul %71, %72, %cst_39 {dimension_numbers = #tpu.dot_dimension_numbers<[1], [0], [0], [1], [0, 0, 1, 1], [], []>} : vector<16x128xbf16>, vector<128x512xbf16>, vector<16x512xf32> -> vector<16x512xf32>
    %c0_40 = arith.constant 0 : index
    %c0_41 = arith.constant 0 : index
    %74 = vector.load %arg11[%c0_40, %c0_41] : memref<16x512xf32, #tpu.memory_space<vmem>>, vector<16x512xf32>
    %75 = arith.addf %73, %74 : vector<16x512xf32>
    %c0_42 = arith.constant 0 : index
    %c0_43 = arith.constant 0 : index
    %76 = vector.load %arg7[%c0_42, %c0_43] : memref<1x512xf32, #tpu.memory_space<vmem>>, vector<1x512xf32>
    %77 = vector.broadcast %76 : vector<1x512xf32> to vector<16x512xf32>
    %78 = arith.addf %75, %77 : vector<16x512xf32>
    %79 = vector.extract_strided_slice %78 {offsets = [0, 0], sizes = [16, 128], strides = [1, 1]} : vector<16x512xf32> to vector<16x128xf32>
    %80 = arith.negf %79 : vector<16x128xf32>
    %81 = math.exp %80 : vector<16x128xf32>
    %cst_44 = arith.constant 1.000000e+00 : f32
    %82 = vector.broadcast %cst_44 : f32 to vector<16x128xf32>
    %83 = arith.addf %82, %81 : vector<16x128xf32>
    %84 = arith.divf %82, %83 : vector<16x128xf32>
    %85 = vector.extract_strided_slice %78 {offsets = [0, 128], sizes = [16, 128], strides = [1, 1]} : vector<16x512xf32> to vector<16x128xf32>
    %86 = arith.negf %85 : vector<16x128xf32>
    %87 = math.exp %86 : vector<16x128xf32>
    %cst_45 = arith.constant 1.000000e+00 : f32
    %88 = vector.broadcast %cst_45 : f32 to vector<16x128xf32>
    %89 = arith.addf %88, %87 : vector<16x128xf32>
    %90 = arith.divf %88, %89 : vector<16x128xf32>
    %91 = vector.extract_strided_slice %78 {offsets = [0, 256], sizes = [16, 128], strides = [1, 1]} : vector<16x512xf32> to vector<16x128xf32>
    %92 = math.tanh %91 : vector<16x128xf32>
    %93 = vector.extract_strided_slice %78 {offsets = [0, 384], sizes = [16, 128], strides = [1, 1]} : vector<16x512xf32> to vector<16x128xf32>
    %94 = arith.negf %93 : vector<16x128xf32>
    %95 = math.exp %94 : vector<16x128xf32>
    %cst_46 = arith.constant 1.000000e+00 : f32
    %96 = vector.broadcast %cst_46 : f32 to vector<16x128xf32>
    %97 = arith.addf %96, %95 : vector<16x128xf32>
    %98 = arith.divf %96, %97 : vector<16x128xf32>
    %c0_47 = arith.constant 0 : index
    %c0_48 = arith.constant 0 : index
    %99 = vector.load %arg13[%c0_47, %c0_48] : memref<16x128xf32, #tpu.memory_space<vmem>>, vector<16x128xf32>
    %100 = arith.mulf %90, %99 : vector<16x128xf32>
    %101 = arith.mulf %84, %92 : vector<16x128xf32>
    %102 = arith.addf %100, %101 : vector<16x128xf32>
    %103 = math.tanh %102 : vector<16x128xf32>
    %104 = arith.mulf %98, %103 : vector<16x128xf32>
    %105 = arith.truncf %104 : vector<16x128xf32> to vector<16x128xbf16>
    %c0_49 = arith.constant 0 : index
    %c0_50 = arith.constant 0 : index
    %106 = vector.load %arg13[%c0_49, %c0_50] : memref<16x128xf32, #tpu.memory_space<vmem>>, vector<16x128xf32>
    tpu.vector_store %arg13[%c0_49, %c0_50], %102 {strides = array<i32>} : memref<16x128xf32, #tpu.memory_space<vmem>>, vector<16x128xf32>,
    %c0_51 = arith.constant 0 : index
    %c0_52 = arith.constant 0 : index
    %107 = vector.load %arg12[%c0_51, %c0_52] : memref<16x128xbf16, #tpu.memory_space<vmem>>, vector<16x128xbf16>
    tpu.vector_store %arg12[%c0_51, %c0_52], %105 {strides = array<i32>} : memref<16x128xbf16, #tpu.memory_space<vmem>>, vector<16x128xbf16>,
    %c0_53 = arith.constant 0 : index
    %c0_54 = arith.constant 0 : index
    %108 = vector.load %arg8[%c0_53, %c0_54] : memref<128x256xbf16, #tpu.memory_space<vmem>>, vector<128x256xbf16>
    %cst_55 = arith.constant dense<0.000000e+00> : vector<16x256xf32>
    %109 = tpu.matmul %105, %108, %cst_55 {dimension_numbers = #tpu.dot_dimension_numbers<[1], [0], [0], [1], [0, 0, 1, 1], [], []>} : vector<16x128xbf16>, vector<128x256xbf16>, vector<16x256xf32> -> vector<16x256xf32>
    %c0_56 = arith.constant 0 : index
    %c0_57 = arith.constant 0 : index
    %110 = vector.load %arg9[%c0_56, %c0_57] : memref<1x256xf32, #tpu.memory_space<vmem>>, vector<1x256xf32>
    %111 = vector.broadcast %110 : vector<1x256xf32> to vector<16x256xf32>
    %112 = arith.addf %109, %111 : vector<16x256xf32>
    %c1 = arith.constant 1 : index
    %c0_58 = arith.constant 0 : index
    %c0_59 = arith.constant 0 : index
    %113 = vector.load %arg10[%c1, %c0_58, %c0_59] : memref<4x16x256xf32, #tpu.memory_space<vmem>>, vector<1x16x256xf32>
    %114 = vector.shape_cast %113 : vector<1x16x256xf32> to vector<16x256xf32>
    %115 = vector.shape_cast %112 : vector<16x256xf32> to vector<1x16x256xf32>
    tpu.vector_store %arg10[%c1, %c0_58, %c0_59], %115 {strides = array<i32>} : memref<4x16x256xf32, #tpu.memory_space<vmem>>, vector<1x16x256xf32>,
    %c1_i32_60 = arith.constant 1 : i32
    %116 = arith.addi %65, %c1_i32_60 : i32
    %c8_i32_61 = arith.constant 8 : i32
    %117 = arith.cmpi slt, %116, %c8_i32_61 : i32
    %c1_i32_62 = arith.constant 1 : i32
    %118 = arith.addi %65, %c1_i32_62 : i32
    %119 = arith.index_cast %118 : i32 to index
    %120 = memref.load %arg1[%119] : memref<9xi32, #tpu.memory_space<smem>>
    %c0_i32_63 = arith.constant 0 : i32
    %121 = arith.cmpi eq, %120, %c0_i32_63 : i32
    %122 = arith.andi %117, %121 : i1
    %123 = arith.extui %122 : i1 to i32
    %c0_i32_64 = arith.constant 0 : i32
    %124 = arith.cmpi ne, %123, %c0_i32_64 : i32
    scf.if %124 {
      %247 = tpu.iota {dimensions = array<i32: 1>} : vector<16x256xi32>
      %cst_131 = arith.constant dense<0xFF800000> : vector<16xf32>
      %248 = vector.multi_reduction <maximumf>, %112, %cst_131 [1] : vector<16x256xf32> to vector<16xf32>
      %249 = vector.shape_cast %248 : vector<16xf32> to vector<16x1xf32>
      %250 = vector.broadcast %249 : vector<16x1xf32> to vector<16x256xf32>
      %251 = arith.cmpf oeq, %112, %250 : vector<16x256xf32>
      %c256_i32 = arith.constant 256 : i32
      %252 = vector.broadcast %c256_i32 : i32 to vector<16x256xi32>
      %253 = arith.select %251, %247, %252 : vector<16x256xi1>, vector<16x256xi32>
      %cst_132 = arith.constant dense<2147483647> : vector<16xi32>
      %254 = vector.multi_reduction <minsi>, %253, %cst_132 [1] : vector<16x256xi32> to vector<16xi32>
      %255 = vector.shape_cast %254 : vector<16xi32> to vector<16x1xi32>
      %256 = vector.broadcast %255 : vector<16x1xi32> to vector<16x256xi32>
      %257 = arith.cmpi eq, %247, %256 : vector<16x256xi32>
      %258 = arith.extui %257 : vector<16x256xi1> to vector<16x256xi32>
      %259 = arith.sitofp %258 : vector<16x256xi32> to vector<16x256xf32>
      %260 = arith.truncf %259 : vector<16x256xf32> to vector<16x256xbf16>
      %c0_133 = arith.constant 0 : index
      %c0_134 = arith.constant 0 : index
      %261 = vector.load %arg5[%c0_133, %c0_134] : memref<256x512xbf16, #tpu.memory_space<vmem>>, vector<256x512xbf16>
      %cst_135 = arith.constant dense<0.000000e+00> : vector<16x512xf32>
      %262 = tpu.matmul %260, %261, %cst_135 {dimension_numbers = #tpu.dot_dimension_numbers<[1], [0], [0], [1], [0, 0, 1, 1], [], []>} : vector<16x256xbf16>, vector<256x512xbf16>, vector<16x512xf32> -> vector<16x512xf32>
      %c0_136 = arith.constant 0 : index
      %c0_137 = arith.constant 0 : index
      %263 = vector.load %arg11[%c0_136, %c0_137] : memref<16x512xf32, #tpu.memory_space<vmem>>, vector<16x512xf32>
      tpu.vector_store %arg11[%c0_136, %c0_137], %262 {strides = array<i32>} : memref<16x512xf32, #tpu.memory_space<vmem>>, vector<16x512xf32>,
    } else {
    }
    %c4_i32_65 = arith.constant 4 : i32
    %125 = arith.muli %arg0, %c4_i32_65 : i32
    %c2_i32 = arith.constant 2 : i32
    %126 = arith.addi %125, %c2_i32 : i32
    %127 = arith.index_cast %126 : i32 to index
    %128 = memref.load %arg1[%127] : memref<9xi32, #tpu.memory_space<smem>>
    %c0_i32_66 = arith.constant 0 : i32
    %129 = arith.cmpi ne, %128, %c0_i32_66 : i32
    %130 = arith.extui %129 : i1 to i32
    %c0_i32_67 = arith.constant 0 : i32
    %131 = arith.cmpi ne, %130, %c0_i32_67 : i32
    scf.if %131 {
      %c2_131 = arith.constant 2 : index
      %c0_132 = arith.constant 0 : index
      %c0_133 = arith.constant 0 : index
      %247 = vector.load %arg2[%c2_131, %c0_132, %c0_133] : memref<4x16x512xf32, #tpu.memory_space<vmem>>, vector<1x16x512xf32>
      %248 = vector.shape_cast %247 : vector<1x16x512xf32> to vector<16x512xf32>
      %c0_134 = arith.constant 0 : index
      %c0_135 = arith.constant 0 : index
      %249 = vector.load %arg11[%c0_134, %c0_135] : memref<16x512xf32, #tpu.memory_space<vmem>>, vector<16x512xf32>
      tpu.vector_store %arg11[%c0_134, %c0_135], %248 {strides = array<i32>} : memref<16x512xf32, #tpu.memory_space<vmem>>, vector<16x512xf32>,
    } else {
    }
    %c0_68 = arith.constant 0 : index
    %c0_69 = arith.constant 0 : index
    %132 = vector.load %arg12[%c0_68, %c0_69] : memref<16x128xbf16, #tpu.memory_space<vmem>>, vector<16x128xbf16>
    %c0_70 = arith.constant 0 : index
    %c0_71 = arith.constant 0 : index
    %133 = vector.load %arg6[%c0_70, %c0_71] : memref<128x512xbf16, #tpu.memory_space<vmem>>, vector<128x512xbf16>
    %cst_72 = arith.constant dense<0.000000e+00> : vector<16x512xf32>
    %134 = tpu.matmul %132, %133, %cst_72 {dimension_numbers = #tpu.dot_dimension_numbers<[1], [0], [0], [1], [0, 0, 1, 1], [], []>} : vector<16x128xbf16>, vector<128x512xbf16>, vector<16x512xf32> -> vector<16x512xf32>
    %c0_73 = arith.constant 0 : index
    %c0_74 = arith.constant 0 : index
    %135 = vector.load %arg11[%c0_73, %c0_74] : memref<16x512xf32, #tpu.memory_space<vmem>>, vector<16x512xf32>
    %136 = arith.addf %134, %135 : vector<16x512xf32>
    %c0_75 = arith.constant 0 : index
    %c0_76 = arith.constant 0 : index
    %137 = vector.load %arg7[%c0_75, %c0_76] : memref<1x512xf32, #tpu.memory_space<vmem>>, vector<1x512xf32>
    %138 = vector.broadcast %137 : vector<1x512xf32> to vector<16x512xf32>
    %139 = arith.addf %136, %138 : vector<16x512xf32>
    %140 = vector.extract_strided_slice %139 {offsets = [0, 0], sizes = [16, 128], strides = [1, 1]} : vector<16x512xf32> to vector<16x128xf32>
    %141 = arith.negf %140 : vector<16x128xf32>
    %142 = math.exp %141 : vector<16x128xf32>
    %cst_77 = arith.constant 1.000000e+00 : f32
    %143 = vector.broadcast %cst_77 : f32 to vector<16x128xf32>
    %144 = arith.addf %143, %142 : vector<16x128xf32>
    %145 = arith.divf %143, %144 : vector<16x128xf32>
    %146 = vector.extract_strided_slice %139 {offsets = [0, 128], sizes = [16, 128], strides = [1, 1]} : vector<16x512xf32> to vector<16x128xf32>
    %147 = arith.negf %146 : vector<16x128xf32>
    %148 = math.exp %147 : vector<16x128xf32>
    %cst_78 = arith.constant 1.000000e+00 : f32
    %149 = vector.broadcast %cst_78 : f32 to vector<16x128xf32>
    %150 = arith.addf %149, %148 : vector<16x128xf32>
    %151 = arith.divf %149, %150 : vector<16x128xf32>
    %152 = vector.extract_strided_slice %139 {offsets = [0, 256], sizes = [16, 128], strides = [1, 1]} : vector<16x512xf32> to vector<16x128xf32>
    %153 = math.tanh %152 : vector<16x128xf32>
    %154 = vector.extract_strided_slice %139 {offsets = [0, 384], sizes = [16, 128], strides = [1, 1]} : vector<16x512xf32> to vector<16x128xf32>
    %155 = arith.negf %154 : vector<16x128xf32>
    %156 = math.exp %155 : vector<16x128xf32>
    %cst_79 = arith.constant 1.000000e+00 : f32
    %157 = vector.broadcast %cst_79 : f32 to vector<16x128xf32>
    %158 = arith.addf %157, %156 : vector<16x128xf32>
    %159 = arith.divf %157, %158 : vector<16x128xf32>
    %c0_80 = arith.constant 0 : index
    %c0_81 = arith.constant 0 : index
    %160 = vector.load %arg13[%c0_80, %c0_81] : memref<16x128xf32, #tpu.memory_space<vmem>>, vector<16x128xf32>
    %161 = arith.mulf %151, %160 : vector<16x128xf32>
    %162 = arith.mulf %145, %153 : vector<16x128xf32>
    %163 = arith.addf %161, %162 : vector<16x128xf32>
    %164 = math.tanh %163 : vector<16x128xf32>
    %165 = arith.mulf %159, %164 : vector<16x128xf32>
    %166 = arith.truncf %165 : vector<16x128xf32> to vector<16x128xbf16>
    %c0_82 = arith.constant 0 : index
    %c0_83 = arith.constant 0 : index
    %167 = vector.load %arg13[%c0_82, %c0_83] : memref<16x128xf32, #tpu.memory_space<vmem>>, vector<16x128xf32>
    tpu.vector_store %arg13[%c0_82, %c0_83], %163 {strides = array<i32>} : memref<16x128xf32, #tpu.memory_space<vmem>>, vector<16x128xf32>,
    %c0_84 = arith.constant 0 : index
    %c0_85 = arith.constant 0 : index
    %168 = vector.load %arg12[%c0_84, %c0_85] : memref<16x128xbf16, #tpu.memory_space<vmem>>, vector<16x128xbf16>
    tpu.vector_store %arg12[%c0_84, %c0_85], %166 {strides = array<i32>} : memref<16x128xbf16, #tpu.memory_space<vmem>>, vector<16x128xbf16>,
    %c0_86 = arith.constant 0 : index
    %c0_87 = arith.constant 0 : index
    %169 = vector.load %arg8[%c0_86, %c0_87] : memref<128x256xbf16, #tpu.memory_space<vmem>>, vector<128x256xbf16>
    %cst_88 = arith.constant dense<0.000000e+00> : vector<16x256xf32>
    %170 = tpu.matmul %166, %169, %cst_88 {dimension_numbers = #tpu.dot_dimension_numbers<[1], [0], [0], [1], [0, 0, 1, 1], [], []>} : vector<16x128xbf16>, vector<128x256xbf16>, vector<16x256xf32> -> vector<16x256xf32>
    %c0_89 = arith.constant 0 : index
    %c0_90 = arith.constant 0 : index
    %171 = vector.load %arg9[%c0_89, %c0_90] : memref<1x256xf32, #tpu.memory_space<vmem>>, vector<1x256xf32>
    %172 = vector.broadcast %171 : vector<1x256xf32> to vector<16x256xf32>
    %173 = arith.addf %170, %172 : vector<16x256xf32>
    %c2 = arith.constant 2 : index
    %c0_91 = arith.constant 0 : index
    %c0_92 = arith.constant 0 : index
    %174 = vector.load %arg10[%c2, %c0_91, %c0_92] : memref<4x16x256xf32, #tpu.memory_space<vmem>>, vector<1x16x256xf32>
    %175 = vector.shape_cast %174 : vector<1x16x256xf32> to vector<16x256xf32>
    %176 = vector.shape_cast %173 : vector<16x256xf32> to vector<1x16x256xf32>
    tpu.vector_store %arg10[%c2, %c0_91, %c0_92], %176 {strides = array<i32>} : memref<4x16x256xf32, #tpu.memory_space<vmem>>, vector<1x16x256xf32>,
    %c1_i32_93 = arith.constant 1 : i32
    %177 = arith.addi %126, %c1_i32_93 : i32
    %c8_i32_94 = arith.constant 8 : i32
    %178 = arith.cmpi slt, %177, %c8_i32_94 : i32
    %c1_i32_95 = arith.constant 1 : i32
    %179 = arith.addi %126, %c1_i32_95 : i32
    %180 = arith.index_cast %179 : i32 to index
    %181 = memref.load %arg1[%180] : memref<9xi32, #tpu.memory_space<smem>>
    %c0_i32_96 = arith.constant 0 : i32
    %182 = arith.cmpi eq, %181, %c0_i32_96 : i32
    %183 = arith.andi %178, %182 : i1
    %184 = arith.extui %183 : i1 to i32
    %c0_i32_97 = arith.constant 0 : i32
    %185 = arith.cmpi ne, %184, %c0_i32_97 : i32
    scf.if %185 {
      %247 = tpu.iota {dimensions = array<i32: 1>} : vector<16x256xi32>
      %cst_131 = arith.constant dense<0xFF800000> : vector<16xf32>
      %248 = vector.multi_reduction <maximumf>, %173, %cst_131 [1] : vector<16x256xf32> to vector<16xf32>
      %249 = vector.shape_cast %248 : vector<16xf32> to vector<16x1xf32>
      %250 = vector.broadcast %249 : vector<16x1xf32> to vector<16x256xf32>
      %251 = arith.cmpf oeq, %173, %250 : vector<16x256xf32>
      %c256_i32 = arith.constant 256 : i32
      %252 = vector.broadcast %c256_i32 : i32 to vector<16x256xi32>
      %253 = arith.select %251, %247, %252 : vector<16x256xi1>, vector<16x256xi32>
      %cst_132 = arith.constant dense<2147483647> : vector<16xi32>
      %254 = vector.multi_reduction <minsi>, %253, %cst_132 [1] : vector<16x256xi32> to vector<16xi32>
      %255 = vector.shape_cast %254 : vector<16xi32> to vector<16x1xi32>
      %256 = vector.broadcast %255 : vector<16x1xi32> to vector<16x256xi32>
      %257 = arith.cmpi eq, %247, %256 : vector<16x256xi32>
      %258 = arith.extui %257 : vector<16x256xi1> to vector<16x256xi32>
      %259 = arith.sitofp %258 : vector<16x256xi32> to vector<16x256xf32>
      %260 = arith.truncf %259 : vector<16x256xf32> to vector<16x256xbf16>
      %c0_133 = arith.constant 0 : index
      %c0_134 = arith.constant 0 : index
      %261 = vector.load %arg5[%c0_133, %c0_134] : memref<256x512xbf16, #tpu.memory_space<vmem>>, vector<256x512xbf16>
      %cst_135 = arith.constant dense<0.000000e+00> : vector<16x512xf32>
      %262 = tpu.matmul %260, %261, %cst_135 {dimension_numbers = #tpu.dot_dimension_numbers<[1], [0], [0], [1], [0, 0, 1, 1], [], []>} : vector<16x256xbf16>, vector<256x512xbf16>, vector<16x512xf32> -> vector<16x512xf32>
      %c0_136 = arith.constant 0 : index
      %c0_137 = arith.constant 0 : index
      %263 = vector.load %arg11[%c0_136, %c0_137] : memref<16x512xf32, #tpu.memory_space<vmem>>, vector<16x512xf32>
      tpu.vector_store %arg11[%c0_136, %c0_137], %262 {strides = array<i32>} : memref<16x512xf32, #tpu.memory_space<vmem>>, vector<16x512xf32>,
    } else {
    }
    %c4_i32_98 = arith.constant 4 : i32
    %186 = arith.muli %arg0, %c4_i32_98 : i32
    %c3_i32 = arith.constant 3 : i32
    %187 = arith.addi %186, %c3_i32 : i32
    %188 = arith.index_cast %187 : i32 to index
    %189 = memref.load %arg1[%188] : memref<9xi32, #tpu.memory_space<smem>>
    %c0_i32_99 = arith.constant 0 : i32
    %190 = arith.cmpi ne, %189, %c0_i32_99 : i32
    %191 = arith.extui %190 : i1 to i32
    %c0_i32_100 = arith.constant 0 : i32
    %192 = arith.cmpi ne, %191, %c0_i32_100 : i32
    scf.if %192 {
      %c3_131 = arith.constant 3 : index
      %c0_132 = arith.constant 0 : index
      %c0_133 = arith.constant 0 : index
      %247 = vector.load %arg2[%c3_131, %c0_132, %c0_133] : memref<4x16x512xf32, #tpu.memory_space<vmem>>, vector<1x16x512xf32>
      %248 = vector.shape_cast %247 : vector<1x16x512xf32> to vector<16x512xf32>
      %c0_134 = arith.constant 0 : index
      %c0_135 = arith.constant 0 : index
      %249 = vector.load %arg11[%c0_134, %c0_135] : memref<16x512xf32, #tpu.memory_space<vmem>>, vector<16x512xf32>
      tpu.vector_store %arg11[%c0_134, %c0_135], %248 {strides = array<i32>} : memref<16x512xf32, #tpu.memory_space<vmem>>, vector<16x512xf32>,
    } else {
    }
    %c0_101 = arith.constant 0 : index
    %c0_102 = arith.constant 0 : index
    %193 = vector.load %arg12[%c0_101, %c0_102] : memref<16x128xbf16, #tpu.memory_space<vmem>>, vector<16x128xbf16>
    %c0_103 = arith.constant 0 : index
    %c0_104 = arith.constant 0 : index
    %194 = vector.load %arg6[%c0_103, %c0_104] : memref<128x512xbf16, #tpu.memory_space<vmem>>, vector<128x512xbf16>
    %cst_105 = arith.constant dense<0.000000e+00> : vector<16x512xf32>
    %195 = tpu.matmul %193, %194, %cst_105 {dimension_numbers = #tpu.dot_dimension_numbers<[1], [0], [0], [1], [0, 0, 1, 1], [], []>} : vector<16x128xbf16>, vector<128x512xbf16>, vector<16x512xf32> -> vector<16x512xf32>
    %c0_106 = arith.constant 0 : index
    %c0_107 = arith.constant 0 : index
    %196 = vector.load %arg11[%c0_106, %c0_107] : memref<16x512xf32, #tpu.memory_space<vmem>>, vector<16x512xf32>
    %197 = arith.addf %195, %196 : vector<16x512xf32>
    %c0_108 = arith.constant 0 : index
    %c0_109 = arith.constant 0 : index
    %198 = vector.load %arg7[%c0_108, %c0_109] : memref<1x512xf32, #tpu.memory_space<vmem>>, vector<1x512xf32>
    %199 = vector.broadcast %198 : vector<1x512xf32> to vector<16x512xf32>
    %200 = arith.addf %197, %199 : vector<16x512xf32>
    %201 = vector.extract_strided_slice %200 {offsets = [0, 0], sizes = [16, 128], strides = [1, 1]} : vector<16x512xf32> to vector<16x128xf32>
    %202 = arith.negf %201 : vector<16x128xf32>
    %203 = math.exp %202 : vector<16x128xf32>
    %cst_110 = arith.constant 1.000000e+00 : f32
    %204 = vector.broadcast %cst_110 : f32 to vector<16x128xf32>
    %205 = arith.addf %204, %203 : vector<16x128xf32>
    %206 = arith.divf %204, %205 : vector<16x128xf32>
    %207 = vector.extract_strided_slice %200 {offsets = [0, 128], sizes = [16, 128], strides = [1, 1]} : vector<16x512xf32> to vector<16x128xf32>
    %208 = arith.negf %207 : vector<16x128xf32>
    %209 = math.exp %208 : vector<16x128xf32>
    %cst_111 = arith.constant 1.000000e+00 : f32
    %210 = vector.broadcast %cst_111 : f32 to vector<16x128xf32>
    %211 = arith.addf %210, %209 : vector<16x128xf32>
    %212 = arith.divf %210, %211 : vector<16x128xf32>
    %213 = vector.extract_strided_slice %200 {offsets = [0, 256], sizes = [16, 128], strides = [1, 1]} : vector<16x512xf32> to vector<16x128xf32>
    %214 = math.tanh %213 : vector<16x128xf32>
    %215 = vector.extract_strided_slice %200 {offsets = [0, 384], sizes = [16, 128], strides = [1, 1]} : vector<16x512xf32> to vector<16x128xf32>
    %216 = arith.negf %215 : vector<16x128xf32>
    %217 = math.exp %216 : vector<16x128xf32>
    %cst_112 = arith.constant 1.000000e+00 : f32
    %218 = vector.broadcast %cst_112 : f32 to vector<16x128xf32>
    %219 = arith.addf %218, %217 : vector<16x128xf32>
    %220 = arith.divf %218, %219 : vector<16x128xf32>
    %c0_113 = arith.constant 0 : index
    %c0_114 = arith.constant 0 : index
    %221 = vector.load %arg13[%c0_113, %c0_114] : memref<16x128xf32, #tpu.memory_space<vmem>>, vector<16x128xf32>
    %222 = arith.mulf %212, %221 : vector<16x128xf32>
    %223 = arith.mulf %206, %214 : vector<16x128xf32>
    %224 = arith.addf %222, %223 : vector<16x128xf32>
    %225 = math.tanh %224 : vector<16x128xf32>
    %226 = arith.mulf %220, %225 : vector<16x128xf32>
    %227 = arith.truncf %226 : vector<16x128xf32> to vector<16x128xbf16>
    %c0_115 = arith.constant 0 : index
    %c0_116 = arith.constant 0 : index
    %228 = vector.load %arg13[%c0_115, %c0_116] : memref<16x128xf32, #tpu.memory_space<vmem>>, vector<16x128xf32>
    tpu.vector_store %arg13[%c0_115, %c0_116], %224 {strides = array<i32>} : memref<16x128xf32, #tpu.memory_space<vmem>>, vector<16x128xf32>,
    %c0_117 = arith.constant 0 : index
    %c0_118 = arith.constant 0 : index
    %229 = vector.load %arg12[%c0_117, %c0_118] : memref<16x128xbf16, #tpu.memory_space<vmem>>, vector<16x128xbf16>
    tpu.vector_store %arg12[%c0_117, %c0_118], %227 {strides = array<i32>} : memref<16x128xbf16, #tpu.memory_space<vmem>>, vector<16x128xbf16>,
    %c0_119 = arith.constant 0 : index
    %c0_120 = arith.constant 0 : index
    %230 = vector.load %arg8[%c0_119, %c0_120] : memref<128x256xbf16, #tpu.memory_space<vmem>>, vector<128x256xbf16>
    %cst_121 = arith.constant dense<0.000000e+00> : vector<16x256xf32>
    %231 = tpu.matmul %227, %230, %cst_121 {dimension_numbers = #tpu.dot_dimension_numbers<[1], [0], [0], [1], [0, 0, 1, 1], [], []>} : vector<16x128xbf16>, vector<128x256xbf16>, vector<16x256xf32> -> vector<16x256xf32>
    %c0_122 = arith.constant 0 : index
    %c0_123 = arith.constant 0 : index
    %232 = vector.load %arg9[%c0_122, %c0_123] : memref<1x256xf32, #tpu.memory_space<vmem>>, vector<1x256xf32>
    %233 = vector.broadcast %232 : vector<1x256xf32> to vector<16x256xf32>
    %234 = arith.addf %231, %233 : vector<16x256xf32>
    %c3 = arith.constant 3 : index
    %c0_124 = arith.constant 0 : index
    %c0_125 = arith.constant 0 : index
    %235 = vector.load %arg10[%c3, %c0_124, %c0_125] : memref<4x16x256xf32, #tpu.memory_space<vmem>>, vector<1x16x256xf32>
    %236 = vector.shape_cast %235 : vector<1x16x256xf32> to vector<16x256xf32>
    %237 = vector.shape_cast %234 : vector<16x256xf32> to vector<1x16x256xf32>
    tpu.vector_store %arg10[%c3, %c0_124, %c0_125], %237 {strides = array<i32>} : memref<4x16x256xf32, #tpu.memory_space<vmem>>, vector<1x16x256xf32>,
    %c1_i32_126 = arith.constant 1 : i32
    %238 = arith.addi %187, %c1_i32_126 : i32
    %c8_i32_127 = arith.constant 8 : i32
    %239 = arith.cmpi slt, %238, %c8_i32_127 : i32
    %c1_i32_128 = arith.constant 1 : i32
    %240 = arith.addi %187, %c1_i32_128 : i32
    %241 = arith.index_cast %240 : i32 to index
    %242 = memref.load %arg1[%241] : memref<9xi32, #tpu.memory_space<smem>>
    %c0_i32_129 = arith.constant 0 : i32
    %243 = arith.cmpi eq, %242, %c0_i32_129 : i32
    %244 = arith.andi %239, %243 : i1
    %245 = arith.extui %244 : i1 to i32
    %c0_i32_130 = arith.constant 0 : i32
    %246 = arith.cmpi ne, %245, %c0_i32_130 : i32
    scf.if %246 {
      %247 = tpu.iota {dimensions = array<i32: 1>} : vector<16x256xi32>
      %cst_131 = arith.constant dense<0xFF800000> : vector<16xf32>
      %248 = vector.multi_reduction <maximumf>, %234, %cst_131 [1] : vector<16x256xf32> to vector<16xf32>
      %249 = vector.shape_cast %248 : vector<16xf32> to vector<16x1xf32>
      %250 = vector.broadcast %249 : vector<16x1xf32> to vector<16x256xf32>
      %251 = arith.cmpf oeq, %234, %250 : vector<16x256xf32>
      %c256_i32 = arith.constant 256 : i32
      %252 = vector.broadcast %c256_i32 : i32 to vector<16x256xi32>
      %253 = arith.select %251, %247, %252 : vector<16x256xi1>, vector<16x256xi32>
      %cst_132 = arith.constant dense<2147483647> : vector<16xi32>
      %254 = vector.multi_reduction <minsi>, %253, %cst_132 [1] : vector<16x256xi32> to vector<16xi32>
      %255 = vector.shape_cast %254 : vector<16xi32> to vector<16x1xi32>
      %256 = vector.broadcast %255 : vector<16x1xi32> to vector<16x256xi32>
      %257 = arith.cmpi eq, %247, %256 : vector<16x256xi32>
      %258 = arith.extui %257 : vector<16x256xi1> to vector<16x256xi32>
      %259 = arith.sitofp %258 : vector<16x256xi32> to vector<16x256xf32>
      %260 = arith.truncf %259 : vector<16x256xf32> to vector<16x256xbf16>
      %c0_133 = arith.constant 0 : index
      %c0_134 = arith.constant 0 : index
      %261 = vector.load %arg5[%c0_133, %c0_134] : memref<256x512xbf16, #tpu.memory_space<vmem>>, vector<256x512xbf16>
      %cst_135 = arith.constant dense<0.000000e+00> : vector<16x512xf32>
      %262 = tpu.matmul %260, %261, %cst_135 {dimension_numbers = #tpu.dot_dimension_numbers<[1], [0], [0], [1], [0, 0, 1, 1], [], []>} : vector<16x256xbf16>, vector<256x512xbf16>, vector<16x512xf32> -> vector<16x512xf32>
      %c0_136 = arith.constant 0 : index
      %c0_137 = arith.constant 0 : index
      %263 = vector.load %arg11[%c0_136, %c0_137] : memref<16x512xf32, #tpu.memory_space<vmem>>, vector<16x512xf32>
      tpu.vector_store %arg11[%c0_136, %c0_137], %262 {strides = array<i32>} : memref<16x512xf32, #tpu.memory_space<vmem>>, vector<16x512xf32>,
    } else {
    }
    return
  }
  func.func @transform_0(%arg0: i32, %arg1: memref<9xi32, #tpu.memory_space<smem>>) -> (i32, i32, i32) {
    %c0_i32 = arith.constant 0 : i32
    %c0_i32_0 = arith.constant 0 : i32
    %c0_i32_1 = arith.constant 0 : i32
    return %arg0, %c0_i32, %c0_i32_0 : i32, i32, i32
  }
  func.func @transform_1(%arg0: i32, %arg1: memref<9xi32, #tpu.memory_space<smem>>) -> (i32, i32) {
    %c0_i32 = arith.constant 0 : i32
    %c0_i32_0 = arith.constant 0 : i32
    %c0_i32_1 = arith.constant 0 : i32
    return %c0_i32, %c0_i32_0 : i32, i32
  }
  func.func @transform_2(%arg0: i32, %arg1: memref<9xi32, #tpu.memory_space<smem>>) -> (i32, i32) {
    %c0_i32 = arith.constant 0 : i32
    %c0_i32_0 = arith.constant 0 : i32
    %c0_i32_1 = arith.constant 0 : i32
    return %c0_i32, %c0_i32_0 : i32, i32
  }
  func.func @transform_3(%arg0: i32, %arg1: memref<9xi32, #tpu.memory_space<smem>>) -> (i32, i32) {
    %c0_i32 = arith.constant 0 : i32
    %c0_i32_0 = arith.constant 0 : i32
    %c0_i32_1 = arith.constant 0 : i32
    return %c0_i32, %c0_i32_0 : i32, i32
  }
  func.func @transform_4(%arg0: i32, %arg1: memref<9xi32, #tpu.memory_space<smem>>) -> (i32, i32) {
    %c0_i32 = arith.constant 0 : i32
    %c0_i32_0 = arith.constant 0 : i32
    %c0_i32_1 = arith.constant 0 : i32
    return %c0_i32, %c0_i32_0 : i32, i32
  }
  func.func @transform_5(%arg0: i32, %arg1: memref<9xi32, #tpu.memory_space<smem>>) -> (i32, i32) {
    %c0_i32 = arith.constant 0 : i32
    %c0_i32_0 = arith.constant 0 : i32
    %c0_i32_1 = arith.constant 0 : i32
    return %c0_i32, %c0_i32_0 : i32, i32
  }
  func.func @transform_6(%arg0: i32, %arg1: memref<9xi32, #tpu.memory_space<smem>>) -> (i32, i32) {
    %c0_i32 = arith.constant 0 : i32
    %c0_i32_0 = arith.constant 0 : i32
    %c0_i32_1 = arith.constant 0 : i32
    return %c0_i32, %c0_i32_0 : i32, i32
  }
  func.func @transform_7(%arg0: i32, %arg1: memref<9xi32, #tpu.memory_space<smem>>) -> (i32, i32) {
    %c0_i32 = arith.constant 0 : i32
    %c0_i32_0 = arith.constant 0 : i32
    %c0_i32_1 = arith.constant 0 : i32
    return %c0_i32, %c0_i32_0 : i32, i32
  }
  func.func @transform_8(%arg0: i32, %arg1: memref<9xi32, #tpu.memory_space<smem>>) -> (i32, i32, i32) {
    %c0_i32 = arith.constant 0 : i32
    %c0_i32_0 = arith.constant 0 : i32
    %c0_i32_1 = arith.constant 0 : i32
    return %arg0, %c0_i32, %c0_i32_0 : i32, i32, i32
  }
}

</mosaic_0001>

<llo_original>
// kernel: seq2seq_forward.2
$region0: #{seq2seq_forward.2}
  #allocation0 [shape = 'u32[]', space=smem, size = 0x4, offset = 0x4, fixed_abs, tag = 'smem constant byte address 0x4 - core index']
  #allocation1 [shape = 'u32[72,128]{1,0:T(1,128)}', space=vmem, size = 0x9000, scoped, tag = 'internal scratch']
  %s0 = inlined_call_operand.vmem [shape: f32[12,16,512], index: 0, kind: input, shape index: {}]
  %s1 = inlined_call_operand.vmem [shape: bf16[128,512], index: 1, kind: input, shape index: {}]
  %s2 = inlined_call_operand.vmem [shape: f32[16,128], index: 2, kind: output, shape index: {0}]
  %s3 = inlined_call_operand.vmem [shape: f32[16,128], index: 3, kind: output, shape index: {1}]
  %4 = xla_tuple %s2, %s3
  %s5 = sld [smem:[#allocation0]]
  $region53: #{seq2seq_forward.2} parent=0
    _
  %s7 = ssub.s32 1, %s5
  %s8 = scalar_select 0, %s7, %s5
  loop: start=0, step=1, limit=5
  $region2: #{seq2seq_forward.2} parent=0 // loop_pre_header
    _
  $region3: #{seq2seq_forward.2} parent=0 // loop_header
    %s10 = sphi 0, %s14
    %p11 = scmp.ge.s32.totalorder %s10, 5
    %s20 = sphi 0, %s22
    %s23 = sphi 0, %s20
    %s24 = sphi 0, %s23
    %s40 = sphi 0, %s24
    %s44 = sphi 0, %s44
    %s46 = sphi 0, %s44
    %s47 = sphi 0, %s46
    %s61 = sphi 0, %s47
    %s65 = sphi 0, %s65
    %s67 = sphi 0, %s65
    %s68 = sphi 0, %s67
    %s82 = sphi 0, %s68
    %s86 = sphi 0, %s86
    %s88 = sphi 0, %s86
    %s89 = sphi 0, %s88
    %s103 = sphi 0, %s89
  $region4: #{seq2seq_forward.2} parent=0 // loop_header_branch
    %13 = sbr.rel (%p11) target = $region8
  $region5: #{seq2seq_forward.2} parent=0 // loop_body
    %s15 = ssub.s32 %s10, 1
    %s16 = ssub.s32 %s10, 2
    %s17 = sadd.s32 %s10, 1
    %s18 = ssub.s32 %s10, %s17
    %p19 = scmp.eq.s32.totalorder %s18, 0
    %s21 = sadd.s32 %s20, 1
    %s22 = scalar_select %p19, %s20, %s21
    %p25 = pneg %p19
    %p26 = scmp.eq.s32.totalorder %s10, 2
    %p27 = por %p25, %p26
    %p28 = scmp.ne.s32.totalorder %s20, %s23
    %p29 = scmp.eq.s32.totalorder %s10, 0
    %p30 = por %p28, %p29
    %p31 = scmp.ne.s32.totalorder %s20, %s23
    %p32 = scmp.eq.s32.totalorder %s15, 2
    %p33 = por %p31, %p32
    %p34 = scmp.ne.s32.totalorder %s23, %s24
    %p35 = scmp.eq.s32.totalorder %s15, 0
    %p36 = por %p34, %p35
    %p37 = scmp.ne.s32.totalorder %s23, %s24
    %p38 = scmp.eq.s32.totalorder %s16, 2
    %p39 = por %p37, %p38
    %p41 = scmp.ne.s32.totalorder %s24, %s40
    %p42 = scmp.eq.s32.totalorder %s16, 0
    %p43 = por %p41, %p42
    %s45 = sadd.s32 %s44, 1
    %p48 = scmp.eq.s32.totalorder %s10, 2
    %p49 = scmp.ne.s32.totalorder %s44, %s46
    %p50 = scmp.eq.s32.totalorder %s10, 0
    %p51 = por %p49, %p50
    %p52 = scmp.ne.s32.totalorder %s44, %s46
    %p53 = scmp.eq.s32.totalorder %s15, 2
    %p54 = por %p52, %p53
    %p55 = scmp.ne.s32.totalorder %s46, %s47
    %p56 = scmp.eq.s32.totalorder %s15, 0
    %p57 = por %p55, %p56
    %p58 = scmp.ne.s32.totalorder %s46, %s47
    %p59 = scmp.eq.s32.totalorder %s16, 2
    %p60 = por %p58, %p59
    %p62 = scmp.ne.s32.totalorder %s47, %s61
    %p63 = scmp.eq.s32.totalorder %s16, 0
    %p64 = por %p62, %p63
    %s66 = sadd.s32 %s65, 1
    %p69 = scmp.eq.s32.totalorder %s10, 2
    %p70 = scmp.ne.s32.totalorder %s65, %s67
    %p71 = scmp.eq.s32.totalorder %s10, 0
    %p72 = por %p70, %p71
    %p73 = scmp.ne.s32.totalorder %s65, %s67
    %p74 = scmp.eq.s32.totalorder %s15, 2
    %p75 = por %p73, %p74
    %p76 = scmp.ne.s32.totalorder %s67, %s68
    %p77 = scmp.eq.s32.totalorder %s15, 0
    %p78 = por %p76, %p77
    %p79 = scmp.ne.s32.totalorder %s67, %s68
    %p80 = scmp.eq.s32.totalorder %s16, 2
    %p81 = por %p79, %p80
    %p83 = scmp.ne.s32.totalorder %s68, %s82
    %p84 = scmp.eq.s32.totalorder %s16, 0
    %p85 = por %p83, %p84
    %s87 = sadd.s32 %s86, 1
    %p90 = scmp.eq.s32.totalorder %s10, 2
    %p91 = scmp.ne.s32.totalorder %s86, %s88
    %p92 = scmp.eq.s32.totalorder %s10, 0
    %p93 = por %p91, %p92
    %p94 = scmp.ne.s32.totalorder %s86, %s88
    %p95 = scmp.eq.s32.totalorder %s15, 2
    %p96 = por %p94, %p95
    %p97 = scmp.ne.s32.totalorder %s88, %s89
    %p98 = scmp.eq.s32.totalorder %s15, 0
    %p99 = por %p97, %p98
    %p100 = scmp.ne.s32.totalorder %s88, %s89
    %p101 = scmp.eq.s32.totalorder %s16, 2
    %p102 = por %p100, %p101
    %p104 = scmp.ne.s32.totalorder %s89, %s103
    %p105 = scmp.eq.s32.totalorder %s16, 0
    %p106 = por %p104, %p105
    %p107 = scmp.le.s32.totalorder 1, %s10
    %p108 = scmp.lt.s32.totalorder %s10, 4
    %p109 = pnand %p107, %p108
    %p110 = pneg %p109
    // Predicated region
    $region9: #{seq2seq_forward.2} parent=5 // pred_check
      _
    $region10: #{seq2seq_forward.2} parent=5 // pred_check_branch
      %112 = sbr.rel (%p109) target = $region12
    $region11: #{seq2seq_forward.2} parent=5 // pred_region
      %s113 = ssub.s32 %s10, 1
      // Predicated region
      $region13: #{seq2seq_forward.2} parent=11 // pred_check
        %p114 = pneg %p57
      $region14: #{seq2seq_forward.2} parent=11 // pred_check_branch
        %116 = sbr.rel (%p114) target = $region16
      $region15: #{seq2seq_forward.2} parent=11 // pred_region
        _
      $region16: #{seq2seq_forward.2} parent=11 // pred_fallthru
        _
    $region12: #{seq2seq_forward.2} parent=5 // pred_fallthru
      _
    %p117 = scmp.lt.s32.totalorder %s10, 3
    // Predicated region
    $region17: #{seq2seq_forward.2} parent=5 // pred_check
      %p118 = pneg %p117
    $region18: #{seq2seq_forward.2} parent=5 // pred_check_branch
      %120 = sbr.rel (%p118) target = $region20
    $region19: #{seq2seq_forward.2} parent=5 // pred_region
      // Predicated region
      $region21: #{seq2seq_forward.2} parent=19 // pred_check
        %p121 = pneg %p30
      $region22: #{seq2seq_forward.2} parent=19 // pred_check_branch
        %123 = sbr.rel (%p121) target = $region24
      $region23: #{seq2seq_forward.2} parent=19 // pred_region
        %s124 = smul.u32 4, %s10
        %p125 = scmp.lt.s32.totalorder %s124, 11
        %s126 = scalar_select %p125, %s124, 11
        %s127 = smul.addr %s126, 8
        %s128 = smul.addr %s127, 8
        %s129 = scalar_lea.vmem %s0, %s128
        %s130 = smul.u32 4, %s10
      $region24: #{seq2seq_forward.2} parent=19 // pred_fallthru
        _
    $region20: #{seq2seq_forward.2} parent=5 // pred_fallthru
      _
    %p131 = scmp.le.s32.totalorder 1, %s10
    %p132 = scmp.lt.s32.totalorder %s10, 4
    %p133 = pnand %p131, %p132
    %p134 = pneg %p133
    // Predicated region
    $region25: #{seq2seq_forward.2} parent=5 // pred_check
      _
    $region26: #{seq2seq_forward.2} parent=5 // pred_check_branch
      %136 = sbr.rel (%p133) target = $region28
    $region27: #{seq2seq_forward.2} parent=5 // pred_region
      %s137 = ssub.s32 %s10, 1
      %s138 = smul.u32 4, %s15
      %p139 = scmp.lt.s32.totalorder %s138, 11
      %s140 = scalar_select %p139, %s138, 11
      %s141 = smul.addr %s140, 8
      %s142 = smul.addr %s141, 8
      %s143 = scalar_lea.vmem %s0, %s142
      %p144 = pneg %p36
      %p145 = pneg %p33
      %p146 = pneg %p57
      %p147 = pneg %p54
      %p148 = pneg %p78
      %p149 = pneg %p75
      %p150 = pneg %p99
      %p151 = pneg %p96
      %s152 = smul.u32 4, %s15
      %p153 = scmp.lt.s32.totalorder %s152, 11
      %s154 = scalar_select %p153, %s152, 11
      %s155 = smul.addr %s154, 8
      %s156 = smul.addr %s155, 8
      %s157 = scalar_lea.vmem %s0, %s156
      %s158 = smul.u32 4, %s15
      %p159 = scmp.eq.s32.totalorder %s15, 0
      // Predicated region
      $region29: #{seq2seq_forward.2} parent=27 // pred_check
        %p160 = pneg %p159
      $region30: #{seq2seq_forward.2} parent=27 // pred_check_branch
        %162 = sbr.rel (%p160) target = $region32
      $region31: #{seq2seq_forward.2} parent=27 // pred_region
        %163 = vst [vmem:[%s2] sm:$0xff] 0.0
        %164 = vst [vmem:[%s2 + $0x8] sm:$0xff] 0.0
        %165 = vst [vmem:[%s3] sm:$0xff] 0.0
        %166 = vst [vmem:[%s3 + $0x8] sm:$0xff] 0.0
      $region32: #{seq2seq_forward.2} parent=27 // pred_fallthru
        _
      %v167 = vld [vmem:[%s2] sm:$0xff]
      %v168 = vld [vmem:[%s2 + $0x8] sm:$0xff]
      %v169 = vld [vmem:[%s3] sm:$0xff]
      %v170 = vld [vmem:[%s3 + $0x8] sm:$0xff]
      %v171 = vpack.c.bf16 %v168, %v167
      %v172 = vld [vmem:[%s1] sm:$0xff]
      %v173 = vld [vmem:[%s1 + $0x8] sm:$0xff]
      %v174 = vld [vmem:[%s1 + $0x10] sm:$0xff]
      %v175 = vld [vmem:[%s1 + $0x18] sm:$0xff]
      %v176 = vld [vmem:[%s1 + $0x20] sm:$0xff]
      %v177 = vld [vmem:[%s1 + $0x28] sm:$0xff]
      %v178 = vld [vmem:[%s1 + $0x30] sm:$0xff]
      %v179 = vld [vmem:[%s1 + $0x38] sm:$0xff]
      %v180 = vld [vmem:[%s1 + $0x40] sm:$0xff]
      %v181 = vld [vmem:[%s1 + $0x48] sm:$0xff]
      %v182 = vld [vmem:[%s1 + $0x50] sm:$0xff]
      %v183 = vld [vmem:[%s1 + $0x58] sm:$0xff]
      %v184 = vld [vmem:[%s1 + $0x60] sm:$0xff]
      %v185 = vld [vmem:[%s1 + $0x68] sm:$0xff]
      %v186 = vld [vmem:[%s1 + $0x70] sm:$0xff]
      %v187 = vld [vmem:[%s1 + $0x78] sm:$0xff]
      %v188 = vld [vmem:[%s1 + $0x80] sm:$0xff]
      %v189 = vld [vmem:[%s1 + $0x88] sm:$0xff]
      %v190 = vld [vmem:[%s1 + $0x90] sm:$0xff]
      %v191 = vld [vmem:[%s1 + $0x98] sm:$0xff]
      %v192 = vld [vmem:[%s1 + $0xa0] sm:$0xff]
      %v193 = vld [vmem:[%s1 + $0xa8] sm:$0xff]
      %v194 = vld [vmem:[%s1 + $0xb0] sm:$0xff]
      %v195 = vld [vmem:[%s1 + $0xb8] sm:$0xff]
      %v196 = vld [vmem:[%s1 + $0xc0] sm:$0xff]
      %v197 = vld [vmem:[%s1 + $0xc8] sm:$0xff]
      %v198 = vld [vmem:[%s1 + $0xd0] sm:$0xff]
      %v199 = vld [vmem:[%s1 + $0xd8] sm:$0xff]
      %v200 = vld [vmem:[%s1 + $0xe0] sm:$0xff]
      %v201 = vld [vmem:[%s1 + $0xe8] sm:$0xff]
      %v202 = vld [vmem:[%s1 + $0xf0] sm:$0xff]
      %v203 = vld [vmem:[%s1 + $0xf8] sm:$0xff]
      %v204 = vld [vmem:[%s157] sm:$0xff]
      %v205 = vld [vmem:[%s157 + $0x8] sm:$0xff]
      %v206 = vld [vmem:[%s157 + $0x10] sm:$0xff]
      %v207 = vld [vmem:[%s157 + $0x18] sm:$0xff]
      %v208 = vld [vmem:[%s157 + $0x20] sm:$0xff]
      %v209 = vld [vmem:[%s157 + $0x28] sm:$0xff]
      %v210 = vld [vmem:[%s157 + $0x30] sm:$0xff]
      %v211 = vld [vmem:[%s157 + $0x38] sm:$0xff]
      %v244 = vunpack.c.l.b16 %v172
      %v245 = vunpack.c.h.b16 %v172
      %v246 = vunpack.c.l.b16 %v173
      %v247 = vunpack.c.h.b16 %v173
      %v248 = vunpack.c.l.b16 %v174
      %v249 = vunpack.c.h.b16 %v174
      %v250 = vunpack.c.l.b16 %v175
      %v251 = vunpack.c.h.b16 %v175
      %v252 = vunpack.c.l.b16 %v176
      %v253 = vunpack.c.h.b16 %v176
      %v254 = vunpack.c.l.b16 %v177
      %v255 = vunpack.c.h.b16 %v177
      %v256 = vunpack.c.l.b16 %v178
      %v257 = vunpack.c.h.b16 %v178
      %v258 = vunpack.c.l.b16 %v179
      %v259 = vunpack.c.h.b16 %v179
      %v260 = vunpack.c.l.b16 %v180
      %v261 = vunpack.c.h.b16 %v180
      %v262 = vunpack.c.l.b16 %v181
      %v263 = vunpack.c.h.b16 %v181
      %v264 = vunpack.c.l.b16 %v182
      %v265 = vunpack.c.h.b16 %v182
      %v266 = vunpack.c.l.b16 %v183
      %v267 = vunpack.c.h.b16 %v183
      %v268 = vunpack.c.l.b16 %v184
      %v269 = vunpack.c.h.b16 %v184
      %v270 = vunpack.c.l.b16 %v185
      %v271 = vunpack.c.h.b16 %v185
      %v272 = vunpack.c.l.b16 %v186
      %v273 = vunpack.c.h.b16 %v186
      %v274 = vunpack.c.l.b16 %v187
      %v275 = vunpack.c.h.b16 %v187
      %v276 = vunpack.c.l.b16 %v188
      %v277 = vunpack.c.h.b16 %v188
      %v278 = vunpack.c.l.b16 %v189
      %v279 = vunpack.c.h.b16 %v189
      %v280 = vunpack.c.l.b16 %v190
      %v281 = vunpack.c.h.b16 %v190
      %v282 = vunpack.c.l.b16 %v191
      %v283 = vunpack.c.h.b16 %v191
      %v284 = vunpack.c.l.b16 %v192
      %v285 = vunpack.c.h.b16 %v192
      %v286 = vunpack.c.l.b16 %v193
      %v287 = vunpack.c.h.b16 %v193
      %v288 = vunpack.c.l.b16 %v194
      %v289 = vunpack.c.h.b16 %v194
      %v290 = vunpack.c.l.b16 %v195
      %v291 = vunpack.c.h.b16 %v195
      %v292 = vunpack.c.l.b16 %v196
      %v293 = vunpack.c.h.b16 %v196
      %v294 = vunpack.c.l.b16 %v197
      %v295 = vunpack.c.h.b16 %v197
      %v296 = vunpack.c.l.b16 %v198
      %v297 = vunpack.c.h.b16 %v198
      %v298 = vunpack.c.l.b16 %v199
      %v299 = vunpack.c.h.b16 %v199
      %v300 = vunpack.c.l.b16 %v200
      %v301 = vunpack.c.h.b16 %v200
      %v302 = vunpack.c.l.b16 %v201
      %v303 = vunpack.c.h.b16 %v201
      %v304 = vunpack.c.l.b16 %v202
      %v305 = vunpack.c.h.b16 %v202
      %v306 = vunpack.c.l.b16 %v203
      %v307 = vunpack.c.h.b16 %v203
      %v308 = vpack.c.b16 %v248, %v244
      %v309 = vpack.c.b16 %v249, %v245
      %v310 = vpack.c.b16 %v250, %v246
      %v311 = vpack.c.b16 %v251, %v247
      %v312 = vpack.c.b16 %v256, %v252
      %v313 = vpack.c.b16 %v257, %v253
      %v314 = vpack.c.b16 %v258, %v254
      %v315 = vpack.c.b16 %v259, %v255
      %v316 = vpack.c.b16 %v264, %v260
      %v317 = vpack.c.b16 %v265, %v261
      %v318 = vpack.c.b16 %v266, %v262
      %v319 = vpack.c.b16 %v267, %v263
      %v320 = vpack.c.b16 %v272, %v268
      %v321 = vpack.c.b16 %v273, %v269
      %v322 = vpack.c.b16 %v274, %v270
      %v323 = vpack.c.b16 %v275, %v271
      %v324 = vpack.c.b16 %v280, %v276
      %v325 = vpack.c.b16 %v281, %v277
      %v326 = vpack.c.b16 %v282, %v278
      %v327 = vpack.c.b16 %v283, %v279
      %v328 = vpack.c.b16 %v288, %v284
      %v329 = vpack.c.b16 %v289, %v285
      %v330 = vpack.c.b16 %v290, %v286
      %v331 = vpack.c.b16 %v291, %v287
      %v332 = vpack.c.b16 %v296, %v292
      %v333 = vpack.c.b16 %v297, %v293
      %v334 = vpack.c.b16 %v298, %v294
      %v335 = vpack.c.b16 %v299, %v295
      %v336 = vpack.c.b16 %v304, %v300
      %v337 = vpack.c.b16 %v305, %v301
      %v338 = vpack.c.b16 %v306, %v302
      %v339 = vpack.c.b16 %v307, %v303
      %372 = vmatpush.bf16.msra.mxu0 %v336
      %373 = vmatpush.bf16.msra.mxu0 %v332
      %374 = vmatpush.bf16.msra.mxu0 %v328
      %375 = vmatpush.bf16.msra.mxu0 %v324
      %376 = vmatpush.bf16.msra.mxu0 %v320
      %377 = vmatpush.bf16.msra.mxu0 %v316
      %378 = vmatpush.bf16.msra.mxu0 %v312
      %379 = vmatpush.bf16.msra.mxu0 %v308
      %380 = vmatmul.bf16.gmra.mxu0 %v171
      %v381 = vpop.f32.mrf.mxu0
      %v382 = vadd.f32 %v204, %v381
      %v383 = vpop.f32.mrf.mxu0
      %v384 = vadd.f32 %v208, %v383
      %385 = vdwg.mxu0
      %386 = vmatpush.bf16.msra.mxu0 %v337
      %387 = vmatpush.bf16.msra.mxu0 %v333
      %388 = vmatpush.bf16.msra.mxu0 %v329
      %389 = vmatpush.bf16.msra.mxu0 %v325
      %390 = vmatpush.bf16.msra.mxu0 %v321
      %391 = vmatpush.bf16.msra.mxu0 %v317
      %392 = vmatpush.bf16.msra.mxu0 %v313
      %393 = vmatpush.bf16.msra.mxu0 %v309
      %394 = vmatmul.bf16.gmra.mxu0 %v171
      %v395 = vpop.f32.mrf.mxu0
      %v396 = vadd.f32 %v205, %v395
      %v397 = vpop.f32.mrf.mxu0
      %v398 = vadd.f32 %v209, %v397
      %399 = vdwg.mxu0
      %400 = vmatpush.bf16.msra.mxu0 %v338
      %401 = vmatpush.bf16.msra.mxu0 %v334
      %402 = vmatpush.bf16.msra.mxu0 %v330
      %403 = vmatpush.bf16.msra.mxu0 %v326
      %404 = vmatpush.bf16.msra.mxu0 %v322
      %405 = vmatpush.bf16.msra.mxu0 %v318
      %406 = vmatpush.bf16.msra.mxu0 %v314
      %407 = vmatpush.bf16.msra.mxu0 %v310
      %408 = vmatmul.bf16.gmra.mxu0 %v171
      %v409 = vpop.f32.mrf.mxu0
      %v410 = vadd.f32 %v206, %v409
      %v411 = vpop.f32.mrf.mxu0
      %v412 = vadd.f32 %v210, %v411
      %413 = vdwg.mxu0
      %414 = vmatpush.bf16.msra.mxu0 %v339
      %415 = vmatpush.bf16.msra.mxu0 %v335
      %416 = vmatpush.bf16.msra.mxu0 %v331
      %417 = vmatpush.bf16.msra.mxu0 %v327
      %418 = vmatpush.bf16.msra.mxu0 %v323
      %419 = vmatpush.bf16.msra.mxu0 %v319
      %420 = vmatpush.bf16.msra.mxu0 %v315
      %421 = vmatpush.bf16.msra.mxu0 %v311
      %422 = vmatmul.bf16.gmra.mxu0 %v171
      %v423 = vpop.f32.mrf.mxu0
      %v424 = vadd.f32 %v207, %v423
      %v425 = vpop.f32.mrf.mxu0
      %v426 = vadd.f32 %v211, %v425
      %427 = vdwg.mxu0
      %v428 = vxor.u32 %v382, 2147483648
      %v429 = vxor.u32 %v384, 2147483648
      %v430 = vmul.f32 %v428, 1.442695
      %v431 = vpow.pop %v430
      %v432 = vmul.f32 %v429, 1.442695
      %v433 = vpow.pop %v432
      %v434 = vadd.f32 %v431, 1.0
      %v435 = vadd.f32 %v433, 1.0
      %v436 = vrcp.pop %v434
      %v437 = vmul.f32 %v434, %v436
      %v438 = vsub.f32 1.0, %v437
      %v439 = vmul.f32 %v436, %v438
      %v440 = vadd.f32 %v436, %v439
      %vm441 = vweird.f32 %v434
      %vm442 = vweird.f32 %v436
      %vm443 = vmor %vm441, %vm442
      %v444 = vsel %vm443, %v436, %v440
      %v445 = vand.u32 2147483647, %v434
      %vm446 = vcmp.eq.f32.partialorder %v445, 8.507059e+37
      %v447 = vand.u32 %v434, 2147483648
      %v448 = vor.u32 1.1754944e-38, %v447
      %v449 = vsel %vm446, %v448, %v444
      %v450 = vmul.f32 1.0, %v449
      %v451 = vrcp.pop %v435
      %v452 = vmul.f32 %v435, %v451
      %v453 = vsub.f32 1.0, %v452
      %v454 = vmul.f32 %v451, %v453
      %v455 = vadd.f32 %v451, %v454
      %vm456 = vweird.f32 %v435
      %vm457 = vweird.f32 %v451
      %vm458 = vmor %vm456, %vm457
      %v459 = vsel %vm458, %v451, %v455
      %v460 = vand.u32 2147483647, %v435
      %vm461 = vcmp.eq.f32.partialorder %v460, 8.507059e+37
      %v462 = vand.u32 %v435, 2147483648
      %v463 = vor.u32 1.1754944e-38, %v462
      %v464 = vsel %vm461, %v463, %v459
      %v465 = vmul.f32 1.0, %v464
      %v466 = vxor.u32 %v396, 2147483648
      %v467 = vxor.u32 %v398, 2147483648
      %v468 = vmul.f32 %v466, 1.442695
      %v469 = vpow.pop %v468
      %v470 = vmul.f32 %v467, 1.442695
      %v471 = vpow.pop %v470
      %v472 = vadd.f32 %v469, 1.0
      %v473 = vadd.f32 %v471, 1.0
      %v474 = vrcp.pop %v472
      %v475 = vmul.f32 %v472, %v474
      %v476 = vsub.f32 1.0, %v475
      %v477 = vmul.f32 %v474, %v476
      %v478 = vadd.f32 %v474, %v477
      %vm479 = vweird.f32 %v472
      %vm480 = vweird.f32 %v474
      %vm481 = vmor %vm479, %vm480
      %v482 = vsel %vm481, %v474, %v478
      %v483 = vand.u32 2147483647, %v472
      %vm484 = vcmp.eq.f32.partialorder %v483, 8.507059e+37
      %v485 = vand.u32 %v472, 2147483648
      %v486 = vor.u32 1.1754944e-38, %v485
      %v487 = vsel %vm484, %v486, %v482
      %v488 = vmul.f32 1.0, %v487
      %v489 = vrcp.pop %v473
      %v490 = vmul.f32 %v473, %v489
      %v491 = vsub.f32 1.0, %v490
      %v492 = vmul.f32 %v489, %v491
      %v493 = vadd.f32 %v489, %v492
      %vm494 = vweird.f32 %v473
      %vm495 = vweird.f32 %v489
      %vm496 = vmor %vm494, %vm495
      %v497 = vsel %vm496, %v489, %v493
      %v498 = vand.u32 2147483647, %v473
      %vm499 = vcmp.eq.f32.partialorder %v498, 8.507059e+37
      %v500 = vand.u32 %v473, 2147483648
      %v501 = vor.u32 1.1754944e-38, %v500
      %v502 = vsel %vm499, %v501, %v497
      %v503 = vmul.f32 1.0, %v502
      %v504 = vtanh.pop %v410
      %v505 = vtanh.pop %v412
      %v506 = vxor.u32 %v424, 2147483648
      %v507 = vxor.u32 %v426, 2147483648
      %v508 = vmul.f32 %v506, 1.442695
      %v509 = vpow.pop %v508
      %v510 = vmul.f32 %v507, 1.442695
      %v511 = vpow.pop %v510
      %v512 = vadd.f32 %v509, 1.0
      %v513 = vadd.f32 %v511, 1.0
      %v514 = vrcp.pop %v512
      %v515 = vmul.f32 %v512, %v514
      %v516 = vsub.f32 1.0, %v515
      %v517 = vmul.f32 %v514, %v516
      %v518 = vadd.f32 %v514, %v517
      %vm519 = vweird.f32 %v512
      %vm520 = vweird.f32 %v514
      %vm521 = vmor %vm519, %vm520
      %v522 = vsel %vm521, %v514, %v518
      %v523 = vand.u32 2147483647, %v512
      %vm524 = vcmp.eq.f32.partialorder %v523, 8.507059e+37
      %v525 = vand.u32 %v512, 2147483648
      %v526 = vor.u32 1.1754944e-38, %v525
      %v527 = vsel %vm524, %v526, %v522
      %v528 = vmul.f32 1.0, %v527
      %v529 = vrcp.pop %v513
      %v530 = vmul.f32 %v513, %v529
      %v531 = vsub.f32 1.0, %v530
      %v532 = vmul.f32 %v529, %v531
      %v533 = vadd.f32 %v529, %v532
      %vm534 = vweird.f32 %v513
      %vm535 = vweird.f32 %v529
      %vm536 = vmor %vm534, %vm535
      %v537 = vsel %vm536, %v529, %v533
      %v538 = vand.u32 2147483647, %v513
      %vm539 = vcmp.eq.f32.partialorder %v538, 8.507059e+37
      %v540 = vand.u32 %v513, 2147483648
      %v541 = vor.u32 1.1754944e-38, %v540
      %v542 = vsel %vm539, %v541, %v537
      %v543 = vmul.f32 1.0, %v542
      %v544 = vmul.f32 %v488, %v169
      %v545 = vmul.f32 %v503, %v170
      %v546 = vmul.f32 %v450, %v504
      %v547 = vmul.f32 %v465, %v505
      %v548 = vadd.f32 %v544, %v546
      %v549 = vadd.f32 %v545, %v547
      %550 = vst [vmem:[%s3] sm:$0xff] %v548
      %551 = vst [vmem:[%s3 + $0x8] sm:$0xff] %v549
      %v552 = vtanh.pop %v548
      %v553 = vtanh.pop %v549
      %v554 = vmul.f32 %v528, %v552
      %v555 = vmul.f32 %v543, %v553
      %556 = vst [vmem:[%s2] sm:$0xff] %v554
      %557 = vst [vmem:[%s2 + $0x8] sm:$0xff] %v555
      %v558 = vld [vmem:[%s2] sm:$0xff]
      %v559 = vld [vmem:[%s2 + $0x8] sm:$0xff]
      %v560 = vld [vmem:[%s3] sm:$0xff]
      %v561 = vld [vmem:[%s3 + $0x8] sm:$0xff]
      %v562 = vpack.c.bf16 %v559, %v558
      %v563 = vld [vmem:[%s1] sm:$0xff]
      %v564 = vld [vmem:[%s1 + $0x8] sm:$0xff]
      %v565 = vld [vmem:[%s1 + $0x10] sm:$0xff]
      %v566 = vld [vmem:[%s1 + $0x18] sm:$0xff]
      %v567 = vld [vmem:[%s1 + $0x20] sm:$0xff]
      %v568 = vld [vmem:[%s1 + $0x28] sm:$0xff]
      %v569 = vld [vmem:[%s1 + $0x30] sm:$0xff]
      %v570 = vld [vmem:[%s1 + $0x38] sm:$0xff]
      %v571 = vld [vmem:[%s1 + $0x40] sm:$0xff]
      %v572 = vld [vmem:[%s1 + $0x48] sm:$0xff]
      %v573 = vld [vmem:[%s1 + $0x50] sm:$0xff]
      %v574 = vld [vmem:[%s1 + $0x58] sm:$0xff]
      %v575 = vld [vmem:[%s1 + $0x60] sm:$0xff]
      %v576 = vld [vmem:[%s1 + $0x68] sm:$0xff]
      %v577 = vld [vmem:[%s1 + $0x70] sm:$0xff]
      %v578 = vld [vmem:[%s1 + $0x78] sm:$0xff]
      %v579 = vld [vmem:[%s1 + $0x80] sm:$0xff]
      %v580 = vld [vmem:[%s1 + $0x88] sm:$0xff]
      %v581 = vld [vmem:[%s1 + $0x90] sm:$0xff]
      %v582 = vld [vmem:[%s1 + $0x98] sm:$0xff]
      %v583 = vld [vmem:[%s1 + $0xa0] sm:$0xff]
      %v584 = vld [vmem:[%s1 + $0xa8] sm:$0xff]
      %v585 = vld [vmem:[%s1 + $0xb0] sm:$0xff]
      %v586 = vld [vmem:[%s1 + $0xb8] sm:$0xff]
      %v587 = vld [vmem:[%s1 + $0xc0] sm:$0xff]
      %v588 = vld [vmem:[%s1 + $0xc8] sm:$0xff]
      %v589 = vld [vmem:[%s1 + $0xd0] sm:$0xff]
      %v590 = vld [vmem:[%s1 + $0xd8] sm:$0xff]
      %v591 = vld [vmem:[%s1 + $0xe0] sm:$0xff]
      %v592 = vld [vmem:[%s1 + $0xe8] sm:$0xff]
      %v593 = vld [vmem:[%s1 + $0xf0] sm:$0xff]
      %v594 = vld [vmem:[%s1 + $0xf8] sm:$0xff]
      %s595 = scalar_lea.vmem %s157, 64
      %v596 = vld [vmem:[%s595] sm:$0xff]
      %v597 = vld [vmem:[%s595 + $0x8] sm:$0xff]
      %v598 = vld [vmem:[%s595 + $0x10] sm:$0xff]
      %v599 = vld [vmem:[%s595 + $0x18] sm:$0xff]
      %v600 = vld [vmem:[%s595 + $0x20] sm:$0xff]
      %v601 = vld [vmem:[%s595 + $0x28] sm:$0xff]
      %v602 = vld [vmem:[%s595 + $0x30] sm:$0xff]
      %v603 = vld [vmem:[%s595 + $0x38] sm:$0xff]
      %v636 = vunpack.c.l.b16 %v563
      %v637 = vunpack.c.h.b16 %v563
      %v638 = vunpack.c.l.b16 %v564
      %v639 = vunpack.c.h.b16 %v564
      %v640 = vunpack.c.l.b16 %v565
      %v641 = vunpack.c.h.b16 %v565
      %v642 = vunpack.c.l.b16 %v566
      %v643 = vunpack.c.h.b16 %v566
      %v644 = vunpack.c.l.b16 %v567
      %v645 = vunpack.c.h.b16 %v567
      %v646 = vunpack.c.l.b16 %v568
      %v647 = vunpack.c.h.b16 %v568
      %v648 = vunpack.c.l.b16 %v569
      %v649 = vunpack.c.h.b16 %v569
      %v650 = vunpack.c.l.b16 %v570
      %v651 = vunpack.c.h.b16 %v570
      %v652 = vunpack.c.l.b16 %v571
      %v653 = vunpack.c.h.b16 %v571
      %v654 = vunpack.c.l.b16 %v572
      %v655 = vunpack.c.h.b16 %v572
      %v656 = vunpack.c.l.b16 %v573
      %v657 = vunpack.c.h.b16 %v573
      %v658 = vunpack.c.l.b16 %v574
      %v659 = vunpack.c.h.b16 %v574
      %v660 = vunpack.c.l.b16 %v575
      %v661 = vunpack.c.h.b16 %v575
      %v662 = vunpack.c.l.b16 %v576
      %v663 = vunpack.c.h.b16 %v576
      %v664 = vunpack.c.l.b16 %v577
      %v665 = vunpack.c.h.b16 %v577
      %v666 = vunpack.c.l.b16 %v578
      %v667 = vunpack.c.h.b16 %v578
      %v668 = vunpack.c.l.b16 %v579
      %v669 = vunpack.c.h.b16 %v579
      %v670 = vunpack.c.l.b16 %v580
      %v671 = vunpack.c.h.b16 %v580
      %v672 = vunpack.c.l.b16 %v581
      %v673 = vunpack.c.h.b16 %v581
      %v674 = vunpack.c.l.b16 %v582
      %v675 = vunpack.c.h.b16 %v582
      %v676 = vunpack.c.l.b16 %v583
      %v677 = vunpack.c.h.b16 %v583
      %v678 = vunpack.c.l.b16 %v584
      %v679 = vunpack.c.h.b16 %v584
      %v680 = vunpack.c.l.b16 %v585
      %v681 = vunpack.c.h.b16 %v585
      %v682 = vunpack.c.l.b16 %v586
      %v683 = vunpack.c.h.b16 %v586
      %v684 = vunpack.c.l.b16 %v587
      %v685 = vunpack.c.h.b16 %v587
      %v686 = vunpack.c.l.b16 %v588
      %v687 = vunpack.c.h.b16 %v588
      %v688 = vunpack.c.l.b16 %v589
      %v689 = vunpack.c.h.b16 %v589
      %v690 = vunpack.c.l.b16 %v590
      %v691 = vunpack.c.h.b16 %v590
      %v692 = vunpack.c.l.b16 %v591
      %v693 = vunpack.c.h.b16 %v591
      %v694 = vunpack.c.l.b16 %v592
      %v695 = vunpack.c.h.b16 %v592
      %v696 = vunpack.c.l.b16 %v593
      %v697 = vunpack.c.h.b16 %v593
      %v698 = vunpack.c.l.b16 %v594
      %v699 = vunpack.c.h.b16 %v594
      %v700 = vpack.c.b16 %v640, %v636
      %v701 = vpack.c.b16 %v641, %v637
      %v702 = vpack.c.b16 %v642, %v638
      %v703 = vpack.c.b16 %v643, %v639
      %v704 = vpack.c.b16 %v648, %v644
      %v705 = vpack.c.b16 %v649, %v645
      %v706 = vpack.c.b16 %v650, %v646
      %v707 = vpack.c.b16 %v651, %v647
      %v708 = vpack.c.b16 %v656, %v652
      %v709 = vpack.c.b16 %v657, %v653
      %v710 = vpack.c.b16 %v658, %v654
      %v711 = vpack.c.b16 %v659, %v655
      %v712 = vpack.c.b16 %v664, %v660
      %v713 = vpack.c.b16 %v665, %v661
      %v714 = vpack.c.b16 %v666, %v662
      %v715 = vpack.c.b16 %v667, %v663
      %v716 = vpack.c.b16 %v672, %v668
      %v717 = vpack.c.b16 %v673, %v669
      %v718 = vpack.c.b16 %v674, %v670
      %v719 = vpack.c.b16 %v675, %v671
      %v720 = vpack.c.b16 %v680, %v676
      %v721 = vpack.c.b16 %v681, %v677
      %v722 = vpack.c.b16 %v682, %v678
      %v723 = vpack.c.b16 %v683, %v679
      %v724 = vpack.c.b16 %v688, %v684
      %v725 = vpack.c.b16 %v689, %v685
      %v726 = vpack.c.b16 %v690, %v686
      %v727 = vpack.c.b16 %v691, %v687
      %v728 = vpack.c.b16 %v696, %v692
      %v729 = vpack.c.b16 %v697, %v693
      %v730 = vpack.c.b16 %v698, %v694
      %v731 = vpack.c.b16 %v699, %v695
      %764 = vmatpush.bf16.msra.mxu0 %v728
      %765 = vmatpush.bf16.msra.mxu0 %v724
      %766 = vmatpush.bf16.msra.mxu0 %v720
      %767 = vmatpush.bf16.msra.mxu0 %v716
      %768 = vmatpush.bf16.msra.mxu0 %v712
      %769 = vmatpush.bf16.msra.mxu0 %v708
      %770 = vmatpush.bf16.msra.mxu0 %v704
      %771 = vmatpush.bf16.msra.mxu0 %v700
      %772 = vmatmul.bf16.gmra.mxu0 %v562
      %v773 = vpop.f32.mrf.mxu0
      %v774 = vadd.f32 %v596, %v773
      %v775 = vpop.f32.mrf.mxu0
      %v776 = vadd.f32 %v600, %v775
      %777 = vdwg.mxu0
      %778 = vmatpush.bf16.msra.mxu0 %v729
      %779 = vmatpush.bf16.msra.mxu0 %v725
      %780 = vmatpush.bf16.msra.mxu0 %v721
      %781 = vmatpush.bf16.msra.mxu0 %v717
      %782 = vmatpush.bf16.msra.mxu0 %v713
      %783 = vmatpush.bf16.msra.mxu0 %v709
      %784 = vmatpush.bf16.msra.mxu0 %v705
      %785 = vmatpush.bf16.msra.mxu0 %v701
      %786 = vmatmul.bf16.gmra.mxu0 %v562
      %v787 = vpop.f32.mrf.mxu0
      %v788 = vadd.f32 %v597, %v787
      %v789 = vpop.f32.mrf.mxu0
      %v790 = vadd.f32 %v601, %v789
      %791 = vdwg.mxu0
      %792 = vmatpush.bf16.msra.mxu0 %v730
      %793 = vmatpush.bf16.msra.mxu0 %v726
      %794 = vmatpush.bf16.msra.mxu0 %v722
      %795 = vmatpush.bf16.msra.mxu0 %v718
      %796 = vmatpush.bf16.msra.mxu0 %v714
      %797 = vmatpush.bf16.msra.mxu0 %v710
      %798 = vmatpush.bf16.msra.mxu0 %v706
      %799 = vmatpush.bf16.msra.mxu0 %v702
      %800 = vmatmul.bf16.gmra.mxu0 %v562
      %v801 = vpop.f32.mrf.mxu0
      %v802 = vadd.f32 %v598, %v801
      %v803 = vpop.f32.mrf.mxu0
      %v804 = vadd.f32 %v602, %v803
      %805 = vdwg.mxu0
      %806 = vmatpush.bf16.msra.mxu0 %v731
      %807 = vmatpush.bf16.msra.mxu0 %v727
      %808 = vmatpush.bf16.msra.mxu0 %v723
      %809 = vmatpush.bf16.msra.mxu0 %v719
      %810 = vmatpush.bf16.msra.mxu0 %v715
      %811 = vmatpush.bf16.msra.mxu0 %v711
      %812 = vmatpush.bf16.msra.mxu0 %v707
      %813 = vmatpush.bf16.msra.mxu0 %v703
      %814 = vmatmul.bf16.gmra.mxu0 %v562
      %v815 = vpop.f32.mrf.mxu0
      %v816 = vadd.f32 %v599, %v815
      %v817 = vpop.f32.mrf.mxu0
      %v818 = vadd.f32 %v603, %v817
      %819 = vdwg.mxu0
      %v820 = vxor.u32 %v774, 2147483648
      %v821 = vxor.u32 %v776, 2147483648
      %v822 = vmul.f32 %v820, 1.442695
      %v823 = vpow.pop %v822
      %v824 = vmul.f32 %v821, 1.442695
      %v825 = vpow.pop %v824
      %v826 = vadd.f32 %v823, 1.0
      %v827 = vadd.f32 %v825, 1.0
      %v828 = vrcp.pop %v826
      %v829 = vmul.f32 %v826, %v828
      %v830 = vsub.f32 1.0, %v829
      %v831 = vmul.f32 %v828, %v830
      %v832 = vadd.f32 %v828, %v831
      %vm833 = vweird.f32 %v826
      %vm834 = vweird.f32 %v828
      %vm835 = vmor %vm833, %vm834
      %v836 = vsel %vm835, %v828, %v832
      %v837 = vand.u32 2147483647, %v826
      %vm838 = vcmp.eq.f32.partialorder %v837, 8.507059e+37
      %v839 = vand.u32 %v826, 2147483648
      %v840 = vor.u32 1.1754944e-38, %v839
      %v841 = vsel %vm838, %v840, %v836
      %v842 = vmul.f32 1.0, %v841
      %v843 = vrcp.pop %v827
      %v844 = vmul.f32 %v827, %v843
      %v845 = vsub.f32 1.0, %v844
      %v846 = vmul.f32 %v843, %v845
      %v847 = vadd.f32 %v843, %v846
      %vm848 = vweird.f32 %v827
      %vm849 = vweird.f32 %v843
      %vm850 = vmor %vm848, %vm849
      %v851 = vsel %vm850, %v843, %v847
      %v852 = vand.u32 2147483647, %v827
      %vm853 = vcmp.eq.f32.partialorder %v852, 8.507059e+37
      %v854 = vand.u32 %v827, 2147483648
      %v855 = vor.u32 1.1754944e-38, %v854
      %v856 = vsel %vm853, %v855, %v851
      %v857 = vmul.f32 1.0, %v856
      %v858 = vxor.u32 %v788, 2147483648
      %v859 = vxor.u32 %v790, 2147483648
      %v860 = vmul.f32 %v858, 1.442695
      %v861 = vpow.pop %v860
      %v862 = vmul.f32 %v859, 1.442695
      %v863 = vpow.pop %v862
      %v864 = vadd.f32 %v861, 1.0
      %v865 = vadd.f32 %v863, 1.0
      %v866 = vrcp.pop %v864
      %v867 = vmul.f32 %v864, %v866
      %v868 = vsub.f32 1.0, %v867
      %v869 = vmul.f32 %v866, %v868
      %v870 = vadd.f32 %v866, %v869
      %vm871 = vweird.f32 %v864
      %vm872 = vweird.f32 %v866
      %vm873 = vmor %vm871, %vm872
      %v874 = vsel %vm873, %v866, %v870
      %v875 = vand.u32 2147483647, %v864
      %vm876 = vcmp.eq.f32.partialorder %v875, 8.507059e+37
      %v877 = vand.u32 %v864, 2147483648
      %v878 = vor.u32 1.1754944e-38, %v877
      %v879 = vsel %vm876, %v878, %v874
      %v880 = vmul.f32 1.0, %v879
      %v881 = vrcp.pop %v865
      %v882 = vmul.f32 %v865, %v881
      %v883 = vsub.f32 1.0, %v882
      %v884 = vmul.f32 %v881, %v883
      %v885 = vadd.f32 %v881, %v884
      %vm886 = vweird.f32 %v865
      %vm887 = vweird.f32 %v881
      %vm888 = vmor %vm886, %vm887
      %v889 = vsel %vm888, %v881, %v885
      %v890 = vand.u32 2147483647, %v865
      %vm891 = vcmp.eq.f32.partialorder %v890, 8.507059e+37
      %v892 = vand.u32 %v865, 2147483648
      %v893 = vor.u32 1.1754944e-38, %v892
      %v894 = vsel %vm891, %v893, %v889
      %v895 = vmul.f32 1.0, %v894
      %v896 = vtanh.pop %v802
      %v897 = vtanh.pop %v804
      %v898 = vxor.u32 %v816, 2147483648
      %v899 = vxor.u32 %v818, 2147483648
      %v900 = vmul.f32 %v898, 1.442695
      %v901 = vpow.pop %v900
      %v902 = vmul.f32 %v899, 1.442695
      %v903 = vpow.pop %v902
      %v904 = vadd.f32 %v901, 1.0
      %v905 = vadd.f32 %v903, 1.0
      %v906 = vrcp.pop %v904
      %v907 = vmul.f32 %v904, %v906
      %v908 = vsub.f32 1.0, %v907
      %v909 = vmul.f32 %v906, %v908
      %v910 = vadd.f32 %v906, %v909
      %vm911 = vweird.f32 %v904
      %vm912 = vweird.f32 %v906
      %vm913 = vmor %vm911, %vm912
      %v914 = vsel %vm913, %v906, %v910
      %v915 = vand.u32 2147483647, %v904
      %vm916 = vcmp.eq.f32.partialorder %v915, 8.507059e+37
      %v917 = vand.u32 %v904, 2147483648
      %v918 = vor.u32 1.1754944e-38, %v917
      %v919 = vsel %vm916, %v918, %v914
      %v920 = vmul.f32 1.0, %v919
      %v921 = vrcp.pop %v905
      %v922 = vmul.f32 %v905, %v921
      %v923 = vsub.f32 1.0, %v922
      %v924 = vmul.f32 %v921, %v923
      %v925 = vadd.f32 %v921, %v924
      %vm926 = vweird.f32 %v905
      %vm927 = vweird.f32 %v921
      %vm928 = vmor %vm926, %vm927
      %v929 = vsel %vm928, %v921, %v925
      %v930 = vand.u32 2147483647, %v905
      %vm931 = vcmp.eq.f32.partialorder %v930, 8.507059e+37
      %v932 = vand.u32 %v905, 2147483648
      %v933 = vor.u32 1.1754944e-38, %v932
      %v934 = vsel %vm931, %v933, %v929
      %v935 = vmul.f32 1.0, %v934
      %v936 = vmul.f32 %v880, %v560
      %v937 = vmul.f32 %v895, %v561
      %v938 = vmul.f32 %v842, %v896
      %v939 = vmul.f32 %v857, %v897
      %v940 = vadd.f32 %v936, %v938
      %v941 = vadd.f32 %v937, %v939
      %942 = vst [vmem:[%s3] sm:$0xff] %v940
      %943 = vst [vmem:[%s3 + $0x8] sm:$0xff] %v941
      %v944 = vtanh.pop %v940
      %v945 = vtanh.pop %v941
      %v946 = vmul.f32 %v920, %v944
      %v947 = vmul.f32 %v935, %v945
      %948 = vst [vmem:[%s2] sm:$0xff] %v946
      %949 = vst [vmem:[%s2 + $0x8] sm:$0xff] %v947
      %v950 = vld [vmem:[%s2] sm:$0xff]
      %v951 = vld [vmem:[%s2 + $0x8] sm:$0xff]
      %v952 = vld [vmem:[%s3] sm:$0xff]
      %v953 = vld [vmem:[%s3 + $0x8] sm:$0xff]
      %v954 = vpack.c.bf16 %v951, %v950
      %v955 = vld [vmem:[%s1] sm:$0xff]
      %v956 = vld [vmem:[%s1 + $0x8] sm:$0xff]
      %v957 = vld [vmem:[%s1 + $0x10] sm:$0xff]
      %v958 = vld [vmem:[%s1 + $0x18] sm:$0xff]
      %v959 = vld [vmem:[%s1 + $0x20] sm:$0xff]
      %v960 = vld [vmem:[%s1 + $0x28] sm:$0xff]
      %v961 = vld [vmem:[%s1 + $0x30] sm:$0xff]
      %v962 = vld [vmem:[%s1 + $0x38] sm:$0xff]
      %v963 = vld [vmem:[%s1 + $0x40] sm:$0xff]
      %v964 = vld [vmem:[%s1 + $0x48] sm:$0xff]
      %v965 = vld [vmem:[%s1 + $0x50] sm:$0xff]
      %v966 = vld [vmem:[%s1 + $0x58] sm:$0xff]
      %v967 = vld [vmem:[%s1 + $0x60] sm:$0xff]
      %v968 = vld [vmem:[%s1 + $0x68] sm:$0xff]
      %v969 = vld [vmem:[%s1 + $0x70] sm:$0xff]
      %v970 = vld [vmem:[%s1 + $0x78] sm:$0xff]
      %v971 = vld [vmem:[%s1 + $0x80] sm:$0xff]
      %v972 = vld [vmem:[%s1 + $0x88] sm:$0xff]
      %v973 = vld [vmem:[%s1 + $0x90] sm:$0xff]
      %v974 = vld [vmem:[%s1 + $0x98] sm:$0xff]
      %v975 = vld [vmem:[%s1 + $0xa0] sm:$0xff]
      %v976 = vld [vmem:[%s1 + $0xa8] sm:$0xff]
      %v977 = vld [vmem:[%s1 + $0xb0] sm:$0xff]
      %v978 = vld [vmem:[%s1 + $0xb8] sm:$0xff]
      %v979 = vld [vmem:[%s1 + $0xc0] sm:$0xff]
      %v980 = vld [vmem:[%s1 + $0xc8] sm:$0xff]
      %v981 = vld [vmem:[%s1 + $0xd0] sm:$0xff]
      %v982 = vld [vmem:[%s1 + $0xd8] sm:$0xff]
      %v983 = vld [vmem:[%s1 + $0xe0] sm:$0xff]
      %v984 = vld [vmem:[%s1 + $0xe8] sm:$0xff]
      %v985 = vld [vmem:[%s1 + $0xf0] sm:$0xff]
      %v986 = vld [vmem:[%s1 + $0xf8] sm:$0xff]
      %s987 = scalar_lea.vmem %s157, 128
      %v988 = vld [vmem:[%s987] sm:$0xff]
      %v989 = vld [vmem:[%s987 + $0x8] sm:$0xff]
      %v990 = vld [vmem:[%s987 + $0x10] sm:$0xff]
      %v991 = vld [vmem:[%s987 + $0x18] sm:$0xff]
      %v992 = vld [vmem:[%s987 + $0x20] sm:$0xff]
      %v993 = vld [vmem:[%s987 + $0x28] sm:$0xff]
      %v994 = vld [vmem:[%s987 + $0x30] sm:$0xff]
      %v995 = vld [vmem:[%s987 + $0x38] sm:$0xff]
      %v1028 = vunpack.c.l.b16 %v955
      %v1029 = vunpack.c.h.b16 %v955
      %v1030 = vunpack.c.l.b16 %v956
      %v1031 = vunpack.c.h.b16 %v956
      %v1032 = vunpack.c.l.b16 %v957
      %v1033 = vunpack.c.h.b16 %v957
      %v1034 = vunpack.c.l.b16 %v958
      %v1035 = vunpack.c.h.b16 %v958
      %v1036 = vunpack.c.l.b16 %v959
      %v1037 = vunpack.c.h.b16 %v959
      %v1038 = vunpack.c.l.b16 %v960
      %v1039 = vunpack.c.h.b16 %v960
      %v1040 = vunpack.c.l.b16 %v961
      %v1041 = vunpack.c.h.b16 %v961
      %v1042 = vunpack.c.l.b16 %v962
      %v1043 = vunpack.c.h.b16 %v962
      %v1044 = vunpack.c.l.b16 %v963
      %v1045 = vunpack.c.h.b16 %v963
      %v1046 = vunpack.c.l.b16 %v964
      %v1047 = vunpack.c.h.b16 %v964
      %v1048 = vunpack.c.l.b16 %v965
      %v1049 = vunpack.c.h.b16 %v965
      %v1050 = vunpack.c.l.b16 %v966
      %v1051 = vunpack.c.h.b16 %v966
      %v1052 = vunpack.c.l.b16 %v967
      %v1053 = vunpack.c.h.b16 %v967
      %v1054 = vunpack.c.l.b16 %v968
      %v1055 = vunpack.c.h.b16 %v968
      %v1056 = vunpack.c.l.b16 %v969
      %v1057 = vunpack.c.h.b16 %v969
      %v1058 = vunpack.c.l.b16 %v970
      %v1059 = vunpack.c.h.b16 %v970
      %v1060 = vunpack.c.l.b16 %v971
      %v1061 = vunpack.c.h.b16 %v971
      %v1062 = vunpack.c.l.b16 %v972
      %v1063 = vunpack.c.h.b16 %v972
      %v1064 = vunpack.c.l.b16 %v973
      %v1065 = vunpack.c.h.b16 %v973
      %v1066 = vunpack.c.l.b16 %v974
      %v1067 = vunpack.c.h.b16 %v974
      %v1068 = vunpack.c.l.b16 %v975
      %v1069 = vunpack.c.h.b16 %v975
      %v1070 = vunpack.c.l.b16 %v976
      %v1071 = vunpack.c.h.b16 %v976
      %v1072 = vunpack.c.l.b16 %v977
      %v1073 = vunpack.c.h.b16 %v977
      %v1074 = vunpack.c.l.b16 %v978
      %v1075 = vunpack.c.h.b16 %v978
      %v1076 = vunpack.c.l.b16 %v979
      %v1077 = vunpack.c.h.b16 %v979
      %v1078 = vunpack.c.l.b16 %v980
      %v1079 = vunpack.c.h.b16 %v980
      %v1080 = vunpack.c.l.b16 %v981
      %v1081 = vunpack.c.h.b16 %v981
      %v1082 = vunpack.c.l.b16 %v982
      %v1083 = vunpack.c.h.b16 %v982
      %v1084 = vunpack.c.l.b16 %v983
      %v1085 = vunpack.c.h.b16 %v983
      %v1086 = vunpack.c.l.b16 %v984
      %v1087 = vunpack.c.h.b16 %v984
      %v1088 = vunpack.c.l.b16 %v985
      %v1089 = vunpack.c.h.b16 %v985
      %v1090 = vunpack.c.l.b16 %v986
      %v1091 = vunpack.c.h.b16 %v986
      %v1092 = vpack.c.b16 %v1032, %v1028
      %v1093 = vpack.c.b16 %v1033, %v1029
      %v1094 = vpack.c.b16 %v1034, %v1030
      %v1095 = vpack.c.b16 %v1035, %v1031
      %v1096 = vpack.c.b16 %v1040, %v1036
      %v1097 = vpack.c.b16 %v1041, %v1037
      %v1098 = vpack.c.b16 %v1042, %v1038
      %v1099 = vpack.c.b16 %v1043, %v1039
      %v1100 = vpack.c.b16 %v1048, %v1044
      %v1101 = vpack.c.b16 %v1049, %v1045
      %v1102 = vpack.c.b16 %v1050, %v1046
      %v1103 = vpack.c.b16 %v1051, %v1047
      %v1104 = vpack.c.b16 %v1056, %v1052
      %v1105 = vpack.c.b16 %v1057, %v1053
      %v1106 = vpack.c.b16 %v1058, %v1054
      %v1107 = vpack.c.b16 %v1059, %v1055
      %v1108 = vpack.c.b16 %v1064, %v1060
      %v1109 = vpack.c.b16 %v1065, %v1061
      %v1110 = vpack.c.b16 %v1066, %v1062
      %v1111 = vpack.c.b16 %v1067, %v1063
      %v1112 = vpack.c.b16 %v1072, %v1068
      %v1113 = vpack.c.b16 %v1073, %v1069
      %v1114 = vpack.c.b16 %v1074, %v1070
      %v1115 = vpack.c.b16 %v1075, %v1071
      %v1116 = vpack.c.b16 %v1080, %v1076
      %v1117 = vpack.c.b16 %v1081, %v1077
      %v1118 = vpack.c.b16 %v1082, %v1078
      %v1119 = vpack.c.b16 %v1083, %v1079
      %v1120 = vpack.c.b16 %v1088, %v1084
      %v1121 = vpack.c.b16 %v1089, %v1085
      %v1122 = vpack.c.b16 %v1090, %v1086
      %v1123 = vpack.c.b16 %v1091, %v1087
      %1156 = vmatpush.bf16.msra.mxu0 %v1120
      %1157 = vmatpush.bf16.msra.mxu0 %v1116
      %1158 = vmatpush.bf16.msra.mxu0 %v1112
      %1159 = vmatpush.bf16.msra.mxu0 %v1108
      %1160 = vmatpush.bf16.msra.mxu0 %v1104
      %1161 = vmatpush.bf16.msra.mxu0 %v1100
      %1162 = vmatpush.bf16.msra.mxu0 %v1096
      %1163 = vmatpush.bf16.msra.mxu0 %v1092
      %1164 = vmatmul.bf16.gmra.mxu0 %v954
      %v1165 = vpop.f32.mrf.mxu0
      %v1166 = vadd.f32 %v988, %v1165
      %v1167 = vpop.f32.mrf.mxu0
      %v1168 = vadd.f32 %v992, %v1167
      %1169 = vdwg.mxu0
      %1170 = vmatpush.bf16.msra.mxu0 %v1121
      %1171 = vmatpush.bf16.msra.mxu0 %v1117
      %1172 = vmatpush.bf16.msra.mxu0 %v1113
      %1173 = vmatpush.bf16.msra.mxu0 %v1109
      %1174 = vmatpush.bf16.msra.mxu0 %v1105
      %1175 = vmatpush.bf16.msra.mxu0 %v1101
      %1176 = vmatpush.bf16.msra.mxu0 %v1097
      %1177 = vmatpush.bf16.msra.mxu0 %v1093
      %1178 = vmatmul.bf16.gmra.mxu0 %v954
      %v1179 = vpop.f32.mrf.mxu0
      %v1180 = vadd.f32 %v989, %v1179
      %v1181 = vpop.f32.mrf.mxu0
      %v1182 = vadd.f32 %v993, %v1181
      %1183 = vdwg.mxu0
      %1184 = vmatpush.bf16.msra.mxu0 %v1122
      %1185 = vmatpush.bf16.msra.mxu0 %v1118
      %1186 = vmatpush.bf16.msra.mxu0 %v1114
      %1187 = vmatpush.bf16.msra.mxu0 %v1110
      %1188 = vmatpush.bf16.msra.mxu0 %v1106
      %1189 = vmatpush.bf16.msra.mxu0 %v1102
      %1190 = vmatpush.bf16.msra.mxu0 %v1098
      %1191 = vmatpush.bf16.msra.mxu0 %v1094
      %1192 = vmatmul.bf16.gmra.mxu0 %v954
      %v1193 = vpop.f32.mrf.mxu0
      %v1194 = vadd.f32 %v990, %v1193
      %v1195 = vpop.f32.mrf.mxu0
      %v1196 = vadd.f32 %v994, %v1195
      %1197 = vdwg.mxu0
      %1198 = vmatpush.bf16.msra.mxu0 %v1123
      %1199 = vmatpush.bf16.msra.mxu0 %v1119
      %1200 = vmatpush.bf16.msra.mxu0 %v1115
      %1201 = vmatpush.bf16.msra.mxu0 %v1111
      %1202 = vmatpush.bf16.msra.mxu0 %v1107
      %1203 = vmatpush.bf16.msra.mxu0 %v1103
      %1204 = vmatpush.bf16.msra.mxu0 %v1099
      %1205 = vmatpush.bf16.msra.mxu0 %v1095
      %1206 = vmatmul.bf16.gmra.mxu0 %v954
      %v1207 = vpop.f32.mrf.mxu0
      %v1208 = vadd.f32 %v991, %v1207
      %v1209 = vpop.f32.mrf.mxu0
      %v1210 = vadd.f32 %v995, %v1209
      %1211 = vdwg.mxu0
      %v1212 = vxor.u32 %v1166, 2147483648
      %v1213 = vxor.u32 %v1168, 2147483648
      %v1214 = vmul.f32 %v1212, 1.442695
      %v1215 = vpow.pop %v1214
      %v1216 = vmul.f32 %v1213, 1.442695
      %v1217 = vpow.pop %v1216
      %v1218 = vadd.f32 %v1215, 1.0
      %v1219 = vadd.f32 %v1217, 1.0
      %v1220 = vrcp.pop %v1218
      %v1221 = vmul.f32 %v1218, %v1220
      %v1222 = vsub.f32 1.0, %v1221
      %v1223 = vmul.f32 %v1220, %v1222
      %v1224 = vadd.f32 %v1220, %v1223
      %vm1225 = vweird.f32 %v1218
      %vm1226 = vweird.f32 %v1220
      %vm1227 = vmor %vm1225, %vm1226
      %v1228 = vsel %vm1227, %v1220, %v1224
      %v1229 = vand.u32 2147483647, %v1218
      %vm1230 = vcmp.eq.f32.partialorder %v1229, 8.507059e+37
      %v1231 = vand.u32 %v1218, 2147483648
      %v1232 = vor.u32 1.1754944e-38, %v1231
      %v1233 = vsel %vm1230, %v1232, %v1228
      %v1234 = vmul.f32 1.0, %v1233
      %v1235 = vrcp.pop %v1219
      %v1236 = vmul.f32 %v1219, %v1235
      %v1237 = vsub.f32 1.0, %v1236
      %v1238 = vmul.f32 %v1235, %v1237
      %v1239 = vadd.f32 %v1235, %v1238
      %vm1240 = vweird.f32 %v1219
      %vm1241 = vweird.f32 %v1235
      %vm1242 = vmor %vm1240, %vm1241
      %v1243 = vsel %vm1242, %v1235, %v1239
      %v1244 = vand.u32 2147483647, %v1219
      %vm1245 = vcmp.eq.f32.partialorder %v1244, 8.507059e+37
      %v1246 = vand.u32 %v1219, 2147483648
      %v1247 = vor.u32 1.1754944e-38, %v1246
      %v1248 = vsel %vm1245, %v1247, %v1243
      %v1249 = vmul.f32 1.0, %v1248
      %v1250 = vxor.u32 %v1180, 2147483648
      %v1251 = vxor.u32 %v1182, 2147483648
      %v1252 = vmul.f32 %v1250, 1.442695
      %v1253 = vpow.pop %v1252
      %v1254 = vmul.f32 %v1251, 1.442695
      %v1255 = vpow.pop %v1254
      %v1256 = vadd.f32 %v1253, 1.0
      %v1257 = vadd.f32 %v1255, 1.0
      %v1258 = vrcp.pop %v1256
      %v1259 = vmul.f32 %v1256, %v1258
      %v1260 = vsub.f32 1.0, %v1259
      %v1261 = vmul.f32 %v1258, %v1260
      %v1262 = vadd.f32 %v1258, %v1261
      %vm1263 = vweird.f32 %v1256
      %vm1264 = vweird.f32 %v1258
      %vm1265 = vmor %vm1263, %vm1264
      %v1266 = vsel %vm1265, %v1258, %v1262
      %v1267 = vand.u32 2147483647, %v1256
      %vm1268 = vcmp.eq.f32.partialorder %v1267, 8.507059e+37
      %v1269 = vand.u32 %v1256, 2147483648
      %v1270 = vor.u32 1.1754944e-38, %v1269
      %v1271 = vsel %vm1268, %v1270, %v1266
      %v1272 = vmul.f32 1.0, %v1271
      %v1273 = vrcp.pop %v1257
      %v1274 = vmul.f32 %v1257, %v1273
      %v1275 = vsub.f32 1.0, %v1274
      %v1276 = vmul.f32 %v1273, %v1275
      %v1277 = vadd.f32 %v1273, %v1276
      %vm1278 = vweird.f32 %v1257
      %vm1279 = vweird.f32 %v1273
      %vm1280 = vmor %vm1278, %vm1279
      %v1281 = vsel %vm1280, %v1273, %v1277
      %v1282 = vand.u32 2147483647, %v1257
      %vm1283 = vcmp.eq.f32.partialorder %v1282, 8.507059e+37
      %v1284 = vand.u32 %v1257, 2147483648
      %v1285 = vor.u32 1.1754944e-38, %v1284
      %v1286 = vsel %vm1283, %v1285, %v1281
      %v1287 = vmul.f32 1.0, %v1286
      %v1288 = vtanh.pop %v1194
      %v1289 = vtanh.pop %v1196
      %v1290 = vxor.u32 %v1208, 2147483648
      %v1291 = vxor.u32 %v1210, 2147483648
      %v1292 = vmul.f32 %v1290, 1.442695
      %v1293 = vpow.pop %v1292
      %v1294 = vmul.f32 %v1291, 1.442695
      %v1295 = vpow.pop %v1294
      %v1296 = vadd.f32 %v1293, 1.0
      %v1297 = vadd.f32 %v1295, 1.0
      %v1298 = vrcp.pop %v1296
      %v1299 = vmul.f32 %v1296, %v1298
      %v1300 = vsub.f32 1.0, %v1299
      %v1301 = vmul.f32 %v1298, %v1300
      %v1302 = vadd.f32 %v1298, %v1301
      %vm1303 = vweird.f32 %v1296
      %vm1304 = vweird.f32 %v1298
      %vm1305 = vmor %vm1303, %vm1304
      %v1306 = vsel %vm1305, %v1298, %v1302
      %v1307 = vand.u32 2147483647, %v1296
      %vm1308 = vcmp.eq.f32.partialorder %v1307, 8.507059e+37
      %v1309 = vand.u32 %v1296, 2147483648
      %v1310 = vor.u32 1.1754944e-38, %v1309
      %v1311 = vsel %vm1308, %v1310, %v1306
      %v1312 = vmul.f32 1.0, %v1311
      %v1313 = vrcp.pop %v1297
      %v1314 = vmul.f32 %v1297, %v1313
      %v1315 = vsub.f32 1.0, %v1314
      %v1316 = vmul.f32 %v1313, %v1315
      %v1317 = vadd.f32 %v1313, %v1316
      %vm1318 = vweird.f32 %v1297
      %vm1319 = vweird.f32 %v1313
      %vm1320 = vmor %vm1318, %vm1319
      %v1321 = vsel %vm1320, %v1313, %v1317
      %v1322 = vand.u32 2147483647, %v1297
      %vm1323 = vcmp.eq.f32.partialorder %v1322, 8.507059e+37
      %v1324 = vand.u32 %v1297, 2147483648
      %v1325 = vor.u32 1.1754944e-38, %v1324
      %v1326 = vsel %vm1323, %v1325, %v1321
      %v1327 = vmul.f32 1.0, %v1326
      %v1328 = vmul.f32 %v1272, %v952
      %v1329 = vmul.f32 %v1287, %v953
      %v1330 = vmul.f32 %v1234, %v1288
      %v1331 = vmul.f32 %v1249, %v1289
      %v1332 = vadd.f32 %v1328, %v1330
      %v1333 = vadd.f32 %v1329, %v1331
      %1334 = vst [vmem:[%s3] sm:$0xff] %v1332
      %1335 = vst [vmem:[%s3 + $0x8] sm:$0xff] %v1333
      %v1336 = vtanh.pop %v1332
      %v1337 = vtanh.pop %v1333
      %v1338 = vmul.f32 %v1312, %v1336
      %v1339 = vmul.f32 %v1327, %v1337
      %1340 = vst [vmem:[%s2] sm:$0xff] %v1338
      %1341 = vst [vmem:[%s2 + $0x8] sm:$0xff] %v1339
      %v1342 = vld [vmem:[%s2] sm:$0xff]
      %v1343 = vld [vmem:[%s2 + $0x8] sm:$0xff]
      %v1344 = vld [vmem:[%s3] sm:$0xff]
      %v1345 = vld [vmem:[%s3 + $0x8] sm:$0xff]
      %v1346 = vpack.c.bf16 %v1343, %v1342
      %v1347 = vld [vmem:[%s1] sm:$0xff]
      %v1348 = vld [vmem:[%s1 + $0x8] sm:$0xff]
      %v1349 = vld [vmem:[%s1 + $0x10] sm:$0xff]
      %v1350 = vld [vmem:[%s1 + $0x18] sm:$0xff]
      %v1351 = vld [vmem:[%s1 + $0x20] sm:$0xff]
      %v1352 = vld [vmem:[%s1 + $0x28] sm:$0xff]
      %v1353 = vld [vmem:[%s1 + $0x30] sm:$0xff]
      %v1354 = vld [vmem:[%s1 + $0x38] sm:$0xff]
      %v1355 = vld [vmem:[%s1 + $0x40] sm:$0xff]
      %v1356 = vld [vmem:[%s1 + $0x48] sm:$0xff]
      %v1357 = vld [vmem:[%s1 + $0x50] sm:$0xff]
      %v1358 = vld [vmem:[%s1 + $0x58] sm:$0xff]
      %v1359 = vld [vmem:[%s1 + $0x60] sm:$0xff]
      %v1360 = vld [vmem:[%s1 + $0x68] sm:$0xff]
      %v1361 = vld [vmem:[%s1 + $0x70] sm:$0xff]
      %v1362 = vld [vmem:[%s1 + $0x78] sm:$0xff]
      %v1363 = vld [vmem:[%s1 + $0x80] sm:$0xff]
      %v1364 = vld [vmem:[%s1 + $0x88] sm:$0xff]
      %v1365 = vld [vmem:[%s1 + $0x90] sm:$0xff]
      %v1366 = vld [vmem:[%s1 + $0x98] sm:$0xff]
      %v1367 = vld [vmem:[%s1 + $0xa0] sm:$0xff]
      %v1368 = vld [vmem:[%s1 + $0xa8] sm:$0xff]
      %v1369 = vld [vmem:[%s1 + $0xb0] sm:$0xff]
      %v1370 = vld [vmem:[%s1 + $0xb8] sm:$0xff]
      %v1371 = vld [vmem:[%s1 + $0xc0] sm:$0xff]
      %v1372 = vld [vmem:[%s1 + $0xc8] sm:$0xff]
      %v1373 = vld [vmem:[%s1 + $0xd0] sm:$0xff]
      %v1374 = vld [vmem:[%s1 + $0xd8] sm:$0xff]
      %v1375 = vld [vmem:[%s1 + $0xe0] sm:$0xff]
      %v1376 = vld [vmem:[%s1 + $0xe8] sm:$0xff]
      %v1377 = vld [vmem:[%s1 + $0xf0] sm:$0xff]
      %v1378 = vld [vmem:[%s1 + $0xf8] sm:$0xff]
      %s1379 = scalar_lea.vmem %s157, 192
      %v1380 = vld [vmem:[%s1379] sm:$0xff]
      %v1381 = vld [vmem:[%s1379 + $0x8] sm:$0xff]
      %v1382 = vld [vmem:[%s1379 + $0x10] sm:$0xff]
      %v1383 = vld [vmem:[%s1379 + $0x18] sm:$0xff]
      %v1384 = vld [vmem:[%s1379 + $0x20] sm:$0xff]
      %v1385 = vld [vmem:[%s1379 + $0x28] sm:$0xff]
      %v1386 = vld [vmem:[%s1379 + $0x30] sm:$0xff]
      %v1387 = vld [vmem:[%s1379 + $0x38] sm:$0xff]
      %v1420 = vunpack.c.l.b16 %v1347
      %v1421 = vunpack.c.h.b16 %v1347
      %v1422 = vunpack.c.l.b16 %v1348
      %v1423 = vunpack.c.h.b16 %v1348
      %v1424 = vunpack.c.l.b16 %v1349
      %v1425 = vunpack.c.h.b16 %v1349
      %v1426 = vunpack.c.l.b16 %v1350
      %v1427 = vunpack.c.h.b16 %v1350
      %v1428 = vunpack.c.l.b16 %v1351
      %v1429 = vunpack.c.h.b16 %v1351
      %v1430 = vunpack.c.l.b16 %v1352
      %v1431 = vunpack.c.h.b16 %v1352
      %v1432 = vunpack.c.l.b16 %v1353
      %v1433 = vunpack.c.h.b16 %v1353
      %v1434 = vunpack.c.l.b16 %v1354
      %v1435 = vunpack.c.h.b16 %v1354
      %v1436 = vunpack.c.l.b16 %v1355
      %v1437 = vunpack.c.h.b16 %v1355
      %v1438 = vunpack.c.l.b16 %v1356
      %v1439 = vunpack.c.h.b16 %v1356
      %v1440 = vunpack.c.l.b16 %v1357
      %v1441 = vunpack.c.h.b16 %v1357
      %v1442 = vunpack.c.l.b16 %v1358
      %v1443 = vunpack.c.h.b16 %v1358
      %v1444 = vunpack.c.l.b16 %v1359
      %v1445 = vunpack.c.h.b16 %v1359
      %v1446 = vunpack.c.l.b16 %v1360
      %v1447 = vunpack.c.h.b16 %v1360
      %v1448 = vunpack.c.l.b16 %v1361
      %v1449 = vunpack.c.h.b16 %v1361
      %v1450 = vunpack.c.l.b16 %v1362
      %v1451 = vunpack.c.h.b16 %v1362
      %v1452 = vunpack.c.l.b16 %v1363
      %v1453 = vunpack.c.h.b16 %v1363
      %v1454 = vunpack.c.l.b16 %v1364
      %v1455 = vunpack.c.h.b16 %v1364
      %v1456 = vunpack.c.l.b16 %v1365
      %v1457 = vunpack.c.h.b16 %v1365
      %v1458 = vunpack.c.l.b16 %v1366
      %v1459 = vunpack.c.h.b16 %v1366
      %v1460 = vunpack.c.l.b16 %v1367
      %v1461 = vunpack.c.h.b16 %v1367
      %v1462 = vunpack.c.l.b16 %v1368
      %v1463 = vunpack.c.h.b16 %v1368
      %v1464 = vunpack.c.l.b16 %v1369
      %v1465 = vunpack.c.h.b16 %v1369
      %v1466 = vunpack.c.l.b16 %v1370
      %v1467 = vunpack.c.h.b16 %v1370
      %v1468 = vunpack.c.l.b16 %v1371
      %v1469 = vunpack.c.h.b16 %v1371
      %v1470 = vunpack.c.l.b16 %v1372
      %v1471 = vunpack.c.h.b16 %v1372
      %v1472 = vunpack.c.l.b16 %v1373
      %v1473 = vunpack.c.h.b16 %v1373
      %v1474 = vunpack.c.l.b16 %v1374
      %v1475 = vunpack.c.h.b16 %v1374
      %v1476 = vunpack.c.l.b16 %v1375
      %v1477 = vunpack.c.h.b16 %v1375
      %v1478 = vunpack.c.l.b16 %v1376
      %v1479 = vunpack.c.h.b16 %v1376
      %v1480 = vunpack.c.l.b16 %v1377
      %v1481 = vunpack.c.h.b16 %v1377
      %v1482 = vunpack.c.l.b16 %v1378
      %v1483 = vunpack.c.h.b16 %v1378
      %v1484 = vpack.c.b16 %v1424, %v1420
      %v1485 = vpack.c.b16 %v1425, %v1421
      %v1486 = vpack.c.b16 %v1426, %v1422
      %v1487 = vpack.c.b16 %v1427, %v1423
      %v1488 = vpack.c.b16 %v1432, %v1428
      %v1489 = vpack.c.b16 %v1433, %v1429
      %v1490 = vpack.c.b16 %v1434, %v1430
      %v1491 = vpack.c.b16 %v1435, %v1431
      %v1492 = vpack.c.b16 %v1440, %v1436
      %v1493 = vpack.c.b16 %v1441, %v1437
      %v1494 = vpack.c.b16 %v1442, %v1438
      %v1495 = vpack.c.b16 %v1443, %v1439
      %v1496 = vpack.c.b16 %v1448, %v1444
      %v1497 = vpack.c.b16 %v1449, %v1445
      %v1498 = vpack.c.b16 %v1450, %v1446
      %v1499 = vpack.c.b16 %v1451, %v1447
      %v1500 = vpack.c.b16 %v1456, %v1452
      %v1501 = vpack.c.b16 %v1457, %v1453
      %v1502 = vpack.c.b16 %v1458, %v1454
      %v1503 = vpack.c.b16 %v1459, %v1455
      %v1504 = vpack.c.b16 %v1464, %v1460
      %v1505 = vpack.c.b16 %v1465, %v1461
      %v1506 = vpack.c.b16 %v1466, %v1462
      %v1507 = vpack.c.b16 %v1467, %v1463
      %v1508 = vpack.c.b16 %v1472, %v1468
      %v1509 = vpack.c.b16 %v1473, %v1469
      %v1510 = vpack.c.b16 %v1474, %v1470
      %v1511 = vpack.c.b16 %v1475, %v1471
      %v1512 = vpack.c.b16 %v1480, %v1476
      %v1513 = vpack.c.b16 %v1481, %v1477
      %v1514 = vpack.c.b16 %v1482, %v1478
      %v1515 = vpack.c.b16 %v1483, %v1479
      %1548 = vmatpush.bf16.msra.mxu0 %v1512
      %1549 = vmatpush.bf16.msra.mxu0 %v1508
      %1550 = vmatpush.bf16.msra.mxu0 %v1504
      %1551 = vmatpush.bf16.msra.mxu0 %v1500
      %1552 = vmatpush.bf16.msra.mxu0 %v1496
      %1553 = vmatpush.bf16.msra.mxu0 %v1492
      %1554 = vmatpush.bf16.msra.mxu0 %v1488
      %1555 = vmatpush.bf16.msra.mxu0 %v1484
      %1556 = vmatmul.bf16.gmra.mxu0 %v1346
      %v1557 = vpop.f32.mrf.mxu0
      %v1558 = vadd.f32 %v1380, %v1557
      %v1559 = vpop.f32.mrf.mxu0
      %v1560 = vadd.f32 %v1384, %v1559
      %1561 = vdwg.mxu0
      %1562 = vmatpush.bf16.msra.mxu0 %v1513
      %1563 = vmatpush.bf16.msra.mxu0 %v1509
      %1564 = vmatpush.bf16.msra.mxu0 %v1505
      %1565 = vmatpush.bf16.msra.mxu0 %v1501
      %1566 = vmatpush.bf16.msra.mxu0 %v1497
      %1567 = vmatpush.bf16.msra.mxu0 %v1493
      %1568 = vmatpush.bf16.msra.mxu0 %v1489
      %1569 = vmatpush.bf16.msra.mxu0 %v1485
      %1570 = vmatmul.bf16.gmra.mxu0 %v1346
      %v1571 = vpop.f32.mrf.mxu0
      %v1572 = vadd.f32 %v1381, %v1571
      %v1573 = vpop.f32.mrf.mxu0
      %v1574 = vadd.f32 %v1385, %v1573
      %1575 = vdwg.mxu0
      %1576 = vmatpush.bf16.msra.mxu0 %v1514
      %1577 = vmatpush.bf16.msra.mxu0 %v1510
      %1578 = vmatpush.bf16.msra.mxu0 %v1506
      %1579 = vmatpush.bf16.msra.mxu0 %v1502
      %1580 = vmatpush.bf16.msra.mxu0 %v1498
      %1581 = vmatpush.bf16.msra.mxu0 %v1494
      %1582 = vmatpush.bf16.msra.mxu0 %v1490
      %1583 = vmatpush.bf16.msra.mxu0 %v1486
      %1584 = vmatmul.bf16.gmra.mxu0 %v1346
      %v1585 = vpop.f32.mrf.mxu0
      %v1586 = vadd.f32 %v1382, %v1585
      %v1587 = vpop.f32.mrf.mxu0
      %v1588 = vadd.f32 %v1386, %v1587
      %1589 = vdwg.mxu0
      %1590 = vmatpush.bf16.msra.mxu0 %v1515
      %1591 = vmatpush.bf16.msra.mxu0 %v1511
      %1592 = vmatpush.bf16.msra.mxu0 %v1507
      %1593 = vmatpush.bf16.msra.mxu0 %v1503
      %1594 = vmatpush.bf16.msra.mxu0 %v1499
      %1595 = vmatpush.bf16.msra.mxu0 %v1495
      %1596 = vmatpush.bf16.msra.mxu0 %v1491
      %1597 = vmatpush.bf16.msra.mxu0 %v1487
      %1598 = vmatmul.bf16.gmra.mxu0 %v1346
      %v1599 = vpop.f32.mrf.mxu0
      %v1600 = vadd.f32 %v1383, %v1599
      %v1601 = vpop.f32.mrf.mxu0
      %v1602 = vadd.f32 %v1387, %v1601
      %1603 = vdwg.mxu0
      %v1604 = vxor.u32 %v1558, 2147483648
      %v1605 = vxor.u32 %v1560, 2147483648
      %v1606 = vmul.f32 %v1604, 1.442695
      %v1607 = vpow.pop %v1606
      %v1608 = vmul.f32 %v1605, 1.442695
      %v1609 = vpow.pop %v1608
      %v1610 = vadd.f32 %v1607, 1.0
      %v1611 = vadd.f32 %v1609, 1.0
      %v1612 = vrcp.pop %v1610
      %v1613 = vmul.f32 %v1610, %v1612
      %v1614 = vsub.f32 1.0, %v1613
      %v1615 = vmul.f32 %v1612, %v1614
      %v1616 = vadd.f32 %v1612, %v1615
      %vm1617 = vweird.f32 %v1610
      %vm1618 = vweird.f32 %v1612
      %vm1619 = vmor %vm1617, %vm1618
      %v1620 = vsel %vm1619, %v1612, %v1616
      %v1621 = vand.u32 2147483647, %v1610
      %vm1622 = vcmp.eq.f32.partialorder %v1621, 8.507059e+37
      %v1623 = vand.u32 %v1610, 2147483648
      %v1624 = vor.u32 1.1754944e-38, %v1623
      %v1625 = vsel %vm1622, %v1624, %v1620
      %v1626 = vmul.f32 1.0, %v1625
      %v1627 = vrcp.pop %v1611
      %v1628 = vmul.f32 %v1611, %v1627
      %v1629 = vsub.f32 1.0, %v1628
      %v1630 = vmul.f32 %v1627, %v1629
      %v1631 = vadd.f32 %v1627, %v1630
      %vm1632 = vweird.f32 %v1611
      %vm1633 = vweird.f32 %v1627
      %vm1634 = vmor %vm1632, %vm1633
      %v1635 = vsel %vm1634, %v1627, %v1631
      %v1636 = vand.u32 2147483647, %v1611
      %vm1637 = vcmp.eq.f32.partialorder %v1636, 8.507059e+37
      %v1638 = vand.u32 %v1611, 2147483648
      %v1639 = vor.u32 1.1754944e-38, %v1638
      %v1640 = vsel %vm1637, %v1639, %v1635
      %v1641 = vmul.f32 1.0, %v1640
      %v1642 = vxor.u32 %v1572, 2147483648
      %v1643 = vxor.u32 %v1574, 2147483648
      %v1644 = vmul.f32 %v1642, 1.442695
      %v1645 = vpow.pop %v1644
      %v1646 = vmul.f32 %v1643, 1.442695
      %v1647 = vpow.pop %v1646
      %v1648 = vadd.f32 %v1645, 1.0
      %v1649 = vadd.f32 %v1647, 1.0
      %v1650 = vrcp.pop %v1648
      %v1651 = vmul.f32 %v1648, %v1650
      %v1652 = vsub.f32 1.0, %v1651
      %v1653 = vmul.f32 %v1650, %v1652
      %v1654 = vadd.f32 %v1650, %v1653
      %vm1655 = vweird.f32 %v1648
      %vm1656 = vweird.f32 %v1650
      %vm1657 = vmor %vm1655, %vm1656
      %v1658 = vsel %vm1657, %v1650, %v1654
      %v1659 = vand.u32 2147483647, %v1648
      %vm1660 = vcmp.eq.f32.partialorder %v1659, 8.507059e+37
      %v1661 = vand.u32 %v1648, 2147483648
      %v1662 = vor.u32 1.1754944e-38, %v1661
      %v1663 = vsel %vm1660, %v1662, %v1658
      %v1664 = vmul.f32 1.0, %v1663
      %v1665 = vrcp.pop %v1649
      %v1666 = vmul.f32 %v1649, %v1665
      %v1667 = vsub.f32 1.0, %v1666
      %v1668 = vmul.f32 %v1665, %v1667
      %v1669 = vadd.f32 %v1665, %v1668
      %vm1670 = vweird.f32 %v1649
      %vm1671 = vweird.f32 %v1665
      %vm1672 = vmor %vm1670, %vm1671
      %v1673 = vsel %vm1672, %v1665, %v1669
      %v1674 = vand.u32 2147483647, %v1649
      %vm1675 = vcmp.eq.f32.partialorder %v1674, 8.507059e+37
      %v1676 = vand.u32 %v1649, 2147483648
      %v1677 = vor.u32 1.1754944e-38, %v1676
      %v1678 = vsel %vm1675, %v1677, %v1673
      %v1679 = vmul.f32 1.0, %v1678
      %v1680 = vtanh.pop %v1586
      %v1681 = vtanh.pop %v1588
      %v1682 = vxor.u32 %v1600, 2147483648
      %v1683 = vxor.u32 %v1602, 2147483648
      %v1684 = vmul.f32 %v1682, 1.442695
      %v1685 = vpow.pop %v1684
      %v1686 = vmul.f32 %v1683, 1.442695
      %v1687 = vpow.pop %v1686
      %v1688 = vadd.f32 %v1685, 1.0
      %v1689 = vadd.f32 %v1687, 1.0
      %v1690 = vrcp.pop %v1688
      %v1691 = vmul.f32 %v1688, %v1690
      %v1692 = vsub.f32 1.0, %v1691
      %v1693 = vmul.f32 %v1690, %v1692
      %v1694 = vadd.f32 %v1690, %v1693
      %vm1695 = vweird.f32 %v1688
      %vm1696 = vweird.f32 %v1690
      %vm1697 = vmor %vm1695, %vm1696
      %v1698 = vsel %vm1697, %v1690, %v1694
      %v1699 = vand.u32 2147483647, %v1688
      %vm1700 = vcmp.eq.f32.partialorder %v1699, 8.507059e+37
      %v1701 = vand.u32 %v1688, 2147483648
      %v1702 = vor.u32 1.1754944e-38, %v1701
      %v1703 = vsel %vm1700, %v1702, %v1698
      %v1704 = vmul.f32 1.0, %v1703
      %v1705 = vrcp.pop %v1689
      %v1706 = vmul.f32 %v1689, %v1705
      %v1707 = vsub.f32 1.0, %v1706
      %v1708 = vmul.f32 %v1705, %v1707
      %v1709 = vadd.f32 %v1705, %v1708
      %vm1710 = vweird.f32 %v1689
      %vm1711 = vweird.f32 %v1705
      %vm1712 = vmor %vm1710, %vm1711
      %v1713 = vsel %vm1712, %v1705, %v1709
      %v1714 = vand.u32 2147483647, %v1689
      %vm1715 = vcmp.eq.f32.partialorder %v1714, 8.507059e+37
      %v1716 = vand.u32 %v1689, 2147483648
      %v1717 = vor.u32 1.1754944e-38, %v1716
      %v1718 = vsel %vm1715, %v1717, %v1713
      %v1719 = vmul.f32 1.0, %v1718
      %v1720 = vmul.f32 %v1664, %v1344
      %v1721 = vmul.f32 %v1679, %v1345
      %v1722 = vmul.f32 %v1626, %v1680
      %v1723 = vmul.f32 %v1641, %v1681
      %v1724 = vadd.f32 %v1720, %v1722
      %v1725 = vadd.f32 %v1721, %v1723
      %1726 = vst [vmem:[%s3] sm:$0xff] %v1724
      %1727 = vst [vmem:[%s3 + $0x8] sm:$0xff] %v1725
      %v1728 = vtanh.pop %v1724
      %v1729 = vtanh.pop %v1725
      %v1730 = vmul.f32 %v1704, %v1728
      %v1731 = vmul.f32 %v1719, %v1729
      %1732 = vst [vmem:[%s2] sm:$0xff] %v1730
      %1733 = vst [vmem:[%s2 + $0x8] sm:$0xff] %v1731
      // Predicated region
      $region33: #{seq2seq_forward.2} parent=27 // pred_check
        %p1734 = pneg %p75
      $region34: #{seq2seq_forward.2} parent=27 // pred_check_branch
        %1736 = sbr.rel (%p1734) target = $region36
      $region35: #{seq2seq_forward.2} parent=27 // pred_region
        _
      $region36: #{seq2seq_forward.2} parent=27 // pred_fallthru
        _
      // Predicated region
      $region37: #{seq2seq_forward.2} parent=27 // pred_check
        %p1737 = pneg %p96
      $region38: #{seq2seq_forward.2} parent=27 // pred_check_branch
        %1739 = sbr.rel (%p1737) target = $region40
      $region39: #{seq2seq_forward.2} parent=27 // pred_region
        _
      $region40: #{seq2seq_forward.2} parent=27 // pred_fallthru
        _
      // Predicated region
      $region41: #{seq2seq_forward.2} parent=27 // pred_check
        %p1740 = pneg %p75
      $region42: #{seq2seq_forward.2} parent=27 // pred_check_branch
        %1742 = sbr.rel (%p1740) target = $region44
      $region43: #{seq2seq_forward.2} parent=27 // pred_region
        _
      $region44: #{seq2seq_forward.2} parent=27 // pred_fallthru
        _
      // Predicated region
      $region45: #{seq2seq_forward.2} parent=27 // pred_check
        %p1743 = pneg %p96
      $region46: #{seq2seq_forward.2} parent=27 // pred_check_branch
        %1745 = sbr.rel (%p1743) target = $region48
      $region47: #{seq2seq_forward.2} parent=27 // pred_region
        _
      $region48: #{seq2seq_forward.2} parent=27 // pred_fallthru
        _
    $region28: #{seq2seq_forward.2} parent=5 // pred_fallthru
      _
    %p1746 = scmp.le.s32.totalorder 2, %s10
    // Predicated region
    $region49: #{seq2seq_forward.2} parent=5 // pred_check
      %p1747 = pneg %p1746
    $region50: #{seq2seq_forward.2} parent=5 // pred_check_branch
      %1749 = sbr.rel (%p1747) target = $region52
    $region51: #{seq2seq_forward.2} parent=5 // pred_region
      %s1750 = ssub.s32 %s10, 2
    $region52: #{seq2seq_forward.2} parent=5 // pred_fallthru
      _
  $region6: #{seq2seq_forward.2} parent=0 // loop_footer
    %s14 = sadd.s32 1, %s10
  $region7: #{seq2seq_forward.2} parent=0 // loop_footer_branch
    %9 = sbr.rel target = $region3
  $region8: #{seq2seq_forward.2} parent=0 // loop_exit
    _

// kernel: seq2seq_forward.3
$region0: #{seq2seq_forward.3}
  #allocation0 [shape = 'u32[]', space=smem, size = 0x4, offset = 0x4, fixed_abs, tag = 'smem constant byte address 0x4 - core index']
  #allocation1 [shape = 'u32[72,128]{1,0:T(1,128)}', space=vmem, size = 0x9000, scoped, tag = 'internal scratch']
  #allocation2 [shape = 'f32[16,512]{1,0:T(8,128)}', space=vmem, size = 0x8000, scoped, tag = 'scratch operand']
  #allocation3 [shape = 'bf16[16,128]{1,0:T(8,128)(2,1)}', space=vmem, size = 0x1000, scoped, tag = 'scratch operand']
  #allocation4 [shape = 'f32[16,128]{1,0:T(8,128)}', space=vmem, size = 0x2000, scoped, tag = 'scratch operand']
  #allocation5 [shape = 's32[1]{0}', space=sflag, size = 0x4, scoped, tag = 'scoped memory for seq2seq_forward.3']
  #allocation6 [shape = 'u8[512]{0}', space=smem, size = 0x200, scoped, tag = 'prefetched SMEM operand 0']
  %s0 = inlined_call_operand.vmem [shape: s32[9], index: 0, kind: input, shape index: {}]
  %s1 = inlined_call_operand.vmem [shape: f32[8,16,512], index: 1, kind: input, shape index: {}]
  %s2 = inlined_call_operand.vmem [shape: f32[16,128], index: 2, kind: input, shape index: {}]
  %s3 = inlined_call_operand.vmem [shape: f32[16,128], index: 3, kind: input, shape index: {}]
  %s4 = inlined_call_operand.vmem [shape: bf16[256,512], index: 4, kind: input, shape index: {}]
  %s5 = inlined_call_operand.vmem [shape: bf16[128,512], index: 5, kind: input, shape index: {}]
  %s6 = inlined_call_operand.vmem [shape: f32[1,512], index: 6, kind: input, shape index: {}]
  %s7 = inlined_call_operand.vmem [shape: bf16[128,256], index: 7, kind: input, shape index: {}]
  %s8 = inlined_call_operand.vmem [shape: f32[1,256], index: 8, kind: input, shape index: {}]
  %s9 = inlined_call_operand.vmem [shape: f32[8,16,256], index: 9, kind: output, shape index: {}]
  %s10 = sld [smem:[#allocation0]]
  $region101: #{seq2seq_forward.3} parent=0
    _
  %s12 = ssub.s32 1, %s10
  %s13 = scalar_select 0, %s12, %s10
  %s15 = sshll.u32 %s0, 4
  %s16 = int_to_ptr.vmem [resolvable:$true] %s15
  %18 = dma.vmem_to_smem %s16, 16, [#allocation6], [#allocation5]
  %20 = dma.done [#allocation5], 16
  %21 = sfence
  loop: start=0, step=1, limit=4
  $region2: #{seq2seq_forward.3} parent=0 // loop_pre_header
    _
  $region3: #{seq2seq_forward.3} parent=0 // loop_header
    %s23 = sphi 0, %s27
    %p24 = scmp.ge.s32.totalorder %s23, 4
    %s33 = sphi 0, %s35
    %s36 = sphi 0, %s33
    %s37 = sphi 0, %s36
    %s53 = sphi 0, %s37
    %s57 = sphi 0, %s57
    %s59 = sphi 0, %s57
    %s60 = sphi 0, %s59
    %s74 = sphi 0, %s60
    %s78 = sphi 0, %s78
    %s80 = sphi 0, %s78
    %s81 = sphi 0, %s80
    %s95 = sphi 0, %s81
    %s99 = sphi 0, %s99
    %s101 = sphi 0, %s99
    %s102 = sphi 0, %s101
    %s116 = sphi 0, %s102
    %s120 = sphi 0, %s120
    %s122 = sphi 0, %s120
    %s123 = sphi 0, %s122
    %s137 = sphi 0, %s123
    %s141 = sphi 0, %s141
    %s143 = sphi 0, %s141
    %s144 = sphi 0, %s143
    %s158 = sphi 0, %s144
    %s162 = sphi 0, %s162
    %s164 = sphi 0, %s162
    %s165 = sphi 0, %s164
    %s179 = sphi 0, %s165
    %s183 = sphi 0, %s183
    %s185 = sphi 0, %s183
    %s186 = sphi 0, %s185
    %s200 = sphi 0, %s186
    %s206 = sphi 0, %s208
    %s209 = sphi 0, %s206
    %s210 = sphi 0, %s209
    %s226 = sphi 0, %s210
  $region4: #{seq2seq_forward.3} parent=0 // loop_header_branch
    %26 = sbr.rel (%p24) target = $region8
  $region5: #{seq2seq_forward.3} parent=0 // loop_body
    %s28 = ssub.s32 %s23, 1
    %s29 = ssub.s32 %s23, 2
    %s30 = sadd.s32 %s23, 1
    %s31 = ssub.s32 %s23, %s30
    %p32 = scmp.eq.s32.totalorder %s31, 0
    %s34 = sadd.s32 %s33, 1
    %s35 = scalar_select %p32, %s33, %s34
    %p38 = pneg %p32
    %p39 = scmp.eq.s32.totalorder %s23, 1
    %p40 = por %p38, %p39
    %p41 = scmp.ne.s32.totalorder %s33, %s36
    %p42 = scmp.eq.s32.totalorder %s23, 0
    %p43 = por %p41, %p42
    %p44 = scmp.ne.s32.totalorder %s33, %s36
    %p45 = scmp.eq.s32.totalorder %s28, 1
    %p46 = por %p44, %p45
    %p47 = scmp.ne.s32.totalorder %s36, %s37
    %p48 = scmp.eq.s32.totalorder %s28, 0
    %p49 = por %p47, %p48
    %p50 = scmp.ne.s32.totalorder %s36, %s37
    %p51 = scmp.eq.s32.totalorder %s29, 1
    %p52 = por %p50, %p51
    %p54 = scmp.ne.s32.totalorder %s37, %s53
    %p55 = scmp.eq.s32.totalorder %s29, 0
    %p56 = por %p54, %p55
    %s58 = sadd.s32 %s57, 1
    %p61 = scmp.eq.s32.totalorder %s23, 1
    %p62 = scmp.ne.s32.totalorder %s57, %s59
    %p63 = scmp.eq.s32.totalorder %s23, 0
    %p64 = por %p62, %p63
    %p65 = scmp.ne.s32.totalorder %s57, %s59
    %p66 = scmp.eq.s32.totalorder %s28, 1
    %p67 = por %p65, %p66
    %p68 = scmp.ne.s32.totalorder %s59, %s60
    %p69 = scmp.eq.s32.totalorder %s28, 0
    %p70 = por %p68, %p69
    %p71 = scmp.ne.s32.totalorder %s59, %s60
    %p72 = scmp.eq.s32.totalorder %s29, 1
    %p73 = por %p71, %p72
    %p75 = scmp.ne.s32.totalorder %s60, %s74
    %p76 = scmp.eq.s32.totalorder %s29, 0
    %p77 = por %p75, %p76
    %s79 = sadd.s32 %s78, 1
    %p82 = scmp.eq.s32.totalorder %s23, 1
    %p83 = scmp.ne.s32.totalorder %s78, %s80
    %p84 = scmp.eq.s32.totalorder %s23, 0
    %p85 = por %p83, %p84
    %p86 = scmp.ne.s32.totalorder %s78, %s80
    %p87 = scmp.eq.s32.totalorder %s28, 1
    %p88 = por %p86, %p87
    %p89 = scmp.ne.s32.totalorder %s80, %s81
    %p90 = scmp.eq.s32.totalorder %s28, 0
    %p91 = por %p89, %p90
    %p92 = scmp.ne.s32.totalorder %s80, %s81
    %p93 = scmp.eq.s32.totalorder %s29, 1
    %p94 = por %p92, %p93
    %p96 = scmp.ne.s32.totalorder %s81, %s95
    %p97 = scmp.eq.s32.totalorder %s29, 0
    %p98 = por %p96, %p97
    %s100 = sadd.s32 %s99, 1
    %p103 = scmp.eq.s32.totalorder %s23, 1
    %p104 = scmp.ne.s32.totalorder %s99, %s101
    %p105 = scmp.eq.s32.totalorder %s23, 0
    %p106 = por %p104, %p105
    %p107 = scmp.ne.s32.totalorder %s99, %s101
    %p108 = scmp.eq.s32.totalorder %s28, 1
    %p109 = por %p107, %p108
    %p110 = scmp.ne.s32.totalorder %s101, %s102
    %p111 = scmp.eq.s32.totalorder %s28, 0
    %p112 = por %p110, %p111
    %p113 = scmp.ne.s32.totalorder %s101, %s102
    %p114 = scmp.eq.s32.totalorder %s29, 1
    %p115 = por %p113, %p114
    %p117 = scmp.ne.s32.totalorder %s102, %s116
    %p118 = scmp.eq.s32.totalorder %s29, 0
    %p119 = por %p117, %p118
    %s121 = sadd.s32 %s120, 1
    %p124 = scmp.eq.s32.totalorder %s23, 1
    %p125 = scmp.ne.s32.totalorder %s120, %s122
    %p126 = scmp.eq.s32.totalorder %s23, 0
    %p127 = por %p125, %p126
    %p128 = scmp.ne.s32.totalorder %s120, %s122
    %p129 = scmp.eq.s32.totalorder %s28, 1
    %p130 = por %p128, %p129
    %p131 = scmp.ne.s32.totalorder %s122, %s123
    %p132 = scmp.eq.s32.totalorder %s28, 0
    %p133 = por %p131, %p132
    %p134 = scmp.ne.s32.totalorder %s122, %s123
    %p135 = scmp.eq.s32.totalorder %s29, 1
    %p136 = por %p134, %p135
    %p138 = scmp.ne.s32.totalorder %s123, %s137
    %p139 = scmp.eq.s32.totalorder %s29, 0
    %p140 = por %p138, %p139
    %s142 = sadd.s32 %s141, 1
    %p145 = scmp.eq.s32.totalorder %s23, 1
    %p146 = scmp.ne.s32.totalorder %s141, %s143
    %p147 = scmp.eq.s32.totalorder %s23, 0
    %p148 = por %p146, %p147
    %p149 = scmp.ne.s32.totalorder %s141, %s143
    %p150 = scmp.eq.s32.totalorder %s28, 1
    %p151 = por %p149, %p150
    %p152 = scmp.ne.s32.totalorder %s143, %s144
    %p153 = scmp.eq.s32.totalorder %s28, 0
    %p154 = por %p152, %p153
    %p155 = scmp.ne.s32.totalorder %s143, %s144
    %p156 = scmp.eq.s32.totalorder %s29, 1
    %p157 = por %p155, %p156
    %p159 = scmp.ne.s32.totalorder %s144, %s158
    %p160 = scmp.eq.s32.totalorder %s29, 0
    %p161 = por %p159, %p160
    %s163 = sadd.s32 %s162, 1
    %p166 = scmp.eq.s32.totalorder %s23, 1
    %p167 = scmp.ne.s32.totalorder %s162, %s164
    %p168 = scmp.eq.s32.totalorder %s23, 0
    %p169 = por %p167, %p168
    %p170 = scmp.ne.s32.totalorder %s162, %s164
    %p171 = scmp.eq.s32.totalorder %s28, 1
    %p172 = por %p170, %p171
    %p173 = scmp.ne.s32.totalorder %s164, %s165
    %p174 = scmp.eq.s32.totalorder %s28, 0
    %p175 = por %p173, %p174
    %p176 = scmp.ne.s32.totalorder %s164, %s165
    %p177 = scmp.eq.s32.totalorder %s29, 1
    %p178 = por %p176, %p177
    %p180 = scmp.ne.s32.totalorder %s165, %s179
    %p181 = scmp.eq.s32.totalorder %s29, 0
    %p182 = por %p180, %p181
    %s184 = sadd.s32 %s183, 1
    %p187 = scmp.eq.s32.totalorder %s23, 1
    %p188 = scmp.ne.s32.totalorder %s183, %s185
    %p189 = scmp.eq.s32.totalorder %s23, 0
    %p190 = por %p188, %p189
    %p191 = scmp.ne.s32.totalorder %s183, %s185
    %p192 = scmp.eq.s32.totalorder %s28, 1
    %p193 = por %p191, %p192
    %p194 = scmp.ne.s32.totalorder %s185, %s186
    %p195 = scmp.eq.s32.totalorder %s28, 0
    %p196 = por %p194, %p195
    %p197 = scmp.ne.s32.totalorder %s185, %s186
    %p198 = scmp.eq.s32.totalorder %s29, 1
    %p199 = por %p197, %p198
    %p201 = scmp.ne.s32.totalorder %s186, %s200
    %p202 = scmp.eq.s32.totalorder %s29, 0
    %p203 = por %p201, %p202
    %s204 = ssub.s32 %s23, %s30
    %p205 = scmp.eq.s32.totalorder %s204, 0
    %s207 = sadd.s32 %s206, 1
    %s208 = scalar_select %p205, %s206, %s207
    %p211 = pneg %p205
    %p212 = scmp.eq.s32.totalorder %s23, 1
    %p213 = por %p211, %p212
    %p214 = scmp.ne.s32.totalorder %s206, %s209
    %p215 = scmp.eq.s32.totalorder %s23, 0
    %p216 = por %p214, %p215
    %p217 = scmp.ne.s32.totalorder %s206, %s209
    %p218 = scmp.eq.s32.totalorder %s28, 1
    %p219 = por %p217, %p218
    %p220 = scmp.ne.s32.totalorder %s209, %s210
    %p221 = scmp.eq.s32.totalorder %s28, 0
    %p222 = por %p220, %p221
    %p223 = scmp.ne.s32.totalorder %s209, %s210
    %p224 = scmp.eq.s32.totalorder %s29, 1
    %p225 = por %p223, %p224
    %p227 = scmp.ne.s32.totalorder %s210, %s226
    %p228 = scmp.eq.s32.totalorder %s29, 0
    %p229 = por %p227, %p228
    %p230 = scmp.le.s32.totalorder 1, %s23
    %p231 = scmp.lt.s32.totalorder %s23, 3
    %p232 = pnand %p230, %p231
    %p233 = pneg %p232
    // Predicated region
    $region9: #{seq2seq_forward.3} parent=5 // pred_check
      _
    $region10: #{seq2seq_forward.3} parent=5 // pred_check_branch
      %235 = sbr.rel (%p232) target = $region12
    $region11: #{seq2seq_forward.3} parent=5 // pred_region
      %s236 = ssub.s32 %s23, 1
      // Predicated region
      $region13: #{seq2seq_forward.3} parent=11 // pred_check
        %p237 = pneg %p70
      $region14: #{seq2seq_forward.3} parent=11 // pred_check_branch
        %239 = sbr.rel (%p237) target = $region16
      $region15: #{seq2seq_forward.3} parent=11 // pred_region
        _
      $region16: #{seq2seq_forward.3} parent=11 // pred_fallthru
        _
      // Predicated region
      $region17: #{seq2seq_forward.3} parent=11 // pred_check
        %p240 = pneg %p91
      $region18: #{seq2seq_forward.3} parent=11 // pred_check_branch
        %242 = sbr.rel (%p240) target = $region20
      $region19: #{seq2seq_forward.3} parent=11 // pred_region
        _
      $region20: #{seq2seq_forward.3} parent=11 // pred_fallthru
        _
      // Predicated region
      $region21: #{seq2seq_forward.3} parent=11 // pred_check
        %p243 = pneg %p112
      $region22: #{seq2seq_forward.3} parent=11 // pred_check_branch
        %245 = sbr.rel (%p243) target = $region24
      $region23: #{seq2seq_forward.3} parent=11 // pred_region
        _
      $region24: #{seq2seq_forward.3} parent=11 // pred_fallthru
        _
      // Predicated region
      $region25: #{seq2seq_forward.3} parent=11 // pred_check
        %p246 = pneg %p133
      $region26: #{seq2seq_forward.3} parent=11 // pred_check_branch
        %248 = sbr.rel (%p246) target = $region28
      $region27: #{seq2seq_forward.3} parent=11 // pred_region
        _
      $region28: #{seq2seq_forward.3} parent=11 // pred_fallthru
        _
      // Predicated region
      $region29: #{seq2seq_forward.3} parent=11 // pred_check
        %p249 = pneg %p154
      $region30: #{seq2seq_forward.3} parent=11 // pred_check_branch
        %251 = sbr.rel (%p249) target = $region32
      $region31: #{seq2seq_forward.3} parent=11 // pred_region
        _
      $region32: #{seq2seq_forward.3} parent=11 // pred_fallthru
        _
      // Predicated region
      $region33: #{seq2seq_forward.3} parent=11 // pred_check
        %p252 = pneg %p175
      $region34: #{seq2seq_forward.3} parent=11 // pred_check_branch
        %254 = sbr.rel (%p252) target = $region36
      $region35: #{seq2seq_forward.3} parent=11 // pred_region
        _
      $region36: #{seq2seq_forward.3} parent=11 // pred_fallthru
        _
      // Predicated region
      $region37: #{seq2seq_forward.3} parent=11 // pred_check
        %p255 = pneg %p196
      $region38: #{seq2seq_forward.3} parent=11 // pred_check_branch
        %257 = sbr.rel (%p255) target = $region40
      $region39: #{seq2seq_forward.3} parent=11 // pred_region
        _
      $region40: #{seq2seq_forward.3} parent=11 // pred_fallthru
        _
    $region12: #{seq2seq_forward.3} parent=5 // pred_fallthru
      _
    %p258 = scmp.lt.s32.totalorder %s23, 2
    // Predicated region
    $region41: #{seq2seq_forward.3} parent=5 // pred_check
      %p259 = pneg %p258
    $region42: #{seq2seq_forward.3} parent=5 // pred_check_branch
      %261 = sbr.rel (%p259) target = $region44
    $region43: #{seq2seq_forward.3} parent=5 // pred_region
      // Predicated region
      $region45: #{seq2seq_forward.3} parent=43 // pred_check
        %p262 = pneg %p43
      $region46: #{seq2seq_forward.3} parent=43 // pred_check_branch
        %264 = sbr.rel (%p262) target = $region48
      $region47: #{seq2seq_forward.3} parent=43 // pred_region
        %s265 = smul.u32 4, %s23
        %p266 = scmp.lt.s32.totalorder %s265, 7
        %s267 = scalar_select %p266, %s265, 7
        %s268 = smul.addr %s267, 8
        %s269 = smul.addr %s268, 8
        %s270 = scalar_lea.vmem %s1, %s269
        %s271 = smul.u32 4, %s23
      $region48: #{seq2seq_forward.3} parent=43 // pred_fallthru
        _
    $region44: #{seq2seq_forward.3} parent=5 // pred_fallthru
      _
    %p272 = scmp.le.s32.totalorder 1, %s23
    %p273 = scmp.lt.s32.totalorder %s23, 3
    %p274 = pnand %p272, %p273
    %p275 = pneg %p274
    // Predicated region
    $region49: #{seq2seq_forward.3} parent=5 // pred_check
      _
    $region50: #{seq2seq_forward.3} parent=5 // pred_check_branch
      %277 = sbr.rel (%p274) target = $region52
    $region51: #{seq2seq_forward.3} parent=5 // pred_region
      %s278 = ssub.s32 %s23, 1
      %s279 = smul.u32 4, %s28
      %p280 = scmp.lt.s32.totalorder %s279, 7
      %s281 = scalar_select %p280, %s279, 7
      %s282 = smul.addr %s281, 8
      %s283 = smul.addr %s282, 8
      %s284 = scalar_lea.vmem %s1, %s283
      %p285 = pneg %p49
      %p286 = pneg %p46
      %p287 = pneg %p70
      %p288 = pneg %p67
      %p289 = pneg %p91
      %p290 = pneg %p88
      %p291 = pneg %p112
      %p292 = pneg %p109
      %p293 = pneg %p133
      %p294 = pneg %p130
      %p295 = pneg %p154
      %p296 = pneg %p151
      %p297 = pneg %p175
      %p298 = pneg %p172
      %p299 = pneg %p196
      %p300 = pneg %p193
      %p301 = pneg %p222
      %p302 = pneg %p219
      %s303 = smul.u32 4, %s28
      %p304 = scmp.lt.s32.totalorder %s303, 7
      %s305 = scalar_select %p304, %s303, 7
      %s306 = smul.addr %s305, 4
      %s307 = smul.addr %s306, 8
      %s308 = scalar_lea.vmem %s9, %s307
      %s309 = smul.u32 4, %s28
      %p310 = scmp.lt.s32.totalorder %s309, 7
      %s311 = scalar_select %p310, %s309, 7
      %s312 = smul.addr %s311, 8
      %s313 = smul.addr %s312, 8
      %s314 = scalar_lea.vmem %s1, %s313
      %s315 = smul.u32 4, %s28
      %s316 = smul.u32 4, %s28
      %p317 = scmp.lt.s32.totalorder %s316, 7
      %s318 = scalar_select %p317, %s316, 7
      %s319 = smul.addr %s318, 4
      %s320 = smul.addr %s319, 8
      %s321 = scalar_lea.vmem %s9, %s320
      %s322 = smul.u32 4, %s28
      %p323 = scmp.eq.s32.totalorder %s28, 0
      // Predicated region
      $region53: #{seq2seq_forward.3} parent=51 // pred_check
        %p324 = pneg %p323
      $region54: #{seq2seq_forward.3} parent=51 // pred_check_branch
        %326 = sbr.rel (%p324) target = $region56
      $region55: #{seq2seq_forward.3} parent=51 // pred_region
        %v327 = vld [vmem:[%s2] sm:$0xff]
        %v328 = vld [vmem:[%s2 + $0x8] sm:$0xff]
        %v329 = vpack.c.bf16 %v327, %v327
        %v330 = vpack.c.bf16 %v328, %v328
        %331 = vst [vmem:[#allocation3] sm:$0xf] %v329
        %332 = vst [vmem:[#allocation3 + $0x4] sm:$0xf] %v330
        %v333 = vld [vmem:[%s3] sm:$0xff]
        %v334 = vld [vmem:[%s3 + $0x8] sm:$0xff]
        %335 = vst [vmem:[#allocation4] sm:$0xff] %v333
        %336 = vst [vmem:[#allocation4 + $0x8] sm:$0xff] %v334
      $region56: #{seq2seq_forward.3} parent=51 // pred_fallthru
        _
      %s337 = smul.u32 %s28, 4
      %s338 = sld [smem:[#allocation6 + %s337]]
      %p339 = scmp.ne.s32.totalorder %s338, 0
      // Predicated region
      $region57: #{seq2seq_forward.3} parent=51 // pred_check
        %p340 = pneg %p339
      $region58: #{seq2seq_forward.3} parent=51 // pred_check_branch
        %342 = sbr.rel (%p340) target = $region60
      $region59: #{seq2seq_forward.3} parent=51 // pred_region
        %v343 = vld [vmem:[%s314] sm:$0xff]
        %v344 = vld [vmem:[%s314 + $0x8] sm:$0xff]
        %v345 = vld [vmem:[%s314 + $0x10] sm:$0xff]
        %v346 = vld [vmem:[%s314 + $0x18] sm:$0xff]
        %v347 = vld [vmem:[%s314 + $0x20] sm:$0xff]
        %v348 = vld [vmem:[%s314 + $0x28] sm:$0xff]
        %v349 = vld [vmem:[%s314 + $0x30] sm:$0xff]
        %v350 = vld [vmem:[%s314 + $0x38] sm:$0xff]
        %351 = vst [vmem:[#allocation2] sm:$0xff] %v343
        %352 = vst [vmem:[#allocation2 + $0x8] sm:$0xff] %v344
        %353 = vst [vmem:[#allocation2 + $0x10] sm:$0xff] %v345
        %354 = vst [vmem:[#allocation2 + $0x18] sm:$0xff] %v346
        %355 = vst [vmem:[#allocation2 + $0x20] sm:$0xff] %v347
        %356 = vst [vmem:[#allocation2 + $0x28] sm:$0xff] %v348
        %357 = vst [vmem:[#allocation2 + $0x30] sm:$0xff] %v349
        %358 = vst [vmem:[#allocation2 + $0x38] sm:$0xff] %v350
      $region60: #{seq2seq_forward.3} parent=51 // pred_fallthru
        _
      %v359 = vld [vmem:[#allocation3] sm:$0xf]
      %v360 = vld [vmem:[#allocation3 + $0x4] sm:$0xf]
      %v361 = vld [vmem:[%s5] sm:$0xff]
      %v362 = vld [vmem:[%s5 + $0x8] sm:$0xff]
      %v363 = vld [vmem:[%s5 + $0x10] sm:$0xff]
      %v364 = vld [vmem:[%s5 + $0x18] sm:$0xff]
      %v365 = vld [vmem:[%s5 + $0x20] sm:$0xff]
      %v366 = vld [vmem:[%s5 + $0x28] sm:$0xff]
      %v367 = vld [vmem:[%s5 + $0x30] sm:$0xff]
      %v368 = vld [vmem:[%s5 + $0x38] sm:$0xff]
      %v369 = vld [vmem:[%s5 + $0x40] sm:$0xff]
      %v370 = vld [vmem:[%s5 + $0x48] sm:$0xff]
      %v371 = vld [vmem:[%s5 + $0x50] sm:$0xff]
      %v372 = vld [vmem:[%s5 + $0x58] sm:$0xff]
      %v373 = vld [vmem:[%s5 + $0x60] sm:$0xff]
      %v374 = vld [vmem:[%s5 + $0x68] sm:$0xff]
      %v375 = vld [vmem:[%s5 + $0x70] sm:$0xff]
      %v376 = vld [vmem:[%s5 + $0x78] sm:$0xff]
      %v377 = vld [vmem:[%s5 + $0x80] sm:$0xff]
      %v378 = vld [vmem:[%s5 + $0x88] sm:$0xff]
      %v379 = vld [vmem:[%s5 + $0x90] sm:$0xff]
      %v380 = vld [vmem:[%s5 + $0x98] sm:$0xff]
      %v381 = vld [vmem:[%s5 + $0xa0] sm:$0xff]
      %v382 = vld [vmem:[%s5 + $0xa8] sm:$0xff]
      %v383 = vld [vmem:[%s5 + $0xb0] sm:$0xff]
      %v384 = vld [vmem:[%s5 + $0xb8] sm:$0xff]
      %v385 = vld [vmem:[%s5 + $0xc0] sm:$0xff]
      %v386 = vld [vmem:[%s5 + $0xc8] sm:$0xff]
      %v387 = vld [vmem:[%s5 + $0xd0] sm:$0xff]
      %v388 = vld [vmem:[%s5 + $0xd8] sm:$0xff]
      %v389 = vld [vmem:[%s5 + $0xe0] sm:$0xff]
      %v390 = vld [vmem:[%s5 + $0xe8] sm:$0xff]
      %v391 = vld [vmem:[%s5 + $0xf0] sm:$0xff]
      %v392 = vld [vmem:[%s5 + $0xf8] sm:$0xff]
      %v393 = vld [vmem:[#allocation2] sm:$0xff]
      %v394 = vld [vmem:[#allocation2 + $0x8] sm:$0xff]
      %v395 = vld [vmem:[#allocation2 + $0x10] sm:$0xff]
      %v396 = vld [vmem:[#allocation2 + $0x18] sm:$0xff]
      %v397 = vld [vmem:[#allocation2 + $0x20] sm:$0xff]
      %v398 = vld [vmem:[#allocation2 + $0x28] sm:$0xff]
      %v399 = vld [vmem:[#allocation2 + $0x30] sm:$0xff]
      %v400 = vld [vmem:[#allocation2 + $0x38] sm:$0xff]
      %v403 = vunpack.c.l.b16 %v359
      %v404 = vunpack.c.l.b16 %v360
      %v405 = vpack.c.b16 %v404, %v403
      %v439 = vunpack.c.l.b16 %v361
      %v440 = vunpack.c.h.b16 %v361
      %v441 = vunpack.c.l.b16 %v362
      %v442 = vunpack.c.h.b16 %v362
      %v443 = vunpack.c.l.b16 %v363
      %v444 = vunpack.c.h.b16 %v363
      %v445 = vunpack.c.l.b16 %v364
      %v446 = vunpack.c.h.b16 %v364
      %v447 = vunpack.c.l.b16 %v365
      %v448 = vunpack.c.h.b16 %v365
      %v449 = vunpack.c.l.b16 %v366
      %v450 = vunpack.c.h.b16 %v366
      %v451 = vunpack.c.l.b16 %v367
      %v452 = vunpack.c.h.b16 %v367
      %v453 = vunpack.c.l.b16 %v368
      %v454 = vunpack.c.h.b16 %v368
      %v455 = vunpack.c.l.b16 %v369
      %v456 = vunpack.c.h.b16 %v369
      %v457 = vunpack.c.l.b16 %v370
      %v458 = vunpack.c.h.b16 %v370
      %v459 = vunpack.c.l.b16 %v371
      %v460 = vunpack.c.h.b16 %v371
      %v461 = vunpack.c.l.b16 %v372
      %v462 = vunpack.c.h.b16 %v372
      %v463 = vunpack.c.l.b16 %v373
      %v464 = vunpack.c.h.b16 %v373
      %v465 = vunpack.c.l.b16 %v374
      %v466 = vunpack.c.h.b16 %v374
      %v467 = vunpack.c.l.b16 %v375
      %v468 = vunpack.c.h.b16 %v375
      %v469 = vunpack.c.l.b16 %v376
      %v470 = vunpack.c.h.b16 %v376
      %v471 = vunpack.c.l.b16 %v377
      %v472 = vunpack.c.h.b16 %v377
      %v473 = vunpack.c.l.b16 %v378
      %v474 = vunpack.c.h.b16 %v378
      %v475 = vunpack.c.l.b16 %v379
      %v476 = vunpack.c.h.b16 %v379
      %v477 = vunpack.c.l.b16 %v380
      %v478 = vunpack.c.h.b16 %v380
      %v479 = vunpack.c.l.b16 %v381
      %v480 = vunpack.c.h.b16 %v381
      %v481 = vunpack.c.l.b16 %v382
      %v482 = vunpack.c.h.b16 %v382
      %v483 = vunpack.c.l.b16 %v383
      %v484 = vunpack.c.h.b16 %v383
      %v485 = vunpack.c.l.b16 %v384
      %v486 = vunpack.c.h.b16 %v384
      %v487 = vunpack.c.l.b16 %v385
      %v488 = vunpack.c.h.b16 %v385
      %v489 = vunpack.c.l.b16 %v386
      %v490 = vunpack.c.h.b16 %v386
      %v491 = vunpack.c.l.b16 %v387
      %v492 = vunpack.c.h.b16 %v387
      %v493 = vunpack.c.l.b16 %v388
      %v494 = vunpack.c.h.b16 %v388
      %v495 = vunpack.c.l.b16 %v389
      %v496 = vunpack.c.h.b16 %v389
      %v497 = vunpack.c.l.b16 %v390
      %v498 = vunpack.c.h.b16 %v390
      %v499 = vunpack.c.l.b16 %v391
      %v500 = vunpack.c.h.b16 %v391
      %v501 = vunpack.c.l.b16 %v392
      %v502 = vunpack.c.h.b16 %v392
      %v503 = vpack.c.b16 %v443, %v439
      %v504 = vpack.c.b16 %v444, %v440
      %v505 = vpack.c.b16 %v445, %v441
      %v506 = vpack.c.b16 %v446, %v442
      %v507 = vpack.c.b16 %v451, %v447
      %v508 = vpack.c.b16 %v452, %v448
      %v509 = vpack.c.b16 %v453, %v449
      %v510 = vpack.c.b16 %v454, %v450
      %v511 = vpack.c.b16 %v459, %v455
      %v512 = vpack.c.b16 %v460, %v456
      %v513 = vpack.c.b16 %v461, %v457
      %v514 = vpack.c.b16 %v462, %v458
      %v515 = vpack.c.b16 %v467, %v463
      %v516 = vpack.c.b16 %v468, %v464
      %v517 = vpack.c.b16 %v469, %v465
      %v518 = vpack.c.b16 %v470, %v466
      %v519 = vpack.c.b16 %v475, %v471
      %v520 = vpack.c.b16 %v476, %v472
      %v521 = vpack.c.b16 %v477, %v473
      %v522 = vpack.c.b16 %v478, %v474
      %v523 = vpack.c.b16 %v483, %v479
      %v524 = vpack.c.b16 %v484, %v480
      %v525 = vpack.c.b16 %v485, %v481
      %v526 = vpack.c.b16 %v486, %v482
      %v527 = vpack.c.b16 %v491, %v487
      %v528 = vpack.c.b16 %v492, %v488
      %v529 = vpack.c.b16 %v493, %v489
      %v530 = vpack.c.b16 %v494, %v490
      %v531 = vpack.c.b16 %v499, %v495
      %v532 = vpack.c.b16 %v500, %v496
      %v533 = vpack.c.b16 %v501, %v497
      %v534 = vpack.c.b16 %v502, %v498
      %567 = vmatpush.bf16.msra.mxu0 %v531
      %568 = vmatpush.bf16.msra.mxu0 %v527
      %569 = vmatpush.bf16.msra.mxu0 %v523
      %570 = vmatpush.bf16.msra.mxu0 %v519
      %571 = vmatpush.bf16.msra.mxu0 %v515
      %572 = vmatpush.bf16.msra.mxu0 %v511
      %573 = vmatpush.bf16.msra.mxu0 %v507
      %574 = vmatpush.bf16.msra.mxu0 %v503
      %575 = vmatmul.bf16.gmra.mxu0 %v405
      %v576 = vpop.f32.mrf.mxu0
      %v577 = vadd.f32 %v393, %v576
      %v578 = vpop.f32.mrf.mxu0
      %v579 = vadd.f32 %v397, %v578
      %580 = vdwg.mxu0
      %581 = vmatpush.bf16.msra.mxu0 %v532
      %582 = vmatpush.bf16.msra.mxu0 %v528
      %583 = vmatpush.bf16.msra.mxu0 %v524
      %584 = vmatpush.bf16.msra.mxu0 %v520
      %585 = vmatpush.bf16.msra.mxu0 %v516
      %586 = vmatpush.bf16.msra.mxu0 %v512
      %587 = vmatpush.bf16.msra.mxu0 %v508
      %588 = vmatpush.bf16.msra.mxu0 %v504
      %589 = vmatmul.bf16.gmra.mxu0 %v405
      %v590 = vpop.f32.mrf.mxu0
      %v591 = vadd.f32 %v394, %v590
      %v592 = vpop.f32.mrf.mxu0
      %v593 = vadd.f32 %v398, %v592
      %594 = vdwg.mxu0
      %595 = vmatpush.bf16.msra.mxu0 %v533
      %596 = vmatpush.bf16.msra.mxu0 %v529
      %597 = vmatpush.bf16.msra.mxu0 %v525
      %598 = vmatpush.bf16.msra.mxu0 %v521
      %599 = vmatpush.bf16.msra.mxu0 %v517
      %600 = vmatpush.bf16.msra.mxu0 %v513
      %601 = vmatpush.bf16.msra.mxu0 %v509
      %602 = vmatpush.bf16.msra.mxu0 %v505
      %603 = vmatmul.bf16.gmra.mxu0 %v405
      %v604 = vpop.f32.mrf.mxu0
      %v605 = vadd.f32 %v395, %v604
      %v606 = vpop.f32.mrf.mxu0
      %v607 = vadd.f32 %v399, %v606
      %608 = vdwg.mxu0
      %609 = vmatpush.bf16.msra.mxu0 %v534
      %610 = vmatpush.bf16.msra.mxu0 %v530
      %611 = vmatpush.bf16.msra.mxu0 %v526
      %612 = vmatpush.bf16.msra.mxu0 %v522
      %613 = vmatpush.bf16.msra.mxu0 %v518
      %614 = vmatpush.bf16.msra.mxu0 %v514
      %615 = vmatpush.bf16.msra.mxu0 %v510
      %616 = vmatpush.bf16.msra.mxu0 %v506
      %617 = vmatmul.bf16.gmra.mxu0 %v405
      %v618 = vpop.f32.mrf.mxu0
      %v619 = vadd.f32 %v396, %v618
      %v620 = vpop.f32.mrf.mxu0
      %v621 = vadd.f32 %v400, %v620
      %622 = vdwg.mxu0
      %v623 = vld [vmem:[%s6] sm:$0xf]
      %v625 = vperm.slane %v623, 0
      %v626 = vperm.slane %v623, 1
      %v627 = vperm.slane %v623, 2
      %v628 = vperm.slane %v623, 3
      %v633 = vadd.f32 %v577, %v625
      %v634 = vadd.f32 %v591, %v626
      %v635 = vadd.f32 %v605, %v627
      %v636 = vadd.f32 %v619, %v628
      %v637 = vadd.f32 %v579, %v625
      %v638 = vadd.f32 %v593, %v626
      %v639 = vadd.f32 %v607, %v627
      %v640 = vadd.f32 %v621, %v628
      %v641 = vxor.u32 %v633, 2147483648
      %v642 = vxor.u32 %v637, 2147483648
      %v643 = vmul.f32 %v641, 1.442695
      %v644 = vpow.pop %v643
      %v645 = vmul.f32 %v642, 1.442695
      %v646 = vpow.pop %v645
      %v647 = vadd.f32 %v644, 1.0
      %v648 = vadd.f32 %v646, 1.0
      %v649 = vrcp.pop %v647
      %v650 = vmul.f32 %v647, %v649
      %v651 = vsub.f32 1.0, %v650
      %v652 = vmul.f32 %v649, %v651
      %v653 = vadd.f32 %v649, %v652
      %vm654 = vweird.f32 %v647
      %vm655 = vweird.f32 %v649
      %vm656 = vmor %vm654, %vm655
      %v657 = vsel %vm656, %v649, %v653
      %v658 = vand.u32 2147483647, %v647
      %vm659 = vcmp.eq.f32.partialorder %v658, 8.507059e+37
      %v660 = vand.u32 %v647, 2147483648
      %v661 = vor.u32 1.1754944e-38, %v660
      %v662 = vsel %vm659, %v661, %v657
      %v663 = vmul.f32 1.0, %v662
      %v664 = vrcp.pop %v648
      %v665 = vmul.f32 %v648, %v664
      %v666 = vsub.f32 1.0, %v665
      %v667 = vmul.f32 %v664, %v666
      %v668 = vadd.f32 %v664, %v667
      %vm669 = vweird.f32 %v648
      %vm670 = vweird.f32 %v664
      %vm671 = vmor %vm669, %vm670
      %v672 = vsel %vm671, %v664, %v668
      %v673 = vand.u32 2147483647, %v648
      %vm674 = vcmp.eq.f32.partialorder %v673, 8.507059e+37
      %v675 = vand.u32 %v648, 2147483648
      %v676 = vor.u32 1.1754944e-38, %v675
      %v677 = vsel %vm674, %v676, %v672
      %v678 = vmul.f32 1.0, %v677
      %v679 = vxor.u32 %v634, 2147483648
      %v680 = vxor.u32 %v638, 2147483648
      %v681 = vmul.f32 %v679, 1.442695
      %v682 = vpow.pop %v681
      %v683 = vmul.f32 %v680, 1.442695
      %v684 = vpow.pop %v683
      %v685 = vadd.f32 %v682, 1.0
      %v686 = vadd.f32 %v684, 1.0
      %v687 = vrcp.pop %v685
      %v688 = vmul.f32 %v685, %v687
      %v689 = vsub.f32 1.0, %v688
      %v690 = vmul.f32 %v687, %v689
      %v691 = vadd.f32 %v687, %v690
      %vm692 = vweird.f32 %v685
      %vm693 = vweird.f32 %v687
      %vm694 = vmor %vm692, %vm693
      %v695 = vsel %vm694, %v687, %v691
      %v696 = vand.u32 2147483647, %v685
      %vm697 = vcmp.eq.f32.partialorder %v696, 8.507059e+37
      %v698 = vand.u32 %v685, 2147483648
      %v699 = vor.u32 1.1754944e-38, %v698
      %v700 = vsel %vm697, %v699, %v695
      %v701 = vmul.f32 1.0, %v700
      %v702 = vrcp.pop %v686
      %v703 = vmul.f32 %v686, %v702
      %v704 = vsub.f32 1.0, %v703
      %v705 = vmul.f32 %v702, %v704
      %v706 = vadd.f32 %v702, %v705
      %vm707 = vweird.f32 %v686
      %vm708 = vweird.f32 %v702
      %vm709 = vmor %vm707, %vm708
      %v710 = vsel %vm709, %v702, %v706
      %v711 = vand.u32 2147483647, %v686
      %vm712 = vcmp.eq.f32.partialorder %v711, 8.507059e+37
      %v713 = vand.u32 %v686, 2147483648
      %v714 = vor.u32 1.1754944e-38, %v713
      %v715 = vsel %vm712, %v714, %v710
      %v716 = vmul.f32 1.0, %v715
      %v717 = vtanh.pop %v635
      %v718 = vtanh.pop %v639
      %v719 = vxor.u32 %v636, 2147483648
      %v720 = vxor.u32 %v640, 2147483648
      %v721 = vmul.f32 %v719, 1.442695
      %v722 = vpow.pop %v721
      %v723 = vmul.f32 %v720, 1.442695
      %v724 = vpow.pop %v723
      %v725 = vadd.f32 %v722, 1.0
      %v726 = vadd.f32 %v724, 1.0
      %v727 = vrcp.pop %v725
      %v728 = vmul.f32 %v725, %v727
      %v729 = vsub.f32 1.0, %v728
      %v730 = vmul.f32 %v727, %v729
      %v731 = vadd.f32 %v727, %v730
      %vm732 = vweird.f32 %v725
      %vm733 = vweird.f32 %v727
      %vm734 = vmor %vm732, %vm733
      %v735 = vsel %vm734, %v727, %v731
      %v736 = vand.u32 2147483647, %v725
      %vm737 = vcmp.eq.f32.partialorder %v736, 8.507059e+37
      %v738 = vand.u32 %v725, 2147483648
      %v739 = vor.u32 1.1754944e-38, %v738
      %v740 = vsel %vm737, %v739, %v735
      %v741 = vmul.f32 1.0, %v740
      %v742 = vrcp.pop %v726
      %v743 = vmul.f32 %v726, %v742
      %v744 = vsub.f32 1.0, %v743
      %v745 = vmul.f32 %v742, %v744
      %v746 = vadd.f32 %v742, %v745
      %vm747 = vweird.f32 %v726
      %vm748 = vweird.f32 %v742
      %vm749 = vmor %vm747, %vm748
      %v750 = vsel %vm749, %v742, %v746
      %v751 = vand.u32 2147483647, %v726
      %vm752 = vcmp.eq.f32.partialorder %v751, 8.507059e+37
      %v753 = vand.u32 %v726, 2147483648
      %v754 = vor.u32 1.1754944e-38, %v753
      %v755 = vsel %vm752, %v754, %v750
      %v756 = vmul.f32 1.0, %v755
      %v757 = vld [vmem:[#allocation4] sm:$0xff]
      %v758 = vld [vmem:[#allocation4 + $0x8] sm:$0xff]
      %v759 = vmul.f32 %v701, %v757
      %v760 = vmul.f32 %v716, %v758
      %v761 = vmul.f32 %v663, %v717
      %v762 = vmul.f32 %v678, %v718
      %v763 = vadd.f32 %v759, %v761
      %v764 = vadd.f32 %v760, %v762
      %v765 = vtanh.pop %v763
      %v766 = vtanh.pop %v764
      %v767 = vmul.f32 %v741, %v765
      %v768 = vmul.f32 %v756, %v766
      %v769 = vpack.c.bf16 %v767, %v767
      %v770 = vpack.c.bf16 %v768, %v768
      %771 = vst [vmem:[#allocation4] sm:$0xff] %v763
      %772 = vst [vmem:[#allocation4 + $0x8] sm:$0xff] %v764
      %773 = vst [vmem:[#allocation3] sm:$0xf] %v769
      %774 = vst [vmem:[#allocation3 + $0x4] sm:$0xf] %v770
      %v775 = vld [vmem:[%s7] sm:$0xff]
      %v776 = vld [vmem:[%s7 + $0x8] sm:$0xff]
      %v777 = vld [vmem:[%s7 + $0x10] sm:$0xff]
      %v778 = vld [vmem:[%s7 + $0x18] sm:$0xff]
      %v779 = vld [vmem:[%s7 + $0x20] sm:$0xff]
      %v780 = vld [vmem:[%s7 + $0x28] sm:$0xff]
      %v781 = vld [vmem:[%s7 + $0x30] sm:$0xff]
      %v782 = vld [vmem:[%s7 + $0x38] sm:$0xff]
      %v783 = vld [vmem:[%s7 + $0x40] sm:$0xff]
      %v784 = vld [vmem:[%s7 + $0x48] sm:$0xff]
      %v785 = vld [vmem:[%s7 + $0x50] sm:$0xff]
      %v786 = vld [vmem:[%s7 + $0x58] sm:$0xff]
      %v787 = vld [vmem:[%s7 + $0x60] sm:$0xff]
      %v788 = vld [vmem:[%s7 + $0x68] sm:$0xff]
      %v789 = vld [vmem:[%s7 + $0x70] sm:$0xff]
      %v790 = vld [vmem:[%s7 + $0x78] sm:$0xff]
      %v791 = vld [vmem:[%s8] sm:$0x3]
      %v793 = vperm.slane %v791, 0
      %v794 = vperm.slane %v791, 1
      %v799 = vunpack.c.l.b16 %v769
      %v800 = vunpack.c.l.b16 %v770
      %v801 = vpack.c.b16 %v800, %v799
      %v819 = vunpack.c.l.b16 %v775
      %v820 = vunpack.c.h.b16 %v775
      %v821 = vunpack.c.l.b16 %v776
      %v822 = vunpack.c.h.b16 %v776
      %v823 = vunpack.c.l.b16 %v777
      %v824 = vunpack.c.h.b16 %v777
      %v825 = vunpack.c.l.b16 %v778
      %v826 = vunpack.c.h.b16 %v778
      %v827 = vunpack.c.l.b16 %v779
      %v828 = vunpack.c.h.b16 %v779
      %v829 = vunpack.c.l.b16 %v780
      %v830 = vunpack.c.h.b16 %v780
      %v831 = vunpack.c.l.b16 %v781
      %v832 = vunpack.c.h.b16 %v781
      %v833 = vunpack.c.l.b16 %v782
      %v834 = vunpack.c.h.b16 %v782
      %v835 = vunpack.c.l.b16 %v783
      %v836 = vunpack.c.h.b16 %v783
      %v837 = vunpack.c.l.b16 %v784
      %v838 = vunpack.c.h.b16 %v784
      %v839 = vunpack.c.l.b16 %v785
      %v840 = vunpack.c.h.b16 %v785
      %v841 = vunpack.c.l.b16 %v786
      %v842 = vunpack.c.h.b16 %v786
      %v843 = vunpack.c.l.b16 %v787
      %v844 = vunpack.c.h.b16 %v787
      %v845 = vunpack.c.l.b16 %v788
      %v846 = vunpack.c.h.b16 %v788
      %v847 = vunpack.c.l.b16 %v789
      %v848 = vunpack.c.h.b16 %v789
      %v849 = vunpack.c.l.b16 %v790
      %v850 = vunpack.c.h.b16 %v790
      %v851 = vpack.c.b16 %v821, %v819
      %v852 = vpack.c.b16 %v822, %v820
      %v853 = vpack.c.b16 %v825, %v823
      %v854 = vpack.c.b16 %v826, %v824
      %v855 = vpack.c.b16 %v829, %v827
      %v856 = vpack.c.b16 %v830, %v828
      %v857 = vpack.c.b16 %v833, %v831
      %v858 = vpack.c.b16 %v834, %v832
      %v859 = vpack.c.b16 %v837, %v835
      %v860 = vpack.c.b16 %v838, %v836
      %v861 = vpack.c.b16 %v841, %v839
      %v862 = vpack.c.b16 %v842, %v840
      %v863 = vpack.c.b16 %v845, %v843
      %v864 = vpack.c.b16 %v846, %v844
      %v865 = vpack.c.b16 %v849, %v847
      %v866 = vpack.c.b16 %v850, %v848
      %883 = vmatpush.bf16.msra.mxu0 %v865
      %884 = vmatpush.bf16.msra.mxu0 %v863
      %885 = vmatpush.bf16.msra.mxu0 %v861
      %886 = vmatpush.bf16.msra.mxu0 %v859
      %887 = vmatpush.bf16.msra.mxu0 %v857
      %888 = vmatpush.bf16.msra.mxu0 %v855
      %889 = vmatpush.bf16.msra.mxu0 %v853
      %890 = vmatpush.bf16.msra.mxu0 %v851
      %891 = vmatmul.bf16.gmra.mxu0 %v801
      %v892 = vpop.f32.mrf.mxu0
      %v893 = vadd.f32 %v793, %v892
      %v894 = vpop.f32.mrf.mxu0
      %v895 = vadd.f32 %v793, %v894
      %896 = vdwg.mxu0
      %897 = vmatpush.bf16.msra.mxu0 %v866
      %898 = vmatpush.bf16.msra.mxu0 %v864
      %899 = vmatpush.bf16.msra.mxu0 %v862
      %900 = vmatpush.bf16.msra.mxu0 %v860
      %901 = vmatpush.bf16.msra.mxu0 %v858
      %902 = vmatpush.bf16.msra.mxu0 %v856
      %903 = vmatpush.bf16.msra.mxu0 %v854
      %904 = vmatpush.bf16.msra.mxu0 %v852
      %905 = vmatmul.bf16.gmra.mxu0 %v801
      %v906 = vpop.f32.mrf.mxu0
      %v907 = vadd.f32 %v794, %v906
      %v908 = vpop.f32.mrf.mxu0
      %v909 = vadd.f32 %v794, %v908
      %910 = vdwg.mxu0
      %911 = vst [vmem:[%s321] sm:$0xff] %v893
      %912 = vst [vmem:[%s321 + $0x8] sm:$0xff] %v907
      %913 = vst [vmem:[%s321 + $0x10] sm:$0xff] %v895
      %914 = vst [vmem:[%s321 + $0x18] sm:$0xff] %v909
      %s915 = sadd.s32 %s337, 1
      %p916 = scmp.lt.s32.totalorder %s915, 8
      %s917 = sld [smem:[#allocation6 + %s915]]
      %p918 = scmp.eq.s32.totalorder %s917, 0
      %p919 = pnand %p916, %p918
      %p920 = pneg %p919
      // Predicated region
      $region61: #{seq2seq_forward.3} parent=51 // pred_check
        _
      $region62: #{seq2seq_forward.3} parent=51 // pred_check_branch
        %922 = sbr.rel (%p919) target = $region64
      $region63: #{seq2seq_forward.3} parent=51 // pred_region
        %v923 = vlaneseq
        %v924 = vand.u32 %v923, 127
        %v925 = vadd.s32 %v924, 128
        %v926 = vmax.f32 %v893, %v907
        %927 = vmax.xlane.f32.xlu0 %v926
        %v928 = vpop.xlane.xlu0 %927
        %v929 = vmax.f32 %v895, %v909
        %930 = vmax.xlane.f32.xlu0 %v929
        %v931 = vpop.xlane.xlu0 %930
        %vm932 = vcmp.eq.f32.partialorder %v893, %v928
        %vm933 = vcmp.eq.f32.partialorder %v907, %v928
        %vm934 = vcmp.eq.f32.partialorder %v895, %v931
        %vm935 = vcmp.eq.f32.partialorder %v909, %v931
        %v936 = vsel %vm932, %v924, 256
        %v937 = vsel %vm933, %v925, 256
        %v938 = vsel %vm934, %v924, 256
        %v939 = vsel %vm935, %v925, 256
        %vm940 = vcmp.lt.s32.totalorder %v936, %v937
        %v941 = vsel %vm940, %v936, %v937
        %v942 = vand.u32 %v941, 65535
        %v943 = vshra.s32 %v941, 16
        %v944 = vcvt.s32.f32 %v942
        %v945 = vcvt.s32.f32 %v943
        %946 = vmin.xlane.f32.xlu0 %v945
        %v947 = vpop.xlane.xlu0 %946
        %vm948 = vcmp.eq.f32.partialorder %v945, %v947
        %v949 = vsel %vm948, %v944, inf
        %950 = vmin.xlane.f32.xlu0 %v949
        %v951 = vpop.xlane.xlu0 %950
        %v952 = vcvt.f32.s32 %v951
        %v953 = vcvt.f32.s32 %v947
        %v954 = vshll.u32 %v953, 16
        %v955 = vadd.s32 %v954, %v952
        %vm956 = vcmp.lt.s32.totalorder %v938, %v939
        %v957 = vsel %vm956, %v938, %v939
        %v958 = vand.u32 %v957, 65535
        %v959 = vshra.s32 %v957, 16
        %v960 = vcvt.s32.f32 %v958
        %v961 = vcvt.s32.f32 %v959
        %962 = vmin.xlane.f32.xlu0 %v961
        %v963 = vpop.xlane.xlu0 %962
        %vm964 = vcmp.eq.f32.partialorder %v961, %v963
        %v965 = vsel %vm964, %v960, inf
        %966 = vmin.xlane.f32.xlu0 %v965
        %v967 = vpop.xlane.xlu0 %966
        %v968 = vcvt.f32.s32 %v967
        %v969 = vcvt.f32.s32 %v963
        %v970 = vshll.u32 %v969, 16
        %v971 = vadd.s32 %v970, %v968
        %vm972 = vcmp.eq.s32.totalorder %v924, %v955
        %vm973 = vcmp.eq.s32.totalorder %v925, %v955
        %vm974 = vcmp.eq.s32.totalorder %v924, %v971
        %vm975 = vcmp.eq.s32.totalorder %v925, %v971
        %v976 = vsel %vm972, 1, 0
        %v977 = vsel %vm973, 1, 0
        %v978 = vsel %vm974, 1, 0
        %v979 = vsel %vm975, 1, 0
        %v980 = vcvt.s32.f32 %v976
        %v981 = vcvt.s32.f32 %v977
        %v982 = vcvt.s32.f32 %v978
        %v983 = vcvt.s32.f32 %v979
        %v984 = vpack.c.bf16 %v982, %v980
        %v985 = vpack.c.bf16 %v983, %v981
        %v986 = vld [vmem:[%s4] sm:$0xff]
        %v987 = vld [vmem:[%s4 + $0x8] sm:$0xff]
        %v988 = vld [vmem:[%s4 + $0x10] sm:$0xff]
        %v989 = vld [vmem:[%s4 + $0x18] sm:$0xff]
        %v990 = vld [vmem:[%s4 + $0x20] sm:$0xff]
        %v991 = vld [vmem:[%s4 + $0x28] sm:$0xff]
        %v992 = vld [vmem:[%s4 + $0x30] sm:$0xff]
        %v993 = vld [vmem:[%s4 + $0x38] sm:$0xff]
        %v994 = vld [vmem:[%s4 + $0x40] sm:$0xff]
        %v995 = vld [vmem:[%s4 + $0x48] sm:$0xff]
        %v996 = vld [vmem:[%s4 + $0x50] sm:$0xff]
        %v997 = vld [vmem:[%s4 + $0x58] sm:$0xff]
        %v998 = vld [vmem:[%s4 + $0x60] sm:$0xff]
        %v999 = vld [vmem:[%s4 + $0x68] sm:$0xff]
        %v1000 = vld [vmem:[%s4 + $0x70] sm:$0xff]
        %v1001 = vld [vmem:[%s4 + $0x78] sm:$0xff]
        %v1002 = vld [vmem:[%s4 + $0x80] sm:$0xff]
        %v1003 = vld [vmem:[%s4 + $0x88] sm:$0xff]
        %v1004 = vld [vmem:[%s4 + $0x90] sm:$0xff]
        %v1005 = vld [vmem:[%s4 + $0x98] sm:$0xff]
        %v1006 = vld [vmem:[%s4 + $0xa0] sm:$0xff]
        %v1007 = vld [vmem:[%s4 + $0xa8] sm:$0xff]
        %v1008 = vld [vmem:[%s4 + $0xb0] sm:$0xff]
        %v1009 = vld [vmem:[%s4 + $0xb8] sm:$0xff]
        %v1010 = vld [vmem:[%s4 + $0xc0] sm:$0xff]
        %v1011 = vld [vmem:[%s4 + $0xc8] sm:$0xff]
        %v1012 = vld [vmem:[%s4 + $0xd0] sm:$0xff]
        %v1013 = vld [vmem:[%s4 + $0xd8] sm:$0xff]
        %v1014 = vld [vmem:[%s4 + $0xe0] sm:$0xff]
        %v1015 = vld [vmem:[%s4 + $0xe8] sm:$0xff]
        %v1016 = vld [vmem:[%s4 + $0xf0] sm:$0xff]
        %v1017 = vld [vmem:[%s4 + $0xf8] sm:$0xff]
        %v1018 = vld [vmem:[%s4 + $0x100] sm:$0xff]
        %v1019 = vld [vmem:[%s4 + $0x108] sm:$0xff]
        %v1020 = vld [vmem:[%s4 + $0x110] sm:$0xff]
        %v1021 = vld [vmem:[%s4 + $0x118] sm:$0xff]
        %v1022 = vld [vmem:[%s4 + $0x120] sm:$0xff]
        %v1023 = vld [vmem:[%s4 + $0x128] sm:$0xff]
        %v1024 = vld [vmem:[%s4 + $0x130] sm:$0xff]
        %v1025 = vld [vmem:[%s4 + $0x138] sm:$0xff]
        %v1026 = vld [vmem:[%s4 + $0x140] sm:$0xff]
        %v1027 = vld [vmem:[%s4 + $0x148] sm:$0xff]
        %v1028 = vld [vmem:[%s4 + $0x150] sm:$0xff]
        %v1029 = vld [vmem:[%s4 + $0x158] sm:$0xff]
        %v1030 = vld [vmem:[%s4 + $0x160] sm:$0xff]
        %v1031 = vld [vmem:[%s4 + $0x168] sm:$0xff]
        %v1032 = vld [vmem:[%s4 + $0x170] sm:$0xff]
        %v1033 = vld [vmem:[%s4 + $0x178] sm:$0xff]
        %v1034 = vld [vmem:[%s4 + $0x180] sm:$0xff]
        %v1035 = vld [vmem:[%s4 + $0x188] sm:$0xff]
        %v1036 = vld [vmem:[%s4 + $0x190] sm:$0xff]
        %v1037 = vld [vmem:[%s4 + $0x198] sm:$0xff]
        %v1038 = vld [vmem:[%s4 + $0x1a0] sm:$0xff]
        %v1039 = vld [vmem:[%s4 + $0x1a8] sm:$0xff]
        %v1040 = vld [vmem:[%s4 + $0x1b0] sm:$0xff]
        %v1041 = vld [vmem:[%s4 + $0x1b8] sm:$0xff]
        %v1042 = vld [vmem:[%s4 + $0x1c0] sm:$0xff]
        %v1043 = vld [vmem:[%s4 + $0x1c8] sm:$0xff]
        %v1044 = vld [vmem:[%s4 + $0x1d0] sm:$0xff]
        %v1045 = vld [vmem:[%s4 + $0x1d8] sm:$0xff]
        %v1046 = vld [vmem:[%s4 + $0x1e0] sm:$0xff]
        %v1047 = vld [vmem:[%s4 + $0x1e8] sm:$0xff]
        %v1048 = vld [vmem:[%s4 + $0x1f0] sm:$0xff]
        %v1049 = vld [vmem:[%s4 + $0x1f8] sm:$0xff]
        %v1114 = vunpack.c.l.b16 %v986
        %v1115 = vunpack.c.h.b16 %v986
        %v1116 = vunpack.c.l.b16 %v987
        %v1117 = vunpack.c.h.b16 %v987
        %v1118 = vunpack.c.l.b16 %v988
        %v1119 = vunpack.c.h.b16 %v988
        %v1120 = vunpack.c.l.b16 %v989
        %v1121 = vunpack.c.h.b16 %v989
        %v1122 = vunpack.c.l.b16 %v990
        %v1123 = vunpack.c.h.b16 %v990
        %v1124 = vunpack.c.l.b16 %v991
        %v1125 = vunpack.c.h.b16 %v991
        %v1126 = vunpack.c.l.b16 %v992
        %v1127 = vunpack.c.h.b16 %v992
        %v1128 = vunpack.c.l.b16 %v993
        %v1129 = vunpack.c.h.b16 %v993
        %v1130 = vunpack.c.l.b16 %v994
        %v1131 = vunpack.c.h.b16 %v994
        %v1132 = vunpack.c.l.b16 %v995
        %v1133 = vunpack.c.h.b16 %v995
        %v1134 = vunpack.c.l.b16 %v996
        %v1135 = vunpack.c.h.b16 %v996
        %v1136 = vunpack.c.l.b16 %v997
        %v1137 = vunpack.c.h.b16 %v997
        %v1138 = vunpack.c.l.b16 %v998
        %v1139 = vunpack.c.h.b16 %v998
        %v1140 = vunpack.c.l.b16 %v999
        %v1141 = vunpack.c.h.b16 %v999
        %v1142 = vunpack.c.l.b16 %v1000
        %v1143 = vunpack.c.h.b16 %v1000
        %v1144 = vunpack.c.l.b16 %v1001
        %v1145 = vunpack.c.h.b16 %v1001
        %v1146 = vunpack.c.l.b16 %v1002
        %v1147 = vunpack.c.h.b16 %v1002
        %v1148 = vunpack.c.l.b16 %v1003
        %v1149 = vunpack.c.h.b16 %v1003
        %v1150 = vunpack.c.l.b16 %v1004
        %v1151 = vunpack.c.h.b16 %v1004
        %v1152 = vunpack.c.l.b16 %v1005
        %v1153 = vunpack.c.h.b16 %v1005
        %v1154 = vunpack.c.l.b16 %v1006
        %v1155 = vunpack.c.h.b16 %v1006
        %v1156 = vunpack.c.l.b16 %v1007
        %v1157 = vunpack.c.h.b16 %v1007
        %v1158 = vunpack.c.l.b16 %v1008
        %v1159 = vunpack.c.h.b16 %v1008
        %v1160 = vunpack.c.l.b16 %v1009
        %v1161 = vunpack.c.h.b16 %v1009
        %v1162 = vunpack.c.l.b16 %v1010
        %v1163 = vunpack.c.h.b16 %v1010
        %v1164 = vunpack.c.l.b16 %v1011
        %v1165 = vunpack.c.h.b16 %v1011
        %v1166 = vunpack.c.l.b16 %v1012
        %v1167 = vunpack.c.h.b16 %v1012
        %v1168 = vunpack.c.l.b16 %v1013
        %v1169 = vunpack.c.h.b16 %v1013
        %v1170 = vunpack.c.l.b16 %v1014
        %v1171 = vunpack.c.h.b16 %v1014
        %v1172 = vunpack.c.l.b16 %v1015
        %v1173 = vunpack.c.h.b16 %v1015
        %v1174 = vunpack.c.l.b16 %v1016
        %v1175 = vunpack.c.h.b16 %v1016
        %v1176 = vunpack.c.l.b16 %v1017
        %v1177 = vunpack.c.h.b16 %v1017
        %v1178 = vunpack.c.l.b16 %v1018
        %v1179 = vunpack.c.h.b16 %v1018
        %v1180 = vunpack.c.l.b16 %v1019
        %v1181 = vunpack.c.h.b16 %v1019
        %v1182 = vunpack.c.l.b16 %v1020
        %v1183 = vunpack.c.h.b16 %v1020
        %v1184 = vunpack.c.l.b16 %v1021
        %v1185 = vunpack.c.h.b16 %v1021
        %v1186 = vunpack.c.l.b16 %v1022
        %v1187 = vunpack.c.h.b16 %v1022
        %v1188 = vunpack.c.l.b16 %v1023
        %v1189 = vunpack.c.h.b16 %v1023
        %v1190 = vunpack.c.l.b16 %v1024
        %v1191 = vunpack.c.h.b16 %v1024
        %v1192 = vunpack.c.l.b16 %v1025
        %v1193 = vunpack.c.h.b16 %v1025
        %v1194 = vunpack.c.l.b16 %v1026
        %v1195 = vunpack.c.h.b16 %v1026
        %v1196 = vunpack.c.l.b16 %v1027
        %v1197 = vunpack.c.h.b16 %v1027
        %v1198 = vunpack.c.l.b16 %v1028
        %v1199 = vunpack.c.h.b16 %v1028
        %v1200 = vunpack.c.l.b16 %v1029
        %v1201 = vunpack.c.h.b16 %v1029
        %v1202 = vunpack.c.l.b16 %v1030
        %v1203 = vunpack.c.h.b16 %v1030
        %v1204 = vunpack.c.l.b16 %v1031
        %v1205 = vunpack.c.h.b16 %v1031
        %v1206 = vunpack.c.l.b16 %v1032
        %v1207 = vunpack.c.h.b16 %v1032
        %v1208 = vunpack.c.l.b16 %v1033
        %v1209 = vunpack.c.h.b16 %v1033
        %v1210 = vunpack.c.l.b16 %v1034
        %v1211 = vunpack.c.h.b16 %v1034
        %v1212 = vunpack.c.l.b16 %v1035
        %v1213 = vunpack.c.h.b16 %v1035
        %v1214 = vunpack.c.l.b16 %v1036
        %v1215 = vunpack.c.h.b16 %v1036
        %v1216 = vunpack.c.l.b16 %v1037
        %v1217 = vunpack.c.h.b16 %v1037
        %v1218 = vunpack.c.l.b16 %v1038
        %v1219 = vunpack.c.h.b16 %v1038
        %v1220 = vunpack.c.l.b16 %v1039
        %v1221 = vunpack.c.h.b16 %v1039
        %v1222 = vunpack.c.l.b16 %v1040
        %v1223 = vunpack.c.h.b16 %v1040
        %v1224 = vunpack.c.l.b16 %v1041
        %v1225 = vunpack.c.h.b16 %v1041
        %v1226 = vunpack.c.l.b16 %v1042
        %v1227 = vunpack.c.h.b16 %v1042
        %v1228 = vunpack.c.l.b16 %v1043
        %v1229 = vunpack.c.h.b16 %v1043
        %v1230 = vunpack.c.l.b16 %v1044
        %v1231 = vunpack.c.h.b16 %v1044
        %v1232 = vunpack.c.l.b16 %v1045
        %v1233 = vunpack.c.h.b16 %v1045
        %v1234 = vunpack.c.l.b16 %v1046
        %v1235 = vunpack.c.h.b16 %v1046
        %v1236 = vunpack.c.l.b16 %v1047
        %v1237 = vunpack.c.h.b16 %v1047
        %v1238 = vunpack.c.l.b16 %v1048
        %v1239 = vunpack.c.h.b16 %v1048
        %v1240 = vunpack.c.l.b16 %v1049
        %v1241 = vunpack.c.h.b16 %v1049
        %v1242 = vpack.c.b16 %v1118, %v1114
        %v1243 = vpack.c.b16 %v1119, %v1115
        %v1244 = vpack.c.b16 %v1120, %v1116
        %v1245 = vpack.c.b16 %v1121, %v1117
        %v1246 = vpack.c.b16 %v1126, %v1122
        %v1247 = vpack.c.b16 %v1127, %v1123
        %v1248 = vpack.c.b16 %v1128, %v1124
        %v1249 = vpack.c.b16 %v1129, %v1125
        %v1250 = vpack.c.b16 %v1134, %v1130
        %v1251 = vpack.c.b16 %v1135, %v1131
        %v1252 = vpack.c.b16 %v1136, %v1132
        %v1253 = vpack.c.b16 %v1137, %v1133
        %v1254 = vpack.c.b16 %v1142, %v1138
        %v1255 = vpack.c.b16 %v1143, %v1139
        %v1256 = vpack.c.b16 %v1144, %v1140
        %v1257 = vpack.c.b16 %v1145, %v1141
        %v1258 = vpack.c.b16 %v1150, %v1146
        %v1259 = vpack.c.b16 %v1151, %v1147
        %v1260 = vpack.c.b16 %v1152, %v1148
        %v1261 = vpack.c.b16 %v1153, %v1149
        %v1262 = vpack.c.b16 %v1158, %v1154
        %v1263 = vpack.c.b16 %v1159, %v1155
        %v1264 = vpack.c.b16 %v1160, %v1156
        %v1265 = vpack.c.b16 %v1161, %v1157
        %v1266 = vpack.c.b16 %v1166, %v1162
        %v1267 = vpack.c.b16 %v1167, %v1163
        %v1268 = vpack.c.b16 %v1168, %v1164
        %v1269 = vpack.c.b16 %v1169, %v1165
        %v1270 = vpack.c.b16 %v1174, %v1170
        %v1271 = vpack.c.b16 %v1175, %v1171
        %v1272 = vpack.c.b16 %v1176, %v1172
        %v1273 = vpack.c.b16 %v1177, %v1173
        %v1274 = vpack.c.b16 %v1182, %v1178
        %v1275 = vpack.c.b16 %v1183, %v1179
        %v1276 = vpack.c.b16 %v1184, %v1180
        %v1277 = vpack.c.b16 %v1185, %v1181
        %v1278 = vpack.c.b16 %v1190, %v1186
        %v1279 = vpack.c.b16 %v1191, %v1187
        %v1280 = vpack.c.b16 %v1192, %v1188
        %v1281 = vpack.c.b16 %v1193, %v1189
        %v1282 = vpack.c.b16 %v1198, %v1194
        %v1283 = vpack.c.b16 %v1199, %v1195
        %v1284 = vpack.c.b16 %v1200, %v1196
        %v1285 = vpack.c.b16 %v1201, %v1197
        %v1286 = vpack.c.b16 %v1206, %v1202
        %v1287 = vpack.c.b16 %v1207, %v1203
        %v1288 = vpack.c.b16 %v1208, %v1204
        %v1289 = vpack.c.b16 %v1209, %v1205
        %v1290 = vpack.c.b16 %v1214, %v1210
        %v1291 = vpack.c.b16 %v1215, %v1211
        %v1292 = vpack.c.b16 %v1216, %v1212
        %v1293 = vpack.c.b16 %v1217, %v1213
        %v1294 = vpack.c.b16 %v1222, %v1218
        %v1295 = vpack.c.b16 %v1223, %v1219
        %v1296 = vpack.c.b16 %v1224, %v1220
        %v1297 = vpack.c.b16 %v1225, %v1221
        %v1298 = vpack.c.b16 %v1230, %v1226
        %v1299 = vpack.c.b16 %v1231, %v1227
        %v1300 = vpack.c.b16 %v1232, %v1228
        %v1301 = vpack.c.b16 %v1233, %v1229
        %v1302 = vpack.c.b16 %v1238, %v1234
        %v1303 = vpack.c.b16 %v1239, %v1235
        %v1304 = vpack.c.b16 %v1240, %v1236
        %v1305 = vpack.c.b16 %v1241, %v1237
        %1370 = vmatpush.bf16.msra.mxu0 %v1270
        %1371 = vmatpush.bf16.msra.mxu0 %v1266
        %1372 = vmatpush.bf16.msra.mxu0 %v1262
        %1373 = vmatpush.bf16.msra.mxu0 %v1258
        %1374 = vmatpush.bf16.msra.mxu0 %v1254
        %1375 = vmatpush.bf16.msra.mxu0 %v1250
        %1376 = vmatpush.bf16.msra.mxu0 %v1246
        %1377 = vmatpush.bf16.msra.mxu0 %v1242
        %1378 = vmatmul.bf16.gmra.mxu0 %v984
        %v1379 = vpop.f32.mrf.mxu0
        %v1380 = vadd.f32 0.0, %v1379
        %v1381 = vpop.f32.mrf.mxu0
        %v1382 = vadd.f32 0.0, %v1381
        %1383 = vdwg.mxu0
        %1384 = vmatpush.bf16.msra.mxu0 %v1302
        %1385 = vmatpush.bf16.msra.mxu0 %v1298
        %1386 = vmatpush.bf16.msra.mxu0 %v1294
        %1387 = vmatpush.bf16.msra.mxu0 %v1290
        %1388 = vmatpush.bf16.msra.mxu0 %v1286
        %1389 = vmatpush.bf16.msra.mxu0 %v1282
        %1390 = vmatpush.bf16.msra.mxu0 %v1278
        %1391 = vmatpush.bf16.msra.mxu0 %v1274
        %1392 = vmatmul.bf16.gmra.mxu0 %v985
        %v1393 = vpop.f32.mrf.mxu0
        %v1394 = vadd.f32 %v1380, %v1393
        %v1395 = vpop.f32.mrf.mxu0
        %v1396 = vadd.f32 %v1382, %v1395
        %1397 = vdwg.mxu0
        %1398 = vmatpush.bf16.msra.mxu0 %v1271
        %1399 = vmatpush.bf16.msra.mxu0 %v1267
        %1400 = vmatpush.bf16.msra.mxu0 %v1263
        %1401 = vmatpush.bf16.msra.mxu0 %v1259
        %1402 = vmatpush.bf16.msra.mxu0 %v1255
        %1403 = vmatpush.bf16.msra.mxu0 %v1251
        %1404 = vmatpush.bf16.msra.mxu0 %v1247
        %1405 = vmatpush.bf16.msra.mxu0 %v1243
        %1406 = vmatmul.bf16.gmra.mxu0 %v984
        %v1407 = vpop.f32.mrf.mxu0
        %v1408 = vadd.f32 0.0, %v1407
        %v1409 = vpop.f32.mrf.mxu0
        %v1410 = vadd.f32 0.0, %v1409
        %1411 = vdwg.mxu0
        %1412 = vmatpush.bf16.msra.mxu0 %v1303
        %1413 = vmatpush.bf16.msra.mxu0 %v1299
        %1414 = vmatpush.bf16.msra.mxu0 %v1295
        %1415 = vmatpush.bf16.msra.mxu0 %v1291
        %1416 = vmatpush.bf16.msra.mxu0 %v1287
        %1417 = vmatpush.bf16.msra.mxu0 %v1283
        %1418 = vmatpush.bf16.msra.mxu0 %v1279
        %1419 = vmatpush.bf16.msra.mxu0 %v1275
        %1420 = vmatmul.bf16.gmra.mxu0 %v985
        %v1421 = vpop.f32.mrf.mxu0
        %v1422 = vadd.f32 %v1408, %v1421
        %v1423 = vpop.f32.mrf.mxu0
        %v1424 = vadd.f32 %v1410, %v1423
        %1425 = vdwg.mxu0
        %1426 = vmatpush.bf16.msra.mxu0 %v1272
        %1427 = vmatpush.bf16.msra.mxu0 %v1268
        %1428 = vmatpush.bf16.msra.mxu0 %v1264
        %1429 = vmatpush.bf16.msra.mxu0 %v1260
        %1430 = vmatpush.bf16.msra.mxu0 %v1256
        %1431 = vmatpush.bf16.msra.mxu0 %v1252
        %1432 = vmatpush.bf16.msra.mxu0 %v1248
        %1433 = vmatpush.bf16.msra.mxu0 %v1244
        %1434 = vmatmul.bf16.gmra.mxu0 %v984
        %v1435 = vpop.f32.mrf.mxu0
        %v1436 = vadd.f32 0.0, %v1435
        %v1437 = vpop.f32.mrf.mxu0
        %v1438 = vadd.f32 0.0, %v1437
        %1439 = vdwg.mxu0
        %1440 = vmatpush.bf16.msra.mxu0 %v1304
        %1441 = vmatpush.bf16.msra.mxu0 %v1300
        %1442 = vmatpush.bf16.msra.mxu0 %v1296
        %1443 = vmatpush.bf16.msra.mxu0 %v1292
        %1444 = vmatpush.bf16.msra.mxu0 %v1288
        %1445 = vmatpush.bf16.msra.mxu0 %v1284
        %1446 = vmatpush.bf16.msra.mxu0 %v1280
        %1447 = vmatpush.bf16.msra.mxu0 %v1276
        %1448 = vmatmul.bf16.gmra.mxu0 %v985
        %v1449 = vpop.f32.mrf.mxu0
        %v1450 = vadd.f32 %v1436, %v1449
        %v1451 = vpop.f32.mrf.mxu0
        %v1452 = vadd.f32 %v1438, %v1451
        %1453 = vdwg.mxu0
        %1454 = vmatpush.bf16.msra.mxu0 %v1273
        %1455 = vmatpush.bf16.msra.mxu0 %v1269
        %1456 = vmatpush.bf16.msra.mxu0 %v1265
        %1457 = vmatpush.bf16.msra.mxu0 %v1261
        %1458 = vmatpush.bf16.msra.mxu0 %v1257
        %1459 = vmatpush.bf16.msra.mxu0 %v1253
        %1460 = vmatpush.bf16.msra.mxu0 %v1249
        %1461 = vmatpush.bf16.msra.mxu0 %v1245
        %1462 = vmatmul.bf16.gmra.mxu0 %v984
        %v1463 = vpop.f32.mrf.mxu0
        %v1464 = vadd.f32 0.0, %v1463
        %v1465 = vpop.f32.mrf.mxu0
        %v1466 = vadd.f32 0.0, %v1465
        %1467 = vdwg.mxu0
        %1468 = vmatpush.bf16.msra.mxu0 %v1305
        %1469 = vmatpush.bf16.msra.mxu0 %v1301
        %1470 = vmatpush.bf16.msra.mxu0 %v1297
        %1471 = vmatpush.bf16.msra.mxu0 %v1293
        %1472 = vmatpush.bf16.msra.mxu0 %v1289
        %1473 = vmatpush.bf16.msra.mxu0 %v1285
        %1474 = vmatpush.bf16.msra.mxu0 %v1281
        %1475 = vmatpush.bf16.msra.mxu0 %v1277
        %1476 = vmatmul.bf16.gmra.mxu0 %v985
        %v1477 = vpop.f32.mrf.mxu0
        %v1478 = vadd.f32 %v1464, %v1477
        %v1479 = vpop.f32.mrf.mxu0
        %v1480 = vadd.f32 %v1466, %v1479
        %1481 = vdwg.mxu0
        %1482 = vst [vmem:[#allocation2] sm:$0xff] %v1394
        %1483 = vst [vmem:[#allocation2 + $0x8] sm:$0xff] %v1422
        %1484 = vst [vmem:[#allocation2 + $0x10] sm:$0xff] %v1450
        %1485 = vst [vmem:[#allocation2 + $0x18] sm:$0xff] %v1478
        %1486 = vst [vmem:[#allocation2 + $0x20] sm:$0xff] %v1396
        %1487 = vst [vmem:[#allocation2 + $0x28] sm:$0xff] %v1424
        %1488 = vst [vmem:[#allocation2 + $0x30] sm:$0xff] %v1452
        %1489 = vst [vmem:[#allocation2 + $0x38] sm:$0xff] %v1480
      $region64: #{seq2seq_forward.3} parent=51 // pred_fallthru
        _
      %s1490 = sld [smem:[#allocation6 + %s915]]
      %p1491 = scmp.ne.s32.totalorder %s1490, 0
      // Predicated region
      $region65: #{seq2seq_forward.3} parent=51 // pred_check
        %p1492 = pneg %p1491
      $region66: #{seq2seq_forward.3} parent=51 // pred_check_branch
        %1494 = sbr.rel (%p1492) target = $region68
      $region67: #{seq2seq_forward.3} parent=51 // pred_region
        %s1495 = scalar_lea.vmem %s314, 64
        %v1496 = vld [vmem:[%s1495] sm:$0xff]
        %v1497 = vld [vmem:[%s1495 + $0x8] sm:$0xff]
        %v1498 = vld [vmem:[%s1495 + $0x10] sm:$0xff]
        %v1499 = vld [vmem:[%s1495 + $0x18] sm:$0xff]
        %v1500 = vld [vmem:[%s1495 + $0x20] sm:$0xff]
        %v1501 = vld [vmem:[%s1495 + $0x28] sm:$0xff]
        %v1502 = vld [vmem:[%s1495 + $0x30] sm:$0xff]
        %v1503 = vld [vmem:[%s1495 + $0x38] sm:$0xff]
        %1504 = vst [vmem:[#allocation2] sm:$0xff] %v1496
        %1505 = vst [vmem:[#allocation2 + $0x8] sm:$0xff] %v1497
        %1506 = vst [vmem:[#allocation2 + $0x10] sm:$0xff] %v1498
        %1507 = vst [vmem:[#allocation2 + $0x18] sm:$0xff] %v1499
        %1508 = vst [vmem:[#allocation2 + $0x20] sm:$0xff] %v1500
        %1509 = vst [vmem:[#allocation2 + $0x28] sm:$0xff] %v1501
        %1510 = vst [vmem:[#allocation2 + $0x30] sm:$0xff] %v1502
        %1511 = vst [vmem:[#allocation2 + $0x38] sm:$0xff] %v1503
      $region68: #{seq2seq_forward.3} parent=51 // pred_fallthru
        _
      %v1512 = vld [vmem:[#allocation3] sm:$0xf]
      %v1513 = vld [vmem:[#allocation3 + $0x4] sm:$0xf]
      %v1514 = vld [vmem:[%s5] sm:$0xff]
      %v1515 = vld [vmem:[%s5 + $0x8] sm:$0xff]
      %v1516 = vld [vmem:[%s5 + $0x10] sm:$0xff]
      %v1517 = vld [vmem:[%s5 + $0x18] sm:$0xff]
      %v1518 = vld [vmem:[%s5 + $0x20] sm:$0xff]
      %v1519 = vld [vmem:[%s5 + $0x28] sm:$0xff]
      %v1520 = vld [vmem:[%s5 + $0x30] sm:$0xff]
      %v1521 = vld [vmem:[%s5 + $0x38] sm:$0xff]
      %v1522 = vld [vmem:[%s5 + $0x40] sm:$0xff]
      %v1523 = vld [vmem:[%s5 + $0x48] sm:$0xff]
      %v1524 = vld [vmem:[%s5 + $0x50] sm:$0xff]
      %v1525 = vld [vmem:[%s5 + $0x58] sm:$0xff]
      %v1526 = vld [vmem:[%s5 + $0x60] sm:$0xff]
      %v1527 = vld [vmem:[%s5 + $0x68] sm:$0xff]
      %v1528 = vld [vmem:[%s5 + $0x70] sm:$0xff]
      %v1529 = vld [vmem:[%s5 + $0x78] sm:$0xff]
      %v1530 = vld [vmem:[%s5 + $0x80] sm:$0xff]
      %v1531 = vld [vmem:[%s5 + $0x88] sm:$0xff]
      %v1532 = vld [vmem:[%s5 + $0x90] sm:$0xff]
      %v1533 = vld [vmem:[%s5 + $0x98] sm:$0xff]
      %v1534 = vld [vmem:[%s5 + $0xa0] sm:$0xff]
      %v1535 = vld [vmem:[%s5 + $0xa8] sm:$0xff]
      %v1536 = vld [vmem:[%s5 + $0xb0] sm:$0xff]
      %v1537 = vld [vmem:[%s5 + $0xb8] sm:$0xff]
      %v1538 = vld [vmem:[%s5 + $0xc0] sm:$0xff]
      %v1539 = vld [vmem:[%s5 + $0xc8] sm:$0xff]
      %v1540 = vld [vmem:[%s5 + $0xd0] sm:$0xff]
      %v1541 = vld [vmem:[%s5 + $0xd8] sm:$0xff]
      %v1542 = vld [vmem:[%s5 + $0xe0] sm:$0xff]
      %v1543 = vld [vmem:[%s5 + $0xe8] sm:$0xff]
      %v1544 = vld [vmem:[%s5 + $0xf0] sm:$0xff]
      %v1545 = vld [vmem:[%s5 + $0xf8] sm:$0xff]
      %v1546 = vld [vmem:[#allocation2] sm:$0xff]
      %v1547 = vld [vmem:[#allocation2 + $0x8] sm:$0xff]
      %v1548 = vld [vmem:[#allocation2 + $0x10] sm:$0xff]
      %v1549 = vld [vmem:[#allocation2 + $0x18] sm:$0xff]
      %v1550 = vld [vmem:[#allocation2 + $0x20] sm:$0xff]
      %v1551 = vld [vmem:[#allocation2 + $0x28] sm:$0xff]
      %v1552 = vld [vmem:[#allocation2 + $0x30] sm:$0xff]
      %v1553 = vld [vmem:[#allocation2 + $0x38] sm:$0xff]
      %v1556 = vunpack.c.l.b16 %v1512
      %v1557 = vunpack.c.l.b16 %v1513
      %v1558 = vpack.c.b16 %v1557, %v1556
      %v1592 = vunpack.c.l.b16 %v1514
      %v1593 = vunpack.c.h.b16 %v1514
      %v1594 = vunpack.c.l.b16 %v1515
      %v1595 = vunpack.c.h.b16 %v1515
      %v1596 = vunpack.c.l.b16 %v1516
      %v1597 = vunpack.c.h.b16 %v1516
      %v1598 = vunpack.c.l.b16 %v1517
      %v1599 = vunpack.c.h.b16 %v1517
      %v1600 = vunpack.c.l.b16 %v1518
      %v1601 = vunpack.c.h.b16 %v1518
      %v1602 = vunpack.c.l.b16 %v1519
      %v1603 = vunpack.c.h.b16 %v1519
      %v1604 = vunpack.c.l.b16 %v1520
      %v1605 = vunpack.c.h.b16 %v1520
      %v1606 = vunpack.c.l.b16 %v1521
      %v1607 = vunpack.c.h.b16 %v1521
      %v1608 = vunpack.c.l.b16 %v1522
      %v1609 = vunpack.c.h.b16 %v1522
      %v1610 = vunpack.c.l.b16 %v1523
      %v1611 = vunpack.c.h.b16 %v1523
      %v1612 = vunpack.c.l.b16 %v1524
      %v1613 = vunpack.c.h.b16 %v1524
      %v1614 = vunpack.c.l.b16 %v1525
      %v1615 = vunpack.c.h.b16 %v1525
      %v1616 = vunpack.c.l.b16 %v1526
      %v1617 = vunpack.c.h.b16 %v1526
      %v1618 = vunpack.c.l.b16 %v1527
      %v1619 = vunpack.c.h.b16 %v1527
      %v1620 = vunpack.c.l.b16 %v1528
      %v1621 = vunpack.c.h.b16 %v1528
      %v1622 = vunpack.c.l.b16 %v1529
      %v1623 = vunpack.c.h.b16 %v1529
      %v1624 = vunpack.c.l.b16 %v1530
      %v1625 = vunpack.c.h.b16 %v1530
      %v1626 = vunpack.c.l.b16 %v1531
      %v1627 = vunpack.c.h.b16 %v1531
      %v1628 = vunpack.c.l.b16 %v1532
      %v1629 = vunpack.c.h.b16 %v1532
      %v1630 = vunpack.c.l.b16 %v1533
      %v1631 = vunpack.c.h.b16 %v1533
      %v1632 = vunpack.c.l.b16 %v1534
      %v1633 = vunpack.c.h.b16 %v1534
      %v1634 = vunpack.c.l.b16 %v1535
      %v1635 = vunpack.c.h.b16 %v1535
      %v1636 = vunpack.c.l.b16 %v1536
      %v1637 = vunpack.c.h.b16 %v1536
      %v1638 = vunpack.c.l.b16 %v1537
      %v1639 = vunpack.c.h.b16 %v1537
      %v1640 = vunpack.c.l.b16 %v1538
      %v1641 = vunpack.c.h.b16 %v1538
      %v1642 = vunpack.c.l.b16 %v1539
      %v1643 = vunpack.c.h.b16 %v1539
      %v1644 = vunpack.c.l.b16 %v1540
      %v1645 = vunpack.c.h.b16 %v1540
      %v1646 = vunpack.c.l.b16 %v1541
      %v1647 = vunpack.c.h.b16 %v1541
      %v1648 = vunpack.c.l.b16 %v1542
      %v1649 = vunpack.c.h.b16 %v1542
      %v1650 = vunpack.c.l.b16 %v1543
      %v1651 = vunpack.c.h.b16 %v1543
      %v1652 = vunpack.c.l.b16 %v1544
      %v1653 = vunpack.c.h.b16 %v1544
      %v1654 = vunpack.c.l.b16 %v1545
      %v1655 = vunpack.c.h.b16 %v1545
      %v1656 = vpack.c.b16 %v1596, %v1592
      %v1657 = vpack.c.b16 %v1597, %v1593
      %v1658 = vpack.c.b16 %v1598, %v1594
      %v1659 = vpack.c.b16 %v1599, %v1595
      %v1660 = vpack.c.b16 %v1604, %v1600
      %v1661 = vpack.c.b16 %v1605, %v1601
      %v1662 = vpack.c.b16 %v1606, %v1602
      %v1663 = vpack.c.b16 %v1607, %v1603
      %v1664 = vpack.c.b16 %v1612, %v1608
      %v1665 = vpack.c.b16 %v1613, %v1609
      %v1666 = vpack.c.b16 %v1614, %v1610
      %v1667 = vpack.c.b16 %v1615, %v1611
      %v1668 = vpack.c.b16 %v1620, %v1616
      %v1669 = vpack.c.b16 %v1621, %v1617
      %v1670 = vpack.c.b16 %v1622, %v1618
      %v1671 = vpack.c.b16 %v1623, %v1619
      %v1672 = vpack.c.b16 %v1628, %v1624
      %v1673 = vpack.c.b16 %v1629, %v1625
      %v1674 = vpack.c.b16 %v1630, %v1626
      %v1675 = vpack.c.b16 %v1631, %v1627
      %v1676 = vpack.c.b16 %v1636, %v1632
      %v1677 = vpack.c.b16 %v1637, %v1633
      %v1678 = vpack.c.b16 %v1638, %v1634
      %v1679 = vpack.c.b16 %v1639, %v1635
      %v1680 = vpack.c.b16 %v1644, %v1640
      %v1681 = vpack.c.b16 %v1645, %v1641
      %v1682 = vpack.c.b16 %v1646, %v1642
      %v1683 = vpack.c.b16 %v1647, %v1643
      %v1684 = vpack.c.b16 %v1652, %v1648
      %v1685 = vpack.c.b16 %v1653, %v1649
      %v1686 = vpack.c.b16 %v1654, %v1650
      %v1687 = vpack.c.b16 %v1655, %v1651
      %1720 = vmatpush.bf16.msra.mxu0 %v1684
      %1721 = vmatpush.bf16.msra.mxu0 %v1680
      %1722 = vmatpush.bf16.msra.mxu0 %v1676
      %1723 = vmatpush.bf16.msra.mxu0 %v1672
      %1724 = vmatpush.bf16.msra.mxu0 %v1668
      %1725 = vmatpush.bf16.msra.mxu0 %v1664
      %1726 = vmatpush.bf16.msra.mxu0 %v1660
      %1727 = vmatpush.bf16.msra.mxu0 %v1656
      %1728 = vmatmul.bf16.gmra.mxu0 %v1558
      %v1729 = vpop.f32.mrf.mxu0
      %v1730 = vadd.f32 %v1546, %v1729
      %v1731 = vpop.f32.mrf.mxu0
      %v1732 = vadd.f32 %v1550, %v1731
      %1733 = vdwg.mxu0
      %1734 = vmatpush.bf16.msra.mxu0 %v1685
      %1735 = vmatpush.bf16.msra.mxu0 %v1681
      %1736 = vmatpush.bf16.msra.mxu0 %v1677
      %1737 = vmatpush.bf16.msra.mxu0 %v1673
      %1738 = vmatpush.bf16.msra.mxu0 %v1669
      %1739 = vmatpush.bf16.msra.mxu0 %v1665
      %1740 = vmatpush.bf16.msra.mxu0 %v1661
      %1741 = vmatpush.bf16.msra.mxu0 %v1657
      %1742 = vmatmul.bf16.gmra.mxu0 %v1558
      %v1743 = vpop.f32.mrf.mxu0
      %v1744 = vadd.f32 %v1547, %v1743
      %v1745 = vpop.f32.mrf.mxu0
      %v1746 = vadd.f32 %v1551, %v1745
      %1747 = vdwg.mxu0
      %1748 = vmatpush.bf16.msra.mxu0 %v1686
      %1749 = vmatpush.bf16.msra.mxu0 %v1682
      %1750 = vmatpush.bf16.msra.mxu0 %v1678
      %1751 = vmatpush.bf16.msra.mxu0 %v1674
      %1752 = vmatpush.bf16.msra.mxu0 %v1670
      %1753 = vmatpush.bf16.msra.mxu0 %v1666
      %1754 = vmatpush.bf16.msra.mxu0 %v1662
      %1755 = vmatpush.bf16.msra.mxu0 %v1658
      %1756 = vmatmul.bf16.gmra.mxu0 %v1558
      %v1757 = vpop.f32.mrf.mxu0
      %v1758 = vadd.f32 %v1548, %v1757
      %v1759 = vpop.f32.mrf.mxu0
      %v1760 = vadd.f32 %v1552, %v1759
      %1761 = vdwg.mxu0
      %1762 = vmatpush.bf16.msra.mxu0 %v1687
      %1763 = vmatpush.bf16.msra.mxu0 %v1683
      %1764 = vmatpush.bf16.msra.mxu0 %v1679
      %1765 = vmatpush.bf16.msra.mxu0 %v1675
      %1766 = vmatpush.bf16.msra.mxu0 %v1671
      %1767 = vmatpush.bf16.msra.mxu0 %v1667
      %1768 = vmatpush.bf16.msra.mxu0 %v1663
      %1769 = vmatpush.bf16.msra.mxu0 %v1659
      %1770 = vmatmul.bf16.gmra.mxu0 %v1558
      %v1771 = vpop.f32.mrf.mxu0
      %v1772 = vadd.f32 %v1549, %v1771
      %v1773 = vpop.f32.mrf.mxu0
      %v1774 = vadd.f32 %v1553, %v1773
      %1775 = vdwg.mxu0
      %v1776 = vld [vmem:[%s6] sm:$0xf]
      %v1778 = vperm.slane %v1776, 0
      %v1779 = vperm.slane %v1776, 1
      %v1780 = vperm.slane %v1776, 2
      %v1781 = vperm.slane %v1776, 3
      %v1786 = vadd.f32 %v1730, %v1778
      %v1787 = vadd.f32 %v1744, %v1779
      %v1788 = vadd.f32 %v1758, %v1780
      %v1789 = vadd.f32 %v1772, %v1781
      %v1790 = vadd.f32 %v1732, %v1778
      %v1791 = vadd.f32 %v1746, %v1779
      %v1792 = vadd.f32 %v1760, %v1780
      %v1793 = vadd.f32 %v1774, %v1781
      %v1794 = vxor.u32 %v1786, 2147483648
      %v1795 = vxor.u32 %v1790, 2147483648
      %v1796 = vmul.f32 %v1794, 1.442695
      %v1797 = vpow.pop %v1796
      %v1798 = vmul.f32 %v1795, 1.442695
      %v1799 = vpow.pop %v1798
      %v1800 = vadd.f32 %v1797, 1.0
      %v1801 = vadd.f32 %v1799, 1.0
      %v1802 = vrcp.pop %v1800
      %v1803 = vmul.f32 %v1800, %v1802
      %v1804 = vsub.f32 1.0, %v1803
      %v1805 = vmul.f32 %v1802, %v1804
      %v1806 = vadd.f32 %v1802, %v1805
      %vm1807 = vweird.f32 %v1800
      %vm1808 = vweird.f32 %v1802
      %vm1809 = vmor %vm1807, %vm1808
      %v1810 = vsel %vm1809, %v1802, %v1806
      %v1811 = vand.u32 2147483647, %v1800
      %vm1812 = vcmp.eq.f32.partialorder %v1811, 8.507059e+37
      %v1813 = vand.u32 %v1800, 2147483648
      %v1814 = vor.u32 1.1754944e-38, %v1813
      %v1815 = vsel %vm1812, %v1814, %v1810
      %v1816 = vmul.f32 1.0, %v1815
      %v1817 = vrcp.pop %v1801
      %v1818 = vmul.f32 %v1801, %v1817
      %v1819 = vsub.f32 1.0, %v1818
      %v1820 = vmul.f32 %v1817, %v1819
      %v1821 = vadd.f32 %v1817, %v1820
      %vm1822 = vweird.f32 %v1801
      %vm1823 = vweird.f32 %v1817
      %vm1824 = vmor %vm1822, %vm1823
      %v1825 = vsel %vm1824, %v1817, %v1821
      %v1826 = vand.u32 2147483647, %v1801
      %vm1827 = vcmp.eq.f32.partialorder %v1826, 8.507059e+37
      %v1828 = vand.u32 %v1801, 2147483648
      %v1829 = vor.u32 1.1754944e-38, %v1828
      %v1830 = vsel %vm1827, %v1829, %v1825
      %v1831 = vmul.f32 1.0, %v1830
      %v1832 = vxor.u32 %v1787, 2147483648
      %v1833 = vxor.u32 %v1791, 2147483648
      %v1834 = vmul.f32 %v1832, 1.442695
      %v1835 = vpow.pop %v1834
      %v1836 = vmul.f32 %v1833, 1.442695
      %v1837 = vpow.pop %v1836
      %v1838 = vadd.f32 %v1835, 1.0
      %v1839 = vadd.f32 %v1837, 1.0
      %v1840 = vrcp.pop %v1838
      %v1841 = vmul.f32 %v1838, %v1840
      %v1842 = vsub.f32 1.0, %v1841
      %v1843 = vmul.f32 %v1840, %v1842
      %v1844 = vadd.f32 %v1840, %v1843
      %vm1845 = vweird.f32 %v1838
      %vm1846 = vweird.f32 %v1840
      %vm1847 = vmor %vm1845, %vm1846
      %v1848 = vsel %vm1847, %v1840, %v1844
      %v1849 = vand.u32 2147483647, %v1838
      %vm1850 = vcmp.eq.f32.partialorder %v1849, 8.507059e+37
      %v1851 = vand.u32 %v1838, 2147483648
      %v1852 = vor.u32 1.1754944e-38, %v1851
      %v1853 = vsel %vm1850, %v1852, %v1848
      %v1854 = vmul.f32 1.0, %v1853
      %v1855 = vrcp.pop %v1839
      %v1856 = vmul.f32 %v1839, %v1855
      %v1857 = vsub.f32 1.0, %v1856
      %v1858 = vmul.f32 %v1855, %v1857
      %v1859 = vadd.f32 %v1855, %v1858
      %vm1860 = vweird.f32 %v1839
      %vm1861 = vweird.f32 %v1855
      %vm1862 = vmor %vm1860, %vm1861
      %v1863 = vsel %vm1862, %v1855, %v1859
      %v1864 = vand.u32 2147483647, %v1839
      %vm1865 = vcmp.eq.f32.partialorder %v1864, 8.507059e+37
      %v1866 = vand.u32 %v1839, 2147483648
      %v1867 = vor.u32 1.1754944e-38, %v1866
      %v1868 = vsel %vm1865, %v1867, %v1863
      %v1869 = vmul.f32 1.0, %v1868
      %v1870 = vtanh.pop %v1788
      %v1871 = vtanh.pop %v1792
      %v1872 = vxor.u32 %v1789, 2147483648
      %v1873 = vxor.u32 %v1793, 2147483648
      %v1874 = vmul.f32 %v1872, 1.442695
      %v1875 = vpow.pop %v1874
      %v1876 = vmul.f32 %v1873, 1.442695
      %v1877 = vpow.pop %v1876
      %v1878 = vadd.f32 %v1875, 1.0
      %v1879 = vadd.f32 %v1877, 1.0
      %v1880 = vrcp.pop %v1878
      %v1881 = vmul.f32 %v1878, %v1880
      %v1882 = vsub.f32 1.0, %v1881
      %v1883 = vmul.f32 %v1880, %v1882
      %v1884 = vadd.f32 %v1880, %v1883
      %vm1885 = vweird.f32 %v1878
      %vm1886 = vweird.f32 %v1880
      %vm1887 = vmor %vm1885, %vm1886
      %v1888 = vsel %vm1887, %v1880, %v1884
      %v1889 = vand.u32 2147483647, %v1878
      %vm1890 = vcmp.eq.f32.partialorder %v1889, 8.507059e+37
      %v1891 = vand.u32 %v1878, 2147483648
      %v1892 = vor.u32 1.1754944e-38, %v1891
      %v1893 = vsel %vm1890, %v1892, %v1888
      %v1894 = vmul.f32 1.0, %v1893
      %v1895 = vrcp.pop %v1879
      %v1896 = vmul.f32 %v1879, %v1895
      %v1897 = vsub.f32 1.0, %v1896
      %v1898 = vmul.f32 %v1895, %v1897
      %v1899 = vadd.f32 %v1895, %v1898
      %vm1900 = vweird.f32 %v1879
      %vm1901 = vweird.f32 %v1895
      %vm1902 = vmor %vm1900, %vm1901
      %v1903 = vsel %vm1902, %v1895, %v1899
      %v1904 = vand.u32 2147483647, %v1879
      %vm1905 = vcmp.eq.f32.partialorder %v1904, 8.507059e+37
      %v1906 = vand.u32 %v1879, 2147483648
      %v1907 = vor.u32 1.1754944e-38, %v1906
      %v1908 = vsel %vm1905, %v1907, %v1903
      %v1909 = vmul.f32 1.0, %v1908
      %v1910 = vld [vmem:[#allocation4] sm:$0xff]
      %v1911 = vld [vmem:[#allocation4 + $0x8] sm:$0xff]
      %v1912 = vmul.f32 %v1854, %v1910
      %v1913 = vmul.f32 %v1869, %v1911
      %v1914 = vmul.f32 %v1816, %v1870
      %v1915 = vmul.f32 %v1831, %v1871
      %v1916 = vadd.f32 %v1912, %v1914
      %v1917 = vadd.f32 %v1913, %v1915
      %v1918 = vtanh.pop %v1916
      %v1919 = vtanh.pop %v1917
      %v1920 = vmul.f32 %v1894, %v1918
      %v1921 = vmul.f32 %v1909, %v1919
      %v1922 = vpack.c.bf16 %v1920, %v1920
      %v1923 = vpack.c.bf16 %v1921, %v1921
      %1924 = vst [vmem:[#allocation4] sm:$0xff] %v1916
      %1925 = vst [vmem:[#allocation4 + $0x8] sm:$0xff] %v1917
      %1926 = vst [vmem:[#allocation3] sm:$0xf] %v1922
      %1927 = vst [vmem:[#allocation3 + $0x4] sm:$0xf] %v1923
      %v1928 = vld [vmem:[%s7] sm:$0xff]
      %v1929 = vld [vmem:[%s7 + $0x8] sm:$0xff]
      %v1930 = vld [vmem:[%s7 + $0x10] sm:$0xff]
      %v1931 = vld [vmem:[%s7 + $0x18] sm:$0xff]
      %v1932 = vld [vmem:[%s7 + $0x20] sm:$0xff]
      %v1933 = vld [vmem:[%s7 + $0x28] sm:$0xff]
      %v1934 = vld [vmem:[%s7 + $0x30] sm:$0xff]
      %v1935 = vld [vmem:[%s7 + $0x38] sm:$0xff]
      %v1936 = vld [vmem:[%s7 + $0x40] sm:$0xff]
      %v1937 = vld [vmem:[%s7 + $0x48] sm:$0xff]
      %v1938 = vld [vmem:[%s7 + $0x50] sm:$0xff]
      %v1939 = vld [vmem:[%s7 + $0x58] sm:$0xff]
      %v1940 = vld [vmem:[%s7 + $0x60] sm:$0xff]
      %v1941 = vld [vmem:[%s7 + $0x68] sm:$0xff]
      %v1942 = vld [vmem:[%s7 + $0x70] sm:$0xff]
      %v1943 = vld [vmem:[%s7 + $0x78] sm:$0xff]
      %v1944 = vld [vmem:[%s8] sm:$0x3]
      %v1946 = vperm.slane %v1944, 0
      %v1947 = vperm.slane %v1944, 1
      %v1952 = vunpack.c.l.b16 %v1922
      %v1953 = vunpack.c.l.b16 %v1923
      %v1954 = vpack.c.b16 %v1953, %v1952
      %v1972 = vunpack.c.l.b16 %v1928
      %v1973 = vunpack.c.h.b16 %v1928
      %v1974 = vunpack.c.l.b16 %v1929
      %v1975 = vunpack.c.h.b16 %v1929
      %v1976 = vunpack.c.l.b16 %v1930
      %v1977 = vunpack.c.h.b16 %v1930
      %v1978 = vunpack.c.l.b16 %v1931
      %v1979 = vunpack.c.h.b16 %v1931
      %v1980 = vunpack.c.l.b16 %v1932
      %v1981 = vunpack.c.h.b16 %v1932
      %v1982 = vunpack.c.l.b16 %v1933
      %v1983 = vunpack.c.h.b16 %v1933
      %v1984 = vunpack.c.l.b16 %v1934
      %v1985 = vunpack.c.h.b16 %v1934
      %v1986 = vunpack.c.l.b16 %v1935
      %v1987 = vunpack.c.h.b16 %v1935
      %v1988 = vunpack.c.l.b16 %v1936
      %v1989 = vunpack.c.h.b16 %v1936
      %v1990 = vunpack.c.l.b16 %v1937
      %v1991 = vunpack.c.h.b16 %v1937
      %v1992 = vunpack.c.l.b16 %v1938
      %v1993 = vunpack.c.h.b16 %v1938
      %v1994 = vunpack.c.l.b16 %v1939
      %v1995 = vunpack.c.h.b16 %v1939
      %v1996 = vunpack.c.l.b16 %v1940
      %v1997 = vunpack.c.h.b16 %v1940
      %v1998 = vunpack.c.l.b16 %v1941
      %v1999 = vunpack.c.h.b16 %v1941
      %v2000 = vunpack.c.l.b16 %v1942
      %v2001 = vunpack.c.h.b16 %v1942
      %v2002 = vunpack.c.l.b16 %v1943
      %v2003 = vunpack.c.h.b16 %v1943
      %v2004 = vpack.c.b16 %v1974, %v1972
      %v2005 = vpack.c.b16 %v1975, %v1973
      %v2006 = vpack.c.b16 %v1978, %v1976
      %v2007 = vpack.c.b16 %v1979, %v1977
      %v2008 = vpack.c.b16 %v1982, %v1980
      %v2009 = vpack.c.b16 %v1983, %v1981
      %v2010 = vpack.c.b16 %v1986, %v1984
      %v2011 = vpack.c.b16 %v1987, %v1985
      %v2012 = vpack.c.b16 %v1990, %v1988
      %v2013 = vpack.c.b16 %v1991, %v1989
      %v2014 = vpack.c.b16 %v1994, %v1992
      %v2015 = vpack.c.b16 %v1995, %v1993
      %v2016 = vpack.c.b16 %v1998, %v1996
      %v2017 = vpack.c.b16 %v1999, %v1997
      %v2018 = vpack.c.b16 %v2002, %v2000
      %v2019 = vpack.c.b16 %v2003, %v2001
      %2036 = vmatpush.bf16.msra.mxu0 %v2018
      %2037 = vmatpush.bf16.msra.mxu0 %v2016
      %2038 = vmatpush.bf16.msra.mxu0 %v2014
      %2039 = vmatpush.bf16.msra.mxu0 %v2012
      %2040 = vmatpush.bf16.msra.mxu0 %v2010
      %2041 = vmatpush.bf16.msra.mxu0 %v2008
      %2042 = vmatpush.bf16.msra.mxu0 %v2006
      %2043 = vmatpush.bf16.msra.mxu0 %v2004
      %2044 = vmatmul.bf16.gmra.mxu0 %v1954
      %v2045 = vpop.f32.mrf.mxu0
      %v2046 = vadd.f32 %v1946, %v2045
      %v2047 = vpop.f32.mrf.mxu0
      %v2048 = vadd.f32 %v1946, %v2047
      %2049 = vdwg.mxu0
      %2050 = vmatpush.bf16.msra.mxu0 %v2019
      %2051 = vmatpush.bf16.msra.mxu0 %v2017
      %2052 = vmatpush.bf16.msra.mxu0 %v2015
      %2053 = vmatpush.bf16.msra.mxu0 %v2013
      %2054 = vmatpush.bf16.msra.mxu0 %v2011
      %2055 = vmatpush.bf16.msra.mxu0 %v2009
      %2056 = vmatpush.bf16.msra.mxu0 %v2007
      %2057 = vmatpush.bf16.msra.mxu0 %v2005
      %2058 = vmatmul.bf16.gmra.mxu0 %v1954
      %v2059 = vpop.f32.mrf.mxu0
      %v2060 = vadd.f32 %v1947, %v2059
      %v2061 = vpop.f32.mrf.mxu0
      %v2062 = vadd.f32 %v1947, %v2061
      %2063 = vdwg.mxu0
      %s2064 = scalar_lea.vmem %s321, 32
      %2065 = vst [vmem:[%s2064] sm:$0xff] %v2046
      %2066 = vst [vmem:[%s2064 + $0x8] sm:$0xff] %v2060
      %2067 = vst [vmem:[%s2064 + $0x10] sm:$0xff] %v2048
      %2068 = vst [vmem:[%s2064 + $0x18] sm:$0xff] %v2062
      %s2069 = sadd.s32 %s337, 2
      %p2070 = scmp.lt.s32.totalorder %s2069, 8
      %s2071 = sld [smem:[#allocation6 + %s2069]]
      %p2072 = scmp.eq.s32.totalorder %s2071, 0
      %p2073 = pnand %p2070, %p2072
      %p2074 = pneg %p2073
      // Predicated region
      $region69: #{seq2seq_forward.3} parent=51 // pred_check
        _
      $region70: #{seq2seq_forward.3} parent=51 // pred_check_branch
        %2076 = sbr.rel (%p2073) target = $region72
      $region71: #{seq2seq_forward.3} parent=51 // pred_region
        %v2077 = vlaneseq
        %v2078 = vand.u32 %v2077, 127
        %v2079 = vadd.s32 %v2078, 128
        %v2080 = vmax.f32 %v2046, %v2060
        %2081 = vmax.xlane.f32.xlu0 %v2080
        %v2082 = vpop.xlane.xlu0 %2081
        %v2083 = vmax.f32 %v2048, %v2062
        %2084 = vmax.xlane.f32.xlu0 %v2083
        %v2085 = vpop.xlane.xlu0 %2084
        %vm2086 = vcmp.eq.f32.partialorder %v2046, %v2082
        %vm2087 = vcmp.eq.f32.partialorder %v2060, %v2082
        %vm2088 = vcmp.eq.f32.partialorder %v2048, %v2085
        %vm2089 = vcmp.eq.f32.partialorder %v2062, %v2085
        %v2090 = vsel %vm2086, %v2078, 256
        %v2091 = vsel %vm2087, %v2079, 256
        %v2092 = vsel %vm2088, %v2078, 256
        %v2093 = vsel %vm2089, %v2079, 256
        %vm2094 = vcmp.lt.s32.totalorder %v2090, %v2091
        %v2095 = vsel %vm2094, %v2090, %v2091
        %v2096 = vand.u32 %v2095, 65535
        %v2097 = vshra.s32 %v2095, 16
        %v2098 = vcvt.s32.f32 %v2096
        %v2099 = vcvt.s32.f32 %v2097
        %2100 = vmin.xlane.f32.xlu0 %v2099
        %v2101 = vpop.xlane.xlu0 %2100
        %vm2102 = vcmp.eq.f32.partialorder %v2099, %v2101
        %v2103 = vsel %vm2102, %v2098, inf
        %2104 = vmin.xlane.f32.xlu0 %v2103
        %v2105 = vpop.xlane.xlu0 %2104
        %v2106 = vcvt.f32.s32 %v2105
        %v2107 = vcvt.f32.s32 %v2101
        %v2108 = vshll.u32 %v2107, 16
        %v2109 = vadd.s32 %v2108, %v2106
        %vm2110 = vcmp.lt.s32.totalorder %v2092, %v2093
        %v2111 = vsel %vm2110, %v2092, %v2093
        %v2112 = vand.u32 %v2111, 65535
        %v2113 = vshra.s32 %v2111, 16
        %v2114 = vcvt.s32.f32 %v2112
        %v2115 = vcvt.s32.f32 %v2113
        %2116 = vmin.xlane.f32.xlu0 %v2115
        %v2117 = vpop.xlane.xlu0 %2116
        %vm2118 = vcmp.eq.f32.partialorder %v2115, %v2117
        %v2119 = vsel %vm2118, %v2114, inf
        %2120 = vmin.xlane.f32.xlu0 %v2119
        %v2121 = vpop.xlane.xlu0 %2120
        %v2122 = vcvt.f32.s32 %v2121
        %v2123 = vcvt.f32.s32 %v2117
        %v2124 = vshll.u32 %v2123, 16
        %v2125 = vadd.s32 %v2124, %v2122
        %vm2126 = vcmp.eq.s32.totalorder %v2078, %v2109
        %vm2127 = vcmp.eq.s32.totalorder %v2079, %v2109
        %vm2128 = vcmp.eq.s32.totalorder %v2078, %v2125
        %vm2129 = vcmp.eq.s32.totalorder %v2079, %v2125
        %v2130 = vsel %vm2126, 1, 0
        %v2131 = vsel %vm2127, 1, 0
        %v2132 = vsel %vm2128, 1, 0
        %v2133 = vsel %vm2129, 1, 0
        %v2134 = vcvt.s32.f32 %v2130
        %v2135 = vcvt.s32.f32 %v2131
        %v2136 = vcvt.s32.f32 %v2132
        %v2137 = vcvt.s32.f32 %v2133
        %v2138 = vpack.c.bf16 %v2136, %v2134
        %v2139 = vpack.c.bf16 %v2137, %v2135
        %v2140 = vld [vmem:[%s4] sm:$0xff]
        %v2141 = vld [vmem:[%s4 + $0x8] sm:$0xff]
        %v2142 = vld [vmem:[%s4 + $0x10] sm:$0xff]
        %v2143 = vld [vmem:[%s4 + $0x18] sm:$0xff]
        %v2144 = vld [vmem:[%s4 + $0x20] sm:$0xff]
        %v2145 = vld [vmem:[%s4 + $0x28] sm:$0xff]
        %v2146 = vld [vmem:[%s4 + $0x30] sm:$0xff]
        %v2147 = vld [vmem:[%s4 + $0x38] sm:$0xff]
        %v2148 = vld [vmem:[%s4 + $0x40] sm:$0xff]
        %v2149 = vld [vmem:[%s4 + $0x48] sm:$0xff]
        %v2150 = vld [vmem:[%s4 + $0x50] sm:$0xff]
        %v2151 = vld [vmem:[%s4 + $0x58] sm:$0xff]
        %v2152 = vld [vmem:[%s4 + $0x60] sm:$0xff]
        %v2153 = vld [vmem:[%s4 + $0x68] sm:$0xff]
        %v2154 = vld [vmem:[%s4 + $0x70] sm:$0xff]
        %v2155 = vld [vmem:[%s4 + $0x78] sm:$0xff]
        %v2156 = vld [vmem:[%s4 + $0x80] sm:$0xff]
        %v2157 = vld [vmem:[%s4 + $0x88] sm:$0xff]
        %v2158 = vld [vmem:[%s4 + $0x90] sm:$0xff]
        %v2159 = vld [vmem:[%s4 + $0x98] sm:$0xff]
        %v2160 = vld [vmem:[%s4 + $0xa0] sm:$0xff]
        %v2161 = vld [vmem:[%s4 + $0xa8] sm:$0xff]
        %v2162 = vld [vmem:[%s4 + $0xb0] sm:$0xff]
        %v2163 = vld [vmem:[%s4 + $0xb8] sm:$0xff]
        %v2164 = vld [vmem:[%s4 + $0xc0] sm:$0xff]
        %v2165 = vld [vmem:[%s4 + $0xc8] sm:$0xff]
        %v2166 = vld [vmem:[%s4 + $0xd0] sm:$0xff]
        %v2167 = vld [vmem:[%s4 + $0xd8] sm:$0xff]
        %v2168 = vld [vmem:[%s4 + $0xe0] sm:$0xff]
        %v2169 = vld [vmem:[%s4 + $0xe8] sm:$0xff]
        %v2170 = vld [vmem:[%s4 + $0xf0] sm:$0xff]
        %v2171 = vld [vmem:[%s4 + $0xf8] sm:$0xff]
        %v2172 = vld [vmem:[%s4 + $0x100] sm:$0xff]
        %v2173 = vld [vmem:[%s4 + $0x108] sm:$0xff]
        %v2174 = vld [vmem:[%s4 + $0x110] sm:$0xff]
        %v2175 = vld [vmem:[%s4 + $0x118] sm:$0xff]
        %v2176 = vld [vmem:[%s4 + $0x120] sm:$0xff]
        %v2177 = vld [vmem:[%s4 + $0x128] sm:$0xff]
        %v2178 = vld [vmem:[%s4 + $0x130] sm:$0xff]
        %v2179 = vld [vmem:[%s4 + $0x138] sm:$0xff]
        %v2180 = vld [vmem:[%s4 + $0x140] sm:$0xff]
        %v2181 = vld [vmem:[%s4 + $0x148] sm:$0xff]
        %v2182 = vld [vmem:[%s4 + $0x150] sm:$0xff]
        %v2183 = vld [vmem:[%s4 + $0x158] sm:$0xff]
        %v2184 = vld [vmem:[%s4 + $0x160] sm:$0xff]
        %v2185 = vld [vmem:[%s4 + $0x168] sm:$0xff]
        %v2186 = vld [vmem:[%s4 + $0x170] sm:$0xff]
        %v2187 = vld [vmem:[%s4 + $0x178] sm:$0xff]
        %v2188 = vld [vmem:[%s4 + $0x180] sm:$0xff]
        %v2189 = vld [vmem:[%s4 + $0x188] sm:$0xff]
        %v2190 = vld [vmem:[%s4 + $0x190] sm:$0xff]
        %v2191 = vld [vmem:[%s4 + $0x198] sm:$0xff]
        %v2192 = vld [vmem:[%s4 + $0x1a0] sm:$0xff]
        %v2193 = vld [vmem:[%s4 + $0x1a8] sm:$0xff]
        %v2194 = vld [vmem:[%s4 + $0x1b0] sm:$0xff]
        %v2195 = vld [vmem:[%s4 + $0x1b8] sm:$0xff]
        %v2196 = vld [vmem:[%s4 + $0x1c0] sm:$0xff]
        %v2197 = vld [vmem:[%s4 + $0x1c8] sm:$0xff]
        %v2198 = vld [vmem:[%s4 + $0x1d0] sm:$0xff]
        %v2199 = vld [vmem:[%s4 + $0x1d8] sm:$0xff]
        %v2200 = vld [vmem:[%s4 + $0x1e0] sm:$0xff]
        %v2201 = vld [vmem:[%s4 + $0x1e8] sm:$0xff]
        %v2202 = vld [vmem:[%s4 + $0x1f0] sm:$0xff]
        %v2203 = vld [vmem:[%s4 + $0x1f8] sm:$0xff]
        %v2268 = vunpack.c.l.b16 %v2140
        %v2269 = vunpack.c.h.b16 %v2140
        %v2270 = vunpack.c.l.b16 %v2141
        %v2271 = vunpack.c.h.b16 %v2141
        %v2272 = vunpack.c.l.b16 %v2142
        %v2273 = vunpack.c.h.b16 %v2142
        %v2274 = vunpack.c.l.b16 %v2143
        %v2275 = vunpack.c.h.b16 %v2143
        %v2276 = vunpack.c.l.b16 %v2144
        %v2277 = vunpack.c.h.b16 %v2144
        %v2278 = vunpack.c.l.b16 %v2145
        %v2279 = vunpack.c.h.b16 %v2145
        %v2280 = vunpack.c.l.b16 %v2146
        %v2281 = vunpack.c.h.b16 %v2146
        %v2282 = vunpack.c.l.b16 %v2147
        %v2283 = vunpack.c.h.b16 %v2147
        %v2284 = vunpack.c.l.b16 %v2148
        %v2285 = vunpack.c.h.b16 %v2148
        %v2286 = vunpack.c.l.b16 %v2149
        %v2287 = vunpack.c.h.b16 %v2149
        %v2288 = vunpack.c.l.b16 %v2150
        %v2289 = vunpack.c.h.b16 %v2150
        %v2290 = vunpack.c.l.b16 %v2151
        %v2291 = vunpack.c.h.b16 %v2151
        %v2292 = vunpack.c.l.b16 %v2152
        %v2293 = vunpack.c.h.b16 %v2152
        %v2294 = vunpack.c.l.b16 %v2153
        %v2295 = vunpack.c.h.b16 %v2153
        %v2296 = vunpack.c.l.b16 %v2154
        %v2297 = vunpack.c.h.b16 %v2154
        %v2298 = vunpack.c.l.b16 %v2155
        %v2299 = vunpack.c.h.b16 %v2155
        %v2300 = vunpack.c.l.b16 %v2156
        %v2301 = vunpack.c.h.b16 %v2156
        %v2302 = vunpack.c.l.b16 %v2157
        %v2303 = vunpack.c.h.b16 %v2157
        %v2304 = vunpack.c.l.b16 %v2158
        %v2305 = vunpack.c.h.b16 %v2158
        %v2306 = vunpack.c.l.b16 %v2159
        %v2307 = vunpack.c.h.b16 %v2159
        %v2308 = vunpack.c.l.b16 %v2160
        %v2309 = vunpack.c.h.b16 %v2160
        %v2310 = vunpack.c.l.b16 %v2161
        %v2311 = vunpack.c.h.b16 %v2161
        %v2312 = vunpack.c.l.b16 %v2162
        %v2313 = vunpack.c.h.b16 %v2162
        %v2314 = vunpack.c.l.b16 %v2163
        %v2315 = vunpack.c.h.b16 %v2163
        %v2316 = vunpack.c.l.b16 %v2164
        %v2317 = vunpack.c.h.b16 %v2164
        %v2318 = vunpack.c.l.b16 %v2165
        %v2319 = vunpack.c.h.b16 %v2165
        %v2320 = vunpack.c.l.b16 %v2166
        %v2321 = vunpack.c.h.b16 %v2166
        %v2322 = vunpack.c.l.b16 %v2167
        %v2323 = vunpack.c.h.b16 %v2167
        %v2324 = vunpack.c.l.b16 %v2168
        %v2325 = vunpack.c.h.b16 %v2168
        %v2326 = vunpack.c.l.b16 %v2169
        %v2327 = vunpack.c.h.b16 %v2169
        %v2328 = vunpack.c.l.b16 %v2170
        %v2329 = vunpack.c.h.b16 %v2170
        %v2330 = vunpack.c.l.b16 %v2171
        %v2331 = vunpack.c.h.b16 %v2171
        %v2332 = vunpack.c.l.b16 %v2172
        %v2333 = vunpack.c.h.b16 %v2172
        %v2334 = vunpack.c.l.b16 %v2173
        %v2335 = vunpack.c.h.b16 %v2173
        %v2336 = vunpack.c.l.b16 %v2174
        %v2337 = vunpack.c.h.b16 %v2174
        %v2338 = vunpack.c.l.b16 %v2175
        %v2339 = vunpack.c.h.b16 %v2175
        %v2340 = vunpack.c.l.b16 %v2176
        %v2341 = vunpack.c.h.b16 %v2176
        %v2342 = vunpack.c.l.b16 %v2177
        %v2343 = vunpack.c.h.b16 %v2177
        %v2344 = vunpack.c.l.b16 %v2178
        %v2345 = vunpack.c.h.b16 %v2178
        %v2346 = vunpack.c.l.b16 %v2179
        %v2347 = vunpack.c.h.b16 %v2179
        %v2348 = vunpack.c.l.b16 %v2180
        %v2349 = vunpack.c.h.b16 %v2180
        %v2350 = vunpack.c.l.b16 %v2181
        %v2351 = vunpack.c.h.b16 %v2181
        %v2352 = vunpack.c.l.b16 %v2182
        %v2353 = vunpack.c.h.b16 %v2182
        %v2354 = vunpack.c.l.b16 %v2183
        %v2355 = vunpack.c.h.b16 %v2183
        %v2356 = vunpack.c.l.b16 %v2184
        %v2357 = vunpack.c.h.b16 %v2184
        %v2358 = vunpack.c.l.b16 %v2185
        %v2359 = vunpack.c.h.b16 %v2185
        %v2360 = vunpack.c.l.b16 %v2186
        %v2361 = vunpack.c.h.b16 %v2186
        %v2362 = vunpack.c.l.b16 %v2187
        %v2363 = vunpack.c.h.b16 %v2187
        %v2364 = vunpack.c.l.b16 %v2188
        %v2365 = vunpack.c.h.b16 %v2188
        %v2366 = vunpack.c.l.b16 %v2189
        %v2367 = vunpack.c.h.b16 %v2189
        %v2368 = vunpack.c.l.b16 %v2190
        %v2369 = vunpack.c.h.b16 %v2190
        %v2370 = vunpack.c.l.b16 %v2191
        %v2371 = vunpack.c.h.b16 %v2191
        %v2372 = vunpack.c.l.b16 %v2192
        %v2373 = vunpack.c.h.b16 %v2192
        %v2374 = vunpack.c.l.b16 %v2193
        %v2375 = vunpack.c.h.b16 %v2193
        %v2376 = vunpack.c.l.b16 %v2194
        %v2377 = vunpack.c.h.b16 %v2194
        %v2378 = vunpack.c.l.b16 %v2195
        %v2379 = vunpack.c.h.b16 %v2195
        %v2380 = vunpack.c.l.b16 %v2196
        %v2381 = vunpack.c.h.b16 %v2196
        %v2382 = vunpack.c.l.b16 %v2197
        %v2383 = vunpack.c.h.b16 %v2197
        %v2384 = vunpack.c.l.b16 %v2198
        %v2385 = vunpack.c.h.b16 %v2198
        %v2386 = vunpack.c.l.b16 %v2199
        %v2387 = vunpack.c.h.b16 %v2199
        %v2388 = vunpack.c.l.b16 %v2200
        %v2389 = vunpack.c.h.b16 %v2200
        %v2390 = vunpack.c.l.b16 %v2201
        %v2391 = vunpack.c.h.b16 %v2201
        %v2392 = vunpack.c.l.b16 %v2202
        %v2393 = vunpack.c.h.b16 %v2202
        %v2394 = vunpack.c.l.b16 %v2203
        %v2395 = vunpack.c.h.b16 %v2203
        %v2396 = vpack.c.b16 %v2272, %v2268
        %v2397 = vpack.c.b16 %v2273, %v2269
        %v2398 = vpack.c.b16 %v2274, %v2270
        %v2399 = vpack.c.b16 %v2275, %v2271
        %v2400 = vpack.c.b16 %v2280, %v2276
        %v2401 = vpack.c.b16 %v2281, %v2277
        %v2402 = vpack.c.b16 %v2282, %v2278
        %v2403 = vpack.c.b16 %v2283, %v2279
        %v2404 = vpack.c.b16 %v2288, %v2284
        %v2405 = vpack.c.b16 %v2289, %v2285
        %v2406 = vpack.c.b16 %v2290, %v2286
        %v2407 = vpack.c.b16 %v2291, %v2287
        %v2408 = vpack.c.b16 %v2296, %v2292
        %v2409 = vpack.c.b16 %v2297, %v2293
        %v2410 = vpack.c.b16 %v2298, %v2294
        %v2411 = vpack.c.b16 %v2299, %v2295
        %v2412 = vpack.c.b16 %v2304, %v2300
        %v2413 = vpack.c.b16 %v2305, %v2301
        %v2414 = vpack.c.b16 %v2306, %v2302
        %v2415 = vpack.c.b16 %v2307, %v2303
        %v2416 = vpack.c.b16 %v2312, %v2308
        %v2417 = vpack.c.b16 %v2313, %v2309
        %v2418 = vpack.c.b16 %v2314, %v2310
        %v2419 = vpack.c.b16 %v2315, %v2311
        %v2420 = vpack.c.b16 %v2320, %v2316
        %v2421 = vpack.c.b16 %v2321, %v2317
        %v2422 = vpack.c.b16 %v2322, %v2318
        %v2423 = vpack.c.b16 %v2323, %v2319
        %v2424 = vpack.c.b16 %v2328, %v2324
        %v2425 = vpack.c.b16 %v2329, %v2325
        %v2426 = vpack.c.b16 %v2330, %v2326
        %v2427 = vpack.c.b16 %v2331, %v2327
        %v2428 = vpack.c.b16 %v2336, %v2332
        %v2429 = vpack.c.b16 %v2337, %v2333
        %v2430 = vpack.c.b16 %v2338, %v2334
        %v2431 = vpack.c.b16 %v2339, %v2335
        %v2432 = vpack.c.b16 %v2344, %v2340
        %v2433 = vpack.c.b16 %v2345, %v2341
        %v2434 = vpack.c.b16 %v2346, %v2342
        %v2435 = vpack.c.b16 %v2347, %v2343
        %v2436 = vpack.c.b16 %v2352, %v2348
        %v2437 = vpack.c.b16 %v2353, %v2349
        %v2438 = vpack.c.b16 %v2354, %v2350
        %v2439 = vpack.c.b16 %v2355, %v2351
        %v2440 = vpack.c.b16 %v2360, %v2356
        %v2441 = vpack.c.b16 %v2361, %v2357
        %v2442 = vpack.c.b16 %v2362, %v2358
        %v2443 = vpack.c.b16 %v2363, %v2359
        %v2444 = vpack.c.b16 %v2368, %v2364
        %v2445 = vpack.c.b16 %v2369, %v2365
        %v2446 = vpack.c.b16 %v2370, %v2366
        %v2447 = vpack.c.b16 %v2371, %v2367
        %v2448 = vpack.c.b16 %v2376, %v2372
        %v2449 = vpack.c.b16 %v2377, %v2373
        %v2450 = vpack.c.b16 %v2378, %v2374
        %v2451 = vpack.c.b16 %v2379, %v2375
        %v2452 = vpack.c.b16 %v2384, %v2380
        %v2453 = vpack.c.b16 %v2385, %v2381
        %v2454 = vpack.c.b16 %v2386, %v2382
        %v2455 = vpack.c.b16 %v2387, %v2383
        %v2456 = vpack.c.b16 %v2392, %v2388
        %v2457 = vpack.c.b16 %v2393, %v2389
        %v2458 = vpack.c.b16 %v2394, %v2390
        %v2459 = vpack.c.b16 %v2395, %v2391
        %2524 = vmatpush.bf16.msra.mxu0 %v2424
        %2525 = vmatpush.bf16.msra.mxu0 %v2420
        %2526 = vmatpush.bf16.msra.mxu0 %v2416
        %2527 = vmatpush.bf16.msra.mxu0 %v2412
        %2528 = vmatpush.bf16.msra.mxu0 %v2408
        %2529 = vmatpush.bf16.msra.mxu0 %v2404
        %2530 = vmatpush.bf16.msra.mxu0 %v2400
        %2531 = vmatpush.bf16.msra.mxu0 %v2396
        %2532 = vmatmul.bf16.gmra.mxu0 %v2138
        %v2533 = vpop.f32.mrf.mxu0
        %v2534 = vadd.f32 0.0, %v2533
        %v2535 = vpop.f32.mrf.mxu0
        %v2536 = vadd.f32 0.0, %v2535
        %2537 = vdwg.mxu0
        %2538 = vmatpush.bf16.msra.mxu0 %v2456
        %2539 = vmatpush.bf16.msra.mxu0 %v2452
        %2540 = vmatpush.bf16.msra.mxu0 %v2448
        %2541 = vmatpush.bf16.msra.mxu0 %v2444
        %2542 = vmatpush.bf16.msra.mxu0 %v2440
        %2543 = vmatpush.bf16.msra.mxu0 %v2436
        %2544 = vmatpush.bf16.msra.mxu0 %v2432
        %2545 = vmatpush.bf16.msra.mxu0 %v2428
        %2546 = vmatmul.bf16.gmra.mxu0 %v2139
        %v2547 = vpop.f32.mrf.mxu0
        %v2548 = vadd.f32 %v2534, %v2547
        %v2549 = vpop.f32.mrf.mxu0
        %v2550 = vadd.f32 %v2536, %v2549
        %2551 = vdwg.mxu0
        %2552 = vmatpush.bf16.msra.mxu0 %v2425
        %2553 = vmatpush.bf16.msra.mxu0 %v2421
        %2554 = vmatpush.bf16.msra.mxu0 %v2417
        %2555 = vmatpush.bf16.msra.mxu0 %v2413
        %2556 = vmatpush.bf16.msra.mxu0 %v2409
        %2557 = vmatpush.bf16.msra.mxu0 %v2405
        %2558 = vmatpush.bf16.msra.mxu0 %v2401
        %2559 = vmatpush.bf16.msra.mxu0 %v2397
        %2560 = vmatmul.bf16.gmra.mxu0 %v2138
        %v2561 = vpop.f32.mrf.mxu0
        %v2562 = vadd.f32 0.0, %v2561
        %v2563 = vpop.f32.mrf.mxu0
        %v2564 = vadd.f32 0.0, %v2563
        %2565 = vdwg.mxu0
        %2566 = vmatpush.bf16.msra.mxu0 %v2457
        %2567 = vmatpush.bf16.msra.mxu0 %v2453
        %2568 = vmatpush.bf16.msra.mxu0 %v2449
        %2569 = vmatpush.bf16.msra.mxu0 %v2445
        %2570 = vmatpush.bf16.msra.mxu0 %v2441
        %2571 = vmatpush.bf16.msra.mxu0 %v2437
        %2572 = vmatpush.bf16.msra.mxu0 %v2433
        %2573 = vmatpush.bf16.msra.mxu0 %v2429
        %2574 = vmatmul.bf16.gmra.mxu0 %v2139
        %v2575 = vpop.f32.mrf.mxu0
        %v2576 = vadd.f32 %v2562, %v2575
        %v2577 = vpop.f32.mrf.mxu0
        %v2578 = vadd.f32 %v2564, %v2577
        %2579 = vdwg.mxu0
        %2580 = vmatpush.bf16.msra.mxu0 %v2426
        %2581 = vmatpush.bf16.msra.mxu0 %v2422
        %2582 = vmatpush.bf16.msra.mxu0 %v2418
        %2583 = vmatpush.bf16.msra.mxu0 %v2414
        %2584 = vmatpush.bf16.msra.mxu0 %v2410
        %2585 = vmatpush.bf16.msra.mxu0 %v2406
        %2586 = vmatpush.bf16.msra.mxu0 %v2402
        %2587 = vmatpush.bf16.msra.mxu0 %v2398
        %2588 = vmatmul.bf16.gmra.mxu0 %v2138
        %v2589 = vpop.f32.mrf.mxu0
        %v2590 = vadd.f32 0.0, %v2589
        %v2591 = vpop.f32.mrf.mxu0
        %v2592 = vadd.f32 0.0, %v2591
        %2593 = vdwg.mxu0
        %2594 = vmatpush.bf16.msra.mxu0 %v2458
        %2595 = vmatpush.bf16.msra.mxu0 %v2454
        %2596 = vmatpush.bf16.msra.mxu0 %v2450
        %2597 = vmatpush.bf16.msra.mxu0 %v2446
        %2598 = vmatpush.bf16.msra.mxu0 %v2442
        %2599 = vmatpush.bf16.msra.mxu0 %v2438
        %2600 = vmatpush.bf16.msra.mxu0 %v2434
        %2601 = vmatpush.bf16.msra.mxu0 %v2430
        %2602 = vmatmul.bf16.gmra.mxu0 %v2139
        %v2603 = vpop.f32.mrf.mxu0
        %v2604 = vadd.f32 %v2590, %v2603
        %v2605 = vpop.f32.mrf.mxu0
        %v2606 = vadd.f32 %v2592, %v2605
        %2607 = vdwg.mxu0
        %2608 = vmatpush.bf16.msra.mxu0 %v2427
        %2609 = vmatpush.bf16.msra.mxu0 %v2423
        %2610 = vmatpush.bf16.msra.mxu0 %v2419
        %2611 = vmatpush.bf16.msra.mxu0 %v2415
        %2612 = vmatpush.bf16.msra.mxu0 %v2411
        %2613 = vmatpush.bf16.msra.mxu0 %v2407
        %2614 = vmatpush.bf16.msra.mxu0 %v2403
        %2615 = vmatpush.bf16.msra.mxu0 %v2399
        %2616 = vmatmul.bf16.gmra.mxu0 %v2138
        %v2617 = vpop.f32.mrf.mxu0
        %v2618 = vadd.f32 0.0, %v2617
        %v2619 = vpop.f32.mrf.mxu0
        %v2620 = vadd.f32 0.0, %v2619
        %2621 = vdwg.mxu0
        %2622 = vmatpush.bf16.msra.mxu0 %v2459
        %2623 = vmatpush.bf16.msra.mxu0 %v2455
        %2624 = vmatpush.bf16.msra.mxu0 %v2451
        %2625 = vmatpush.bf16.msra.mxu0 %v2447
        %2626 = vmatpush.bf16.msra.mxu0 %v2443
        %2627 = vmatpush.bf16.msra.mxu0 %v2439
        %2628 = vmatpush.bf16.msra.mxu0 %v2435
        %2629 = vmatpush.bf16.msra.mxu0 %v2431
        %2630 = vmatmul.bf16.gmra.mxu0 %v2139
        %v2631 = vpop.f32.mrf.mxu0
        %v2632 = vadd.f32 %v2618, %v2631
        %v2633 = vpop.f32.mrf.mxu0
        %v2634 = vadd.f32 %v2620, %v2633
        %2635 = vdwg.mxu0
        %2636 = vst [vmem:[#allocation2] sm:$0xff] %v2548
        %2637 = vst [vmem:[#allocation2 + $0x8] sm:$0xff] %v2576
        %2638 = vst [vmem:[#allocation2 + $0x10] sm:$0xff] %v2604
        %2639 = vst [vmem:[#allocation2 + $0x18] sm:$0xff] %v2632
        %2640 = vst [vmem:[#allocation2 + $0x20] sm:$0xff] %v2550
        %2641 = vst [vmem:[#allocation2 + $0x28] sm:$0xff] %v2578
        %2642 = vst [vmem:[#allocation2 + $0x30] sm:$0xff] %v2606
        %2643 = vst [vmem:[#allocation2 + $0x38] sm:$0xff] %v2634
      $region72: #{seq2seq_forward.3} parent=51 // pred_fallthru
        _
      %s2644 = sld [smem:[#allocation6 + %s2069]]
      %p2645 = scmp.ne.s32.totalorder %s2644, 0
      // Predicated region
      $region73: #{seq2seq_forward.3} parent=51 // pred_check
        %p2646 = pneg %p2645
      $region74: #{seq2seq_forward.3} parent=51 // pred_check_branch
        %2648 = sbr.rel (%p2646) target = $region76
      $region75: #{seq2seq_forward.3} parent=51 // pred_region
        %s2649 = scalar_lea.vmem %s314, 128
        %v2650 = vld [vmem:[%s2649] sm:$0xff]
        %v2651 = vld [vmem:[%s2649 + $0x8] sm:$0xff]
        %v2652 = vld [vmem:[%s2649 + $0x10] sm:$0xff]
        %v2653 = vld [vmem:[%s2649 + $0x18] sm:$0xff]
        %v2654 = vld [vmem:[%s2649 + $0x20] sm:$0xff]
        %v2655 = vld [vmem:[%s2649 + $0x28] sm:$0xff]
        %v2656 = vld [vmem:[%s2649 + $0x30] sm:$0xff]
        %v2657 = vld [vmem:[%s2649 + $0x38] sm:$0xff]
        %2658 = vst [vmem:[#allocation2] sm:$0xff] %v2650
        %2659 = vst [vmem:[#allocation2 + $0x8] sm:$0xff] %v2651
        %2660 = vst [vmem:[#allocation2 + $0x10] sm:$0xff] %v2652
        %2661 = vst [vmem:[#allocation2 + $0x18] sm:$0xff] %v2653
        %2662 = vst [vmem:[#allocation2 + $0x20] sm:$0xff] %v2654
        %2663 = vst [vmem:[#allocation2 + $0x28] sm:$0xff] %v2655
        %2664 = vst [vmem:[#allocation2 + $0x30] sm:$0xff] %v2656
        %2665 = vst [vmem:[#allocation2 + $0x38] sm:$0xff] %v2657
      $region76: #{seq2seq_forward.3} parent=51 // pred_fallthru
        _
      %v2666 = vld [vmem:[#allocation3] sm:$0xf]
      %v2667 = vld [vmem:[#allocation3 + $0x4] sm:$0xf]
      %v2668 = vld [vmem:[%s5] sm:$0xff]
      %v2669 = vld [vmem:[%s5 + $0x8] sm:$0xff]
      %v2670 = vld [vmem:[%s5 + $0x10] sm:$0xff]
      %v2671 = vld [vmem:[%s5 + $0x18] sm:$0xff]
      %v2672 = vld [vmem:[%s5 + $0x20] sm:$0xff]
      %v2673 = vld [vmem:[%s5 + $0x28] sm:$0xff]
      %v2674 = vld [vmem:[%s5 + $0x30] sm:$0xff]
      %v2675 = vld [vmem:[%s5 + $0x38] sm:$0xff]
      %v2676 = vld [vmem:[%s5 + $0x40] sm:$0xff]
      %v2677 = vld [vmem:[%s5 + $0x48] sm:$0xff]
      %v2678 = vld [vmem:[%s5 + $0x50] sm:$0xff]
      %v2679 = vld [vmem:[%s5 + $0x58] sm:$0xff]
      %v2680 = vld [vmem:[%s5 + $0x60] sm:$0xff]
      %v2681 = vld [vmem:[%s5 + $0x68] sm:$0xff]
      %v2682 = vld [vmem:[%s5 + $0x70] sm:$0xff]
      %v2683 = vld [vmem:[%s5 + $0x78] sm:$0xff]
      %v2684 = vld [vmem:[%s5 + $0x80] sm:$0xff]
      %v2685 = vld [vmem:[%s5 + $0x88] sm:$0xff]
      %v2686 = vld [vmem:[%s5 + $0x90] sm:$0xff]
      %v2687 = vld [vmem:[%s5 + $0x98] sm:$0xff]
      %v2688 = vld [vmem:[%s5 + $0xa0] sm:$0xff]
      %v2689 = vld [vmem:[%s5 + $0xa8] sm:$0xff]
      %v2690 = vld [vmem:[%s5 + $0xb0] sm:$0xff]
      %v2691 = vld [vmem:[%s5 + $0xb8] sm:$0xff]
      %v2692 = vld [vmem:[%s5 + $0xc0] sm:$0xff]
      %v2693 = vld [vmem:[%s5 + $0xc8] sm:$0xff]
      %v2694 = vld [vmem:[%s5 + $0xd0] sm:$0xff]
      %v2695 = vld [vmem:[%s5 + $0xd8] sm:$0xff]
      %v2696 = vld [vmem:[%s5 + $0xe0] sm:$0xff]
      %v2697 = vld [vmem:[%s5 + $0xe8] sm:$0xff]
      %v2698 = vld [vmem:[%s5 + $0xf0] sm:$0xff]
      %v2699 = vld [vmem:[%s5 + $0xf8] sm:$0xff]
      %v2700 = vld [vmem:[#allocation2] sm:$0xff]
      %v2701 = vld [vmem:[#allocation2 + $0x8] sm:$0xff]
      %v2702 = vld [vmem:[#allocation2 + $0x10] sm:$0xff]
      %v2703 = vld [vmem:[#allocation2 + $0x18] sm:$0xff]
      %v2704 = vld [vmem:[#allocation2 + $0x20] sm:$0xff]
      %v2705 = vld [vmem:[#allocation2 + $0x28] sm:$0xff]
      %v2706 = vld [vmem:[#allocation2 + $0x30] sm:$0xff]
      %v2707 = vld [vmem:[#allocation2 + $0x38] sm:$0xff]
      %v2710 = vunpack.c.l.b16 %v2666
      %v2711 = vunpack.c.l.b16 %v2667
      %v2712 = vpack.c.b16 %v2711, %v2710
      %v2746 = vunpack.c.l.b16 %v2668
      %v2747 = vunpack.c.h.b16 %v2668
      %v2748 = vunpack.c.l.b16 %v2669
      %v2749 = vunpack.c.h.b16 %v2669
      %v2750 = vunpack.c.l.b16 %v2670
      %v2751 = vunpack.c.h.b16 %v2670
      %v2752 = vunpack.c.l.b16 %v2671
      %v2753 = vunpack.c.h.b16 %v2671
      %v2754 = vunpack.c.l.b16 %v2672
      %v2755 = vunpack.c.h.b16 %v2672
      %v2756 = vunpack.c.l.b16 %v2673
      %v2757 = vunpack.c.h.b16 %v2673
      %v2758 = vunpack.c.l.b16 %v2674
      %v2759 = vunpack.c.h.b16 %v2674
      %v2760 = vunpack.c.l.b16 %v2675
      %v2761 = vunpack.c.h.b16 %v2675
      %v2762 = vunpack.c.l.b16 %v2676
      %v2763 = vunpack.c.h.b16 %v2676
      %v2764 = vunpack.c.l.b16 %v2677
      %v2765 = vunpack.c.h.b16 %v2677
      %v2766 = vunpack.c.l.b16 %v2678
      %v2767 = vunpack.c.h.b16 %v2678
      %v2768 = vunpack.c.l.b16 %v2679
      %v2769 = vunpack.c.h.b16 %v2679
      %v2770 = vunpack.c.l.b16 %v2680
      %v2771 = vunpack.c.h.b16 %v2680
      %v2772 = vunpack.c.l.b16 %v2681
      %v2773 = vunpack.c.h.b16 %v2681
      %v2774 = vunpack.c.l.b16 %v2682
      %v2775 = vunpack.c.h.b16 %v2682
      %v2776 = vunpack.c.l.b16 %v2683
      %v2777 = vunpack.c.h.b16 %v2683
      %v2778 = vunpack.c.l.b16 %v2684
      %v2779 = vunpack.c.h.b16 %v2684
      %v2780 = vunpack.c.l.b16 %v2685
      %v2781 = vunpack.c.h.b16 %v2685
      %v2782 = vunpack.c.l.b16 %v2686
      %v2783 = vunpack.c.h.b16 %v2686
      %v2784 = vunpack.c.l.b16 %v2687
      %v2785 = vunpack.c.h.b16 %v2687
      %v2786 = vunpack.c.l.b16 %v2688
      %v2787 = vunpack.c.h.b16 %v2688
      %v2788 = vunpack.c.l.b16 %v2689
      %v2789 = vunpack.c.h.b16 %v2689
      %v2790 = vunpack.c.l.b16 %v2690
      %v2791 = vunpack.c.h.b16 %v2690
      %v2792 = vunpack.c.l.b16 %v2691
      %v2793 = vunpack.c.h.b16 %v2691
      %v2794 = vunpack.c.l.b16 %v2692
      %v2795 = vunpack.c.h.b16 %v2692
      %v2796 = vunpack.c.l.b16 %v2693
      %v2797 = vunpack.c.h.b16 %v2693
      %v2798 = vunpack.c.l.b16 %v2694
      %v2799 = vunpack.c.h.b16 %v2694
      %v2800 = vunpack.c.l.b16 %v2695
      %v2801 = vunpack.c.h.b16 %v2695
      %v2802 = vunpack.c.l.b16 %v2696
      %v2803 = vunpack.c.h.b16 %v2696
      %v2804 = vunpack.c.l.b16 %v2697
      %v2805 = vunpack.c.h.b16 %v2697
      %v2806 = vunpack.c.l.b16 %v2698
      %v2807 = vunpack.c.h.b16 %v2698
      %v2808 = vunpack.c.l.b16 %v2699
      %v2809 = vunpack.c.h.b16 %v2699
      %v2810 = vpack.c.b16 %v2750, %v2746
      %v2811 = vpack.c.b16 %v2751, %v2747
      %v2812 = vpack.c.b16 %v2752, %v2748
      %v2813 = vpack.c.b16 %v2753, %v2749
      %v2814 = vpack.c.b16 %v2758, %v2754
      %v2815 = vpack.c.b16 %v2759, %v2755
      %v2816 = vpack.c.b16 %v2760, %v2756
      %v2817 = vpack.c.b16 %v2761, %v2757
      %v2818 = vpack.c.b16 %v2766, %v2762
      %v2819 = vpack.c.b16 %v2767, %v2763
      %v2820 = vpack.c.b16 %v2768, %v2764
      %v2821 = vpack.c.b16 %v2769, %v2765
      %v2822 = vpack.c.b16 %v2774, %v2770
      %v2823 = vpack.c.b16 %v2775, %v2771
      %v2824 = vpack.c.b16 %v2776, %v2772
      %v2825 = vpack.c.b16 %v2777, %v2773
      %v2826 = vpack.c.b16 %v2782, %v2778
      %v2827 = vpack.c.b16 %v2783, %v2779
      %v2828 = vpack.c.b16 %v2784, %v2780
      %v2829 = vpack.c.b16 %v2785, %v2781
      %v2830 = vpack.c.b16 %v2790, %v2786
      %v2831 = vpack.c.b16 %v2791, %v2787
      %v2832 = vpack.c.b16 %v2792, %v2788
      %v2833 = vpack.c.b16 %v2793, %v2789
      %v2834 = vpack.c.b16 %v2798, %v2794
      %v2835 = vpack.c.b16 %v2799, %v2795
      %v2836 = vpack.c.b16 %v2800, %v2796
      %v2837 = vpack.c.b16 %v2801, %v2797
      %v2838 = vpack.c.b16 %v2806, %v2802
      %v2839 = vpack.c.b16 %v2807, %v2803
      %v2840 = vpack.c.b16 %v2808, %v2804
      %v2841 = vpack.c.b16 %v2809, %v2805
      %2874 = vmatpush.bf16.msra.mxu0 %v2838
      %2875 = vmatpush.bf16.msra.mxu0 %v2834
      %2876 = vmatpush.bf16.msra.mxu0 %v2830
      %2877 = vmatpush.bf16.msra.mxu0 %v2826
      %2878 = vmatpush.bf16.msra.mxu0 %v2822
      %2879 = vmatpush.bf16.msra.mxu0 %v2818
      %2880 = vmatpush.bf16.msra.mxu0 %v2814
      %2881 = vmatpush.bf16.msra.mxu0 %v2810
      %2882 = vmatmul.bf16.gmra.mxu0 %v2712
      %v2883 = vpop.f32.mrf.mxu0
      %v2884 = vadd.f32 %v2700, %v2883
      %v2885 = vpop.f32.mrf.mxu0
      %v2886 = vadd.f32 %v2704, %v2885
      %2887 = vdwg.mxu0
      %2888 = vmatpush.bf16.msra.mxu0 %v2839
      %2889 = vmatpush.bf16.msra.mxu0 %v2835
      %2890 = vmatpush.bf16.msra.mxu0 %v2831
      %2891 = vmatpush.bf16.msra.mxu0 %v2827
      %2892 = vmatpush.bf16.msra.mxu0 %v2823
      %2893 = vmatpush.bf16.msra.mxu0 %v2819
      %2894 = vmatpush.bf16.msra.mxu0 %v2815
      %2895 = vmatpush.bf16.msra.mxu0 %v2811
      %2896 = vmatmul.bf16.gmra.mxu0 %v2712
      %v2897 = vpop.f32.mrf.mxu0
      %v2898 = vadd.f32 %v2701, %v2897
      %v2899 = vpop.f32.mrf.mxu0
      %v2900 = vadd.f32 %v2705, %v2899
      %2901 = vdwg.mxu0
      %2902 = vmatpush.bf16.msra.mxu0 %v2840
      %2903 = vmatpush.bf16.msra.mxu0 %v2836
      %2904 = vmatpush.bf16.msra.mxu0 %v2832
      %2905 = vmatpush.bf16.msra.mxu0 %v2828
      %2906 = vmatpush.bf16.msra.mxu0 %v2824
      %2907 = vmatpush.bf16.msra.mxu0 %v2820
      %2908 = vmatpush.bf16.msra.mxu0 %v2816
      %2909 = vmatpush.bf16.msra.mxu0 %v2812
      %2910 = vmatmul.bf16.gmra.mxu0 %v2712
      %v2911 = vpop.f32.mrf.mxu0
      %v2912 = vadd.f32 %v2702, %v2911
      %v2913 = vpop.f32.mrf.mxu0
      %v2914 = vadd.f32 %v2706, %v2913
      %2915 = vdwg.mxu0
      %2916 = vmatpush.bf16.msra.mxu0 %v2841
      %2917 = vmatpush.bf16.msra.mxu0 %v2837
      %2918 = vmatpush.bf16.msra.mxu0 %v2833
      %2919 = vmatpush.bf16.msra.mxu0 %v2829
      %2920 = vmatpush.bf16.msra.mxu0 %v2825
      %2921 = vmatpush.bf16.msra.mxu0 %v2821
      %2922 = vmatpush.bf16.msra.mxu0 %v2817
      %2923 = vmatpush.bf16.msra.mxu0 %v2813
      %2924 = vmatmul.bf16.gmra.mxu0 %v2712
      %v2925 = vpop.f32.mrf.mxu0
      %v2926 = vadd.f32 %v2703, %v2925
      %v2927 = vpop.f32.mrf.mxu0
      %v2928 = vadd.f32 %v2707, %v2927
      %2929 = vdwg.mxu0
      %v2930 = vld [vmem:[%s6] sm:$0xf]
      %v2932 = vperm.slane %v2930, 0
      %v2933 = vperm.slane %v2930, 1
      %v2934 = vperm.slane %v2930, 2
      %v2935 = vperm.slane %v2930, 3
      %v2940 = vadd.f32 %v2884, %v2932
      %v2941 = vadd.f32 %v2898, %v2933
      %v2942 = vadd.f32 %v2912, %v2934
      %v2943 = vadd.f32 %v2926, %v2935
      %v2944 = vadd.f32 %v2886, %v2932
      %v2945 = vadd.f32 %v2900, %v2933
      %v2946 = vadd.f32 %v2914, %v2934
      %v2947 = vadd.f32 %v2928, %v2935
      %v2948 = vxor.u32 %v2940, 2147483648
      %v2949 = vxor.u32 %v2944, 2147483648
      %v2950 = vmul.f32 %v2948, 1.442695
      %v2951 = vpow.pop %v2950
      %v2952 = vmul.f32 %v2949, 1.442695
      %v2953 = vpow.pop %v2952
      %v2954 = vadd.f32 %v2951, 1.0
      %v2955 = vadd.f32 %v2953, 1.0
      %v2956 = vrcp.pop %v2954
      %v2957 = vmul.f32 %v2954, %v2956
      %v2958 = vsub.f32 1.0, %v2957
      %v2959 = vmul.f32 %v2956, %v2958
      %v2960 = vadd.f32 %v2956, %v2959
      %vm2961 = vweird.f32 %v2954
      %vm2962 = vweird.f32 %v2956
      %vm2963 = vmor %vm2961, %vm2962
      %v2964 = vsel %vm2963, %v2956, %v2960
      %v2965 = vand.u32 2147483647, %v2954
      %vm2966 = vcmp.eq.f32.partialorder %v2965, 8.507059e+37
      %v2967 = vand.u32 %v2954, 2147483648
      %v2968 = vor.u32 1.1754944e-38, %v2967
      %v2969 = vsel %vm2966, %v2968, %v2964
      %v2970 = vmul.f32 1.0, %v2969
      %v2971 = vrcp.pop %v2955
      %v2972 = vmul.f32 %v2955, %v2971
      %v2973 = vsub.f32 1.0, %v2972
      %v2974 = vmul.f32 %v2971, %v2973
      %v2975 = vadd.f32 %v2971, %v2974
      %vm2976 = vweird.f32 %v2955
      %vm2977 = vweird.f32 %v2971
      %vm2978 = vmor %vm2976, %vm2977
      %v2979 = vsel %vm2978, %v2971, %v2975
      %v2980 = vand.u32 2147483647, %v2955
      %vm2981 = vcmp.eq.f32.partialorder %v2980, 8.507059e+37
      %v2982 = vand.u32 %v2955, 2147483648
      %v2983 = vor.u32 1.1754944e-38, %v2982
      %v2984 = vsel %vm2981, %v2983, %v2979
      %v2985 = vmul.f32 1.0, %v2984
      %v2986 = vxor.u32 %v2941, 2147483648
      %v2987 = vxor.u32 %v2945, 2147483648
      %v2988 = vmul.f32 %v2986, 1.442695
      %v2989 = vpow.pop %v2988
      %v2990 = vmul.f32 %v2987, 1.442695
      %v2991 = vpow.pop %v2990
      %v2992 = vadd.f32 %v2989, 1.0
      %v2993 = vadd.f32 %v2991, 1.0
      %v2994 = vrcp.pop %v2992
      %v2995 = vmul.f32 %v2992, %v2994
      %v2996 = vsub.f32 1.0, %v2995
      %v2997 = vmul.f32 %v2994, %v2996
      %v2998 = vadd.f32 %v2994, %v2997
      %vm2999 = vweird.f32 %v2992
      %vm3000 = vweird.f32 %v2994
      %vm3001 = vmor %vm2999, %vm3000
      %v3002 = vsel %vm3001, %v2994, %v2998
      %v3003 = vand.u32 2147483647, %v2992
      %vm3004 = vcmp.eq.f32.partialorder %v3003, 8.507059e+37
      %v3005 = vand.u32 %v2992, 2147483648
      %v3006 = vor.u32 1.1754944e-38, %v3005
      %v3007 = vsel %vm3004, %v3006, %v3002
      %v3008 = vmul.f32 1.0, %v3007
      %v3009 = vrcp.pop %v2993
      %v3010 = vmul.f32 %v2993, %v3009
      %v3011 = vsub.f32 1.0, %v3010
      %v3012 = vmul.f32 %v3009, %v3011
      %v3013 = vadd.f32 %v3009, %v3012
      %vm3014 = vweird.f32 %v2993
      %vm3015 = vweird.f32 %v3009
      %vm3016 = vmor %vm3014, %vm3015
      %v3017 = vsel %vm3016, %v3009, %v3013
      %v3018 = vand.u32 2147483647, %v2993
      %vm3019 = vcmp.eq.f32.partialorder %v3018, 8.507059e+37
      %v3020 = vand.u32 %v2993, 2147483648
      %v3021 = vor.u32 1.1754944e-38, %v3020
      %v3022 = vsel %vm3019, %v3021, %v3017
      %v3023 = vmul.f32 1.0, %v3022
      %v3024 = vtanh.pop %v2942
      %v3025 = vtanh.pop %v2946
      %v3026 = vxor.u32 %v2943, 2147483648
      %v3027 = vxor.u32 %v2947, 2147483648
      %v3028 = vmul.f32 %v3026, 1.442695
      %v3029 = vpow.pop %v3028
      %v3030 = vmul.f32 %v3027, 1.442695
      %v3031 = vpow.pop %v3030
      %v3032 = vadd.f32 %v3029, 1.0
      %v3033 = vadd.f32 %v3031, 1.0
      %v3034 = vrcp.pop %v3032
      %v3035 = vmul.f32 %v3032, %v3034
      %v3036 = vsub.f32 1.0, %v3035
      %v3037 = vmul.f32 %v3034, %v3036
      %v3038 = vadd.f32 %v3034, %v3037
      %vm3039 = vweird.f32 %v3032
      %vm3040 = vweird.f32 %v3034
      %vm3041 = vmor %vm3039, %vm3040
      %v3042 = vsel %vm3041, %v3034, %v3038
      %v3043 = vand.u32 2147483647, %v3032
      %vm3044 = vcmp.eq.f32.partialorder %v3043, 8.507059e+37
      %v3045 = vand.u32 %v3032, 2147483648
      %v3046 = vor.u32 1.1754944e-38, %v3045
      %v3047 = vsel %vm3044, %v3046, %v3042
      %v3048 = vmul.f32 1.0, %v3047
      %v3049 = vrcp.pop %v3033
      %v3050 = vmul.f32 %v3033, %v3049
      %v3051 = vsub.f32 1.0, %v3050
      %v3052 = vmul.f32 %v3049, %v3051
      %v3053 = vadd.f32 %v3049, %v3052
      %vm3054 = vweird.f32 %v3033
      %vm3055 = vweird.f32 %v3049
      %vm3056 = vmor %vm3054, %vm3055
      %v3057 = vsel %vm3056, %v3049, %v3053
      %v3058 = vand.u32 2147483647, %v3033
      %vm3059 = vcmp.eq.f32.partialorder %v3058, 8.507059e+37
      %v3060 = vand.u32 %v3033, 2147483648
      %v3061 = vor.u32 1.1754944e-38, %v3060
      %v3062 = vsel %vm3059, %v3061, %v3057
      %v3063 = vmul.f32 1.0, %v3062
      %v3064 = vld [vmem:[#allocation4] sm:$0xff]
      %v3065 = vld [vmem:[#allocation4 + $0x8] sm:$0xff]
      %v3066 = vmul.f32 %v3008, %v3064
      %v3067 = vmul.f32 %v3023, %v3065
      %v3068 = vmul.f32 %v2970, %v3024
      %v3069 = vmul.f32 %v2985, %v3025
      %v3070 = vadd.f32 %v3066, %v3068
      %v3071 = vadd.f32 %v3067, %v3069
      %v3072 = vtanh.pop %v3070
      %v3073 = vtanh.pop %v3071
      %v3074 = vmul.f32 %v3048, %v3072
      %v3075 = vmul.f32 %v3063, %v3073
      %v3076 = vpack.c.bf16 %v3074, %v3074
      %v3077 = vpack.c.bf16 %v3075, %v3075
      %3078 = vst [vmem:[#allocation4] sm:$0xff] %v3070
      %3079 = vst [vmem:[#allocation4 + $0x8] sm:$0xff] %v3071
      %3080 = vst [vmem:[#allocation3] sm:$0xf] %v3076
      %3081 = vst [vmem:[#allocation3 + $0x4] sm:$0xf] %v3077
      %v3082 = vld [vmem:[%s7] sm:$0xff]
      %v3083 = vld [vmem:[%s7 + $0x8] sm:$0xff]
      %v3084 = vld [vmem:[%s7 + $0x10] sm:$0xff]
      %v3085 = vld [vmem:[%s7 + $0x18] sm:$0xff]
      %v3086 = vld [vmem:[%s7 + $0x20] sm:$0xff]
      %v3087 = vld [vmem:[%s7 + $0x28] sm:$0xff]
      %v3088 = vld [vmem:[%s7 + $0x30] sm:$0xff]
      %v3089 = vld [vmem:[%s7 + $0x38] sm:$0xff]
      %v3090 = vld [vmem:[%s7 + $0x40] sm:$0xff]
      %v3091 = vld [vmem:[%s7 + $0x48] sm:$0xff]
      %v3092 = vld [vmem:[%s7 + $0x50] sm:$0xff]
      %v3093 = vld [vmem:[%s7 + $0x58] sm:$0xff]
      %v3094 = vld [vmem:[%s7 + $0x60] sm:$0xff]
      %v3095 = vld [vmem:[%s7 + $0x68] sm:$0xff]
      %v3096 = vld [vmem:[%s7 + $0x70] sm:$0xff]
      %v3097 = vld [vmem:[%s7 + $0x78] sm:$0xff]
      %v3098 = vld [vmem:[%s8] sm:$0x3]
      %v3100 = vperm.slane %v3098, 0
      %v3101 = vperm.slane %v3098, 1
      %v3106 = vunpack.c.l.b16 %v3076
      %v3107 = vunpack.c.l.b16 %v3077
      %v3108 = vpack.c.b16 %v3107, %v3106
      %v3126 = vunpack.c.l.b16 %v3082
      %v3127 = vunpack.c.h.b16 %v3082
      %v3128 = vunpack.c.l.b16 %v3083
      %v3129 = vunpack.c.h.b16 %v3083
      %v3130 = vunpack.c.l.b16 %v3084
      %v3131 = vunpack.c.h.b16 %v3084
      %v3132 = vunpack.c.l.b16 %v3085
      %v3133 = vunpack.c.h.b16 %v3085
      %v3134 = vunpack.c.l.b16 %v3086
      %v3135 = vunpack.c.h.b16 %v3086
      %v3136 = vunpack.c.l.b16 %v3087
      %v3137 = vunpack.c.h.b16 %v3087
      %v3138 = vunpack.c.l.b16 %v3088
      %v3139 = vunpack.c.h.b16 %v3088
      %v3140 = vunpack.c.l.b16 %v3089
      %v3141 = vunpack.c.h.b16 %v3089
      %v3142 = vunpack.c.l.b16 %v3090
      %v3143 = vunpack.c.h.b16 %v3090
      %v3144 = vunpack.c.l.b16 %v3091
      %v3145 = vunpack.c.h.b16 %v3091
      %v3146 = vunpack.c.l.b16 %v3092
      %v3147 = vunpack.c.h.b16 %v3092
      %v3148 = vunpack.c.l.b16 %v3093
      %v3149 = vunpack.c.h.b16 %v3093
      %v3150 = vunpack.c.l.b16 %v3094
      %v3151 = vunpack.c.h.b16 %v3094
      %v3152 = vunpack.c.l.b16 %v3095
      %v3153 = vunpack.c.h.b16 %v3095
      %v3154 = vunpack.c.l.b16 %v3096
      %v3155 = vunpack.c.h.b16 %v3096
      %v3156 = vunpack.c.l.b16 %v3097
      %v3157 = vunpack.c.h.b16 %v3097
      %v3158 = vpack.c.b16 %v3128, %v3126
      %v3159 = vpack.c.b16 %v3129, %v3127
      %v3160 = vpack.c.b16 %v3132, %v3130
      %v3161 = vpack.c.b16 %v3133, %v3131
      %v3162 = vpack.c.b16 %v3136, %v3134
      %v3163 = vpack.c.b16 %v3137, %v3135
      %v3164 = vpack.c.b16 %v3140, %v3138
      %v3165 = vpack.c.b16 %v3141, %v3139
      %v3166 = vpack.c.b16 %v3144, %v3142
      %v3167 = vpack.c.b16 %v3145, %v3143
      %v3168 = vpack.c.b16 %v3148, %v3146
      %v3169 = vpack.c.b16 %v3149, %v3147
      %v3170 = vpack.c.b16 %v3152, %v3150
      %v3171 = vpack.c.b16 %v3153, %v3151
      %v3172 = vpack.c.b16 %v3156, %v3154
      %v3173 = vpack.c.b16 %v3157, %v3155
      %3190 = vmatpush.bf16.msra.mxu0 %v3172
      %3191 = vmatpush.bf16.msra.mxu0 %v3170
      %3192 = vmatpush.bf16.msra.mxu0 %v3168
      %3193 = vmatpush.bf16.msra.mxu0 %v3166
      %3194 = vmatpush.bf16.msra.mxu0 %v3164
      %3195 = vmatpush.bf16.msra.mxu0 %v3162
      %3196 = vmatpush.bf16.msra.mxu0 %v3160
      %3197 = vmatpush.bf16.msra.mxu0 %v3158
      %3198 = vmatmul.bf16.gmra.mxu0 %v3108
      %v3199 = vpop.f32.mrf.mxu0
      %v3200 = vadd.f32 %v3100, %v3199
      %v3201 = vpop.f32.mrf.mxu0
      %v3202 = vadd.f32 %v3100, %v3201
      %3203 = vdwg.mxu0
      %3204 = vmatpush.bf16.msra.mxu0 %v3173
      %3205 = vmatpush.bf16.msra.mxu0 %v3171
      %3206 = vmatpush.bf16.msra.mxu0 %v3169
      %3207 = vmatpush.bf16.msra.mxu0 %v3167
      %3208 = vmatpush.bf16.msra.mxu0 %v3165
      %3209 = vmatpush.bf16.msra.mxu0 %v3163
      %3210 = vmatpush.bf16.msra.mxu0 %v3161
      %3211 = vmatpush.bf16.msra.mxu0 %v3159
      %3212 = vmatmul.bf16.gmra.mxu0 %v3108
      %v3213 = vpop.f32.mrf.mxu0
      %v3214 = vadd.f32 %v3101, %v3213
      %v3215 = vpop.f32.mrf.mxu0
      %v3216 = vadd.f32 %v3101, %v3215
      %3217 = vdwg.mxu0
      %s3218 = scalar_lea.vmem %s321, 64
      %3219 = vst [vmem:[%s3218] sm:$0xff] %v3200
      %3220 = vst [vmem:[%s3218 + $0x8] sm:$0xff] %v3214
      %3221 = vst [vmem:[%s3218 + $0x10] sm:$0xff] %v3202
      %3222 = vst [vmem:[%s3218 + $0x18] sm:$0xff] %v3216
      %s3223 = sadd.s32 %s337, 3
      %p3224 = scmp.lt.s32.totalorder %s3223, 8
      %s3225 = sld [smem:[#allocation6 + %s3223]]
      %p3226 = scmp.eq.s32.totalorder %s3225, 0
      %p3227 = pnand %p3224, %p3226
      %p3228 = pneg %p3227
      // Predicated region
      $region77: #{seq2seq_forward.3} parent=51 // pred_check
        _
      $region78: #{seq2seq_forward.3} parent=51 // pred_check_branch
        %3230 = sbr.rel (%p3227) target = $region80
      $region79: #{seq2seq_forward.3} parent=51 // pred_region
        %v3231 = vlaneseq
        %v3232 = vand.u32 %v3231, 127
        %v3233 = vadd.s32 %v3232, 128
        %v3234 = vmax.f32 %v3200, %v3214
        %3235 = vmax.xlane.f32.xlu0 %v3234
        %v3236 = vpop.xlane.xlu0 %3235
        %v3237 = vmax.f32 %v3202, %v3216
        %3238 = vmax.xlane.f32.xlu0 %v3237
        %v3239 = vpop.xlane.xlu0 %3238
        %vm3240 = vcmp.eq.f32.partialorder %v3200, %v3236
        %vm3241 = vcmp.eq.f32.partialorder %v3214, %v3236
        %vm3242 = vcmp.eq.f32.partialorder %v3202, %v3239
        %vm3243 = vcmp.eq.f32.partialorder %v3216, %v3239
        %v3244 = vsel %vm3240, %v3232, 256
        %v3245 = vsel %vm3241, %v3233, 256
        %v3246 = vsel %vm3242, %v3232, 256
        %v3247 = vsel %vm3243, %v3233, 256
        %vm3248 = vcmp.lt.s32.totalorder %v3244, %v3245
        %v3249 = vsel %vm3248, %v3244, %v3245
        %v3250 = vand.u32 %v3249, 65535
        %v3251 = vshra.s32 %v3249, 16
        %v3252 = vcvt.s32.f32 %v3250
        %v3253 = vcvt.s32.f32 %v3251
        %3254 = vmin.xlane.f32.xlu0 %v3253
        %v3255 = vpop.xlane.xlu0 %3254
        %vm3256 = vcmp.eq.f32.partialorder %v3253, %v3255
        %v3257 = vsel %vm3256, %v3252, inf
        %3258 = vmin.xlane.f32.xlu0 %v3257
        %v3259 = vpop.xlane.xlu0 %3258
        %v3260 = vcvt.f32.s32 %v3259
        %v3261 = vcvt.f32.s32 %v3255
        %v3262 = vshll.u32 %v3261, 16
        %v3263 = vadd.s32 %v3262, %v3260
        %vm3264 = vcmp.lt.s32.totalorder %v3246, %v3247
        %v3265 = vsel %vm3264, %v3246, %v3247
        %v3266 = vand.u32 %v3265, 65535
        %v3267 = vshra.s32 %v3265, 16
        %v3268 = vcvt.s32.f32 %v3266
        %v3269 = vcvt.s32.f32 %v3267
        %3270 = vmin.xlane.f32.xlu0 %v3269
        %v3271 = vpop.xlane.xlu0 %3270
        %vm3272 = vcmp.eq.f32.partialorder %v3269, %v3271
        %v3273 = vsel %vm3272, %v3268, inf
        %3274 = vmin.xlane.f32.xlu0 %v3273
        %v3275 = vpop.xlane.xlu0 %3274
        %v3276 = vcvt.f32.s32 %v3275
        %v3277 = vcvt.f32.s32 %v3271
        %v3278 = vshll.u32 %v3277, 16
        %v3279 = vadd.s32 %v3278, %v3276
        %vm3280 = vcmp.eq.s32.totalorder %v3232, %v3263
        %vm3281 = vcmp.eq.s32.totalorder %v3233, %v3263
        %vm3282 = vcmp.eq.s32.totalorder %v3232, %v3279
        %vm3283 = vcmp.eq.s32.totalorder %v3233, %v3279
        %v3284 = vsel %vm3280, 1, 0
        %v3285 = vsel %vm3281, 1, 0
        %v3286 = vsel %vm3282, 1, 0
        %v3287 = vsel %vm3283, 1, 0
        %v3288 = vcvt.s32.f32 %v3284
        %v3289 = vcvt.s32.f32 %v3285
        %v3290 = vcvt.s32.f32 %v3286
        %v3291 = vcvt.s32.f32 %v3287
        %v3292 = vpack.c.bf16 %v3290, %v3288
        %v3293 = vpack.c.bf16 %v3291, %v3289
        %v3294 = vld [vmem:[%s4] sm:$0xff]
        %v3295 = vld [vmem:[%s4 + $0x8] sm:$0xff]
        %v3296 = vld [vmem:[%s4 + $0x10] sm:$0xff]
        %v3297 = vld [vmem:[%s4 + $0x18] sm:$0xff]
        %v3298 = vld [vmem:[%s4 + $0x20] sm:$0xff]
        %v3299 = vld [vmem:[%s4 + $0x28] sm:$0xff]
        %v3300 = vld [vmem:[%s4 + $0x30] sm:$0xff]
        %v3301 = vld [vmem:[%s4 + $0x38] sm:$0xff]
        %v3302 = vld [vmem:[%s4 + $0x40] sm:$0xff]
        %v3303 = vld [vmem:[%s4 + $0x48] sm:$0xff]
        %v3304 = vld [vmem:[%s4 + $0x50] sm:$0xff]
        %v3305 = vld [vmem:[%s4 + $0x58] sm:$0xff]
        %v3306 = vld [vmem:[%s4 + $0x60] sm:$0xff]
        %v3307 = vld [vmem:[%s4 + $0x68] sm:$0xff]
        %v3308 = vld [vmem:[%s4 + $0x70] sm:$0xff]
        %v3309 = vld [vmem:[%s4 + $0x78] sm:$0xff]
        %v3310 = vld [vmem:[%s4 + $0x80] sm:$0xff]
        %v3311 = vld [vmem:[%s4 + $0x88] sm:$0xff]
        %v3312 = vld [vmem:[%s4 + $0x90] sm:$0xff]
        %v3313 = vld [vmem:[%s4 + $0x98] sm:$0xff]
        %v3314 = vld [vmem:[%s4 + $0xa0] sm:$0xff]
        %v3315 = vld [vmem:[%s4 + $0xa8] sm:$0xff]
        %v3316 = vld [vmem:[%s4 + $0xb0] sm:$0xff]
        %v3317 = vld [vmem:[%s4 + $0xb8] sm:$0xff]
        %v3318 = vld [vmem:[%s4 + $0xc0] sm:$0xff]
        %v3319 = vld [vmem:[%s4 + $0xc8] sm:$0xff]
        %v3320 = vld [vmem:[%s4 + $0xd0] sm:$0xff]
        %v3321 = vld [vmem:[%s4 + $0xd8] sm:$0xff]
        %v3322 = vld [vmem:[%s4 + $0xe0] sm:$0xff]
        %v3323 = vld [vmem:[%s4 + $0xe8] sm:$0xff]
        %v3324 = vld [vmem:[%s4 + $0xf0] sm:$0xff]
        %v3325 = vld [vmem:[%s4 + $0xf8] sm:$0xff]
        %v3326 = vld [vmem:[%s4 + $0x100] sm:$0xff]
        %v3327 = vld [vmem:[%s4 + $0x108] sm:$0xff]
        %v3328 = vld [vmem:[%s4 + $0x110] sm:$0xff]
        %v3329 = vld [vmem:[%s4 + $0x118] sm:$0xff]
        %v3330 = vld [vmem:[%s4 + $0x120] sm:$0xff]
        %v3331 = vld [vmem:[%s4 + $0x128] sm:$0xff]
        %v3332 = vld [vmem:[%s4 + $0x130] sm:$0xff]
        %v3333 = vld [vmem:[%s4 + $0x138] sm:$0xff]
        %v3334 = vld [vmem:[%s4 + $0x140] sm:$0xff]
        %v3335 = vld [vmem:[%s4 + $0x148] sm:$0xff]
        %v3336 = vld [vmem:[%s4 + $0x150] sm:$0xff]
        %v3337 = vld [vmem:[%s4 + $0x158] sm:$0xff]
        %v3338 = vld [vmem:[%s4 + $0x160] sm:$0xff]
        %v3339 = vld [vmem:[%s4 + $0x168] sm:$0xff]
        %v3340 = vld [vmem:[%s4 + $0x170] sm:$0xff]
        %v3341 = vld [vmem:[%s4 + $0x178] sm:$0xff]
        %v3342 = vld [vmem:[%s4 + $0x180] sm:$0xff]
        %v3343 = vld [vmem:[%s4 + $0x188] sm:$0xff]
        %v3344 = vld [vmem:[%s4 + $0x190] sm:$0xff]
        %v3345 = vld [vmem:[%s4 + $0x198] sm:$0xff]
        %v3346 = vld [vmem:[%s4 + $0x1a0] sm:$0xff]
        %v3347 = vld [vmem:[%s4 + $0x1a8] sm:$0xff]
        %v3348 = vld [vmem:[%s4 + $0x1b0] sm:$0xff]
        %v3349 = vld [vmem:[%s4 + $0x1b8] sm:$0xff]
        %v3350 = vld [vmem:[%s4 + $0x1c0] sm:$0xff]
        %v3351 = vld [vmem:[%s4 + $0x1c8] sm:$0xff]
        %v3352 = vld [vmem:[%s4 + $0x1d0] sm:$0xff]
        %v3353 = vld [vmem:[%s4 + $0x1d8] sm:$0xff]
        %v3354 = vld [vmem:[%s4 + $0x1e0] sm:$0xff]
        %v3355 = vld [vmem:[%s4 + $0x1e8] sm:$0xff]
        %v3356 = vld [vmem:[%s4 + $0x1f0] sm:$0xff]
        %v3357 = vld [vmem:[%s4 + $0x1f8] sm:$0xff]
        %v3422 = vunpack.c.l.b16 %v3294
        %v3423 = vunpack.c.h.b16 %v3294
        %v3424 = vunpack.c.l.b16 %v3295
        %v3425 = vunpack.c.h.b16 %v3295
        %v3426 = vunpack.c.l.b16 %v3296
        %v3427 = vunpack.c.h.b16 %v3296
        %v3428 = vunpack.c.l.b16 %v3297
        %v3429 = vunpack.c.h.b16 %v3297
        %v3430 = vunpack.c.l.b16 %v3298
        %v3431 = vunpack.c.h.b16 %v3298
        %v3432 = vunpack.c.l.b16 %v3299
        %v3433 = vunpack.c.h.b16 %v3299
        %v3434 = vunpack.c.l.b16 %v3300
        %v3435 = vunpack.c.h.b16 %v3300
        %v3436 = vunpack.c.l.b16 %v3301
        %v3437 = vunpack.c.h.b16 %v3301
        %v3438 = vunpack.c.l.b16 %v3302
        %v3439 = vunpack.c.h.b16 %v3302
        %v3440 = vunpack.c.l.b16 %v3303
        %v3441 = vunpack.c.h.b16 %v3303
        %v3442 = vunpack.c.l.b16 %v3304
        %v3443 = vunpack.c.h.b16 %v3304
        %v3444 = vunpack.c.l.b16 %v3305
        %v3445 = vunpack.c.h.b16 %v3305
        %v3446 = vunpack.c.l.b16 %v3306
        %v3447 = vunpack.c.h.b16 %v3306
        %v3448 = vunpack.c.l.b16 %v3307
        %v3449 = vunpack.c.h.b16 %v3307
        %v3450 = vunpack.c.l.b16 %v3308
        %v3451 = vunpack.c.h.b16 %v3308
        %v3452 = vunpack.c.l.b16 %v3309
        %v3453 = vunpack.c.h.b16 %v3309
        %v3454 = vunpack.c.l.b16 %v3310
        %v3455 = vunpack.c.h.b16 %v3310
        %v3456 = vunpack.c.l.b16 %v3311
        %v3457 = vunpack.c.h.b16 %v3311
        %v3458 = vunpack.c.l.b16 %v3312
        %v3459 = vunpack.c.h.b16 %v3312
        %v3460 = vunpack.c.l.b16 %v3313
        %v3461 = vunpack.c.h.b16 %v3313
        %v3462 = vunpack.c.l.b16 %v3314
        %v3463 = vunpack.c.h.b16 %v3314
        %v3464 = vunpack.c.l.b16 %v3315
        %v3465 = vunpack.c.h.b16 %v3315
        %v3466 = vunpack.c.l.b16 %v3316
        %v3467 = vunpack.c.h.b16 %v3316
        %v3468 = vunpack.c.l.b16 %v3317
        %v3469 = vunpack.c.h.b16 %v3317
        %v3470 = vunpack.c.l.b16 %v3318
        %v3471 = vunpack.c.h.b16 %v3318
        %v3472 = vunpack.c.l.b16 %v3319
        %v3473 = vunpack.c.h.b16 %v3319
        %v3474 = vunpack.c.l.b16 %v3320
        %v3475 = vunpack.c.h.b16 %v3320
        %v3476 = vunpack.c.l.b16 %v3321
        %v3477 = vunpack.c.h.b16 %v3321
        %v3478 = vunpack.c.l.b16 %v3322
        %v3479 = vunpack.c.h.b16 %v3322
        %v3480 = vunpack.c.l.b16 %v3323
        %v3481 = vunpack.c.h.b16 %v3323
        %v3482 = vunpack.c.l.b16 %v3324
        %v3483 = vunpack.c.h.b16 %v3324
        %v3484 = vunpack.c.l.b16 %v3325
        %v3485 = vunpack.c.h.b16 %v3325
        %v3486 = vunpack.c.l.b16 %v3326
        %v3487 = vunpack.c.h.b16 %v3326
        %v3488 = vunpack.c.l.b16 %v3327
        %v3489 = vunpack.c.h.b16 %v3327
        %v3490 = vunpack.c.l.b16 %v3328
        %v3491 = vunpack.c.h.b16 %v3328
        %v3492 = vunpack.c.l.b16 %v3329
        %v3493 = vunpack.c.h.b16 %v3329
        %v3494 = vunpack.c.l.b16 %v3330
        %v3495 = vunpack.c.h.b16 %v3330
        %v3496 = vunpack.c.l.b16 %v3331
        %v3497 = vunpack.c.h.b16 %v3331
        %v3498 = vunpack.c.l.b16 %v3332
        %v3499 = vunpack.c.h.b16 %v3332
        %v3500 = vunpack.c.l.b16 %v3333
        %v3501 = vunpack.c.h.b16 %v3333
        %v3502 = vunpack.c.l.b16 %v3334
        %v3503 = vunpack.c.h.b16 %v3334
        %v3504 = vunpack.c.l.b16 %v3335
        %v3505 = vunpack.c.h.b16 %v3335
        %v3506 = vunpack.c.l.b16 %v3336
        %v3507 = vunpack.c.h.b16 %v3336
        %v3508 = vunpack.c.l.b16 %v3337
        %v3509 = vunpack.c.h.b16 %v3337
        %v3510 = vunpack.c.l.b16 %v3338
        %v3511 = vunpack.c.h.b16 %v3338
        %v3512 = vunpack.c.l.b16 %v3339
        %v3513 = vunpack.c.h.b16 %v3339
        %v3514 = vunpack.c.l.b16 %v3340
        %v3515 = vunpack.c.h.b16 %v3340
        %v3516 = vunpack.c.l.b16 %v3341
        %v3517 = vunpack.c.h.b16 %v3341
        %v3518 = vunpack.c.l.b16 %v3342
        %v3519 = vunpack.c.h.b16 %v3342
        %v3520 = vunpack.c.l.b16 %v3343
        %v3521 = vunpack.c.h.b16 %v3343
        %v3522 = vunpack.c.l.b16 %v3344
        %v3523 = vunpack.c.h.b16 %v3344
        %v3524 = vunpack.c.l.b16 %v3345
        %v3525 = vunpack.c.h.b16 %v3345
        %v3526 = vunpack.c.l.b16 %v3346
        %v3527 = vunpack.c.h.b16 %v3346
        %v3528 = vunpack.c.l.b16 %v3347
        %v3529 = vunpack.c.h.b16 %v3347
        %v3530 = vunpack.c.l.b16 %v3348
        %v3531 = vunpack.c.h.b16 %v3348
        %v3532 = vunpack.c.l.b16 %v3349
        %v3533 = vunpack.c.h.b16 %v3349
        %v3534 = vunpack.c.l.b16 %v3350
        %v3535 = vunpack.c.h.b16 %v3350
        %v3536 = vunpack.c.l.b16 %v3351
        %v3537 = vunpack.c.h.b16 %v3351
        %v3538 = vunpack.c.l.b16 %v3352
        %v3539 = vunpack.c.h.b16 %v3352
        %v3540 = vunpack.c.l.b16 %v3353
        %v3541 = vunpack.c.h.b16 %v3353
        %v3542 = vunpack.c.l.b16 %v3354
        %v3543 = vunpack.c.h.b16 %v3354
        %v3544 = vunpack.c.l.b16 %v3355
        %v3545 = vunpack.c.h.b16 %v3355
        %v3546 = vunpack.c.l.b16 %v3356
        %v3547 = vunpack.c.h.b16 %v3356
        %v3548 = vunpack.c.l.b16 %v3357
        %v3549 = vunpack.c.h.b16 %v3357
        %v3550 = vpack.c.b16 %v3426, %v3422
        %v3551 = vpack.c.b16 %v3427, %v3423
        %v3552 = vpack.c.b16 %v3428, %v3424
        %v3553 = vpack.c.b16 %v3429, %v3425
        %v3554 = vpack.c.b16 %v3434, %v3430
        %v3555 = vpack.c.b16 %v3435, %v3431
        %v3556 = vpack.c.b16 %v3436, %v3432
        %v3557 = vpack.c.b16 %v3437, %v3433
        %v3558 = vpack.c.b16 %v3442, %v3438
        %v3559 = vpack.c.b16 %v3443, %v3439
        %v3560 = vpack.c.b16 %v3444, %v3440
        %v3561 = vpack.c.b16 %v3445, %v3441
        %v3562 = vpack.c.b16 %v3450, %v3446
        %v3563 = vpack.c.b16 %v3451, %v3447
        %v3564 = vpack.c.b16 %v3452, %v3448
        %v3565 = vpack.c.b16 %v3453, %v3449
        %v3566 = vpack.c.b16 %v3458, %v3454
        %v3567 = vpack.c.b16 %v3459, %v3455
        %v3568 = vpack.c.b16 %v3460, %v3456
        %v3569 = vpack.c.b16 %v3461, %v3457
        %v3570 = vpack.c.b16 %v3466, %v3462
        %v3571 = vpack.c.b16 %v3467, %v3463
        %v3572 = vpack.c.b16 %v3468, %v3464
        %v3573 = vpack.c.b16 %v3469, %v3465
        %v3574 = vpack.c.b16 %v3474, %v3470
        %v3575 = vpack.c.b16 %v3475, %v3471
        %v3576 = vpack.c.b16 %v3476, %v3472
        %v3577 = vpack.c.b16 %v3477, %v3473
        %v3578 = vpack.c.b16 %v3482, %v3478
        %v3579 = vpack.c.b16 %v3483, %v3479
        %v3580 = vpack.c.b16 %v3484, %v3480
        %v3581 = vpack.c.b16 %v3485, %v3481
        %v3582 = vpack.c.b16 %v3490, %v3486
        %v3583 = vpack.c.b16 %v3491, %v3487
        %v3584 = vpack.c.b16 %v3492, %v3488
        %v3585 = vpack.c.b16 %v3493, %v3489
        %v3586 = vpack.c.b16 %v3498, %v3494
        %v3587 = vpack.c.b16 %v3499, %v3495
        %v3588 = vpack.c.b16 %v3500, %v3496
        %v3589 = vpack.c.b16 %v3501, %v3497
        %v3590 = vpack.c.b16 %v3506, %v3502
        %v3591 = vpack.c.b16 %v3507, %v3503
        %v3592 = vpack.c.b16 %v3508, %v3504
        %v3593 = vpack.c.b16 %v3509, %v3505
        %v3594 = vpack.c.b16 %v3514, %v3510
        %v3595 = vpack.c.b16 %v3515, %v3511
        %v3596 = vpack.c.b16 %v3516, %v3512
        %v3597 = vpack.c.b16 %v3517, %v3513
        %v3598 = vpack.c.b16 %v3522, %v3518
        %v3599 = vpack.c.b16 %v3523, %v3519
        %v3600 = vpack.c.b16 %v3524, %v3520
        %v3601 = vpack.c.b16 %v3525, %v3521
        %v3602 = vpack.c.b16 %v3530, %v3526
        %v3603 = vpack.c.b16 %v3531, %v3527
        %v3604 = vpack.c.b16 %v3532, %v3528
        %v3605 = vpack.c.b16 %v3533, %v3529
        %v3606 = vpack.c.b16 %v3538, %v3534
        %v3607 = vpack.c.b16 %v3539, %v3535
        %v3608 = vpack.c.b16 %v3540, %v3536
        %v3609 = vpack.c.b16 %v3541, %v3537
        %v3610 = vpack.c.b16 %v3546, %v3542
        %v3611 = vpack.c.b16 %v3547, %v3543
        %v3612 = vpack.c.b16 %v3548, %v3544
        %v3613 = vpack.c.b16 %v3549, %v3545
        %3678 = vmatpush.bf16.msra.mxu0 %v3578
        %3679 = vmatpush.bf16.msra.mxu0 %v3574
        %3680 = vmatpush.bf16.msra.mxu0 %v3570
        %3681 = vmatpush.bf16.msra.mxu0 %v3566
        %3682 = vmatpush.bf16.msra.mxu0 %v3562
        %3683 = vmatpush.bf16.msra.mxu0 %v3558
        %3684 = vmatpush.bf16.msra.mxu0 %v3554
        %3685 = vmatpush.bf16.msra.mxu0 %v3550
        %3686 = vmatmul.bf16.gmra.mxu0 %v3292
        %v3687 = vpop.f32.mrf.mxu0
        %v3688 = vadd.f32 0.0, %v3687
        %v3689 = vpop.f32.mrf.mxu0
        %v3690 = vadd.f32 0.0, %v3689
        %3691 = vdwg.mxu0
        %3692 = vmatpush.bf16.msra.mxu0 %v3610
        %3693 = vmatpush.bf16.msra.mxu0 %v3606
        %3694 = vmatpush.bf16.msra.mxu0 %v3602
        %3695 = vmatpush.bf16.msra.mxu0 %v3598
        %3696 = vmatpush.bf16.msra.mxu0 %v3594
        %3697 = vmatpush.bf16.msra.mxu0 %v3590
        %3698 = vmatpush.bf16.msra.mxu0 %v3586
        %3699 = vmatpush.bf16.msra.mxu0 %v3582
        %3700 = vmatmul.bf16.gmra.mxu0 %v3293
        %v3701 = vpop.f32.mrf.mxu0
        %v3702 = vadd.f32 %v3688, %v3701
        %v3703 = vpop.f32.mrf.mxu0
        %v3704 = vadd.f32 %v3690, %v3703
        %3705 = vdwg.mxu0
        %3706 = vmatpush.bf16.msra.mxu0 %v3579
        %3707 = vmatpush.bf16.msra.mxu0 %v3575
        %3708 = vmatpush.bf16.msra.mxu0 %v3571
        %3709 = vmatpush.bf16.msra.mxu0 %v3567
        %3710 = vmatpush.bf16.msra.mxu0 %v3563
        %3711 = vmatpush.bf16.msra.mxu0 %v3559
        %3712 = vmatpush.bf16.msra.mxu0 %v3555
        %3713 = vmatpush.bf16.msra.mxu0 %v3551
        %3714 = vmatmul.bf16.gmra.mxu0 %v3292
        %v3715 = vpop.f32.mrf.mxu0
        %v3716 = vadd.f32 0.0, %v3715
        %v3717 = vpop.f32.mrf.mxu0
        %v3718 = vadd.f32 0.0, %v3717
        %3719 = vdwg.mxu0
        %3720 = vmatpush.bf16.msra.mxu0 %v3611
        %3721 = vmatpush.bf16.msra.mxu0 %v3607
        %3722 = vmatpush.bf16.msra.mxu0 %v3603
        %3723 = vmatpush.bf16.msra.mxu0 %v3599
        %3724 = vmatpush.bf16.msra.mxu0 %v3595
        %3725 = vmatpush.bf16.msra.mxu0 %v3591
        %3726 = vmatpush.bf16.msra.mxu0 %v3587
        %3727 = vmatpush.bf16.msra.mxu0 %v3583
        %3728 = vmatmul.bf16.gmra.mxu0 %v3293
        %v3729 = vpop.f32.mrf.mxu0
        %v3730 = vadd.f32 %v3716, %v3729
        %v3731 = vpop.f32.mrf.mxu0
        %v3732 = vadd.f32 %v3718, %v3731
        %3733 = vdwg.mxu0
        %3734 = vmatpush.bf16.msra.mxu0 %v3580
        %3735 = vmatpush.bf16.msra.mxu0 %v3576
        %3736 = vmatpush.bf16.msra.mxu0 %v3572
        %3737 = vmatpush.bf16.msra.mxu0 %v3568
        %3738 = vmatpush.bf16.msra.mxu0 %v3564
        %3739 = vmatpush.bf16.msra.mxu0 %v3560
        %3740 = vmatpush.bf16.msra.mxu0 %v3556
        %3741 = vmatpush.bf16.msra.mxu0 %v3552
        %3742 = vmatmul.bf16.gmra.mxu0 %v3292
        %v3743 = vpop.f32.mrf.mxu0
        %v3744 = vadd.f32 0.0, %v3743
        %v3745 = vpop.f32.mrf.mxu0
        %v3746 = vadd.f32 0.0, %v3745
        %3747 = vdwg.mxu0
        %3748 = vmatpush.bf16.msra.mxu0 %v3612
        %3749 = vmatpush.bf16.msra.mxu0 %v3608
        %3750 = vmatpush.bf16.msra.mxu0 %v3604
        %3751 = vmatpush.bf16.msra.mxu0 %v3600
        %3752 = vmatpush.bf16.msra.mxu0 %v3596
        %3753 = vmatpush.bf16.msra.mxu0 %v3592
        %3754 = vmatpush.bf16.msra.mxu0 %v3588
        %3755 = vmatpush.bf16.msra.mxu0 %v3584
        %3756 = vmatmul.bf16.gmra.mxu0 %v3293
        %v3757 = vpop.f32.mrf.mxu0
        %v3758 = vadd.f32 %v3744, %v3757
        %v3759 = vpop.f32.mrf.mxu0
        %v3760 = vadd.f32 %v3746, %v3759
        %3761 = vdwg.mxu0
        %3762 = vmatpush.bf16.msra.mxu0 %v3581
        %3763 = vmatpush.bf16.msra.mxu0 %v3577
        %3764 = vmatpush.bf16.msra.mxu0 %v3573
        %3765 = vmatpush.bf16.msra.mxu0 %v3569
        %3766 = vmatpush.bf16.msra.mxu0 %v3565
        %3767 = vmatpush.bf16.msra.mxu0 %v3561
        %3768 = vmatpush.bf16.msra.mxu0 %v3557
        %3769 = vmatpush.bf16.msra.mxu0 %v3553
        %3770 = vmatmul.bf16.gmra.mxu0 %v3292
        %v3771 = vpop.f32.mrf.mxu0
        %v3772 = vadd.f32 0.0, %v3771
        %v3773 = vpop.f32.mrf.mxu0
        %v3774 = vadd.f32 0.0, %v3773
        %3775 = vdwg.mxu0
        %3776 = vmatpush.bf16.msra.mxu0 %v3613
        %3777 = vmatpush.bf16.msra.mxu0 %v3609
        %3778 = vmatpush.bf16.msra.mxu0 %v3605
        %3779 = vmatpush.bf16.msra.mxu0 %v3601
        %3780 = vmatpush.bf16.msra.mxu0 %v3597
        %3781 = vmatpush.bf16.msra.mxu0 %v3593
        %3782 = vmatpush.bf16.msra.mxu0 %v3589
        %3783 = vmatpush.bf16.msra.mxu0 %v3585
        %3784 = vmatmul.bf16.gmra.mxu0 %v3293
        %v3785 = vpop.f32.mrf.mxu0
        %v3786 = vadd.f32 %v3772, %v3785
        %v3787 = vpop.f32.mrf.mxu0
        %v3788 = vadd.f32 %v3774, %v3787
        %3789 = vdwg.mxu0
        %3790 = vst [vmem:[#allocation2] sm:$0xff] %v3702
        %3791 = vst [vmem:[#allocation2 + $0x8] sm:$0xff] %v3730
        %3792 = vst [vmem:[#allocation2 + $0x10] sm:$0xff] %v3758
        %3793 = vst [vmem:[#allocation2 + $0x18] sm:$0xff] %v3786
        %3794 = vst [vmem:[#allocation2 + $0x20] sm:$0xff] %v3704
        %3795 = vst [vmem:[#allocation2 + $0x28] sm:$0xff] %v3732
        %3796 = vst [vmem:[#allocation2 + $0x30] sm:$0xff] %v3760
        %3797 = vst [vmem:[#allocation2 + $0x38] sm:$0xff] %v3788
      $region80: #{seq2seq_forward.3} parent=51 // pred_fallthru
        _
      %s3798 = sld [smem:[#allocation6 + %s3223]]
      %p3799 = scmp.ne.s32.totalorder %s3798, 0
      // Predicated region
      $region81: #{seq2seq_forward.3} parent=51 // pred_check
        %p3800 = pneg %p3799
      $region82: #{seq2seq_forward.3} parent=51 // pred_check_branch
        %3802 = sbr.rel (%p3800) target = $region84
      $region83: #{seq2seq_forward.3} parent=51 // pred_region
        %s3803 = scalar_lea.vmem %s314, 192
        %v3804 = vld [vmem:[%s3803] sm:$0xff]
        %v3805 = vld [vmem:[%s3803 + $0x8] sm:$0xff]
        %v3806 = vld [vmem:[%s3803 + $0x10] sm:$0xff]
        %v3807 = vld [vmem:[%s3803 + $0x18] sm:$0xff]
        %v3808 = vld [vmem:[%s3803 + $0x20] sm:$0xff]
        %v3809 = vld [vmem:[%s3803 + $0x28] sm:$0xff]
        %v3810 = vld [vmem:[%s3803 + $0x30] sm:$0xff]
        %v3811 = vld [vmem:[%s3803 + $0x38] sm:$0xff]
        %3812 = vst [vmem:[#allocation2] sm:$0xff] %v3804
        %3813 = vst [vmem:[#allocation2 + $0x8] sm:$0xff] %v3805
        %3814 = vst [vmem:[#allocation2 + $0x10] sm:$0xff] %v3806
        %3815 = vst [vmem:[#allocation2 + $0x18] sm:$0xff] %v3807
        %3816 = vst [vmem:[#allocation2 + $0x20] sm:$0xff] %v3808
        %3817 = vst [vmem:[#allocation2 + $0x28] sm:$0xff] %v3809
        %3818 = vst [vmem:[#allocation2 + $0x30] sm:$0xff] %v3810
        %3819 = vst [vmem:[#allocation2 + $0x38] sm:$0xff] %v3811
      $region84: #{seq2seq_forward.3} parent=51 // pred_fallthru
        _
      %v3820 = vld [vmem:[#allocation3] sm:$0xf]
      %v3821 = vld [vmem:[#allocation3 + $0x4] sm:$0xf]
      %v3822 = vld [vmem:[%s5] sm:$0xff]
      %v3823 = vld [vmem:[%s5 + $0x8] sm:$0xff]
      %v3824 = vld [vmem:[%s5 + $0x10] sm:$0xff]
      %v3825 = vld [vmem:[%s5 + $0x18] sm:$0xff]
      %v3826 = vld [vmem:[%s5 + $0x20] sm:$0xff]
      %v3827 = vld [vmem:[%s5 + $0x28] sm:$0xff]
      %v3828 = vld [vmem:[%s5 + $0x30] sm:$0xff]
      %v3829 = vld [vmem:[%s5 + $0x38] sm:$0xff]
      %v3830 = vld [vmem:[%s5 + $0x40] sm:$0xff]
      %v3831 = vld [vmem:[%s5 + $0x48] sm:$0xff]
      %v3832 = vld [vmem:[%s5 + $0x50] sm:$0xff]
      %v3833 = vld [vmem:[%s5 + $0x58] sm:$0xff]
      %v3834 = vld [vmem:[%s5 + $0x60] sm:$0xff]
      %v3835 = vld [vmem:[%s5 + $0x68] sm:$0xff]
      %v3836 = vld [vmem:[%s5 + $0x70] sm:$0xff]
      %v3837 = vld [vmem:[%s5 + $0x78] sm:$0xff]
      %v3838 = vld [vmem:[%s5 + $0x80] sm:$0xff]
      %v3839 = vld [vmem:[%s5 + $0x88] sm:$0xff]
      %v3840 = vld [vmem:[%s5 + $0x90] sm:$0xff]
      %v3841 = vld [vmem:[%s5 + $0x98] sm:$0xff]
      %v3842 = vld [vmem:[%s5 + $0xa0] sm:$0xff]
      %v3843 = vld [vmem:[%s5 + $0xa8] sm:$0xff]
      %v3844 = vld [vmem:[%s5 + $0xb0] sm:$0xff]
      %v3845 = vld [vmem:[%s5 + $0xb8] sm:$0xff]
      %v3846 = vld [vmem:[%s5 + $0xc0] sm:$0xff]
      %v3847 = vld [vmem:[%s5 + $0xc8] sm:$0xff]
      %v3848 = vld [vmem:[%s5 + $0xd0] sm:$0xff]
      %v3849 = vld [vmem:[%s5 + $0xd8] sm:$0xff]
      %v3850 = vld [vmem:[%s5 + $0xe0] sm:$0xff]
      %v3851 = vld [vmem:[%s5 + $0xe8] sm:$0xff]
      %v3852 = vld [vmem:[%s5 + $0xf0] sm:$0xff]
      %v3853 = vld [vmem:[%s5 + $0xf8] sm:$0xff]
      %v3854 = vld [vmem:[#allocation2] sm:$0xff]
      %v3855 = vld [vmem:[#allocation2 + $0x8] sm:$0xff]
      %v3856 = vld [vmem:[#allocation2 + $0x10] sm:$0xff]
      %v3857 = vld [vmem:[#allocation2 + $0x18] sm:$0xff]
      %v3858 = vld [vmem:[#allocation2 + $0x20] sm:$0xff]
      %v3859 = vld [vmem:[#allocation2 + $0x28] sm:$0xff]
      %v3860 = vld [vmem:[#allocation2 + $0x30] sm:$0xff]
      %v3861 = vld [vmem:[#allocation2 + $0x38] sm:$0xff]
      %v3864 = vunpack.c.l.b16 %v3820
      %v3865 = vunpack.c.l.b16 %v3821
      %v3866 = vpack.c.b16 %v3865, %v3864
      %v3900 = vunpack.c.l.b16 %v3822
      %v3901 = vunpack.c.h.b16 %v3822
      %v3902 = vunpack.c.l.b16 %v3823
      %v3903 = vunpack.c.h.b16 %v3823
      %v3904 = vunpack.c.l.b16 %v3824
      %v3905 = vunpack.c.h.b16 %v3824
      %v3906 = vunpack.c.l.b16 %v3825
      %v3907 = vunpack.c.h.b16 %v3825
      %v3908 = vunpack.c.l.b16 %v3826
      %v3909 = vunpack.c.h.b16 %v3826
      %v3910 = vunpack.c.l.b16 %v3827
      %v3911 = vunpack.c.h.b16 %v3827
      %v3912 = vunpack.c.l.b16 %v3828
      %v3913 = vunpack.c.h.b16 %v3828
      %v3914 = vunpack.c.l.b16 %v3829
      %v3915 = vunpack.c.h.b16 %v3829
      %v3916 = vunpack.c.l.b16 %v3830
      %v3917 = vunpack.c.h.b16 %v3830
      %v3918 = vunpack.c.l.b16 %v3831
      %v3919 = vunpack.c.h.b16 %v3831
      %v3920 = vunpack.c.l.b16 %v3832
      %v3921 = vunpack.c.h.b16 %v3832
      %v3922 = vunpack.c.l.b16 %v3833
      %v3923 = vunpack.c.h.b16 %v3833
      %v3924 = vunpack.c.l.b16 %v3834
      %v3925 = vunpack.c.h.b16 %v3834
      %v3926 = vunpack.c.l.b16 %v3835
      %v3927 = vunpack.c.h.b16 %v3835
      %v3928 = vunpack.c.l.b16 %v3836
      %v3929 = vunpack.c.h.b16 %v3836
      %v3930 = vunpack.c.l.b16 %v3837
      %v3931 = vunpack.c.h.b16 %v3837
      %v3932 = vunpack.c.l.b16 %v3838
      %v3933 = vunpack.c.h.b16 %v3838
      %v3934 = vunpack.c.l.b16 %v3839
      %v3935 = vunpack.c.h.b16 %v3839
      %v3936 = vunpack.c.l.b16 %v3840
      %v3937 = vunpack.c.h.b16 %v3840
      %v3938 = vunpack.c.l.b16 %v3841
      %v3939 = vunpack.c.h.b16 %v3841
      %v3940 = vunpack.c.l.b16 %v3842
      %v3941 = vunpack.c.h.b16 %v3842
      %v3942 = vunpack.c.l.b16 %v3843
      %v3943 = vunpack.c.h.b16 %v3843
      %v3944 = vunpack.c.l.b16 %v3844
      %v3945 = vunpack.c.h.b16 %v3844
      %v3946 = vunpack.c.l.b16 %v3845
      %v3947 = vunpack.c.h.b16 %v3845
      %v3948 = vunpack.c.l.b16 %v3846
      %v3949 = vunpack.c.h.b16 %v3846
      %v3950 = vunpack.c.l.b16 %v3847
      %v3951 = vunpack.c.h.b16 %v3847
      %v3952 = vunpack.c.l.b16 %v3848
      %v3953 = vunpack.c.h.b16 %v3848
      %v3954 = vunpack.c.l.b16 %v3849
      %v3955 = vunpack.c.h.b16 %v3849
      %v3956 = vunpack.c.l.b16 %v3850
      %v3957 = vunpack.c.h.b16 %v3850
      %v3958 = vunpack.c.l.b16 %v3851
      %v3959 = vunpack.c.h.b16 %v3851
      %v3960 = vunpack.c.l.b16 %v3852
      %v3961 = vunpack.c.h.b16 %v3852
      %v3962 = vunpack.c.l.b16 %v3853
      %v3963 = vunpack.c.h.b16 %v3853
      %v3964 = vpack.c.b16 %v3904, %v3900
      %v3965 = vpack.c.b16 %v3905, %v3901
      %v3966 = vpack.c.b16 %v3906, %v3902
      %v3967 = vpack.c.b16 %v3907, %v3903
      %v3968 = vpack.c.b16 %v3912, %v3908
      %v3969 = vpack.c.b16 %v3913, %v3909
      %v3970 = vpack.c.b16 %v3914, %v3910
      %v3971 = vpack.c.b16 %v3915, %v3911
      %v3972 = vpack.c.b16 %v3920, %v3916
      %v3973 = vpack.c.b16 %v3921, %v3917
      %v3974 = vpack.c.b16 %v3922, %v3918
      %v3975 = vpack.c.b16 %v3923, %v3919
      %v3976 = vpack.c.b16 %v3928, %v3924
      %v3977 = vpack.c.b16 %v3929, %v3925
      %v3978 = vpack.c.b16 %v3930, %v3926
      %v3979 = vpack.c.b16 %v3931, %v3927
      %v3980 = vpack.c.b16 %v3936, %v3932
      %v3981 = vpack.c.b16 %v3937, %v3933
      %v3982 = vpack.c.b16 %v3938, %v3934
      %v3983 = vpack.c.b16 %v3939, %v3935
      %v3984 = vpack.c.b16 %v3944, %v3940
      %v3985 = vpack.c.b16 %v3945, %v3941
      %v3986 = vpack.c.b16 %v3946, %v3942
      %v3987 = vpack.c.b16 %v3947, %v3943
      %v3988 = vpack.c.b16 %v3952, %v3948
      %v3989 = vpack.c.b16 %v3953, %v3949
      %v3990 = vpack.c.b16 %v3954, %v3950
      %v3991 = vpack.c.b16 %v3955, %v3951
      %v3992 = vpack.c.b16 %v3960, %v3956
      %v3993 = vpack.c.b16 %v3961, %v3957
      %v3994 = vpack.c.b16 %v3962, %v3958
      %v3995 = vpack.c.b16 %v3963, %v3959
      %4028 = vmatpush.bf16.msra.mxu0 %v3992
      %4029 = vmatpush.bf16.msra.mxu0 %v3988
      %4030 = vmatpush.bf16.msra.mxu0 %v3984
      %4031 = vmatpush.bf16.msra.mxu0 %v3980
      %4032 = vmatpush.bf16.msra.mxu0 %v3976
      %4033 = vmatpush.bf16.msra.mxu0 %v3972
      %4034 = vmatpush.bf16.msra.mxu0 %v3968
      %4035 = vmatpush.bf16.msra.mxu0 %v3964
      %4036 = vmatmul.bf16.gmra.mxu0 %v3866
      %v4037 = vpop.f32.mrf.mxu0
      %v4038 = vadd.f32 %v3854, %v4037
      %v4039 = vpop.f32.mrf.mxu0
      %v4040 = vadd.f32 %v3858, %v4039
      %4041 = vdwg.mxu0
      %4042 = vmatpush.bf16.msra.mxu0 %v3993
      %4043 = vmatpush.bf16.msra.mxu0 %v3989
      %4044 = vmatpush.bf16.msra.mxu0 %v3985
      %4045 = vmatpush.bf16.msra.mxu0 %v3981
      %4046 = vmatpush.bf16.msra.mxu0 %v3977
      %4047 = vmatpush.bf16.msra.mxu0 %v3973
      %4048 = vmatpush.bf16.msra.mxu0 %v3969
      %4049 = vmatpush.bf16.msra.mxu0 %v3965
      %4050 = vmatmul.bf16.gmra.mxu0 %v3866
      %v4051 = vpop.f32.mrf.mxu0
      %v4052 = vadd.f32 %v3855, %v4051
      %v4053 = vpop.f32.mrf.mxu0
      %v4054 = vadd.f32 %v3859, %v4053
      %4055 = vdwg.mxu0
      %4056 = vmatpush.bf16.msra.mxu0 %v3994
      %4057 = vmatpush.bf16.msra.mxu0 %v3990
      %4058 = vmatpush.bf16.msra.mxu0 %v3986
      %4059 = vmatpush.bf16.msra.mxu0 %v3982
      %4060 = vmatpush.bf16.msra.mxu0 %v3978
      %4061 = vmatpush.bf16.msra.mxu0 %v3974
      %4062 = vmatpush.bf16.msra.mxu0 %v3970
      %4063 = vmatpush.bf16.msra.mxu0 %v3966
      %4064 = vmatmul.bf16.gmra.mxu0 %v3866
      %v4065 = vpop.f32.mrf.mxu0
      %v4066 = vadd.f32 %v3856, %v4065
      %v4067 = vpop.f32.mrf.mxu0
      %v4068 = vadd.f32 %v3860, %v4067
      %4069 = vdwg.mxu0
      %4070 = vmatpush.bf16.msra.mxu0 %v3995
      %4071 = vmatpush.bf16.msra.mxu0 %v3991
      %4072 = vmatpush.bf16.msra.mxu0 %v3987
      %4073 = vmatpush.bf16.msra.mxu0 %v3983
      %4074 = vmatpush.bf16.msra.mxu0 %v3979
      %4075 = vmatpush.bf16.msra.mxu0 %v3975
      %4076 = vmatpush.bf16.msra.mxu0 %v3971
      %4077 = vmatpush.bf16.msra.mxu0 %v3967
      %4078 = vmatmul.bf16.gmra.mxu0 %v3866
      %v4079 = vpop.f32.mrf.mxu0
      %v4080 = vadd.f32 %v3857, %v4079
      %v4081 = vpop.f32.mrf.mxu0
      %v4082 = vadd.f32 %v3861, %v4081
      %4083 = vdwg.mxu0
      %v4084 = vld [vmem:[%s6] sm:$0xf]
      %v4086 = vperm.slane %v4084, 0
      %v4087 = vperm.slane %v4084, 1
      %v4088 = vperm.slane %v4084, 2
      %v4089 = vperm.slane %v4084, 3
      %v4094 = vadd.f32 %v4038, %v4086
      %v4095 = vadd.f32 %v4052, %v4087
      %v4096 = vadd.f32 %v4066, %v4088
      %v4097 = vadd.f32 %v4080, %v4089
      %v4098 = vadd.f32 %v4040, %v4086
      %v4099 = vadd.f32 %v4054, %v4087
      %v4100 = vadd.f32 %v4068, %v4088
      %v4101 = vadd.f32 %v4082, %v4089
      %v4102 = vxor.u32 %v4094, 2147483648
      %v4103 = vxor.u32 %v4098, 2147483648
      %v4104 = vmul.f32 %v4102, 1.442695
      %v4105 = vpow.pop %v4104
      %v4106 = vmul.f32 %v4103, 1.442695
      %v4107 = vpow.pop %v4106
      %v4108 = vadd.f32 %v4105, 1.0
      %v4109 = vadd.f32 %v4107, 1.0
      %v4110 = vrcp.pop %v4108
      %v4111 = vmul.f32 %v4108, %v4110
      %v4112 = vsub.f32 1.0, %v4111
      %v4113 = vmul.f32 %v4110, %v4112
      %v4114 = vadd.f32 %v4110, %v4113
      %vm4115 = vweird.f32 %v4108
      %vm4116 = vweird.f32 %v4110
      %vm4117 = vmor %vm4115, %vm4116
      %v4118 = vsel %vm4117, %v4110, %v4114
      %v4119 = vand.u32 2147483647, %v4108
      %vm4120 = vcmp.eq.f32.partialorder %v4119, 8.507059e+37
      %v4121 = vand.u32 %v4108, 2147483648
      %v4122 = vor.u32 1.1754944e-38, %v4121
      %v4123 = vsel %vm4120, %v4122, %v4118
      %v4124 = vmul.f32 1.0, %v4123
      %v4125 = vrcp.pop %v4109
      %v4126 = vmul.f32 %v4109, %v4125
      %v4127 = vsub.f32 1.0, %v4126
      %v4128 = vmul.f32 %v4125, %v4127
      %v4129 = vadd.f32 %v4125, %v4128
      %vm4130 = vweird.f32 %v4109
      %vm4131 = vweird.f32 %v4125
      %vm4132 = vmor %vm4130, %vm4131
      %v4133 = vsel %vm4132, %v4125, %v4129
      %v4134 = vand.u32 2147483647, %v4109
      %vm4135 = vcmp.eq.f32.partialorder %v4134, 8.507059e+37
      %v4136 = vand.u32 %v4109, 2147483648
      %v4137 = vor.u32 1.1754944e-38, %v4136
      %v4138 = vsel %vm4135, %v4137, %v4133
      %v4139 = vmul.f32 1.0, %v4138
      %v4140 = vxor.u32 %v4095, 2147483648
      %v4141 = vxor.u32 %v4099, 2147483648
      %v4142 = vmul.f32 %v4140, 1.442695
      %v4143 = vpow.pop %v4142
      %v4144 = vmul.f32 %v4141, 1.442695
      %v4145 = vpow.pop %v4144
      %v4146 = vadd.f32 %v4143, 1.0
      %v4147 = vadd.f32 %v4145, 1.0
      %v4148 = vrcp.pop %v4146
      %v4149 = vmul.f32 %v4146, %v4148
      %v4150 = vsub.f32 1.0, %v4149
      %v4151 = vmul.f32 %v4148, %v4150
      %v4152 = vadd.f32 %v4148, %v4151
      %vm4153 = vweird.f32 %v4146
      %vm4154 = vweird.f32 %v4148
      %vm4155 = vmor %vm4153, %vm4154
      %v4156 = vsel %vm4155, %v4148, %v4152
      %v4157 = vand.u32 2147483647, %v4146
      %vm4158 = vcmp.eq.f32.partialorder %v4157, 8.507059e+37
      %v4159 = vand.u32 %v4146, 2147483648
      %v4160 = vor.u32 1.1754944e-38, %v4159
      %v4161 = vsel %vm4158, %v4160, %v4156
      %v4162 = vmul.f32 1.0, %v4161
      %v4163 = vrcp.pop %v4147
      %v4164 = vmul.f32 %v4147, %v4163
      %v4165 = vsub.f32 1.0, %v4164
      %v4166 = vmul.f32 %v4163, %v4165
      %v4167 = vadd.f32 %v4163, %v4166
      %vm4168 = vweird.f32 %v4147
      %vm4169 = vweird.f32 %v4163
      %vm4170 = vmor %vm4168, %vm4169
      %v4171 = vsel %vm4170, %v4163, %v4167
      %v4172 = vand.u32 2147483647, %v4147
      %vm4173 = vcmp.eq.f32.partialorder %v4172, 8.507059e+37
      %v4174 = vand.u32 %v4147, 2147483648
      %v4175 = vor.u32 1.1754944e-38, %v4174
      %v4176 = vsel %vm4173, %v4175, %v4171
      %v4177 = vmul.f32 1.0, %v4176
      %v4178 = vtanh.pop %v4096
      %v4179 = vtanh.pop %v4100
      %v4180 = vxor.u32 %v4097, 2147483648
      %v4181 = vxor.u32 %v4101, 2147483648
      %v4182 = vmul.f32 %v4180, 1.442695
      %v4183 = vpow.pop %v4182
      %v4184 = vmul.f32 %v4181, 1.442695
      %v4185 = vpow.pop %v4184
      %v4186 = vadd.f32 %v4183, 1.0
      %v4187 = vadd.f32 %v4185, 1.0
      %v4188 = vrcp.pop %v4186
      %v4189 = vmul.f32 %v4186, %v4188
      %v4190 = vsub.f32 1.0, %v4189
      %v4191 = vmul.f32 %v4188, %v4190
      %v4192 = vadd.f32 %v4188, %v4191
      %vm4193 = vweird.f32 %v4186
      %vm4194 = vweird.f32 %v4188
      %vm4195 = vmor %vm4193, %vm4194
      %v4196 = vsel %vm4195, %v4188, %v4192
      %v4197 = vand.u32 2147483647, %v4186
      %vm4198 = vcmp.eq.f32.partialorder %v4197, 8.507059e+37
      %v4199 = vand.u32 %v4186, 2147483648
      %v4200 = vor.u32 1.1754944e-38, %v4199
      %v4201 = vsel %vm4198, %v4200, %v4196
      %v4202 = vmul.f32 1.0, %v4201
      %v4203 = vrcp.pop %v4187
      %v4204 = vmul.f32 %v4187, %v4203
      %v4205 = vsub.f32 1.0, %v4204
      %v4206 = vmul.f32 %v4203, %v4205
      %v4207 = vadd.f32 %v4203, %v4206
      %vm4208 = vweird.f32 %v4187
      %vm4209 = vweird.f32 %v4203
      %vm4210 = vmor %vm4208, %vm4209
      %v4211 = vsel %vm4210, %v4203, %v4207
      %v4212 = vand.u32 2147483647, %v4187
      %vm4213 = vcmp.eq.f32.partialorder %v4212, 8.507059e+37
      %v4214 = vand.u32 %v4187, 2147483648
      %v4215 = vor.u32 1.1754944e-38, %v4214
      %v4216 = vsel %vm4213, %v4215, %v4211
      %v4217 = vmul.f32 1.0, %v4216
      %v4218 = vld [vmem:[#allocation4] sm:$0xff]
      %v4219 = vld [vmem:[#allocation4 + $0x8] sm:$0xff]
      %v4220 = vmul.f32 %v4162, %v4218
      %v4221 = vmul.f32 %v4177, %v4219
      %v4222 = vmul.f32 %v4124, %v4178
      %v4223 = vmul.f32 %v4139, %v4179
      %v4224 = vadd.f32 %v4220, %v4222
      %v4225 = vadd.f32 %v4221, %v4223
      %v4226 = vtanh.pop %v4224
      %v4227 = vtanh.pop %v4225
      %v4228 = vmul.f32 %v4202, %v4226
      %v4229 = vmul.f32 %v4217, %v4227
      %v4230 = vpack.c.bf16 %v4228, %v4228
      %v4231 = vpack.c.bf16 %v4229, %v4229
      %4232 = vst [vmem:[#allocation4] sm:$0xff] %v4224
      %4233 = vst [vmem:[#allocation4 + $0x8] sm:$0xff] %v4225
      %4234 = vst [vmem:[#allocation3] sm:$0xf] %v4230
      %4235 = vst [vmem:[#allocation3 + $0x4] sm:$0xf] %v4231
      %v4236 = vld [vmem:[%s7] sm:$0xff]
      %v4237 = vld [vmem:[%s7 + $0x8] sm:$0xff]
      %v4238 = vld [vmem:[%s7 + $0x10] sm:$0xff]
      %v4239 = vld [vmem:[%s7 + $0x18] sm:$0xff]
      %v4240 = vld [vmem:[%s7 + $0x20] sm:$0xff]
      %v4241 = vld [vmem:[%s7 + $0x28] sm:$0xff]
      %v4242 = vld [vmem:[%s7 + $0x30] sm:$0xff]
      %v4243 = vld [vmem:[%s7 + $0x38] sm:$0xff]
      %v4244 = vld [vmem:[%s7 + $0x40] sm:$0xff]
      %v4245 = vld [vmem:[%s7 + $0x48] sm:$0xff]
      %v4246 = vld [vmem:[%s7 + $0x50] sm:$0xff]
      %v4247 = vld [vmem:[%s7 + $0x58] sm:$0xff]
      %v4248 = vld [vmem:[%s7 + $0x60] sm:$0xff]
      %v4249 = vld [vmem:[%s7 + $0x68] sm:$0xff]
      %v4250 = vld [vmem:[%s7 + $0x70] sm:$0xff]
      %v4251 = vld [vmem:[%s7 + $0x78] sm:$0xff]
      %v4252 = vld [vmem:[%s8] sm:$0x3]
      %v4254 = vperm.slane %v4252, 0
      %v4255 = vperm.slane %v4252, 1
      %v4260 = vunpack.c.l.b16 %v4230
      %v4261 = vunpack.c.l.b16 %v4231
      %v4262 = vpack.c.b16 %v4261, %v4260
      %v4280 = vunpack.c.l.b16 %v4236
      %v4281 = vunpack.c.h.b16 %v4236
      %v4282 = vunpack.c.l.b16 %v4237
      %v4283 = vunpack.c.h.b16 %v4237
      %v4284 = vunpack.c.l.b16 %v4238
      %v4285 = vunpack.c.h.b16 %v4238
      %v4286 = vunpack.c.l.b16 %v4239
      %v4287 = vunpack.c.h.b16 %v4239
      %v4288 = vunpack.c.l.b16 %v4240
      %v4289 = vunpack.c.h.b16 %v4240
      %v4290 = vunpack.c.l.b16 %v4241
      %v4291 = vunpack.c.h.b16 %v4241
      %v4292 = vunpack.c.l.b16 %v4242
      %v4293 = vunpack.c.h.b16 %v4242
      %v4294 = vunpack.c.l.b16 %v4243
      %v4295 = vunpack.c.h.b16 %v4243
      %v4296 = vunpack.c.l.b16 %v4244
      %v4297 = vunpack.c.h.b16 %v4244
      %v4298 = vunpack.c.l.b16 %v4245
      %v4299 = vunpack.c.h.b16 %v4245
      %v4300 = vunpack.c.l.b16 %v4246
      %v4301 = vunpack.c.h.b16 %v4246
      %v4302 = vunpack.c.l.b16 %v4247
      %v4303 = vunpack.c.h.b16 %v4247
      %v4304 = vunpack.c.l.b16 %v4248
      %v4305 = vunpack.c.h.b16 %v4248
      %v4306 = vunpack.c.l.b16 %v4249
      %v4307 = vunpack.c.h.b16 %v4249
      %v4308 = vunpack.c.l.b16 %v4250
      %v4309 = vunpack.c.h.b16 %v4250
      %v4310 = vunpack.c.l.b16 %v4251
      %v4311 = vunpack.c.h.b16 %v4251
      %v4312 = vpack.c.b16 %v4282, %v4280
      %v4313 = vpack.c.b16 %v4283, %v4281
      %v4314 = vpack.c.b16 %v4286, %v4284
      %v4315 = vpack.c.b16 %v4287, %v4285
      %v4316 = vpack.c.b16 %v4290, %v4288
      %v4317 = vpack.c.b16 %v4291, %v4289
      %v4318 = vpack.c.b16 %v4294, %v4292
      %v4319 = vpack.c.b16 %v4295, %v4293
      %v4320 = vpack.c.b16 %v4298, %v4296
      %v4321 = vpack.c.b16 %v4299, %v4297
      %v4322 = vpack.c.b16 %v4302, %v4300
      %v4323 = vpack.c.b16 %v4303, %v4301
      %v4324 = vpack.c.b16 %v4306, %v4304
      %v4325 = vpack.c.b16 %v4307, %v4305
      %v4326 = vpack.c.b16 %v4310, %v4308
      %v4327 = vpack.c.b16 %v4311, %v4309
      %4344 = vmatpush.bf16.msra.mxu0 %v4326
      %4345 = vmatpush.bf16.msra.mxu0 %v4324
      %4346 = vmatpush.bf16.msra.mxu0 %v4322
      %4347 = vmatpush.bf16.msra.mxu0 %v4320
      %4348 = vmatpush.bf16.msra.mxu0 %v4318
      %4349 = vmatpush.bf16.msra.mxu0 %v4316
      %4350 = vmatpush.bf16.msra.mxu0 %v4314
      %4351 = vmatpush.bf16.msra.mxu0 %v4312
      %4352 = vmatmul.bf16.gmra.mxu0 %v4262
      %v4353 = vpop.f32.mrf.mxu0
      %v4354 = vadd.f32 %v4254, %v4353
      %v4355 = vpop.f32.mrf.mxu0
      %v4356 = vadd.f32 %v4254, %v4355
      %4357 = vdwg.mxu0
      %4358 = vmatpush.bf16.msra.mxu0 %v4327
      %4359 = vmatpush.bf16.msra.mxu0 %v4325
      %4360 = vmatpush.bf16.msra.mxu0 %v4323
      %4361 = vmatpush.bf16.msra.mxu0 %v4321
      %4362 = vmatpush.bf16.msra.mxu0 %v4319
      %4363 = vmatpush.bf16.msra.mxu0 %v4317
      %4364 = vmatpush.bf16.msra.mxu0 %v4315
      %4365 = vmatpush.bf16.msra.mxu0 %v4313
      %4366 = vmatmul.bf16.gmra.mxu0 %v4262
      %v4367 = vpop.f32.mrf.mxu0
      %v4368 = vadd.f32 %v4255, %v4367
      %v4369 = vpop.f32.mrf.mxu0
      %v4370 = vadd.f32 %v4255, %v4369
      %4371 = vdwg.mxu0
      %s4372 = scalar_lea.vmem %s321, 96
      %4373 = vst [vmem:[%s4372] sm:$0xff] %v4354
      %4374 = vst [vmem:[%s4372 + $0x8] sm:$0xff] %v4368
      %4375 = vst [vmem:[%s4372 + $0x10] sm:$0xff] %v4356
      %4376 = vst [vmem:[%s4372 + $0x18] sm:$0xff] %v4370
      %s4377 = sadd.s32 %s337, 4
      %p4378 = scmp.lt.s32.totalorder %s4377, 8
      %s4379 = sld [smem:[#allocation6 + %s4377]]
      %p4380 = scmp.eq.s32.totalorder %s4379, 0
      %p4381 = pnand %p4378, %p4380
      %p4382 = pneg %p4381
      // Predicated region
      $region85: #{seq2seq_forward.3} parent=51 // pred_check
        _
      $region86: #{seq2seq_forward.3} parent=51 // pred_check_branch
        %4384 = sbr.rel (%p4381) target = $region88
      $region87: #{seq2seq_forward.3} parent=51 // pred_region
        %v4385 = vlaneseq
        %v4386 = vand.u32 %v4385, 127
        %v4387 = vadd.s32 %v4386, 128
        %v4388 = vmax.f32 %v4354, %v4368
        %4389 = vmax.xlane.f32.xlu0 %v4388
        %v4390 = vpop.xlane.xlu0 %4389
        %v4391 = vmax.f32 %v4356, %v4370
        %4392 = vmax.xlane.f32.xlu0 %v4391
        %v4393 = vpop.xlane.xlu0 %4392
        %vm4394 = vcmp.eq.f32.partialorder %v4354, %v4390
        %vm4395 = vcmp.eq.f32.partialorder %v4368, %v4390
        %vm4396 = vcmp.eq.f32.partialorder %v4356, %v4393
        %vm4397 = vcmp.eq.f32.partialorder %v4370, %v4393
        %v4398 = vsel %vm4394, %v4386, 256
        %v4399 = vsel %vm4395, %v4387, 256
        %v4400 = vsel %vm4396, %v4386, 256
        %v4401 = vsel %vm4397, %v4387, 256
        %vm4402 = vcmp.lt.s32.totalorder %v4398, %v4399
        %v4403 = vsel %vm4402, %v4398, %v4399
        %v4404 = vand.u32 %v4403, 65535
        %v4405 = vshra.s32 %v4403, 16
        %v4406 = vcvt.s32.f32 %v4404
        %v4407 = vcvt.s32.f32 %v4405
        %4408 = vmin.xlane.f32.xlu0 %v4407
        %v4409 = vpop.xlane.xlu0 %4408
        %vm4410 = vcmp.eq.f32.partialorder %v4407, %v4409
        %v4411 = vsel %vm4410, %v4406, inf
        %4412 = vmin.xlane.f32.xlu0 %v4411
        %v4413 = vpop.xlane.xlu0 %4412
        %v4414 = vcvt.f32.s32 %v4413
        %v4415 = vcvt.f32.s32 %v4409
        %v4416 = vshll.u32 %v4415, 16
        %v4417 = vadd.s32 %v4416, %v4414
        %vm4418 = vcmp.lt.s32.totalorder %v4400, %v4401
        %v4419 = vsel %vm4418, %v4400, %v4401
        %v4420 = vand.u32 %v4419, 65535
        %v4421 = vshra.s32 %v4419, 16
        %v4422 = vcvt.s32.f32 %v4420
        %v4423 = vcvt.s32.f32 %v4421
        %4424 = vmin.xlane.f32.xlu0 %v4423
        %v4425 = vpop.xlane.xlu0 %4424
        %vm4426 = vcmp.eq.f32.partialorder %v4423, %v4425
        %v4427 = vsel %vm4426, %v4422, inf
        %4428 = vmin.xlane.f32.xlu0 %v4427
        %v4429 = vpop.xlane.xlu0 %4428
        %v4430 = vcvt.f32.s32 %v4429
        %v4431 = vcvt.f32.s32 %v4425
        %v4432 = vshll.u32 %v4431, 16
        %v4433 = vadd.s32 %v4432, %v4430
        %vm4434 = vcmp.eq.s32.totalorder %v4386, %v4417
        %vm4435 = vcmp.eq.s32.totalorder %v4387, %v4417
        %vm4436 = vcmp.eq.s32.totalorder %v4386, %v4433
        %vm4437 = vcmp.eq.s32.totalorder %v4387, %v4433
        %v4438 = vsel %vm4434, 1, 0
        %v4439 = vsel %vm4435, 1, 0
        %v4440 = vsel %vm4436, 1, 0
        %v4441 = vsel %vm4437, 1, 0
        %v4442 = vcvt.s32.f32 %v4438
        %v4443 = vcvt.s32.f32 %v4439
        %v4444 = vcvt.s32.f32 %v4440
        %v4445 = vcvt.s32.f32 %v4441
        %v4446 = vpack.c.bf16 %v4444, %v4442
        %v4447 = vpack.c.bf16 %v4445, %v4443
        %v4448 = vld [vmem:[%s4] sm:$0xff]
        %v4449 = vld [vmem:[%s4 + $0x8] sm:$0xff]
        %v4450 = vld [vmem:[%s4 + $0x10] sm:$0xff]
        %v4451 = vld [vmem:[%s4 + $0x18] sm:$0xff]
        %v4452 = vld [vmem:[%s4 + $0x20] sm:$0xff]
        %v4453 = vld [vmem:[%s4 + $0x28] sm:$0xff]
        %v4454 = vld [vmem:[%s4 + $0x30] sm:$0xff]
        %v4455 = vld [vmem:[%s4 + $0x38] sm:$0xff]
        %v4456 = vld [vmem:[%s4 + $0x40] sm:$0xff]
        %v4457 = vld [vmem:[%s4 + $0x48] sm:$0xff]
        %v4458 = vld [vmem:[%s4 + $0x50] sm:$0xff]
        %v4459 = vld [vmem:[%s4 + $0x58] sm:$0xff]
        %v4460 = vld [vmem:[%s4 + $0x60] sm:$0xff]
        %v4461 = vld [vmem:[%s4 + $0x68] sm:$0xff]
        %v4462 = vld [vmem:[%s4 + $0x70] sm:$0xff]
        %v4463 = vld [vmem:[%s4 + $0x78] sm:$0xff]
        %v4464 = vld [vmem:[%s4 + $0x80] sm:$0xff]
        %v4465 = vld [vmem:[%s4 + $0x88] sm:$0xff]
        %v4466 = vld [vmem:[%s4 + $0x90] sm:$0xff]
        %v4467 = vld [vmem:[%s4 + $0x98] sm:$0xff]
        %v4468 = vld [vmem:[%s4 + $0xa0] sm:$0xff]
        %v4469 = vld [vmem:[%s4 + $0xa8] sm:$0xff]
        %v4470 = vld [vmem:[%s4 + $0xb0] sm:$0xff]
        %v4471 = vld [vmem:[%s4 + $0xb8] sm:$0xff]
        %v4472 = vld [vmem:[%s4 + $0xc0] sm:$0xff]
        %v4473 = vld [vmem:[%s4 + $0xc8] sm:$0xff]
        %v4474 = vld [vmem:[%s4 + $0xd0] sm:$0xff]
        %v4475 = vld [vmem:[%s4 + $0xd8] sm:$0xff]
        %v4476 = vld [vmem:[%s4 + $0xe0] sm:$0xff]
        %v4477 = vld [vmem:[%s4 + $0xe8] sm:$0xff]
        %v4478 = vld [vmem:[%s4 + $0xf0] sm:$0xff]
        %v4479 = vld [vmem:[%s4 + $0xf8] sm:$0xff]
        %v4480 = vld [vmem:[%s4 + $0x100] sm:$0xff]
        %v4481 = vld [vmem:[%s4 + $0x108] sm:$0xff]
        %v4482 = vld [vmem:[%s4 + $0x110] sm:$0xff]
        %v4483 = vld [vmem:[%s4 + $0x118] sm:$0xff]
        %v4484 = vld [vmem:[%s4 + $0x120] sm:$0xff]
        %v4485 = vld [vmem:[%s4 + $0x128] sm:$0xff]
        %v4486 = vld [vmem:[%s4 + $0x130] sm:$0xff]
        %v4487 = vld [vmem:[%s4 + $0x138] sm:$0xff]
        %v4488 = vld [vmem:[%s4 + $0x140] sm:$0xff]
        %v4489 = vld [vmem:[%s4 + $0x148] sm:$0xff]
        %v4490 = vld [vmem:[%s4 + $0x150] sm:$0xff]
        %v4491 = vld [vmem:[%s4 + $0x158] sm:$0xff]
        %v4492 = vld [vmem:[%s4 + $0x160] sm:$0xff]
        %v4493 = vld [vmem:[%s4 + $0x168] sm:$0xff]
        %v4494 = vld [vmem:[%s4 + $0x170] sm:$0xff]
        %v4495 = vld [vmem:[%s4 + $0x178] sm:$0xff]
        %v4496 = vld [vmem:[%s4 + $0x180] sm:$0xff]
        %v4497 = vld [vmem:[%s4 + $0x188] sm:$0xff]
        %v4498 = vld [vmem:[%s4 + $0x190] sm:$0xff]
        %v4499 = vld [vmem:[%s4 + $0x198] sm:$0xff]
        %v4500 = vld [vmem:[%s4 + $0x1a0] sm:$0xff]
        %v4501 = vld [vmem:[%s4 + $0x1a8] sm:$0xff]
        %v4502 = vld [vmem:[%s4 + $0x1b0] sm:$0xff]
        %v4503 = vld [vmem:[%s4 + $0x1b8] sm:$0xff]
        %v4504 = vld [vmem:[%s4 + $0x1c0] sm:$0xff]
        %v4505 = vld [vmem:[%s4 + $0x1c8] sm:$0xff]
        %v4506 = vld [vmem:[%s4 + $0x1d0] sm:$0xff]
        %v4507 = vld [vmem:[%s4 + $0x1d8] sm:$0xff]
        %v4508 = vld [vmem:[%s4 + $0x1e0] sm:$0xff]
        %v4509 = vld [vmem:[%s4 + $0x1e8] sm:$0xff]
        %v4510 = vld [vmem:[%s4 + $0x1f0] sm:$0xff]
        %v4511 = vld [vmem:[%s4 + $0x1f8] sm:$0xff]
        %v4576 = vunpack.c.l.b16 %v4448
        %v4577 = vunpack.c.h.b16 %v4448
        %v4578 = vunpack.c.l.b16 %v4449
        %v4579 = vunpack.c.h.b16 %v4449
        %v4580 = vunpack.c.l.b16 %v4450
        %v4581 = vunpack.c.h.b16 %v4450
        %v4582 = vunpack.c.l.b16 %v4451
        %v4583 = vunpack.c.h.b16 %v4451
        %v4584 = vunpack.c.l.b16 %v4452
        %v4585 = vunpack.c.h.b16 %v4452
        %v4586 = vunpack.c.l.b16 %v4453
        %v4587 = vunpack.c.h.b16 %v4453
        %v4588 = vunpack.c.l.b16 %v4454
        %v4589 = vunpack.c.h.b16 %v4454
        %v4590 = vunpack.c.l.b16 %v4455
        %v4591 = vunpack.c.h.b16 %v4455
        %v4592 = vunpack.c.l.b16 %v4456
        %v4593 = vunpack.c.h.b16 %v4456
        %v4594 = vunpack.c.l.b16 %v4457
        %v4595 = vunpack.c.h.b16 %v4457
        %v4596 = vunpack.c.l.b16 %v4458
        %v4597 = vunpack.c.h.b16 %v4458
        %v4598 = vunpack.c.l.b16 %v4459
        %v4599 = vunpack.c.h.b16 %v4459
        %v4600 = vunpack.c.l.b16 %v4460
        %v4601 = vunpack.c.h.b16 %v4460
        %v4602 = vunpack.c.l.b16 %v4461
        %v4603 = vunpack.c.h.b16 %v4461
        %v4604 = vunpack.c.l.b16 %v4462
        %v4605 = vunpack.c.h.b16 %v4462
        %v4606 = vunpack.c.l.b16 %v4463
        %v4607 = vunpack.c.h.b16 %v4463
        %v4608 = vunpack.c.l.b16 %v4464
        %v4609 = vunpack.c.h.b16 %v4464
        %v4610 = vunpack.c.l.b16 %v4465
        %v4611 = vunpack.c.h.b16 %v4465
        %v4612 = vunpack.c.l.b16 %v4466
        %v4613 = vunpack.c.h.b16 %v4466
        %v4614 = vunpack.c.l.b16 %v4467
        %v4615 = vunpack.c.h.b16 %v4467
        %v4616 = vunpack.c.l.b16 %v4468
        %v4617 = vunpack.c.h.b16 %v4468
        %v4618 = vunpack.c.l.b16 %v4469
        %v4619 = vunpack.c.h.b16 %v4469
        %v4620 = vunpack.c.l.b16 %v4470
        %v4621 = vunpack.c.h.b16 %v4470
        %v4622 = vunpack.c.l.b16 %v4471
        %v4623 = vunpack.c.h.b16 %v4471
        %v4624 = vunpack.c.l.b16 %v4472
        %v4625 = vunpack.c.h.b16 %v4472
        %v4626 = vunpack.c.l.b16 %v4473
        %v4627 = vunpack.c.h.b16 %v4473
        %v4628 = vunpack.c.l.b16 %v4474
        %v4629 = vunpack.c.h.b16 %v4474
        %v4630 = vunpack.c.l.b16 %v4475
        %v4631 = vunpack.c.h.b16 %v4475
        %v4632 = vunpack.c.l.b16 %v4476
        %v4633 = vunpack.c.h.b16 %v4476
        %v4634 = vunpack.c.l.b16 %v4477
        %v4635 = vunpack.c.h.b16 %v4477
        %v4636 = vunpack.c.l.b16 %v4478
        %v4637 = vunpack.c.h.b16 %v4478
        %v4638 = vunpack.c.l.b16 %v4479
        %v4639 = vunpack.c.h.b16 %v4479
        %v4640 = vunpack.c.l.b16 %v4480
        %v4641 = vunpack.c.h.b16 %v4480
        %v4642 = vunpack.c.l.b16 %v4481
        %v4643 = vunpack.c.h.b16 %v4481
        %v4644 = vunpack.c.l.b16 %v4482
        %v4645 = vunpack.c.h.b16 %v4482
        %v4646 = vunpack.c.l.b16 %v4483
        %v4647 = vunpack.c.h.b16 %v4483
        %v4648 = vunpack.c.l.b16 %v4484
        %v4649 = vunpack.c.h.b16 %v4484
        %v4650 = vunpack.c.l.b16 %v4485
        %v4651 = vunpack.c.h.b16 %v4485
        %v4652 = vunpack.c.l.b16 %v4486
        %v4653 = vunpack.c.h.b16 %v4486
        %v4654 = vunpack.c.l.b16 %v4487
        %v4655 = vunpack.c.h.b16 %v4487
        %v4656 = vunpack.c.l.b16 %v4488
        %v4657 = vunpack.c.h.b16 %v4488
        %v4658 = vunpack.c.l.b16 %v4489
        %v4659 = vunpack.c.h.b16 %v4489
        %v4660 = vunpack.c.l.b16 %v4490
        %v4661 = vunpack.c.h.b16 %v4490
        %v4662 = vunpack.c.l.b16 %v4491
        %v4663 = vunpack.c.h.b16 %v4491
        %v4664 = vunpack.c.l.b16 %v4492
        %v4665 = vunpack.c.h.b16 %v4492
        %v4666 = vunpack.c.l.b16 %v4493
        %v4667 = vunpack.c.h.b16 %v4493
        %v4668 = vunpack.c.l.b16 %v4494
        %v4669 = vunpack.c.h.b16 %v4494
        %v4670 = vunpack.c.l.b16 %v4495
        %v4671 = vunpack.c.h.b16 %v4495
        %v4672 = vunpack.c.l.b16 %v4496
        %v4673 = vunpack.c.h.b16 %v4496
        %v4674 = vunpack.c.l.b16 %v4497
        %v4675 = vunpack.c.h.b16 %v4497
        %v4676 = vunpack.c.l.b16 %v4498
        %v4677 = vunpack.c.h.b16 %v4498
        %v4678 = vunpack.c.l.b16 %v4499
        %v4679 = vunpack.c.h.b16 %v4499
        %v4680 = vunpack.c.l.b16 %v4500
        %v4681 = vunpack.c.h.b16 %v4500
        %v4682 = vunpack.c.l.b16 %v4501
        %v4683 = vunpack.c.h.b16 %v4501
        %v4684 = vunpack.c.l.b16 %v4502
        %v4685 = vunpack.c.h.b16 %v4502
        %v4686 = vunpack.c.l.b16 %v4503
        %v4687 = vunpack.c.h.b16 %v4503
        %v4688 = vunpack.c.l.b16 %v4504
        %v4689 = vunpack.c.h.b16 %v4504
        %v4690 = vunpack.c.l.b16 %v4505
        %v4691 = vunpack.c.h.b16 %v4505
        %v4692 = vunpack.c.l.b16 %v4506
        %v4693 = vunpack.c.h.b16 %v4506
        %v4694 = vunpack.c.l.b16 %v4507
        %v4695 = vunpack.c.h.b16 %v4507
        %v4696 = vunpack.c.l.b16 %v4508
        %v4697 = vunpack.c.h.b16 %v4508
        %v4698 = vunpack.c.l.b16 %v4509
        %v4699 = vunpack.c.h.b16 %v4509
        %v4700 = vunpack.c.l.b16 %v4510
        %v4701 = vunpack.c.h.b16 %v4510
        %v4702 = vunpack.c.l.b16 %v4511
        %v4703 = vunpack.c.h.b16 %v4511
        %v4704 = vpack.c.b16 %v4580, %v4576
        %v4705 = vpack.c.b16 %v4581, %v4577
        %v4706 = vpack.c.b16 %v4582, %v4578
        %v4707 = vpack.c.b16 %v4583, %v4579
        %v4708 = vpack.c.b16 %v4588, %v4584
        %v4709 = vpack.c.b16 %v4589, %v4585
        %v4710 = vpack.c.b16 %v4590, %v4586
        %v4711 = vpack.c.b16 %v4591, %v4587
        %v4712 = vpack.c.b16 %v4596, %v4592
        %v4713 = vpack.c.b16 %v4597, %v4593
        %v4714 = vpack.c.b16 %v4598, %v4594
        %v4715 = vpack.c.b16 %v4599, %v4595
        %v4716 = vpack.c.b16 %v4604, %v4600
        %v4717 = vpack.c.b16 %v4605, %v4601
        %v4718 = vpack.c.b16 %v4606, %v4602
        %v4719 = vpack.c.b16 %v4607, %v4603
        %v4720 = vpack.c.b16 %v4612, %v4608
        %v4721 = vpack.c.b16 %v4613, %v4609
        %v4722 = vpack.c.b16 %v4614, %v4610
        %v4723 = vpack.c.b16 %v4615, %v4611
        %v4724 = vpack.c.b16 %v4620, %v4616
        %v4725 = vpack.c.b16 %v4621, %v4617
        %v4726 = vpack.c.b16 %v4622, %v4618
        %v4727 = vpack.c.b16 %v4623, %v4619
        %v4728 = vpack.c.b16 %v4628, %v4624
        %v4729 = vpack.c.b16 %v4629, %v4625
        %v4730 = vpack.c.b16 %v4630, %v4626
        %v4731 = vpack.c.b16 %v4631, %v4627
        %v4732 = vpack.c.b16 %v4636, %v4632
        %v4733 = vpack.c.b16 %v4637, %v4633
        %v4734 = vpack.c.b16 %v4638, %v4634
        %v4735 = vpack.c.b16 %v4639, %v4635
        %v4736 = vpack.c.b16 %v4644, %v4640
        %v4737 = vpack.c.b16 %v4645, %v4641
        %v4738 = vpack.c.b16 %v4646, %v4642
        %v4739 = vpack.c.b16 %v4647, %v4643
        %v4740 = vpack.c.b16 %v4652, %v4648
        %v4741 = vpack.c.b16 %v4653, %v4649
        %v4742 = vpack.c.b16 %v4654, %v4650
        %v4743 = vpack.c.b16 %v4655, %v4651
        %v4744 = vpack.c.b16 %v4660, %v4656
        %v4745 = vpack.c.b16 %v4661, %v4657
        %v4746 = vpack.c.b16 %v4662, %v4658
        %v4747 = vpack.c.b16 %v4663, %v4659
        %v4748 = vpack.c.b16 %v4668, %v4664
        %v4749 = vpack.c.b16 %v4669, %v4665
        %v4750 = vpack.c.b16 %v4670, %v4666
        %v4751 = vpack.c.b16 %v4671, %v4667
        %v4752 = vpack.c.b16 %v4676, %v4672
        %v4753 = vpack.c.b16 %v4677, %v4673
        %v4754 = vpack.c.b16 %v4678, %v4674
        %v4755 = vpack.c.b16 %v4679, %v4675
        %v4756 = vpack.c.b16 %v4684, %v4680
        %v4757 = vpack.c.b16 %v4685, %v4681
        %v4758 = vpack.c.b16 %v4686, %v4682
        %v4759 = vpack.c.b16 %v4687, %v4683
        %v4760 = vpack.c.b16 %v4692, %v4688
        %v4761 = vpack.c.b16 %v4693, %v4689
        %v4762 = vpack.c.b16 %v4694, %v4690
        %v4763 = vpack.c.b16 %v4695, %v4691
        %v4764 = vpack.c.b16 %v4700, %v4696
        %v4765 = vpack.c.b16 %v4701, %v4697
        %v4766 = vpack.c.b16 %v4702, %v4698
        %v4767 = vpack.c.b16 %v4703, %v4699
        %4832 = vmatpush.bf16.msra.mxu0 %v4732
        %4833 = vmatpush.bf16.msra.mxu0 %v4728
        %4834 = vmatpush.bf16.msra.mxu0 %v4724
        %4835 = vmatpush.bf16.msra.mxu0 %v4720
        %4836 = vmatpush.bf16.msra.mxu0 %v4716
        %4837 = vmatpush.bf16.msra.mxu0 %v4712
        %4838 = vmatpush.bf16.msra.mxu0 %v4708
        %4839 = vmatpush.bf16.msra.mxu0 %v4704
        %4840 = vmatmul.bf16.gmra.mxu0 %v4446
        %v4841 = vpop.f32.mrf.mxu0
        %v4842 = vadd.f32 0.0, %v4841
        %v4843 = vpop.f32.mrf.mxu0
        %v4844 = vadd.f32 0.0, %v4843
        %4845 = vdwg.mxu0
        %4846 = vmatpush.bf16.msra.mxu0 %v4764
        %4847 = vmatpush.bf16.msra.mxu0 %v4760
        %4848 = vmatpush.bf16.msra.mxu0 %v4756
        %4849 = vmatpush.bf16.msra.mxu0 %v4752
        %4850 = vmatpush.bf16.msra.mxu0 %v4748
        %4851 = vmatpush.bf16.msra.mxu0 %v4744
        %4852 = vmatpush.bf16.msra.mxu0 %v4740
        %4853 = vmatpush.bf16.msra.mxu0 %v4736
        %4854 = vmatmul.bf16.gmra.mxu0 %v4447
        %v4855 = vpop.f32.mrf.mxu0
        %v4856 = vadd.f32 %v4842, %v4855
        %v4857 = vpop.f32.mrf.mxu0
        %v4858 = vadd.f32 %v4844, %v4857
        %4859 = vdwg.mxu0
        %4860 = vmatpush.bf16.msra.mxu0 %v4733
        %4861 = vmatpush.bf16.msra.mxu0 %v4729
        %4862 = vmatpush.bf16.msra.mxu0 %v4725
        %4863 = vmatpush.bf16.msra.mxu0 %v4721
        %4864 = vmatpush.bf16.msra.mxu0 %v4717
        %4865 = vmatpush.bf16.msra.mxu0 %v4713
        %4866 = vmatpush.bf16.msra.mxu0 %v4709
        %4867 = vmatpush.bf16.msra.mxu0 %v4705
        %4868 = vmatmul.bf16.gmra.mxu0 %v4446
        %v4869 = vpop.f32.mrf.mxu0
        %v4870 = vadd.f32 0.0, %v4869
        %v4871 = vpop.f32.mrf.mxu0
        %v4872 = vadd.f32 0.0, %v4871
        %4873 = vdwg.mxu0
        %4874 = vmatpush.bf16.msra.mxu0 %v4765
        %4875 = vmatpush.bf16.msra.mxu0 %v4761
        %4876 = vmatpush.bf16.msra.mxu0 %v4757
        %4877 = vmatpush.bf16.msra.mxu0 %v4753
        %4878 = vmatpush.bf16.msra.mxu0 %v4749
        %4879 = vmatpush.bf16.msra.mxu0 %v4745
        %4880 = vmatpush.bf16.msra.mxu0 %v4741
        %4881 = vmatpush.bf16.msra.mxu0 %v4737
        %4882 = vmatmul.bf16.gmra.mxu0 %v4447
        %v4883 = vpop.f32.mrf.mxu0
        %v4884 = vadd.f32 %v4870, %v4883
        %v4885 = vpop.f32.mrf.mxu0
        %v4886 = vadd.f32 %v4872, %v4885
        %4887 = vdwg.mxu0
        %4888 = vmatpush.bf16.msra.mxu0 %v4734
        %4889 = vmatpush.bf16.msra.mxu0 %v4730
        %4890 = vmatpush.bf16.msra.mxu0 %v4726
        %4891 = vmatpush.bf16.msra.mxu0 %v4722
        %4892 = vmatpush.bf16.msra.mxu0 %v4718
        %4893 = vmatpush.bf16.msra.mxu0 %v4714
        %4894 = vmatpush.bf16.msra.mxu0 %v4710
        %4895 = vmatpush.bf16.msra.mxu0 %v4706
        %4896 = vmatmul.bf16.gmra.mxu0 %v4446
        %v4897 = vpop.f32.mrf.mxu0
        %v4898 = vadd.f32 0.0, %v4897
        %v4899 = vpop.f32.mrf.mxu0
        %v4900 = vadd.f32 0.0, %v4899
        %4901 = vdwg.mxu0
        %4902 = vmatpush.bf16.msra.mxu0 %v4766
        %4903 = vmatpush.bf16.msra.mxu0 %v4762
        %4904 = vmatpush.bf16.msra.mxu0 %v4758
        %4905 = vmatpush.bf16.msra.mxu0 %v4754
        %4906 = vmatpush.bf16.msra.mxu0 %v4750
        %4907 = vmatpush.bf16.msra.mxu0 %v4746
        %4908 = vmatpush.bf16.msra.mxu0 %v4742
        %4909 = vmatpush.bf16.msra.mxu0 %v4738
        %4910 = vmatmul.bf16.gmra.mxu0 %v4447
        %v4911 = vpop.f32.mrf.mxu0
        %v4912 = vadd.f32 %v4898, %v4911
        %v4913 = vpop.f32.mrf.mxu0
        %v4914 = vadd.f32 %v4900, %v4913
        %4915 = vdwg.mxu0
        %4916 = vmatpush.bf16.msra.mxu0 %v4735
        %4917 = vmatpush.bf16.msra.mxu0 %v4731
        %4918 = vmatpush.bf16.msra.mxu0 %v4727
        %4919 = vmatpush.bf16.msra.mxu0 %v4723
        %4920 = vmatpush.bf16.msra.mxu0 %v4719
        %4921 = vmatpush.bf16.msra.mxu0 %v4715
        %4922 = vmatpush.bf16.msra.mxu0 %v4711
        %4923 = vmatpush.bf16.msra.mxu0 %v4707
        %4924 = vmatmul.bf16.gmra.mxu0 %v4446
        %v4925 = vpop.f32.mrf.mxu0
        %v4926 = vadd.f32 0.0, %v4925
        %v4927 = vpop.f32.mrf.mxu0
        %v4928 = vadd.f32 0.0, %v4927
        %4929 = vdwg.mxu0
        %4930 = vmatpush.bf16.msra.mxu0 %v4767
        %4931 = vmatpush.bf16.msra.mxu0 %v4763
        %4932 = vmatpush.bf16.msra.mxu0 %v4759
        %4933 = vmatpush.bf16.msra.mxu0 %v4755
        %4934 = vmatpush.bf16.msra.mxu0 %v4751
        %4935 = vmatpush.bf16.msra.mxu0 %v4747
        %4936 = vmatpush.bf16.msra.mxu0 %v4743
        %4937 = vmatpush.bf16.msra.mxu0 %v4739
        %4938 = vmatmul.bf16.gmra.mxu0 %v4447
        %v4939 = vpop.f32.mrf.mxu0
        %v4940 = vadd.f32 %v4926, %v4939
        %v4941 = vpop.f32.mrf.mxu0
        %v4942 = vadd.f32 %v4928, %v4941
        %4943 = vdwg.mxu0
        %4944 = vst [vmem:[#allocation2] sm:$0xff] %v4856
        %4945 = vst [vmem:[#allocation2 + $0x8] sm:$0xff] %v4884
        %4946 = vst [vmem:[#allocation2 + $0x10] sm:$0xff] %v4912
        %4947 = vst [vmem:[#allocation2 + $0x18] sm:$0xff] %v4940
        %4948 = vst [vmem:[#allocation2 + $0x20] sm:$0xff] %v4858
        %4949 = vst [vmem:[#allocation2 + $0x28] sm:$0xff] %v4886
        %4950 = vst [vmem:[#allocation2 + $0x30] sm:$0xff] %v4914
        %4951 = vst [vmem:[#allocation2 + $0x38] sm:$0xff] %v4942
      $region88: #{seq2seq_forward.3} parent=51 // pred_fallthru
        _
      %s4952 = smul.u32 4, %s28
      %p4953 = scmp.lt.s32.totalorder %s4952, 7
      %s4954 = scalar_select %p4953, %s4952, 7
      %s4955 = smul.addr %s4954, 4
      %s4956 = smul.addr %s4955, 8
      %s4957 = scalar_lea.vmem %s9, %s4956
      // Predicated region
      $region89: #{seq2seq_forward.3} parent=51 // pred_check
        %p4958 = pneg %p219
      $region90: #{seq2seq_forward.3} parent=51 // pred_check_branch
        %4960 = sbr.rel (%p4958) target = $region92
      $region91: #{seq2seq_forward.3} parent=51 // pred_region
        %s4961 = smul.u32 4, %s28
      $region92: #{seq2seq_forward.3} parent=51 // pred_fallthru
        _
    $region52: #{seq2seq_forward.3} parent=5 // pred_fallthru
      _
    %p4962 = scmp.le.s32.totalorder 2, %s23
    // Predicated region
    $region93: #{seq2seq_forward.3} parent=5 // pred_check
      %p4963 = pneg %p4962
    $region94: #{seq2seq_forward.3} parent=5 // pred_check_branch
      %4965 = sbr.rel (%p4963) target = $region96
    $region95: #{seq2seq_forward.3} parent=5 // pred_region
      %s4966 = ssub.s32 %s23, 2
      // Predicated region
      $region97: #{seq2seq_forward.3} parent=95 // pred_check
        %p4967 = pneg %p225
      $region98: #{seq2seq_forward.3} parent=95 // pred_check_branch
        %4969 = sbr.rel (%p4967) target = $region100
      $region99: #{seq2seq_forward.3} parent=95 // pred_region
        %s4970 = smul.u32 4, %s29
        %p4971 = scmp.lt.s32.totalorder %s4970, 7
        %s4972 = scalar_select %p4971, %s4970, 7
        %s4973 = smul.addr %s4972, 4
        %s4974 = smul.addr %s4973, 8
        %s4975 = scalar_lea.vmem %s9, %s4974
      $region100: #{seq2seq_forward.3} parent=95 // pred_fallthru
        _
    $region96: #{seq2seq_forward.3} parent=5 // pred_fallthru
      _
  $region6: #{seq2seq_forward.3} parent=0 // loop_footer
    %s27 = sadd.s32 1, %s23
  $region7: #{seq2seq_forward.3} parent=0 // loop_footer_branch
    %22 = sbr.rel target = $region3
  $region8: #{seq2seq_forward.3} parent=0 // loop_exit
    _

</llo_original>
